<compile_context>
chip_gen: v7x
topology: tpu7x:2x2x1
jax: 0.10.0
libtpu: 0.0.40
codegen_flags: <defaults>
</compile_context>

<pallas_src>
import functools
import math

import jax
import jax.numpy as jnp
from jax.experimental import pallas as pl
from jax.experimental.pallas import tpu as pltpu


# ----------------------------------------------------------------------------
# Small deterministic stand-ins for alphastarmini's SFS / SCHP / AHP constants.
# ----------------------------------------------------------------------------
class SFS:
    upgrades = 32
    available_actions = 64
    unit_counts_bow = 48
    units_buildings = 48
    effects = 32
    upgrade = 32            # same vocabulary as `upgrades`
    last_action_type = 64
    last_delay = 16
    last_repeat_queued = 8
    time = 64               # 64-bit game-loop encoding (passed through raw)
    mmr = 7


class SCHP:
    count_beginning_build_order = 20


class AHP:
    original_32 = 16
    original_64 = 32
    original_128 = 64
    original_256 = 128
    original_512 = 256


N_STATISTICS = 10
BO_SEQ = SCHP.count_beginning_build_order          # 20
BO_FEAT = SFS.unit_counts_bow                      # 48 per-step build-order one-hot dim
D_MODEL, D_INNER, N_LAYERS, N_HEAD, D_K, D_V = 16, 32, 3, 2, 8, 8

# bf16 MXU operands (f32 accumulation).  Set False for a strict-f32 parity path.
USE_BF16_MATMUL = True
MM_DTYPE = jnp.bfloat16 if USE_BF16_MATMUL else jnp.float32


# ----------------------------------------------------------------------------
# Static layout bookkeeping: packed input columns, block-diag embedding columns.
# ----------------------------------------------------------------------------
# (param_key or 'time', raw input width) -- order == scalar_list order (minus bo).
_PACKED_LAYOUT = (
    ('statistics_fc',         N_STATISTICS),
    ('home_race_fc',          5),
    ('away_race_fc',          5),
    ('upgrades_fc',           SFS.upgrades),
    ('enemy_upgrades_fc',     SFS.upgrades),
    ('time',                  SFS.time),
    ('available_actions_fc',  SFS.available_actions),
    ('unit_counts_bow_fc',    SFS.unit_counts_bow),
    ('mmr_fc',                SFS.mmr),
    ('units_buildings_fc',    SFS.units_buildings),
    ('effects_fc',            SFS.effects),
    ('upgrade_fc',            SFS.upgrade),
    ('last_delay_fc',         SFS.last_delay),
    ('last_action_type_fc',   SFS.last_action_type),
    ('last_repeat_queued_fc', SFS.last_repeat_queued),
)
_EMB_WIDTH = {
    'statistics_fc': AHP.original_64, 'home_race_fc': AHP.original_32,
    'away_race_fc': AHP.original_32, 'upgrades_fc': AHP.original_128,
    'enemy_upgrades_fc': AHP.original_128, 'available_actions_fc': AHP.original_64,
    'unit_counts_bow_fc': AHP.original_64, 'mmr_fc': AHP.original_64,
    'units_buildings_fc': AHP.original_32, 'effects_fc': AHP.original_32,
    'upgrade_fc': AHP.original_32, 'last_delay_fc': AHP.original_64,
    'last_action_type_fc': AHP.original_128, 'last_repeat_queued_fc': AHP.original_256,
}

_IN_OFF, _EMB_OFF, _BLK_PLACEMENT = {}, {}, []
_in = _col = 0
for _key, _w_in in _PACKED_LAYOUT:
    _IN_OFF[_key] = (_in, _w_in)
    if _key != 'time':
        _w_out = _EMB_WIDTH[_key]
        _EMB_OFF[_key] = (_col, _w_out)
        _BLK_PLACEMENT.append((_key, (_in, _w_in), (_col, _w_out)))
        _col += _w_out
    _in += _w_in
PACKED_IN_DIM = _in                                   # 467
EMB_DIM = _col                                        # 560
TIME_IN_OFF = _IN_OFF['time'][0]                      # 84

# Contiguous embedded-column runs between the time / build-order insert points.
SEG1_END   = _EMB_OFF['enemy_upgrades_fc'][0] + _EMB_OFF['enemy_upgrades_fc'][1]   # 192
SEG2_START = _EMB_OFF['available_actions_fc'][0]                                    # 192
SEG2_END   = _EMB_OFF['upgrade_fc'][0] + _EMB_OFF['upgrade_fc'][1]                  # 336
SEG3_START = _EMB_OFF['last_delay_fc'][0]                                           # 336

# Context (fc_2) slices: home+away, available_actions, units_buildings+effects+upgrade.
CTX_A = (_EMB_OFF['home_race_fc'][0],
         _EMB_OFF['away_race_fc'][0] + _EMB_OFF['away_race_fc'][1])
CTX_B = (_EMB_OFF['available_actions_fc'][0],
         _EMB_OFF['available_actions_fc'][0] + _EMB_OFF['available_actions_fc'][1])
CTX_C = (_EMB_OFF['units_buildings_fc'][0],
         _EMB_OFF['upgrade_fc'][0] + _EMB_OFF['upgrade_fc'][1])

FC1_IN_DIM = EMB_DIM + SFS.time + BO_SEQ * D_MODEL
FC2_IN_DIM = (CTX_A[1] - CTX_A[0]) + (CTX_B[1] - CTX_B[0]) + (CTX_C[1] - CTX_C[0]) \
    + BO_SEQ * D_MODEL
AHP.scalar_encoder_fc1_input = FC1_IN_DIM             # 944
AHP.scalar_encoder_fc2_input = FC2_IN_DIM             # 432
assert PACKED_IN_DIM == 467 and EMB_DIM == 560
assert FC1_IN_DIM == 944 and FC2_IN_DIM == 432


# ----------------------------------------------------------------------------
# In-kernel helpers.
# ----------------------------------------------------------------------------
def _mm(a, b, trans_b=False):
    """2-D matmul on the MXU.  Weights are pre-cast to MM_DTYPE outside the kernel;
    activations get a single tiny cast here.  Accumulation is always f32."""
    dn = (((1,), (1,)), ((), ())) if trans_b else (((1,), (0,)), ((), ()))
    return jax.lax.dot_general(a.astype(MM_DTYPE), b.astype(MM_DTYPE), dn,
                               preferred_element_type=jnp.float32)


def _layer_norm(x, g, b, eps=1e-6):
    mean = jnp.mean(x, axis=-1, keepdims=True)
    var = jnp.mean(jnp.square(x - mean), axis=-1, keepdims=True)
    return (x - mean) * jax.lax.rsqrt(var + eps) * g + b


def _rows_to_flat(h, B, S):
    """(B*S, D) -> (B, S*D) using static slices + concat (no general reshape)."""
    out_rows = []
    for b in range(B):
        pieces = [h[b * S + s: b * S + s + 1, :] for s in range(S)]
        out_rows.append(jnp.concatenate(pieces, axis=-1))      # (1, S*D)
    return jnp.concatenate(out_rows, axis=0)                   # (B, S*D)


def _vmem_spec():
    return pl.BlockSpec(memory_space=pltpu.MemorySpace.VMEM)


# ----------------------------------------------------------------------------
# The single fused kernel.
# ----------------------------------------------------------------------------
def _scalar_encoder_kernel(
        packed_ref, bo_ref,
        wpre_ref, bpre_ref,
        wqkv_ref, wo_ref, ln1g_ref, ln1b_ref,
        w1_ref, b1_ref, w2_ref, b2_ref, ln2g_ref, ln2b_ref,
        wblk_ref, bblk_ref, fc1w_ref, fc1b_ref, fc2w_ref, fc2b_ref,
        emb_out_ref, ctx_out_ref,
        *, B, S, n_layers, n_head, d_k, d_v):
    # ---------------- small feature embeddings: ONE block-diagonal matmul ----
    packed = packed_ref[...]                                    # (B, 467) f32
    # log1p only on the agent_statistics columns (mask-select avoids a lane concat).
    col = jax.lax.broadcasted_iota(jnp.int32, packed.shape, 1)
    x_adj = jnp.where(col < N_STATISTICS, jnp.log(packed + 1.0), packed)
    emb = jnp.maximum(_mm(x_adj, wblk_ref[...]) + bblk_ref[...], 0.0)   # (B, 560)
    time_raw = packed[:, TIME_IN_OFF:TIME_IN_OFF + SFS.time]            # (B, 64) raw

    # ---------------- build-order branch: Linear + 3 post-LN encoder layers --
    h = _mm(bo_ref[...], wpre_ref[...]) + bpre_ref[...]        # (B*S, 16)
    q_off, k_off, v_off = 0, n_head * d_k, 2 * n_head * d_k
    for l in range(n_layers):                                   # static unroll
        wqkv, wo = wqkv_ref[l], wo_ref[l]
        g1, be1 = ln1g_ref[l], ln1b_ref[l]
        w1, b1, w2, b2 = w1_ref[l], b1_ref[l], w2_ref[l], b2_ref[l]
        g2, be2 = ln2g_ref[l], ln2b_ref[l]

        residual = h
        qkv = _mm(h, wqkv)                                      # (B*S, 48); 1/sqrt(dk) in Wq
        batch_rows = []
        for b in range(B):                                      # static unroll (B=2)
            r0 = b * S
            heads = []
            for hd in range(n_head):                            # static unroll (2 heads)
                qh = qkv[r0:r0 + S, q_off + hd * d_k: q_off + (hd + 1) * d_k]
                kh = qkv[r0:r0 + S, k_off + hd * d_k: k_off + (hd + 1) * d_k]
                vh = qkv[r0:r0 + S, v_off + hd * d_v: v_off + (hd + 1) * d_v]
                sc = _mm(qh, kh, trans_b=True)                  # (S, S)
                sc = sc - jnp.max(sc, axis=-1, keepdims=True)
                p = jnp.exp(sc)
                p = p / jnp.sum(p, axis=-1, keepdims=True)
                heads.append(_mm(p, vh))                        # (S, d_v)
            batch_rows.append(jnp.concatenate(heads, axis=-1))  # (S, n_head*d_v)
        attn = jnp.concatenate(batch_rows, axis=0)              # (B*S, n_head*d_v)
        h = _layer_norm(_mm(attn, wo) + residual, g1, be1)

        residual = h
        ff = jnp.maximum(_mm(h, w1) + b1, 0.0)
        ff = _mm(ff, w2) + b2
        h = _layer_norm(ff + residual, g2, be2)

    bo_flat = _rows_to_flat(h, B, S)                            # (B, 320)

    # ---------------- fc_1 / fc_2: one matmul each on in-register concats ----
    fc1_in = jnp.concatenate(
        [emb[:, :SEG1_END], time_raw, emb[:, SEG2_START:SEG2_END],
         bo_flat, emb[:, SEG3_START:]], axis=-1)                # (B, 944)
    fc2_in = jnp.concatenate(
        [emb[:, CTX_A[0]:CTX_A[1]], emb[:, CTX_B[0]:CTX_B[1]],
         emb[:, CTX_C[0]:CTX_C[1]], bo_flat], axis=-1)          # (B, 432)

    emb_out_ref[...] = jnp.maximum(_mm(fc1_in, fc1w_ref[...]) + fc1b_ref[...], 0.0)
    ctx_out_ref[...] = jnp.maximum(_mm(fc2_in, fc2w_ref[...]) + fc2b_ref[...], 0.0)


# ----------------------------------------------------------------------------
# Parameter initialization (deterministic, PyTorch-Linear-like uniform init).
# ----------------------------------------------------------------------------
def init_params(key):
    keys = iter(jax.random.split(key, 128))

    def lin(fan_in, fan_out):
        k1, k2 = next(keys), next(keys)
        bound = 1.0 / math.sqrt(fan_in)
        w = jax.random.uniform(k1, (fan_in, fan_out), jnp.float32, -bound, bound)
        b = jax.random.uniform(k2, (1, fan_out), jnp.float32, -bound, bound)
        return w, b

    def lin_nobias(fan_in, fan_out):
        k1 = next(keys)
        bound = 1.0 / math.sqrt(fan_in)
        return jax.random.uniform(k1, (fan_in, fan_out), jnp.float32, -bound, bound)

    params = {
        'statistics_fc': lin(N_STATISTICS, AHP.original_64),
        'home_race_fc': lin(5, AHP.original_32),
        'away_race_fc': lin(5, AHP.original_32),
        'upgrades_fc': lin(SFS.upgrades, AHP.original_128),
        'enemy_upgrades_fc': lin(SFS.upgrades, AHP.original_128),
        'available_actions_fc': lin(SFS.available_actions, AHP.original_64),
        'unit_counts_bow_fc': lin(SFS.unit_counts_bow, AHP.original_64),
        'mmr_fc': lin(SFS.mmr, AHP.original_64),
        'units_buildings_fc': lin(SFS.units_buildings, AHP.original_32),
        'effects_fc': lin(SFS.effects, AHP.original_32),
        'upgrade_fc': lin(SFS.upgrade, AHP.original_32),
        'before_beginning_build_order': lin(SFS.unit_counts_bow, D_MODEL),
        'last_delay_fc': lin(SFS.last_delay, AHP.original_64),
        'last_action_type_fc': lin(SFS.last_action_type, AHP.original_128),
        'last_repeat_queued_fc': lin(SFS.last_repeat_queued, AHP.original_256),
        'fc_1': lin(FC1_IN_DIM, AHP.original_512),
        'fc_2': lin(FC2_IN_DIM, AHP.original_512),
    }

    layers = []
    for _ in range(N_LAYERS):
        w1, b1 = lin(D_MODEL, D_INNER)
        w2, b2 = lin(D_INNER, D_MODEL)
        layers.append({
            'wq': lin_nobias(D_MODEL, N_HEAD * D_K),
            'wk': lin_nobias(D_MODEL, N_HEAD * D_K),
            'wv': lin_nobias(D_MODEL, N_HEAD * D_V),
            'wo': lin_nobias(N_HEAD * D_V, D_MODEL),
            'ln1_g': jnp.ones((1, D_MODEL), jnp.float32),
            'ln1_b': jnp.zeros((1, D_MODEL), jnp.float32),
            'w1': w1, 'b1': b1, 'w2': w2, 'b2': b2,
            'ln2_g': jnp.ones((1, D_MODEL), jnp.float32),
            'ln2_b': jnp.zeros((1, D_MODEL), jnp.float32),
        })
    params['transformer_layers'] = layers
    return params


# ----------------------------------------------------------------------------
# One-time parameter packing: block-diagonal small-linear weight, per-layer
# weight stacks, Q/K/V fusion (+ folded softmax scale), bf16 pre-cast.
# ----------------------------------------------------------------------------
def pack_params(params):
    cast = (lambda w: w.astype(jnp.bfloat16)) if USE_BF16_MATMUL else (lambda w: w)

    wblk = jnp.zeros((PACKED_IN_DIM, EMB_DIM), jnp.float32)
    bblk = jnp.zeros((1, EMB_DIM), jnp.float32)
    for key, (r0, rw), (c0, cw) in _BLK_PLACEMENT:
        w, b = params[key]
        wblk = wblk.at[r0:r0 + rw, c0:c0 + cw].set(w)
        bblk = bblk.at[:, c0:c0 + cw].set(b)

    w_pre, b_pre = params['before_beginning_build_order']
    scale = 1.0 / math.sqrt(D_K)
    st = {k: [] for k in ('wqkv', 'wo', 'g1', 'be1', 'w1', 'b1', 'w2', 'b2', 'g2', 'be2')}
    for lp in params['transformer_layers']:
        st['wqkv'].append(jnp.concatenate([lp['wq'] * scale, lp['wk'], lp['wv']], axis=1))
        st['wo'].append(lp['wo'])
        st['g1'].append(lp['ln1_g']); st['be1'].append(lp['ln1_b'])
        st['w1'].append(lp['w1']);    st['b1'].append(lp['b1'])
        st['w2'].append(lp['w2']);    st['b2'].append(lp['b2'])
        st['g2'].append(lp['ln2_g']); st['be2'].append(lp['ln2_b'])
    st = {k: jnp.stack(v, axis=0) for k, v in st.items()}

    fc1_w, fc1_b = params['fc_1']
    fc2_w, fc2_b = params['fc_2']

    return [
        cast(w_pre), b_pre,
        cast(st['wqkv']), cast(st['wo']), st['g1'], st['be1'],
        cast(st['w1']), st['b1'], cast(st['w2']), st['b2'], st['g2'], st['be2'],
        cast(wblk), bblk, cast(fc1_w), fc1_b, cast(fc2_w), fc2_b,
    ]


# ----------------------------------------------------------------------------
# ScalarEncoder.forward — exactly ONE pallas_call.
# ----------------------------------------------------------------------------
def scalar_encoder_forward(packed_params, scalar_list):
    B = scalar_list[0].shape[0]
    flat = [scalar_list[i].astype(jnp.float32) for i in range(16) if i != 12]
    packed = jnp.concatenate(flat, axis=-1)                          # (B, 467)
    assert packed.shape == (B, PACKED_IN_DIM)
    bo2d = scalar_list[12].astype(jnp.float32).reshape(B * BO_SEQ, BO_FEAT)  # (B*S, 48)

    args = [packed, bo2d] + list(packed_params)
    kernel = functools.partial(_scalar_encoder_kernel, B=B, S=BO_SEQ,
                               n_layers=N_LAYERS, n_head=N_HEAD, d_k=D_K, d_v=D_V)
    return pl.pallas_call(
        kernel,
        out_shape=(jax.ShapeDtypeStruct((B, AHP.original_512), jnp.float32),
                   jax.ShapeDtypeStruct((B, AHP.original_512), jnp.float32)),
        in_specs=[_vmem_spec() for _ in args],
        out_specs=(_vmem_spec(), _vmem_spec()),
    )(*args)


# ----------------------------------------------------------------------------
if __name__ == "__main__":
    key = jax.random.PRNGKey(0)
    k_param, k_in = jax.random.split(key)
    params = init_params(k_param)
    packed_params = pack_params(params)

    B = 2
    ks = iter(jax.random.split(k_in, 32))
    f32 = jnp.float32
    scalar_list = [
        jax.random.uniform(next(ks), (B, N_STATISTICS), f32, 0.0, 100.0),             # agent_statistics
        (jax.random.uniform(next(ks), (B, 5)) > 0.5).astype(f32),                     # home_race
        (jax.random.uniform(next(ks), (B, 5)) > 0.5).astype(f32),                     # away_race
        (jax.random.uniform(next(ks), (B, SFS.upgrades)) > 0.5).astype(f32),          # upgrades
        (jax.random.uniform(next(ks), (B, SFS.upgrades)) > 0.5).astype(f32),          # enemy_upgrades
        (jax.random.uniform(next(ks), (B, SFS.time)) > 0.5).astype(f32),              # time
        (jax.random.uniform(next(ks), (B, SFS.available_actions)) > 0.5).astype(f32), # available_actions
        jax.random.uniform(next(ks), (B, SFS.unit_counts_bow), f32, 0.0, 5.0),        # unit_counts_bow
        jax.random.uniform(next(ks), (B, SFS.mmr), f32, 0.0, 1.0),                    # mmr
        (jax.random.uniform(next(ks), (B, SFS.units_buildings)) > 0.5).astype(f32),   # units_buildings
        (jax.random.uniform(next(ks), (B, SFS.effects)) > 0.5).astype(f32),           # effects
        (jax.random.uniform(next(ks), (B, SFS.upgrade)) > 0.5).astype(f32),           # upgrade
        (jax.random.uniform(next(ks), (B, BO_SEQ, BO_FEAT)) > 0.9).astype(f32),       # beginning_build_order
        (jax.random.uniform(next(ks), (B, SFS.last_delay)) > 0.5).astype(f32),        # last_delay
        (jax.random.uniform(next(ks), (B, SFS.last_action_type)) > 0.5).astype(f32),  # last_action_type
        (jax.random.uniform(next(ks), (B, SFS.last_repeat_queued)) > 0.5).astype(f32),# last_repeat_queued
    ]

    embedded_scalar_out, scalar_context_out = scalar_encoder_forward(packed_params, scalar_list)
    jax.block_until_ready((embedded_scalar_out, scalar_context_out))

    assert embedded_scalar_out.shape == (B, AHP.original_512)
    assert scalar_context_out.shape == (B, AHP.original_512)
    assert jnp.all(jnp.isfinite(embedded_scalar_out))
    assert jnp.all(jnp.isfinite(scalar_context_out))
    print("KERNEL_OK")
</pallas_src>

<mosaic_0001>
module attributes {stable_mosaic.version = 11 : i64} {
  func.func @_scalar_encoder_kernel(%arg0: memref<2x467xf32, #tpu.memory_space<vmem>>, %arg1: memref<40x48xf32, #tpu.memory_space<vmem>>, %arg2: memref<48x16xbf16, #tpu.memory_space<vmem>>, %arg3: memref<1x16xf32, #tpu.memory_space<vmem>>, %arg4: memref<3x16x48xbf16, #tpu.memory_space<vmem>>, %arg5: memref<3x16x16xbf16, #tpu.memory_space<vmem>>, %arg6: memref<3x1x16xf32, #tpu.memory_space<vmem>>, %arg7: memref<3x1x16xf32, #tpu.memory_space<vmem>>, %arg8: memref<3x16x32xbf16, #tpu.memory_space<vmem>>, %arg9: memref<3x1x32xf32, #tpu.memory_space<vmem>>, %arg10: memref<3x32x16xbf16, #tpu.memory_space<vmem>>, %arg11: memref<3x1x16xf32, #tpu.memory_space<vmem>>, %arg12: memref<3x1x16xf32, #tpu.memory_space<vmem>>, %arg13: memref<3x1x16xf32, #tpu.memory_space<vmem>>, %arg14: memref<467x560xbf16, #tpu.memory_space<vmem>>, %arg15: memref<1x560xf32, #tpu.memory_space<vmem>>, %arg16: memref<944x256xbf16, #tpu.memory_space<vmem>>, %arg17: memref<1x256xf32, #tpu.memory_space<vmem>>, %arg18: memref<432x256xbf16, #tpu.memory_space<vmem>>, %arg19: memref<1x256xf32, #tpu.memory_space<vmem>>, %arg20: memref<2x256xf32, #tpu.memory_space<vmem>>, %arg21: memref<2x256xf32, #tpu.memory_space<vmem>>) attributes {dimension_semantics = [], scalar_prefetch = 0 : i64, scratch_operands = 0 : i64, tpu.core_type = #tpu.core_type<tc>} {
    %c0 = arith.constant 0 : index
    %c0_0 = arith.constant 0 : index
    %0 = vector.load %arg0[%c0, %c0_0] : memref<2x467xf32, #tpu.memory_space<vmem>>, vector<2x467xf32>
    %1 = tpu.iota {dimensions = array<i32: 1>} : vector<2x467xi32>
    %c10_i32 = arith.constant 10 : i32
    %2 = vector.broadcast %c10_i32 : i32 to vector<2x467xi32>
    %3 = arith.cmpi slt, %1, %2 : vector<2x467xi32>
    %cst = arith.constant 1.000000e+00 : f32
    %4 = vector.broadcast %cst : f32 to vector<2x467xf32>
    %5 = arith.addf %0, %4 : vector<2x467xf32>
    %6 = math.log %5 : vector<2x467xf32>
    %7 = arith.select %3, %6, %0 : vector<2x467xi1>, vector<2x467xf32>
    %c0_1 = arith.constant 0 : index
    %c0_2 = arith.constant 0 : index
    %8 = vector.load %arg14[%c0_1, %c0_2] : memref<467x560xbf16, #tpu.memory_space<vmem>>, vector<467x560xbf16>
    %9 = arith.truncf %7 : vector<2x467xf32> to vector<2x467xbf16>
    %cst_3 = arith.constant dense<0.000000e+00> : vector<2x560xf32>
    %10 = tpu.matmul %9, %8, %cst_3 {dimension_numbers = #tpu.dot_dimension_numbers<[1], [0], [0], [1], [0, 0, 1, 1], [], []>} : vector<2x467xbf16>, vector<467x560xbf16>, vector<2x560xf32> -> vector<2x560xf32>
    %c0_4 = arith.constant 0 : index
    %c0_5 = arith.constant 0 : index
    %11 = vector.load %arg15[%c0_4, %c0_5] : memref<1x560xf32, #tpu.memory_space<vmem>>, vector<1x560xf32>
    %12 = vector.broadcast %11 : vector<1x560xf32> to vector<2x560xf32>
    %13 = arith.addf %10, %12 : vector<2x560xf32>
    %cst_6 = arith.constant 0.000000e+00 : f32
    %14 = vector.broadcast %cst_6 : f32 to vector<2x560xf32>
    %15 = arith.maximumf %13, %14 : vector<2x560xf32>
    %16 = vector.extract_strided_slice %0 {offsets = [0, 84], sizes = [2, 64], strides = [1, 1]} : vector<2x467xf32> to vector<2x64xf32>
    %c0_7 = arith.constant 0 : index
    %c0_8 = arith.constant 0 : index
    %17 = vector.load %arg1[%c0_7, %c0_8] : memref<40x48xf32, #tpu.memory_space<vmem>>, vector<40x48xf32>
    %c0_9 = arith.constant 0 : index
    %c0_10 = arith.constant 0 : index
    %18 = vector.load %arg2[%c0_9, %c0_10] : memref<48x16xbf16, #tpu.memory_space<vmem>>, vector<48x16xbf16>
    %19 = arith.truncf %17 : vector<40x48xf32> to vector<40x48xbf16>
    %cst_11 = arith.constant dense<0.000000e+00> : vector<40x16xf32>
    %20 = tpu.matmul %19, %18, %cst_11 {dimension_numbers = #tpu.dot_dimension_numbers<[1], [0], [0], [1], [0, 0, 1, 1], [], []>} : vector<40x48xbf16>, vector<48x16xbf16>, vector<40x16xf32> -> vector<40x16xf32>
    %c0_12 = arith.constant 0 : index
    %c0_13 = arith.constant 0 : index
    %21 = vector.load %arg3[%c0_12, %c0_13] : memref<1x16xf32, #tpu.memory_space<vmem>>, vector<1x16xf32>
    %22 = vector.broadcast %21 : vector<1x16xf32> to vector<40x16xf32>
    %23 = arith.addf %20, %22 : vector<40x16xf32>
    %c0_14 = arith.constant 0 : index
    %c0_15 = arith.constant 0 : index
    %c0_16 = arith.constant 0 : index
    %24 = vector.load %arg4[%c0_14, %c0_15, %c0_16] : memref<3x16x48xbf16, #tpu.memory_space<vmem>>, vector<1x16x48xbf16>
    %25 = vector.shape_cast %24 : vector<1x16x48xbf16> to vector<16x48xbf16>
    %c0_17 = arith.constant 0 : index
    %c0_18 = arith.constant 0 : index
    %c0_19 = arith.constant 0 : index
    %26 = vector.load %arg5[%c0_17, %c0_18, %c0_19] : memref<3x16x16xbf16, #tpu.memory_space<vmem>>, vector<1x16x16xbf16>
    %27 = vector.shape_cast %26 : vector<1x16x16xbf16> to vector<16x16xbf16>
    %c0_20 = arith.constant 0 : index
    %c0_21 = arith.constant 0 : index
    %c0_22 = arith.constant 0 : index
    %28 = vector.load %arg6[%c0_20, %c0_21, %c0_22] : memref<3x1x16xf32, #tpu.memory_space<vmem>>, vector<1x1x16xf32>
    %29 = vector.shape_cast %28 : vector<1x1x16xf32> to vector<1x16xf32>
    %c0_23 = arith.constant 0 : index
    %c0_24 = arith.constant 0 : index
    %c0_25 = arith.constant 0 : index
    %30 = vector.load %arg7[%c0_23, %c0_24, %c0_25] : memref<3x1x16xf32, #tpu.memory_space<vmem>>, vector<1x1x16xf32>
    %31 = vector.shape_cast %30 : vector<1x1x16xf32> to vector<1x16xf32>
    %c0_26 = arith.constant 0 : index
    %c0_27 = arith.constant 0 : index
    %c0_28 = arith.constant 0 : index
    %32 = vector.load %arg8[%c0_26, %c0_27, %c0_28] : memref<3x16x32xbf16, #tpu.memory_space<vmem>>, vector<1x16x32xbf16>
    %33 = vector.shape_cast %32 : vector<1x16x32xbf16> to vector<16x32xbf16>
    %c0_29 = arith.constant 0 : index
    %c0_30 = arith.constant 0 : index
    %c0_31 = arith.constant 0 : index
    %34 = vector.load %arg9[%c0_29, %c0_30, %c0_31] : memref<3x1x32xf32, #tpu.memory_space<vmem>>, vector<1x1x32xf32>
    %35 = vector.shape_cast %34 : vector<1x1x32xf32> to vector<1x32xf32>
    %c0_32 = arith.constant 0 : index
    %c0_33 = arith.constant 0 : index
    %c0_34 = arith.constant 0 : index
    %36 = vector.load %arg10[%c0_32, %c0_33, %c0_34] : memref<3x32x16xbf16, #tpu.memory_space<vmem>>, vector<1x32x16xbf16>
    %37 = vector.shape_cast %36 : vector<1x32x16xbf16> to vector<32x16xbf16>
    %c0_35 = arith.constant 0 : index
    %c0_36 = arith.constant 0 : index
    %c0_37 = arith.constant 0 : index
    %38 = vector.load %arg11[%c0_35, %c0_36, %c0_37] : memref<3x1x16xf32, #tpu.memory_space<vmem>>, vector<1x1x16xf32>
    %39 = vector.shape_cast %38 : vector<1x1x16xf32> to vector<1x16xf32>
    %c0_38 = arith.constant 0 : index
    %c0_39 = arith.constant 0 : index
    %c0_40 = arith.constant 0 : index
    %40 = vector.load %arg12[%c0_38, %c0_39, %c0_40] : memref<3x1x16xf32, #tpu.memory_space<vmem>>, vector<1x1x16xf32>
    %41 = vector.shape_cast %40 : vector<1x1x16xf32> to vector<1x16xf32>
    %c0_41 = arith.constant 0 : index
    %c0_42 = arith.constant 0 : index
    %c0_43 = arith.constant 0 : index
    %42 = vector.load %arg13[%c0_41, %c0_42, %c0_43] : memref<3x1x16xf32, #tpu.memory_space<vmem>>, vector<1x1x16xf32>
    %43 = vector.shape_cast %42 : vector<1x1x16xf32> to vector<1x16xf32>
    %44 = arith.truncf %23 : vector<40x16xf32> to vector<40x16xbf16>
    %cst_44 = arith.constant dense<0.000000e+00> : vector<40x48xf32>
    %45 = tpu.matmul %44, %25, %cst_44 {dimension_numbers = #tpu.dot_dimension_numbers<[1], [0], [0], [1], [0, 0, 1, 1], [], []>} : vector<40x16xbf16>, vector<16x48xbf16>, vector<40x48xf32> -> vector<40x48xf32>
    %46 = vector.extract_strided_slice %45 {offsets = [0, 0], sizes = [20, 8], strides = [1, 1]} : vector<40x48xf32> to vector<20x8xf32>
    %47 = vector.extract_strided_slice %45 {offsets = [0, 16], sizes = [20, 8], strides = [1, 1]} : vector<40x48xf32> to vector<20x8xf32>
    %48 = vector.extract_strided_slice %45 {offsets = [0, 32], sizes = [20, 8], strides = [1, 1]} : vector<40x48xf32> to vector<20x8xf32>
    %49 = arith.truncf %46 : vector<20x8xf32> to vector<20x8xbf16>
    %50 = arith.truncf %47 : vector<20x8xf32> to vector<20x8xbf16>
    %cst_45 = arith.constant dense<0.000000e+00> : vector<20x20xf32>
    %51 = tpu.matmul %49, %50, %cst_45 {dimension_numbers = #tpu.dot_dimension_numbers<[1], [1], [0], [0], [0, 0, 1, 0], [], []>} : vector<20x8xbf16>, vector<20x8xbf16>, vector<20x20xf32> -> vector<20x20xf32>
    %cst_46 = arith.constant dense<0xFF800000> : vector<20xf32>
    %52 = vector.multi_reduction <maximumf>, %51, %cst_46 [1] : vector<20x20xf32> to vector<20xf32>
    %53 = vector.shape_cast %52 : vector<20xf32> to vector<20x1xf32>
    %54 = vector.broadcast %53 : vector<20x1xf32> to vector<20x20xf32>
    %55 = arith.subf %51, %54 : vector<20x20xf32>
    %56 = math.exp %55 : vector<20x20xf32>
    %cst_47 = arith.constant dense<0.000000e+00> : vector<20xf32>
    %57 = vector.multi_reduction <add>, %56, %cst_47 [1] : vector<20x20xf32> to vector<20xf32>
    %58 = vector.shape_cast %57 : vector<20xf32> to vector<20x1xf32>
    %59 = vector.broadcast %58 : vector<20x1xf32> to vector<20x20xf32>
    %60 = arith.divf %56, %59 : vector<20x20xf32>
    %61 = arith.truncf %60 : vector<20x20xf32> to vector<20x20xbf16>
    %62 = arith.truncf %48 : vector<20x8xf32> to vector<20x8xbf16>
    %cst_48 = arith.constant dense<0.000000e+00> : vector<20x8xf32>
    %63 = tpu.matmul %61, %62, %cst_48 {dimension_numbers = #tpu.dot_dimension_numbers<[1], [0], [0], [1], [0, 0, 1, 1], [], []>} : vector<20x20xbf16>, vector<20x8xbf16>, vector<20x8xf32> -> vector<20x8xf32>
    %64 = vector.extract_strided_slice %45 {offsets = [0, 8], sizes = [20, 8], strides = [1, 1]} : vector<40x48xf32> to vector<20x8xf32>
    %65 = vector.extract_strided_slice %45 {offsets = [0, 24], sizes = [20, 8], strides = [1, 1]} : vector<40x48xf32> to vector<20x8xf32>
    %66 = vector.extract_strided_slice %45 {offsets = [0, 40], sizes = [20, 8], strides = [1, 1]} : vector<40x48xf32> to vector<20x8xf32>
    %67 = arith.truncf %64 : vector<20x8xf32> to vector<20x8xbf16>
    %68 = arith.truncf %65 : vector<20x8xf32> to vector<20x8xbf16>
    %cst_49 = arith.constant dense<0.000000e+00> : vector<20x20xf32>
    %69 = tpu.matmul %67, %68, %cst_49 {dimension_numbers = #tpu.dot_dimension_numbers<[1], [1], [0], [0], [0, 0, 1, 0], [], []>} : vector<20x8xbf16>, vector<20x8xbf16>, vector<20x20xf32> -> vector<20x20xf32>
    %cst_50 = arith.constant dense<0xFF800000> : vector<20xf32>
    %70 = vector.multi_reduction <maximumf>, %69, %cst_50 [1] : vector<20x20xf32> to vector<20xf32>
    %71 = vector.shape_cast %70 : vector<20xf32> to vector<20x1xf32>
    %72 = vector.broadcast %71 : vector<20x1xf32> to vector<20x20xf32>
    %73 = arith.subf %69, %72 : vector<20x20xf32>
    %74 = math.exp %73 : vector<20x20xf32>
    %cst_51 = arith.constant dense<0.000000e+00> : vector<20xf32>
    %75 = vector.multi_reduction <add>, %74, %cst_51 [1] : vector<20x20xf32> to vector<20xf32>
    %76 = vector.shape_cast %75 : vector<20xf32> to vector<20x1xf32>
    %77 = vector.broadcast %76 : vector<20x1xf32> to vector<20x20xf32>
    %78 = arith.divf %74, %77 : vector<20x20xf32>
    %79 = arith.truncf %78 : vector<20x20xf32> to vector<20x20xbf16>
    %80 = arith.truncf %66 : vector<20x8xf32> to vector<20x8xbf16>
    %cst_52 = arith.constant dense<0.000000e+00> : vector<20x8xf32>
    %81 = tpu.matmul %79, %80, %cst_52 {dimension_numbers = #tpu.dot_dimension_numbers<[1], [0], [0], [1], [0, 0, 1, 1], [], []>} : vector<20x20xbf16>, vector<20x8xbf16>, vector<20x8xf32> -> vector<20x8xf32>
    %82 = tpu.concatenate %63, %81 in 1 : vector<20x8xf32>, vector<20x8xf32> -> vector<20x16xf32>
    %83 = vector.extract_strided_slice %45 {offsets = [20, 0], sizes = [20, 8], strides = [1, 1]} : vector<40x48xf32> to vector<20x8xf32>
    %84 = vector.extract_strided_slice %45 {offsets = [20, 16], sizes = [20, 8], strides = [1, 1]} : vector<40x48xf32> to vector<20x8xf32>
    %85 = vector.extract_strided_slice %45 {offsets = [20, 32], sizes = [20, 8], strides = [1, 1]} : vector<40x48xf32> to vector<20x8xf32>
    %86 = arith.truncf %83 : vector<20x8xf32> to vector<20x8xbf16>
    %87 = arith.truncf %84 : vector<20x8xf32> to vector<20x8xbf16>
    %cst_53 = arith.constant dense<0.000000e+00> : vector<20x20xf32>
    %88 = tpu.matmul %86, %87, %cst_53 {dimension_numbers = #tpu.dot_dimension_numbers<[1], [1], [0], [0], [0, 0, 1, 0], [], []>} : vector<20x8xbf16>, vector<20x8xbf16>, vector<20x20xf32> -> vector<20x20xf32>
    %cst_54 = arith.constant dense<0xFF800000> : vector<20xf32>
    %89 = vector.multi_reduction <maximumf>, %88, %cst_54 [1] : vector<20x20xf32> to vector<20xf32>
    %90 = vector.shape_cast %89 : vector<20xf32> to vector<20x1xf32>
    %91 = vector.broadcast %90 : vector<20x1xf32> to vector<20x20xf32>
    %92 = arith.subf %88, %91 : vector<20x20xf32>
    %93 = math.exp %92 : vector<20x20xf32>
    %cst_55 = arith.constant dense<0.000000e+00> : vector<20xf32>
    %94 = vector.multi_reduction <add>, %93, %cst_55 [1] : vector<20x20xf32> to vector<20xf32>
    %95 = vector.shape_cast %94 : vector<20xf32> to vector<20x1xf32>
    %96 = vector.broadcast %95 : vector<20x1xf32> to vector<20x20xf32>
    %97 = arith.divf %93, %96 : vector<20x20xf32>
    %98 = arith.truncf %97 : vector<20x20xf32> to vector<20x20xbf16>
    %99 = arith.truncf %85 : vector<20x8xf32> to vector<20x8xbf16>
    %cst_56 = arith.constant dense<0.000000e+00> : vector<20x8xf32>
    %100 = tpu.matmul %98, %99, %cst_56 {dimension_numbers = #tpu.dot_dimension_numbers<[1], [0], [0], [1], [0, 0, 1, 1], [], []>} : vector<20x20xbf16>, vector<20x8xbf16>, vector<20x8xf32> -> vector<20x8xf32>
    %101 = vector.extract_strided_slice %45 {offsets = [20, 8], sizes = [20, 8], strides = [1, 1]} : vector<40x48xf32> to vector<20x8xf32>
    %102 = vector.extract_strided_slice %45 {offsets = [20, 24], sizes = [20, 8], strides = [1, 1]} : vector<40x48xf32> to vector<20x8xf32>
    %103 = vector.extract_strided_slice %45 {offsets = [20, 40], sizes = [20, 8], strides = [1, 1]} : vector<40x48xf32> to vector<20x8xf32>
    %104 = arith.truncf %101 : vector<20x8xf32> to vector<20x8xbf16>
    %105 = arith.truncf %102 : vector<20x8xf32> to vector<20x8xbf16>
    %cst_57 = arith.constant dense<0.000000e+00> : vector<20x20xf32>
    %106 = tpu.matmul %104, %105, %cst_57 {dimension_numbers = #tpu.dot_dimension_numbers<[1], [1], [0], [0], [0, 0, 1, 0], [], []>} : vector<20x8xbf16>, vector<20x8xbf16>, vector<20x20xf32> -> vector<20x20xf32>
    %cst_58 = arith.constant dense<0xFF800000> : vector<20xf32>
    %107 = vector.multi_reduction <maximumf>, %106, %cst_58 [1] : vector<20x20xf32> to vector<20xf32>
    %108 = vector.shape_cast %107 : vector<20xf32> to vector<20x1xf32>
    %109 = vector.broadcast %108 : vector<20x1xf32> to vector<20x20xf32>
    %110 = arith.subf %106, %109 : vector<20x20xf32>
    %111 = math.exp %110 : vector<20x20xf32>
    %cst_59 = arith.constant dense<0.000000e+00> : vector<20xf32>
    %112 = vector.multi_reduction <add>, %111, %cst_59 [1] : vector<20x20xf32> to vector<20xf32>
    %113 = vector.shape_cast %112 : vector<20xf32> to vector<20x1xf32>
    %114 = vector.broadcast %113 : vector<20x1xf32> to vector<20x20xf32>
    %115 = arith.divf %111, %114 : vector<20x20xf32>
    %116 = arith.truncf %115 : vector<20x20xf32> to vector<20x20xbf16>
    %117 = arith.truncf %103 : vector<20x8xf32> to vector<20x8xbf16>
    %cst_60 = arith.constant dense<0.000000e+00> : vector<20x8xf32>
    %118 = tpu.matmul %116, %117, %cst_60 {dimension_numbers = #tpu.dot_dimension_numbers<[1], [0], [0], [1], [0, 0, 1, 1], [], []>} : vector<20x20xbf16>, vector<20x8xbf16>, vector<20x8xf32> -> vector<20x8xf32>
    %119 = tpu.concatenate %100, %118 in 1 : vector<20x8xf32>, vector<20x8xf32> -> vector<20x16xf32>
    %120 = tpu.concatenate %82, %119 in 0 : vector<20x16xf32>, vector<20x16xf32> -> vector<40x16xf32>
    %121 = arith.truncf %120 : vector<40x16xf32> to vector<40x16xbf16>
    %cst_61 = arith.constant dense<0.000000e+00> : vector<40x16xf32>
    %122 = tpu.matmul %121, %27, %cst_61 {dimension_numbers = #tpu.dot_dimension_numbers<[1], [0], [0], [1], [0, 0, 1, 1], [], []>} : vector<40x16xbf16>, vector<16x16xbf16>, vector<40x16xf32> -> vector<40x16xf32>
    %123 = arith.addf %122, %23 : vector<40x16xf32>
    %cst_62 = arith.constant dense<0.000000e+00> : vector<40xf32>
    %124 = vector.multi_reduction <add>, %123, %cst_62 [1] : vector<40x16xf32> to vector<40xf32>
    %125 = vector.shape_cast %124 : vector<40xf32> to vector<40x1xf32>
    %cst_63 = arith.constant 1.600000e+01 : f32
    %126 = vector.broadcast %cst_63 : f32 to vector<40x1xf32>
    %127 = arith.divf %125, %126 : vector<40x1xf32>
    %128 = vector.broadcast %127 : vector<40x1xf32> to vector<40x16xf32>
    %129 = arith.subf %123, %128 : vector<40x16xf32>
    %130 = arith.mulf %129, %129 : vector<40x16xf32>
    %cst_64 = arith.constant dense<0.000000e+00> : vector<40xf32>
    %131 = vector.multi_reduction <add>, %130, %cst_64 [1] : vector<40x16xf32> to vector<40xf32>
    %132 = vector.shape_cast %131 : vector<40xf32> to vector<40x1xf32>
    %cst_65 = arith.constant 1.600000e+01 : f32
    %133 = vector.broadcast %cst_65 : f32 to vector<40x1xf32>
    %134 = arith.divf %132, %133 : vector<40x1xf32>
    %135 = vector.broadcast %127 : vector<40x1xf32> to vector<40x16xf32>
    %136 = arith.subf %123, %135 : vector<40x16xf32>
    %cst_66 = arith.constant 9.99999997E-7 : f32
    %137 = vector.broadcast %cst_66 : f32 to vector<40x1xf32>
    %138 = arith.addf %134, %137 : vector<40x1xf32>
    %139 = math.rsqrt %138 : vector<40x1xf32>
    %140 = vector.broadcast %139 : vector<40x1xf32> to vector<40x16xf32>
    %141 = arith.mulf %136, %140 : vector<40x16xf32>
    %142 = vector.broadcast %29 : vector<1x16xf32> to vector<40x16xf32>
    %143 = arith.mulf %141, %142 : vector<40x16xf32>
    %144 = vector.broadcast %31 : vector<1x16xf32> to vector<40x16xf32>
    %145 = arith.addf %143, %144 : vector<40x16xf32>
    %146 = arith.truncf %145 : vector<40x16xf32> to vector<40x16xbf16>
    %cst_67 = arith.constant dense<0.000000e+00> : vector<40x32xf32>
    %147 = tpu.matmul %146, %33, %cst_67 {dimension_numbers = #tpu.dot_dimension_numbers<[1], [0], [0], [1], [0, 0, 1, 1], [], []>} : vector<40x16xbf16>, vector<16x32xbf16>, vector<40x32xf32> -> vector<40x32xf32>
    %148 = vector.broadcast %35 : vector<1x32xf32> to vector<40x32xf32>
    %149 = arith.addf %147, %148 : vector<40x32xf32>
    %cst_68 = arith.constant 0.000000e+00 : f32
    %150 = vector.broadcast %cst_68 : f32 to vector<40x32xf32>
    %151 = arith.maximumf %149, %150 : vector<40x32xf32>
    %152 = arith.truncf %151 : vector<40x32xf32> to vector<40x32xbf16>
    %cst_69 = arith.constant dense<0.000000e+00> : vector<40x16xf32>
    %153 = tpu.matmul %152, %37, %cst_69 {dimension_numbers = #tpu.dot_dimension_numbers<[1], [0], [0], [1], [0, 0, 1, 1], [], []>} : vector<40x32xbf16>, vector<32x16xbf16>, vector<40x16xf32> -> vector<40x16xf32>
    %154 = vector.broadcast %39 : vector<1x16xf32> to vector<40x16xf32>
    %155 = arith.addf %153, %154 : vector<40x16xf32>
    %156 = arith.addf %155, %145 : vector<40x16xf32>
    %cst_70 = arith.constant dense<0.000000e+00> : vector<40xf32>
    %157 = vector.multi_reduction <add>, %156, %cst_70 [1] : vector<40x16xf32> to vector<40xf32>
    %158 = vector.shape_cast %157 : vector<40xf32> to vector<40x1xf32>
    %cst_71 = arith.constant 1.600000e+01 : f32
    %159 = vector.broadcast %cst_71 : f32 to vector<40x1xf32>
    %160 = arith.divf %158, %159 : vector<40x1xf32>
    %161 = vector.broadcast %160 : vector<40x1xf32> to vector<40x16xf32>
    %162 = arith.subf %156, %161 : vector<40x16xf32>
    %163 = arith.mulf %162, %162 : vector<40x16xf32>
    %cst_72 = arith.constant dense<0.000000e+00> : vector<40xf32>
    %164 = vector.multi_reduction <add>, %163, %cst_72 [1] : vector<40x16xf32> to vector<40xf32>
    %165 = vector.shape_cast %164 : vector<40xf32> to vector<40x1xf32>
    %cst_73 = arith.constant 1.600000e+01 : f32
    %166 = vector.broadcast %cst_73 : f32 to vector<40x1xf32>
    %167 = arith.divf %165, %166 : vector<40x1xf32>
    %168 = vector.broadcast %160 : vector<40x1xf32> to vector<40x16xf32>
    %169 = arith.subf %156, %168 : vector<40x16xf32>
    %cst_74 = arith.constant 9.99999997E-7 : f32
    %170 = vector.broadcast %cst_74 : f32 to vector<40x1xf32>
    %171 = arith.addf %167, %170 : vector<40x1xf32>
    %172 = math.rsqrt %171 : vector<40x1xf32>
    %173 = vector.broadcast %172 : vector<40x1xf32> to vector<40x16xf32>
    %174 = arith.mulf %169, %173 : vector<40x16xf32>
    %175 = vector.broadcast %41 : vector<1x16xf32> to vector<40x16xf32>
    %176 = arith.mulf %174, %175 : vector<40x16xf32>
    %177 = vector.broadcast %43 : vector<1x16xf32> to vector<40x16xf32>
    %178 = arith.addf %176, %177 : vector<40x16xf32>
    %c1 = arith.constant 1 : index
    %c0_75 = arith.constant 0 : index
    %c0_76 = arith.constant 0 : index
    %179 = vector.load %arg4[%c1, %c0_75, %c0_76] : memref<3x16x48xbf16, #tpu.memory_space<vmem>>, vector<1x16x48xbf16>
    %180 = vector.shape_cast %179 : vector<1x16x48xbf16> to vector<16x48xbf16>
    %c1_77 = arith.constant 1 : index
    %c0_78 = arith.constant 0 : index
    %c0_79 = arith.constant 0 : index
    %181 = vector.load %arg5[%c1_77, %c0_78, %c0_79] : memref<3x16x16xbf16, #tpu.memory_space<vmem>>, vector<1x16x16xbf16>
    %182 = vector.shape_cast %181 : vector<1x16x16xbf16> to vector<16x16xbf16>
    %c1_80 = arith.constant 1 : index
    %c0_81 = arith.constant 0 : index
    %c0_82 = arith.constant 0 : index
    %183 = vector.load %arg6[%c1_80, %c0_81, %c0_82] : memref<3x1x16xf32, #tpu.memory_space<vmem>>, vector<1x1x16xf32>
    %184 = vector.shape_cast %183 : vector<1x1x16xf32> to vector<1x16xf32>
    %c1_83 = arith.constant 1 : index
    %c0_84 = arith.constant 0 : index
    %c0_85 = arith.constant 0 : index
    %185 = vector.load %arg7[%c1_83, %c0_84, %c0_85] : memref<3x1x16xf32, #tpu.memory_space<vmem>>, vector<1x1x16xf32>
    %186 = vector.shape_cast %185 : vector<1x1x16xf32> to vector<1x16xf32>
    %c1_86 = arith.constant 1 : index
    %c0_87 = arith.constant 0 : index
    %c0_88 = arith.constant 0 : index
    %187 = vector.load %arg8[%c1_86, %c0_87, %c0_88] : memref<3x16x32xbf16, #tpu.memory_space<vmem>>, vector<1x16x32xbf16>
    %188 = vector.shape_cast %187 : vector<1x16x32xbf16> to vector<16x32xbf16>
    %c1_89 = arith.constant 1 : index
    %c0_90 = arith.constant 0 : index
    %c0_91 = arith.constant 0 : index
    %189 = vector.load %arg9[%c1_89, %c0_90, %c0_91] : memref<3x1x32xf32, #tpu.memory_space<vmem>>, vector<1x1x32xf32>
    %190 = vector.shape_cast %189 : vector<1x1x32xf32> to vector<1x32xf32>
    %c1_92 = arith.constant 1 : index
    %c0_93 = arith.constant 0 : index
    %c0_94 = arith.constant 0 : index
    %191 = vector.load %arg10[%c1_92, %c0_93, %c0_94] : memref<3x32x16xbf16, #tpu.memory_space<vmem>>, vector<1x32x16xbf16>
    %192 = vector.shape_cast %191 : vector<1x32x16xbf16> to vector<32x16xbf16>
    %c1_95 = arith.constant 1 : index
    %c0_96 = arith.constant 0 : index
    %c0_97 = arith.constant 0 : index
    %193 = vector.load %arg11[%c1_95, %c0_96, %c0_97] : memref<3x1x16xf32, #tpu.memory_space<vmem>>, vector<1x1x16xf32>
    %194 = vector.shape_cast %193 : vector<1x1x16xf32> to vector<1x16xf32>
    %c1_98 = arith.constant 1 : index
    %c0_99 = arith.constant 0 : index
    %c0_100 = arith.constant 0 : index
    %195 = vector.load %arg12[%c1_98, %c0_99, %c0_100] : memref<3x1x16xf32, #tpu.memory_space<vmem>>, vector<1x1x16xf32>
    %196 = vector.shape_cast %195 : vector<1x1x16xf32> to vector<1x16xf32>
    %c1_101 = arith.constant 1 : index
    %c0_102 = arith.constant 0 : index
    %c0_103 = arith.constant 0 : index
    %197 = vector.load %arg13[%c1_101, %c0_102, %c0_103] : memref<3x1x16xf32, #tpu.memory_space<vmem>>, vector<1x1x16xf32>
    %198 = vector.shape_cast %197 : vector<1x1x16xf32> to vector<1x16xf32>
    %199 = arith.truncf %178 : vector<40x16xf32> to vector<40x16xbf16>
    %cst_104 = arith.constant dense<0.000000e+00> : vector<40x48xf32>
    %200 = tpu.matmul %199, %180, %cst_104 {dimension_numbers = #tpu.dot_dimension_numbers<[1], [0], [0], [1], [0, 0, 1, 1], [], []>} : vector<40x16xbf16>, vector<16x48xbf16>, vector<40x48xf32> -> vector<40x48xf32>
    %201 = vector.extract_strided_slice %200 {offsets = [0, 0], sizes = [20, 8], strides = [1, 1]} : vector<40x48xf32> to vector<20x8xf32>
    %202 = vector.extract_strided_slice %200 {offsets = [0, 16], sizes = [20, 8], strides = [1, 1]} : vector<40x48xf32> to vector<20x8xf32>
    %203 = vector.extract_strided_slice %200 {offsets = [0, 32], sizes = [20, 8], strides = [1, 1]} : vector<40x48xf32> to vector<20x8xf32>
    %204 = arith.truncf %201 : vector<20x8xf32> to vector<20x8xbf16>
    %205 = arith.truncf %202 : vector<20x8xf32> to vector<20x8xbf16>
    %cst_105 = arith.constant dense<0.000000e+00> : vector<20x20xf32>
    %206 = tpu.matmul %204, %205, %cst_105 {dimension_numbers = #tpu.dot_dimension_numbers<[1], [1], [0], [0], [0, 0, 1, 0], [], []>} : vector<20x8xbf16>, vector<20x8xbf16>, vector<20x20xf32> -> vector<20x20xf32>
    %cst_106 = arith.constant dense<0xFF800000> : vector<20xf32>
    %207 = vector.multi_reduction <maximumf>, %206, %cst_106 [1] : vector<20x20xf32> to vector<20xf32>
    %208 = vector.shape_cast %207 : vector<20xf32> to vector<20x1xf32>
    %209 = vector.broadcast %208 : vector<20x1xf32> to vector<20x20xf32>
    %210 = arith.subf %206, %209 : vector<20x20xf32>
    %211 = math.exp %210 : vector<20x20xf32>
    %cst_107 = arith.constant dense<0.000000e+00> : vector<20xf32>
    %212 = vector.multi_reduction <add>, %211, %cst_107 [1] : vector<20x20xf32> to vector<20xf32>
    %213 = vector.shape_cast %212 : vector<20xf32> to vector<20x1xf32>
    %214 = vector.broadcast %213 : vector<20x1xf32> to vector<20x20xf32>
    %215 = arith.divf %211, %214 : vector<20x20xf32>
    %216 = arith.truncf %215 : vector<20x20xf32> to vector<20x20xbf16>
    %217 = arith.truncf %203 : vector<20x8xf32> to vector<20x8xbf16>
    %cst_108 = arith.constant dense<0.000000e+00> : vector<20x8xf32>
    %218 = tpu.matmul %216, %217, %cst_108 {dimension_numbers = #tpu.dot_dimension_numbers<[1], [0], [0], [1], [0, 0, 1, 1], [], []>} : vector<20x20xbf16>, vector<20x8xbf16>, vector<20x8xf32> -> vector<20x8xf32>
    %219 = vector.extract_strided_slice %200 {offsets = [0, 8], sizes = [20, 8], strides = [1, 1]} : vector<40x48xf32> to vector<20x8xf32>
    %220 = vector.extract_strided_slice %200 {offsets = [0, 24], sizes = [20, 8], strides = [1, 1]} : vector<40x48xf32> to vector<20x8xf32>
    %221 = vector.extract_strided_slice %200 {offsets = [0, 40], sizes = [20, 8], strides = [1, 1]} : vector<40x48xf32> to vector<20x8xf32>
    %222 = arith.truncf %219 : vector<20x8xf32> to vector<20x8xbf16>
    %223 = arith.truncf %220 : vector<20x8xf32> to vector<20x8xbf16>
    %cst_109 = arith.constant dense<0.000000e+00> : vector<20x20xf32>
    %224 = tpu.matmul %222, %223, %cst_109 {dimension_numbers = #tpu.dot_dimension_numbers<[1], [1], [0], [0], [0, 0, 1, 0], [], []>} : vector<20x8xbf16>, vector<20x8xbf16>, vector<20x20xf32> -> vector<20x20xf32>
    %cst_110 = arith.constant dense<0xFF800000> : vector<20xf32>
    %225 = vector.multi_reduction <maximumf>, %224, %cst_110 [1] : vector<20x20xf32> to vector<20xf32>
    %226 = vector.shape_cast %225 : vector<20xf32> to vector<20x1xf32>
    %227 = vector.broadcast %226 : vector<20x1xf32> to vector<20x20xf32>
    %228 = arith.subf %224, %227 : vector<20x20xf32>
    %229 = math.exp %228 : vector<20x20xf32>
    %cst_111 = arith.constant dense<0.000000e+00> : vector<20xf32>
    %230 = vector.multi_reduction <add>, %229, %cst_111 [1] : vector<20x20xf32> to vector<20xf32>
    %231 = vector.shape_cast %230 : vector<20xf32> to vector<20x1xf32>
    %232 = vector.broadcast %231 : vector<20x1xf32> to vector<20x20xf32>
    %233 = arith.divf %229, %232 : vector<20x20xf32>
    %234 = arith.truncf %233 : vector<20x20xf32> to vector<20x20xbf16>
    %235 = arith.truncf %221 : vector<20x8xf32> to vector<20x8xbf16>
    %cst_112 = arith.constant dense<0.000000e+00> : vector<20x8xf32>
    %236 = tpu.matmul %234, %235, %cst_112 {dimension_numbers = #tpu.dot_dimension_numbers<[1], [0], [0], [1], [0, 0, 1, 1], [], []>} : vector<20x20xbf16>, vector<20x8xbf16>, vector<20x8xf32> -> vector<20x8xf32>
    %237 = tpu.concatenate %218, %236 in 1 : vector<20x8xf32>, vector<20x8xf32> -> vector<20x16xf32>
    %238 = vector.extract_strided_slice %200 {offsets = [20, 0], sizes = [20, 8], strides = [1, 1]} : vector<40x48xf32> to vector<20x8xf32>
    %239 = vector.extract_strided_slice %200 {offsets = [20, 16], sizes = [20, 8], strides = [1, 1]} : vector<40x48xf32> to vector<20x8xf32>
    %240 = vector.extract_strided_slice %200 {offsets = [20, 32], sizes = [20, 8], strides = [1, 1]} : vector<40x48xf32> to vector<20x8xf32>
    %241 = arith.truncf %238 : vector<20x8xf32> to vector<20x8xbf16>
    %242 = arith.truncf %239 : vector<20x8xf32> to vector<20x8xbf16>
    %cst_113 = arith.constant dense<0.000000e+00> : vector<20x20xf32>
    %243 = tpu.matmul %241, %242, %cst_113 {dimension_numbers = #tpu.dot_dimension_numbers<[1], [1], [0], [0], [0, 0, 1, 0], [], []>} : vector<20x8xbf16>, vector<20x8xbf16>, vector<20x20xf32> -> vector<20x20xf32>
    %cst_114 = arith.constant dense<0xFF800000> : vector<20xf32>
    %244 = vector.multi_reduction <maximumf>, %243, %cst_114 [1] : vector<20x20xf32> to vector<20xf32>
    %245 = vector.shape_cast %244 : vector<20xf32> to vector<20x1xf32>
    %246 = vector.broadcast %245 : vector<20x1xf32> to vector<20x20xf32>
    %247 = arith.subf %243, %246 : vector<20x20xf32>
    %248 = math.exp %247 : vector<20x20xf32>
    %cst_115 = arith.constant dense<0.000000e+00> : vector<20xf32>
    %249 = vector.multi_reduction <add>, %248, %cst_115 [1] : vector<20x20xf32> to vector<20xf32>
    %250 = vector.shape_cast %249 : vector<20xf32> to vector<20x1xf32>
    %251 = vector.broadcast %250 : vector<20x1xf32> to vector<20x20xf32>
    %252 = arith.divf %248, %251 : vector<20x20xf32>
    %253 = arith.truncf %252 : vector<20x20xf32> to vector<20x20xbf16>
    %254 = arith.truncf %240 : vector<20x8xf32> to vector<20x8xbf16>
    %cst_116 = arith.constant dense<0.000000e+00> : vector<20x8xf32>
    %255 = tpu.matmul %253, %254, %cst_116 {dimension_numbers = #tpu.dot_dimension_numbers<[1], [0], [0], [1], [0, 0, 1, 1], [], []>} : vector<20x20xbf16>, vector<20x8xbf16>, vector<20x8xf32> -> vector<20x8xf32>
    %256 = vector.extract_strided_slice %200 {offsets = [20, 8], sizes = [20, 8], strides = [1, 1]} : vector<40x48xf32> to vector<20x8xf32>
    %257 = vector.extract_strided_slice %200 {offsets = [20, 24], sizes = [20, 8], strides = [1, 1]} : vector<40x48xf32> to vector<20x8xf32>
    %258 = vector.extract_strided_slice %200 {offsets = [20, 40], sizes = [20, 8], strides = [1, 1]} : vector<40x48xf32> to vector<20x8xf32>
    %259 = arith.truncf %256 : vector<20x8xf32> to vector<20x8xbf16>
    %260 = arith.truncf %257 : vector<20x8xf32> to vector<20x8xbf16>
    %cst_117 = arith.constant dense<0.000000e+00> : vector<20x20xf32>
    %261 = tpu.matmul %259, %260, %cst_117 {dimension_numbers = #tpu.dot_dimension_numbers<[1], [1], [0], [0], [0, 0, 1, 0], [], []>} : vector<20x8xbf16>, vector<20x8xbf16>, vector<20x20xf32> -> vector<20x20xf32>
    %cst_118 = arith.constant dense<0xFF800000> : vector<20xf32>
    %262 = vector.multi_reduction <maximumf>, %261, %cst_118 [1] : vector<20x20xf32> to vector<20xf32>
    %263 = vector.shape_cast %262 : vector<20xf32> to vector<20x1xf32>
    %264 = vector.broadcast %263 : vector<20x1xf32> to vector<20x20xf32>
    %265 = arith.subf %261, %264 : vector<20x20xf32>
    %266 = math.exp %265 : vector<20x20xf32>
    %cst_119 = arith.constant dense<0.000000e+00> : vector<20xf32>
    %267 = vector.multi_reduction <add>, %266, %cst_119 [1] : vector<20x20xf32> to vector<20xf32>
    %268 = vector.shape_cast %267 : vector<20xf32> to vector<20x1xf32>
    %269 = vector.broadcast %268 : vector<20x1xf32> to vector<20x20xf32>
    %270 = arith.divf %266, %269 : vector<20x20xf32>
    %271 = arith.truncf %270 : vector<20x20xf32> to vector<20x20xbf16>
    %272 = arith.truncf %258 : vector<20x8xf32> to vector<20x8xbf16>
    %cst_120 = arith.constant dense<0.000000e+00> : vector<20x8xf32>
    %273 = tpu.matmul %271, %272, %cst_120 {dimension_numbers = #tpu.dot_dimension_numbers<[1], [0], [0], [1], [0, 0, 1, 1], [], []>} : vector<20x20xbf16>, vector<20x8xbf16>, vector<20x8xf32> -> vector<20x8xf32>
    %274 = tpu.concatenate %255, %273 in 1 : vector<20x8xf32>, vector<20x8xf32> -> vector<20x16xf32>
    %275 = tpu.concatenate %237, %274 in 0 : vector<20x16xf32>, vector<20x16xf32> -> vector<40x16xf32>
    %276 = arith.truncf %275 : vector<40x16xf32> to vector<40x16xbf16>
    %cst_121 = arith.constant dense<0.000000e+00> : vector<40x16xf32>
    %277 = tpu.matmul %276, %182, %cst_121 {dimension_numbers = #tpu.dot_dimension_numbers<[1], [0], [0], [1], [0, 0, 1, 1], [], []>} : vector<40x16xbf16>, vector<16x16xbf16>, vector<40x16xf32> -> vector<40x16xf32>
    %278 = arith.addf %277, %178 : vector<40x16xf32>
    %cst_122 = arith.constant dense<0.000000e+00> : vector<40xf32>
    %279 = vector.multi_reduction <add>, %278, %cst_122 [1] : vector<40x16xf32> to vector<40xf32>
    %280 = vector.shape_cast %279 : vector<40xf32> to vector<40x1xf32>
    %cst_123 = arith.constant 1.600000e+01 : f32
    %281 = vector.broadcast %cst_123 : f32 to vector<40x1xf32>
    %282 = arith.divf %280, %281 : vector<40x1xf32>
    %283 = vector.broadcast %282 : vector<40x1xf32> to vector<40x16xf32>
    %284 = arith.subf %278, %283 : vector<40x16xf32>
    %285 = arith.mulf %284, %284 : vector<40x16xf32>
    %cst_124 = arith.constant dense<0.000000e+00> : vector<40xf32>
    %286 = vector.multi_reduction <add>, %285, %cst_124 [1] : vector<40x16xf32> to vector<40xf32>
    %287 = vector.shape_cast %286 : vector<40xf32> to vector<40x1xf32>
    %cst_125 = arith.constant 1.600000e+01 : f32
    %288 = vector.broadcast %cst_125 : f32 to vector<40x1xf32>
    %289 = arith.divf %287, %288 : vector<40x1xf32>
    %290 = vector.broadcast %282 : vector<40x1xf32> to vector<40x16xf32>
    %291 = arith.subf %278, %290 : vector<40x16xf32>
    %cst_126 = arith.constant 9.99999997E-7 : f32
    %292 = vector.broadcast %cst_126 : f32 to vector<40x1xf32>
    %293 = arith.addf %289, %292 : vector<40x1xf32>
    %294 = math.rsqrt %293 : vector<40x1xf32>
    %295 = vector.broadcast %294 : vector<40x1xf32> to vector<40x16xf32>
    %296 = arith.mulf %291, %295 : vector<40x16xf32>
    %297 = vector.broadcast %184 : vector<1x16xf32> to vector<40x16xf32>
    %298 = arith.mulf %296, %297 : vector<40x16xf32>
    %299 = vector.broadcast %186 : vector<1x16xf32> to vector<40x16xf32>
    %300 = arith.addf %298, %299 : vector<40x16xf32>
    %301 = arith.truncf %300 : vector<40x16xf32> to vector<40x16xbf16>
    %cst_127 = arith.constant dense<0.000000e+00> : vector<40x32xf32>
    %302 = tpu.matmul %301, %188, %cst_127 {dimension_numbers = #tpu.dot_dimension_numbers<[1], [0], [0], [1], [0, 0, 1, 1], [], []>} : vector<40x16xbf16>, vector<16x32xbf16>, vector<40x32xf32> -> vector<40x32xf32>
    %303 = vector.broadcast %190 : vector<1x32xf32> to vector<40x32xf32>
    %304 = arith.addf %302, %303 : vector<40x32xf32>
    %cst_128 = arith.constant 0.000000e+00 : f32
    %305 = vector.broadcast %cst_128 : f32 to vector<40x32xf32>
    %306 = arith.maximumf %304, %305 : vector<40x32xf32>
    %307 = arith.truncf %306 : vector<40x32xf32> to vector<40x32xbf16>
    %cst_129 = arith.constant dense<0.000000e+00> : vector<40x16xf32>
    %308 = tpu.matmul %307, %192, %cst_129 {dimension_numbers = #tpu.dot_dimension_numbers<[1], [0], [0], [1], [0, 0, 1, 1], [], []>} : vector<40x32xbf16>, vector<32x16xbf16>, vector<40x16xf32> -> vector<40x16xf32>
    %309 = vector.broadcast %194 : vector<1x16xf32> to vector<40x16xf32>
    %310 = arith.addf %308, %309 : vector<40x16xf32>
    %311 = arith.addf %310, %300 : vector<40x16xf32>
    %cst_130 = arith.constant dense<0.000000e+00> : vector<40xf32>
    %312 = vector.multi_reduction <add>, %311, %cst_130 [1] : vector<40x16xf32> to vector<40xf32>
    %313 = vector.shape_cast %312 : vector<40xf32> to vector<40x1xf32>
    %cst_131 = arith.constant 1.600000e+01 : f32
    %314 = vector.broadcast %cst_131 : f32 to vector<40x1xf32>
    %315 = arith.divf %313, %314 : vector<40x1xf32>
    %316 = vector.broadcast %315 : vector<40x1xf32> to vector<40x16xf32>
    %317 = arith.subf %311, %316 : vector<40x16xf32>
    %318 = arith.mulf %317, %317 : vector<40x16xf32>
    %cst_132 = arith.constant dense<0.000000e+00> : vector<40xf32>
    %319 = vector.multi_reduction <add>, %318, %cst_132 [1] : vector<40x16xf32> to vector<40xf32>
    %320 = vector.shape_cast %319 : vector<40xf32> to vector<40x1xf32>
    %cst_133 = arith.constant 1.600000e+01 : f32
    %321 = vector.broadcast %cst_133 : f32 to vector<40x1xf32>
    %322 = arith.divf %320, %321 : vector<40x1xf32>
    %323 = vector.broadcast %315 : vector<40x1xf32> to vector<40x16xf32>
    %324 = arith.subf %311, %323 : vector<40x16xf32>
    %cst_134 = arith.constant 9.99999997E-7 : f32
    %325 = vector.broadcast %cst_134 : f32 to vector<40x1xf32>
    %326 = arith.addf %322, %325 : vector<40x1xf32>
    %327 = math.rsqrt %326 : vector<40x1xf32>
    %328 = vector.broadcast %327 : vector<40x1xf32> to vector<40x16xf32>
    %329 = arith.mulf %324, %328 : vector<40x16xf32>
    %330 = vector.broadcast %196 : vector<1x16xf32> to vector<40x16xf32>
    %331 = arith.mulf %329, %330 : vector<40x16xf32>
    %332 = vector.broadcast %198 : vector<1x16xf32> to vector<40x16xf32>
    %333 = arith.addf %331, %332 : vector<40x16xf32>
    %c2 = arith.constant 2 : index
    %c0_135 = arith.constant 0 : index
    %c0_136 = arith.constant 0 : index
    %334 = vector.load %arg4[%c2, %c0_135, %c0_136] : memref<3x16x48xbf16, #tpu.memory_space<vmem>>, vector<1x16x48xbf16>
    %335 = vector.shape_cast %334 : vector<1x16x48xbf16> to vector<16x48xbf16>
    %c2_137 = arith.constant 2 : index
    %c0_138 = arith.constant 0 : index
    %c0_139 = arith.constant 0 : index
    %336 = vector.load %arg5[%c2_137, %c0_138, %c0_139] : memref<3x16x16xbf16, #tpu.memory_space<vmem>>, vector<1x16x16xbf16>
    %337 = vector.shape_cast %336 : vector<1x16x16xbf16> to vector<16x16xbf16>
    %c2_140 = arith.constant 2 : index
    %c0_141 = arith.constant 0 : index
    %c0_142 = arith.constant 0 : index
    %338 = vector.load %arg6[%c2_140, %c0_141, %c0_142] : memref<3x1x16xf32, #tpu.memory_space<vmem>>, vector<1x1x16xf32>
    %339 = vector.shape_cast %338 : vector<1x1x16xf32> to vector<1x16xf32>
    %c2_143 = arith.constant 2 : index
    %c0_144 = arith.constant 0 : index
    %c0_145 = arith.constant 0 : index
    %340 = vector.load %arg7[%c2_143, %c0_144, %c0_145] : memref<3x1x16xf32, #tpu.memory_space<vmem>>, vector<1x1x16xf32>
    %341 = vector.shape_cast %340 : vector<1x1x16xf32> to vector<1x16xf32>
    %c2_146 = arith.constant 2 : index
    %c0_147 = arith.constant 0 : index
    %c0_148 = arith.constant 0 : index
    %342 = vector.load %arg8[%c2_146, %c0_147, %c0_148] : memref<3x16x32xbf16, #tpu.memory_space<vmem>>, vector<1x16x32xbf16>
    %343 = vector.shape_cast %342 : vector<1x16x32xbf16> to vector<16x32xbf16>
    %c2_149 = arith.constant 2 : index
    %c0_150 = arith.constant 0 : index
    %c0_151 = arith.constant 0 : index
    %344 = vector.load %arg9[%c2_149, %c0_150, %c0_151] : memref<3x1x32xf32, #tpu.memory_space<vmem>>, vector<1x1x32xf32>
    %345 = vector.shape_cast %344 : vector<1x1x32xf32> to vector<1x32xf32>
    %c2_152 = arith.constant 2 : index
    %c0_153 = arith.constant 0 : index
    %c0_154 = arith.constant 0 : index
    %346 = vector.load %arg10[%c2_152, %c0_153, %c0_154] : memref<3x32x16xbf16, #tpu.memory_space<vmem>>, vector<1x32x16xbf16>
    %347 = vector.shape_cast %346 : vector<1x32x16xbf16> to vector<32x16xbf16>
    %c2_155 = arith.constant 2 : index
    %c0_156 = arith.constant 0 : index
    %c0_157 = arith.constant 0 : index
    %348 = vector.load %arg11[%c2_155, %c0_156, %c0_157] : memref<3x1x16xf32, #tpu.memory_space<vmem>>, vector<1x1x16xf32>
    %349 = vector.shape_cast %348 : vector<1x1x16xf32> to vector<1x16xf32>
    %c2_158 = arith.constant 2 : index
    %c0_159 = arith.constant 0 : index
    %c0_160 = arith.constant 0 : index
    %350 = vector.load %arg12[%c2_158, %c0_159, %c0_160] : memref<3x1x16xf32, #tpu.memory_space<vmem>>, vector<1x1x16xf32>
    %351 = vector.shape_cast %350 : vector<1x1x16xf32> to vector<1x16xf32>
    %c2_161 = arith.constant 2 : index
    %c0_162 = arith.constant 0 : index
    %c0_163 = arith.constant 0 : index
    %352 = vector.load %arg13[%c2_161, %c0_162, %c0_163] : memref<3x1x16xf32, #tpu.memory_space<vmem>>, vector<1x1x16xf32>
    %353 = vector.shape_cast %352 : vector<1x1x16xf32> to vector<1x16xf32>
    %354 = arith.truncf %333 : vector<40x16xf32> to vector<40x16xbf16>
    %cst_164 = arith.constant dense<0.000000e+00> : vector<40x48xf32>
    %355 = tpu.matmul %354, %335, %cst_164 {dimension_numbers = #tpu.dot_dimension_numbers<[1], [0], [0], [1], [0, 0, 1, 1], [], []>} : vector<40x16xbf16>, vector<16x48xbf16>, vector<40x48xf32> -> vector<40x48xf32>
    %356 = vector.extract_strided_slice %355 {offsets = [0, 0], sizes = [20, 8], strides = [1, 1]} : vector<40x48xf32> to vector<20x8xf32>
    %357 = vector.extract_strided_slice %355 {offsets = [0, 16], sizes = [20, 8], strides = [1, 1]} : vector<40x48xf32> to vector<20x8xf32>
    %358 = vector.extract_strided_slice %355 {offsets = [0, 32], sizes = [20, 8], strides = [1, 1]} : vector<40x48xf32> to vector<20x8xf32>
    %359 = arith.truncf %356 : vector<20x8xf32> to vector<20x8xbf16>
    %360 = arith.truncf %357 : vector<20x8xf32> to vector<20x8xbf16>
    %cst_165 = arith.constant dense<0.000000e+00> : vector<20x20xf32>
    %361 = tpu.matmul %359, %360, %cst_165 {dimension_numbers = #tpu.dot_dimension_numbers<[1], [1], [0], [0], [0, 0, 1, 0], [], []>} : vector<20x8xbf16>, vector<20x8xbf16>, vector<20x20xf32> -> vector<20x20xf32>
    %cst_166 = arith.constant dense<0xFF800000> : vector<20xf32>
    %362 = vector.multi_reduction <maximumf>, %361, %cst_166 [1] : vector<20x20xf32> to vector<20xf32>
    %363 = vector.shape_cast %362 : vector<20xf32> to vector<20x1xf32>
    %364 = vector.broadcast %363 : vector<20x1xf32> to vector<20x20xf32>
    %365 = arith.subf %361, %364 : vector<20x20xf32>
    %366 = math.exp %365 : vector<20x20xf32>
    %cst_167 = arith.constant dense<0.000000e+00> : vector<20xf32>
    %367 = vector.multi_reduction <add>, %366, %cst_167 [1] : vector<20x20xf32> to vector<20xf32>
    %368 = vector.shape_cast %367 : vector<20xf32> to vector<20x1xf32>
    %369 = vector.broadcast %368 : vector<20x1xf32> to vector<20x20xf32>
    %370 = arith.divf %366, %369 : vector<20x20xf32>
    %371 = arith.truncf %370 : vector<20x20xf32> to vector<20x20xbf16>
    %372 = arith.truncf %358 : vector<20x8xf32> to vector<20x8xbf16>
    %cst_168 = arith.constant dense<0.000000e+00> : vector<20x8xf32>
    %373 = tpu.matmul %371, %372, %cst_168 {dimension_numbers = #tpu.dot_dimension_numbers<[1], [0], [0], [1], [0, 0, 1, 1], [], []>} : vector<20x20xbf16>, vector<20x8xbf16>, vector<20x8xf32> -> vector<20x8xf32>
    %374 = vector.extract_strided_slice %355 {offsets = [0, 8], sizes = [20, 8], strides = [1, 1]} : vector<40x48xf32> to vector<20x8xf32>
    %375 = vector.extract_strided_slice %355 {offsets = [0, 24], sizes = [20, 8], strides = [1, 1]} : vector<40x48xf32> to vector<20x8xf32>
    %376 = vector.extract_strided_slice %355 {offsets = [0, 40], sizes = [20, 8], strides = [1, 1]} : vector<40x48xf32> to vector<20x8xf32>
    %377 = arith.truncf %374 : vector<20x8xf32> to vector<20x8xbf16>
    %378 = arith.truncf %375 : vector<20x8xf32> to vector<20x8xbf16>
    %cst_169 = arith.constant dense<0.000000e+00> : vector<20x20xf32>
    %379 = tpu.matmul %377, %378, %cst_169 {dimension_numbers = #tpu.dot_dimension_numbers<[1], [1], [0], [0], [0, 0, 1, 0], [], []>} : vector<20x8xbf16>, vector<20x8xbf16>, vector<20x20xf32> -> vector<20x20xf32>
    %cst_170 = arith.constant dense<0xFF800000> : vector<20xf32>
    %380 = vector.multi_reduction <maximumf>, %379, %cst_170 [1] : vector<20x20xf32> to vector<20xf32>
    %381 = vector.shape_cast %380 : vector<20xf32> to vector<20x1xf32>
    %382 = vector.broadcast %381 : vector<20x1xf32> to vector<20x20xf32>
    %383 = arith.subf %379, %382 : vector<20x20xf32>
    %384 = math.exp %383 : vector<20x20xf32>
    %cst_171 = arith.constant dense<0.000000e+00> : vector<20xf32>
    %385 = vector.multi_reduction <add>, %384, %cst_171 [1] : vector<20x20xf32> to vector<20xf32>
    %386 = vector.shape_cast %385 : vector<20xf32> to vector<20x1xf32>
    %387 = vector.broadcast %386 : vector<20x1xf32> to vector<20x20xf32>
    %388 = arith.divf %384, %387 : vector<20x20xf32>
    %389 = arith.truncf %388 : vector<20x20xf32> to vector<20x20xbf16>
    %390 = arith.truncf %376 : vector<20x8xf32> to vector<20x8xbf16>
    %cst_172 = arith.constant dense<0.000000e+00> : vector<20x8xf32>
    %391 = tpu.matmul %389, %390, %cst_172 {dimension_numbers = #tpu.dot_dimension_numbers<[1], [0], [0], [1], [0, 0, 1, 1], [], []>} : vector<20x20xbf16>, vector<20x8xbf16>, vector<20x8xf32> -> vector<20x8xf32>
    %392 = tpu.concatenate %373, %391 in 1 : vector<20x8xf32>, vector<20x8xf32> -> vector<20x16xf32>
    %393 = vector.extract_strided_slice %355 {offsets = [20, 0], sizes = [20, 8], strides = [1, 1]} : vector<40x48xf32> to vector<20x8xf32>
    %394 = vector.extract_strided_slice %355 {offsets = [20, 16], sizes = [20, 8], strides = [1, 1]} : vector<40x48xf32> to vector<20x8xf32>
    %395 = vector.extract_strided_slice %355 {offsets = [20, 32], sizes = [20, 8], strides = [1, 1]} : vector<40x48xf32> to vector<20x8xf32>
    %396 = arith.truncf %393 : vector<20x8xf32> to vector<20x8xbf16>
    %397 = arith.truncf %394 : vector<20x8xf32> to vector<20x8xbf16>
    %cst_173 = arith.constant dense<0.000000e+00> : vector<20x20xf32>
    %398 = tpu.matmul %396, %397, %cst_173 {dimension_numbers = #tpu.dot_dimension_numbers<[1], [1], [0], [0], [0, 0, 1, 0], [], []>} : vector<20x8xbf16>, vector<20x8xbf16>, vector<20x20xf32> -> vector<20x20xf32>
    %cst_174 = arith.constant dense<0xFF800000> : vector<20xf32>
    %399 = vector.multi_reduction <maximumf>, %398, %cst_174 [1] : vector<20x20xf32> to vector<20xf32>
    %400 = vector.shape_cast %399 : vector<20xf32> to vector<20x1xf32>
    %401 = vector.broadcast %400 : vector<20x1xf32> to vector<20x20xf32>
    %402 = arith.subf %398, %401 : vector<20x20xf32>
    %403 = math.exp %402 : vector<20x20xf32>
    %cst_175 = arith.constant dense<0.000000e+00> : vector<20xf32>
    %404 = vector.multi_reduction <add>, %403, %cst_175 [1] : vector<20x20xf32> to vector<20xf32>
    %405 = vector.shape_cast %404 : vector<20xf32> to vector<20x1xf32>
    %406 = vector.broadcast %405 : vector<20x1xf32> to vector<20x20xf32>
    %407 = arith.divf %403, %406 : vector<20x20xf32>
    %408 = arith.truncf %407 : vector<20x20xf32> to vector<20x20xbf16>
    %409 = arith.truncf %395 : vector<20x8xf32> to vector<20x8xbf16>
    %cst_176 = arith.constant dense<0.000000e+00> : vector<20x8xf32>
    %410 = tpu.matmul %408, %409, %cst_176 {dimension_numbers = #tpu.dot_dimension_numbers<[1], [0], [0], [1], [0, 0, 1, 1], [], []>} : vector<20x20xbf16>, vector<20x8xbf16>, vector<20x8xf32> -> vector<20x8xf32>
    %411 = vector.extract_strided_slice %355 {offsets = [20, 8], sizes = [20, 8], strides = [1, 1]} : vector<40x48xf32> to vector<20x8xf32>
    %412 = vector.extract_strided_slice %355 {offsets = [20, 24], sizes = [20, 8], strides = [1, 1]} : vector<40x48xf32> to vector<20x8xf32>
    %413 = vector.extract_strided_slice %355 {offsets = [20, 40], sizes = [20, 8], strides = [1, 1]} : vector<40x48xf32> to vector<20x8xf32>
    %414 = arith.truncf %411 : vector<20x8xf32> to vector<20x8xbf16>
    %415 = arith.truncf %412 : vector<20x8xf32> to vector<20x8xbf16>
    %cst_177 = arith.constant dense<0.000000e+00> : vector<20x20xf32>
    %416 = tpu.matmul %414, %415, %cst_177 {dimension_numbers = #tpu.dot_dimension_numbers<[1], [1], [0], [0], [0, 0, 1, 0], [], []>} : vector<20x8xbf16>, vector<20x8xbf16>, vector<20x20xf32> -> vector<20x20xf32>
    %cst_178 = arith.constant dense<0xFF800000> : vector<20xf32>
    %417 = vector.multi_reduction <maximumf>, %416, %cst_178 [1] : vector<20x20xf32> to vector<20xf32>
    %418 = vector.shape_cast %417 : vector<20xf32> to vector<20x1xf32>
    %419 = vector.broadcast %418 : vector<20x1xf32> to vector<20x20xf32>
    %420 = arith.subf %416, %419 : vector<20x20xf32>
    %421 = math.exp %420 : vector<20x20xf32>
    %cst_179 = arith.constant dense<0.000000e+00> : vector<20xf32>
    %422 = vector.multi_reduction <add>, %421, %cst_179 [1] : vector<20x20xf32> to vector<20xf32>
    %423 = vector.shape_cast %422 : vector<20xf32> to vector<20x1xf32>
    %424 = vector.broadcast %423 : vector<20x1xf32> to vector<20x20xf32>
    %425 = arith.divf %421, %424 : vector<20x20xf32>
    %426 = arith.truncf %425 : vector<20x20xf32> to vector<20x20xbf16>
    %427 = arith.truncf %413 : vector<20x8xf32> to vector<20x8xbf16>
    %cst_180 = arith.constant dense<0.000000e+00> : vector<20x8xf32>
    %428 = tpu.matmul %426, %427, %cst_180 {dimension_numbers = #tpu.dot_dimension_numbers<[1], [0], [0], [1], [0, 0, 1, 1], [], []>} : vector<20x20xbf16>, vector<20x8xbf16>, vector<20x8xf32> -> vector<20x8xf32>
    %429 = tpu.concatenate %410, %428 in 1 : vector<20x8xf32>, vector<20x8xf32> -> vector<20x16xf32>
    %430 = tpu.concatenate %392, %429 in 0 : vector<20x16xf32>, vector<20x16xf32> -> vector<40x16xf32>
    %431 = arith.truncf %430 : vector<40x16xf32> to vector<40x16xbf16>
    %cst_181 = arith.constant dense<0.000000e+00> : vector<40x16xf32>
    %432 = tpu.matmul %431, %337, %cst_181 {dimension_numbers = #tpu.dot_dimension_numbers<[1], [0], [0], [1], [0, 0, 1, 1], [], []>} : vector<40x16xbf16>, vector<16x16xbf16>, vector<40x16xf32> -> vector<40x16xf32>
    %433 = arith.addf %432, %333 : vector<40x16xf32>
    %cst_182 = arith.constant dense<0.000000e+00> : vector<40xf32>
    %434 = vector.multi_reduction <add>, %433, %cst_182 [1] : vector<40x16xf32> to vector<40xf32>
    %435 = vector.shape_cast %434 : vector<40xf32> to vector<40x1xf32>
    %cst_183 = arith.constant 1.600000e+01 : f32
    %436 = vector.broadcast %cst_183 : f32 to vector<40x1xf32>
    %437 = arith.divf %435, %436 : vector<40x1xf32>
    %438 = vector.broadcast %437 : vector<40x1xf32> to vector<40x16xf32>
    %439 = arith.subf %433, %438 : vector<40x16xf32>
    %440 = arith.mulf %439, %439 : vector<40x16xf32>
    %cst_184 = arith.constant dense<0.000000e+00> : vector<40xf32>
    %441 = vector.multi_reduction <add>, %440, %cst_184 [1] : vector<40x16xf32> to vector<40xf32>
    %442 = vector.shape_cast %441 : vector<40xf32> to vector<40x1xf32>
    %cst_185 = arith.constant 1.600000e+01 : f32
    %443 = vector.broadcast %cst_185 : f32 to vector<40x1xf32>
    %444 = arith.divf %442, %443 : vector<40x1xf32>
    %445 = vector.broadcast %437 : vector<40x1xf32> to vector<40x16xf32>
    %446 = arith.subf %433, %445 : vector<40x16xf32>
    %cst_186 = arith.constant 9.99999997E-7 : f32
    %447 = vector.broadcast %cst_186 : f32 to vector<40x1xf32>
    %448 = arith.addf %444, %447 : vector<40x1xf32>
    %449 = math.rsqrt %448 : vector<40x1xf32>
    %450 = vector.broadcast %449 : vector<40x1xf32> to vector<40x16xf32>
    %451 = arith.mulf %446, %450 : vector<40x16xf32>
    %452 = vector.broadcast %339 : vector<1x16xf32> to vector<40x16xf32>
    %453 = arith.mulf %451, %452 : vector<40x16xf32>
    %454 = vector.broadcast %341 : vector<1x16xf32> to vector<40x16xf32>
    %455 = arith.addf %453, %454 : vector<40x16xf32>
    %456 = arith.truncf %455 : vector<40x16xf32> to vector<40x16xbf16>
    %cst_187 = arith.constant dense<0.000000e+00> : vector<40x32xf32>
    %457 = tpu.matmul %456, %343, %cst_187 {dimension_numbers = #tpu.dot_dimension_numbers<[1], [0], [0], [1], [0, 0, 1, 1], [], []>} : vector<40x16xbf16>, vector<16x32xbf16>, vector<40x32xf32> -> vector<40x32xf32>
    %458 = vector.broadcast %345 : vector<1x32xf32> to vector<40x32xf32>
    %459 = arith.addf %457, %458 : vector<40x32xf32>
    %cst_188 = arith.constant 0.000000e+00 : f32
    %460 = vector.broadcast %cst_188 : f32 to vector<40x32xf32>
    %461 = arith.maximumf %459, %460 : vector<40x32xf32>
    %462 = arith.truncf %461 : vector<40x32xf32> to vector<40x32xbf16>
    %cst_189 = arith.constant dense<0.000000e+00> : vector<40x16xf32>
    %463 = tpu.matmul %462, %347, %cst_189 {dimension_numbers = #tpu.dot_dimension_numbers<[1], [0], [0], [1], [0, 0, 1, 1], [], []>} : vector<40x32xbf16>, vector<32x16xbf16>, vector<40x16xf32> -> vector<40x16xf32>
    %464 = vector.broadcast %349 : vector<1x16xf32> to vector<40x16xf32>
    %465 = arith.addf %463, %464 : vector<40x16xf32>
    %466 = arith.addf %465, %455 : vector<40x16xf32>
    %cst_190 = arith.constant dense<0.000000e+00> : vector<40xf32>
    %467 = vector.multi_reduction <add>, %466, %cst_190 [1] : vector<40x16xf32> to vector<40xf32>
    %468 = vector.shape_cast %467 : vector<40xf32> to vector<40x1xf32>
    %cst_191 = arith.constant 1.600000e+01 : f32
    %469 = vector.broadcast %cst_191 : f32 to vector<40x1xf32>
    %470 = arith.divf %468, %469 : vector<40x1xf32>
    %471 = vector.broadcast %470 : vector<40x1xf32> to vector<40x16xf32>
    %472 = arith.subf %466, %471 : vector<40x16xf32>
    %473 = arith.mulf %472, %472 : vector<40x16xf32>
    %cst_192 = arith.constant dense<0.000000e+00> : vector<40xf32>
    %474 = vector.multi_reduction <add>, %473, %cst_192 [1] : vector<40x16xf32> to vector<40xf32>
    %475 = vector.shape_cast %474 : vector<40xf32> to vector<40x1xf32>
    %cst_193 = arith.constant 1.600000e+01 : f32
    %476 = vector.broadcast %cst_193 : f32 to vector<40x1xf32>
    %477 = arith.divf %475, %476 : vector<40x1xf32>
    %478 = vector.broadcast %470 : vector<40x1xf32> to vector<40x16xf32>
    %479 = arith.subf %466, %478 : vector<40x16xf32>
    %cst_194 = arith.constant 9.99999997E-7 : f32
    %480 = vector.broadcast %cst_194 : f32 to vector<40x1xf32>
    %481 = arith.addf %477, %480 : vector<40x1xf32>
    %482 = math.rsqrt %481 : vector<40x1xf32>
    %483 = vector.broadcast %482 : vector<40x1xf32> to vector<40x16xf32>
    %484 = arith.mulf %479, %483 : vector<40x16xf32>
    %485 = vector.broadcast %351 : vector<1x16xf32> to vector<40x16xf32>
    %486 = arith.mulf %484, %485 : vector<40x16xf32>
    %487 = vector.broadcast %353 : vector<1x16xf32> to vector<40x16xf32>
    %488 = arith.addf %486, %487 : vector<40x16xf32>
    %489 = vector.extract_strided_slice %488 {offsets = [0, 0], sizes = [1, 16], strides = [1, 1]} : vector<40x16xf32> to vector<1x16xf32>
    %490 = vector.extract_strided_slice %488 {offsets = [1, 0], sizes = [1, 16], strides = [1, 1]} : vector<40x16xf32> to vector<1x16xf32>
    %491 = vector.extract_strided_slice %488 {offsets = [2, 0], sizes = [1, 16], strides = [1, 1]} : vector<40x16xf32> to vector<1x16xf32>
    %492 = vector.extract_strided_slice %488 {offsets = [3, 0], sizes = [1, 16], strides = [1, 1]} : vector<40x16xf32> to vector<1x16xf32>
    %493 = vector.extract_strided_slice %488 {offsets = [4, 0], sizes = [1, 16], strides = [1, 1]} : vector<40x16xf32> to vector<1x16xf32>
    %494 = vector.extract_strided_slice %488 {offsets = [5, 0], sizes = [1, 16], strides = [1, 1]} : vector<40x16xf32> to vector<1x16xf32>
    %495 = vector.extract_strided_slice %488 {offsets = [6, 0], sizes = [1, 16], strides = [1, 1]} : vector<40x16xf32> to vector<1x16xf32>
    %496 = vector.extract_strided_slice %488 {offsets = [7, 0], sizes = [1, 16], strides = [1, 1]} : vector<40x16xf32> to vector<1x16xf32>
    %497 = vector.extract_strided_slice %488 {offsets = [8, 0], sizes = [1, 16], strides = [1, 1]} : vector<40x16xf32> to vector<1x16xf32>
    %498 = vector.extract_strided_slice %488 {offsets = [9, 0], sizes = [1, 16], strides = [1, 1]} : vector<40x16xf32> to vector<1x16xf32>
    %499 = vector.extract_strided_slice %488 {offsets = [10, 0], sizes = [1, 16], strides = [1, 1]} : vector<40x16xf32> to vector<1x16xf32>
    %500 = vector.extract_strided_slice %488 {offsets = [11, 0], sizes = [1, 16], strides = [1, 1]} : vector<40x16xf32> to vector<1x16xf32>
    %501 = vector.extract_strided_slice %488 {offsets = [12, 0], sizes = [1, 16], strides = [1, 1]} : vector<40x16xf32> to vector<1x16xf32>
    %502 = vector.extract_strided_slice %488 {offsets = [13, 0], sizes = [1, 16], strides = [1, 1]} : vector<40x16xf32> to vector<1x16xf32>
    %503 = vector.extract_strided_slice %488 {offsets = [14, 0], sizes = [1, 16], strides = [1, 1]} : vector<40x16xf32> to vector<1x16xf32>
    %504 = vector.extract_strided_slice %488 {offsets = [15, 0], sizes = [1, 16], strides = [1, 1]} : vector<40x16xf32> to vector<1x16xf32>
    %505 = vector.extract_strided_slice %488 {offsets = [16, 0], sizes = [1, 16], strides = [1, 1]} : vector<40x16xf32> to vector<1x16xf32>
    %506 = vector.extract_strided_slice %488 {offsets = [17, 0], sizes = [1, 16], strides = [1, 1]} : vector<40x16xf32> to vector<1x16xf32>
    %507 = vector.extract_strided_slice %488 {offsets = [18, 0], sizes = [1, 16], strides = [1, 1]} : vector<40x16xf32> to vector<1x16xf32>
    %508 = vector.extract_strided_slice %488 {offsets = [19, 0], sizes = [1, 16], strides = [1, 1]} : vector<40x16xf32> to vector<1x16xf32>
    %509 = tpu.concatenate %489, %490, %491, %492, %493, %494, %495, %496, %497, %498, %499, %500, %501, %502, %503, %504 in 1 : vector<1x16xf32>, vector<1x16xf32>, vector<1x16xf32>, vector<1x16xf32>, vector<1x16xf32>, vector<1x16xf32>, vector<1x16xf32>, vector<1x16xf32>, vector<1x16xf32>, vector<1x16xf32>, vector<1x16xf32>, vector<1x16xf32>, vector<1x16xf32>, vector<1x16xf32>, vector<1x16xf32>, vector<1x16xf32> -> vector<1x256xf32>
    %510 = tpu.concatenate %505, %506, %507, %508 in 1 : vector<1x16xf32>, vector<1x16xf32>, vector<1x16xf32>, vector<1x16xf32> -> vector<1x64xf32>
    %511 = tpu.concatenate %509, %510 in 1 : vector<1x256xf32>, vector<1x64xf32> -> vector<1x320xf32>
    %512 = vector.extract_strided_slice %488 {offsets = [20, 0], sizes = [1, 16], strides = [1, 1]} : vector<40x16xf32> to vector<1x16xf32>
    %513 = vector.extract_strided_slice %488 {offsets = [21, 0], sizes = [1, 16], strides = [1, 1]} : vector<40x16xf32> to vector<1x16xf32>
    %514 = vector.extract_strided_slice %488 {offsets = [22, 0], sizes = [1, 16], strides = [1, 1]} : vector<40x16xf32> to vector<1x16xf32>
    %515 = vector.extract_strided_slice %488 {offsets = [23, 0], sizes = [1, 16], strides = [1, 1]} : vector<40x16xf32> to vector<1x16xf32>
    %516 = vector.extract_strided_slice %488 {offsets = [24, 0], sizes = [1, 16], strides = [1, 1]} : vector<40x16xf32> to vector<1x16xf32>
    %517 = vector.extract_strided_slice %488 {offsets = [25, 0], sizes = [1, 16], strides = [1, 1]} : vector<40x16xf32> to vector<1x16xf32>
    %518 = vector.extract_strided_slice %488 {offsets = [26, 0], sizes = [1, 16], strides = [1, 1]} : vector<40x16xf32> to vector<1x16xf32>
    %519 = vector.extract_strided_slice %488 {offsets = [27, 0], sizes = [1, 16], strides = [1, 1]} : vector<40x16xf32> to vector<1x16xf32>
    %520 = vector.extract_strided_slice %488 {offsets = [28, 0], sizes = [1, 16], strides = [1, 1]} : vector<40x16xf32> to vector<1x16xf32>
    %521 = vector.extract_strided_slice %488 {offsets = [29, 0], sizes = [1, 16], strides = [1, 1]} : vector<40x16xf32> to vector<1x16xf32>
    %522 = vector.extract_strided_slice %488 {offsets = [30, 0], sizes = [1, 16], strides = [1, 1]} : vector<40x16xf32> to vector<1x16xf32>
    %523 = vector.extract_strided_slice %488 {offsets = [31, 0], sizes = [1, 16], strides = [1, 1]} : vector<40x16xf32> to vector<1x16xf32>
    %524 = vector.extract_strided_slice %488 {offsets = [32, 0], sizes = [1, 16], strides = [1, 1]} : vector<40x16xf32> to vector<1x16xf32>
    %525 = vector.extract_strided_slice %488 {offsets = [33, 0], sizes = [1, 16], strides = [1, 1]} : vector<40x16xf32> to vector<1x16xf32>
    %526 = vector.extract_strided_slice %488 {offsets = [34, 0], sizes = [1, 16], strides = [1, 1]} : vector<40x16xf32> to vector<1x16xf32>
    %527 = vector.extract_strided_slice %488 {offsets = [35, 0], sizes = [1, 16], strides = [1, 1]} : vector<40x16xf32> to vector<1x16xf32>
    %528 = vector.extract_strided_slice %488 {offsets = [36, 0], sizes = [1, 16], strides = [1, 1]} : vector<40x16xf32> to vector<1x16xf32>
    %529 = vector.extract_strided_slice %488 {offsets = [37, 0], sizes = [1, 16], strides = [1, 1]} : vector<40x16xf32> to vector<1x16xf32>
    %530 = vector.extract_strided_slice %488 {offsets = [38, 0], sizes = [1, 16], strides = [1, 1]} : vector<40x16xf32> to vector<1x16xf32>
    %531 = vector.extract_strided_slice %488 {offsets = [39, 0], sizes = [1, 16], strides = [1, 1]} : vector<40x16xf32> to vector<1x16xf32>
    %532 = tpu.concatenate %512, %513, %514, %515, %516, %517, %518, %519, %520, %521, %522, %523, %524, %525, %526, %527 in 1 : vector<1x16xf32>, vector<1x16xf32>, vector<1x16xf32>, vector<1x16xf32>, vector<1x16xf32>, vector<1x16xf32>, vector<1x16xf32>, vector<1x16xf32>, vector<1x16xf32>, vector<1x16xf32>, vector<1x16xf32>, vector<1x16xf32>, vector<1x16xf32>, vector<1x16xf32>, vector<1x16xf32>, vector<1x16xf32> -> vector<1x256xf32>
    %533 = tpu.concatenate %528, %529, %530, %531 in 1 : vector<1x16xf32>, vector<1x16xf32>, vector<1x16xf32>, vector<1x16xf32> -> vector<1x64xf32>
    %534 = tpu.concatenate %532, %533 in 1 : vector<1x256xf32>, vector<1x64xf32> -> vector<1x320xf32>
    %535 = tpu.concatenate %511, %534 in 0 : vector<1x320xf32>, vector<1x320xf32> -> vector<2x320xf32>
    %536 = vector.extract_strided_slice %15 {offsets = [0, 0], sizes = [2, 192], strides = [1, 1]} : vector<2x560xf32> to vector<2x192xf32>
    %537 = vector.extract_strided_slice %15 {offsets = [0, 192], sizes = [2, 144], strides = [1, 1]} : vector<2x560xf32> to vector<2x144xf32>
    %538 = vector.extract_strided_slice %15 {offsets = [0, 336], sizes = [2, 224], strides = [1, 1]} : vector<2x560xf32> to vector<2x224xf32>
    %539 = tpu.concatenate %536, %16, %537, %535, %538 in 1 : vector<2x192xf32>, vector<2x64xf32>, vector<2x144xf32>, vector<2x320xf32>, vector<2x224xf32> -> vector<2x944xf32>
    %540 = vector.extract_strided_slice %15 {offsets = [0, 32], sizes = [2, 32], strides = [1, 1]} : vector<2x560xf32> to vector<2x32xf32>
    %541 = vector.extract_strided_slice %15 {offsets = [0, 192], sizes = [2, 32], strides = [1, 1]} : vector<2x560xf32> to vector<2x32xf32>
    %542 = vector.extract_strided_slice %15 {offsets = [0, 288], sizes = [2, 48], strides = [1, 1]} : vector<2x560xf32> to vector<2x48xf32>
    %543 = tpu.concatenate %540, %541, %542, %535 in 1 : vector<2x32xf32>, vector<2x32xf32>, vector<2x48xf32>, vector<2x320xf32> -> vector<2x432xf32>
    %c0_195 = arith.constant 0 : index
    %c0_196 = arith.constant 0 : index
    %544 = vector.load %arg16[%c0_195, %c0_196] : memref<944x256xbf16, #tpu.memory_space<vmem>>, vector<944x256xbf16>
    %545 = arith.truncf %539 : vector<2x944xf32> to vector<2x944xbf16>
    %cst_197 = arith.constant dense<0.000000e+00> : vector<2x256xf32>
    %546 = tpu.matmul %545, %544, %cst_197 {dimension_numbers = #tpu.dot_dimension_numbers<[1], [0], [0], [1], [0, 0, 1, 1], [], []>} : vector<2x944xbf16>, vector<944x256xbf16>, vector<2x256xf32> -> vector<2x256xf32>
    %c0_198 = arith.constant 0 : index
    %c0_199 = arith.constant 0 : index
    %547 = vector.load %arg17[%c0_198, %c0_199] : memref<1x256xf32, #tpu.memory_space<vmem>>, vector<1x256xf32>
    %548 = vector.broadcast %547 : vector<1x256xf32> to vector<2x256xf32>
    %549 = arith.addf %546, %548 : vector<2x256xf32>
    %cst_200 = arith.constant 0.000000e+00 : f32
    %550 = vector.broadcast %cst_200 : f32 to vector<2x256xf32>
    %551 = arith.maximumf %549, %550 : vector<2x256xf32>
    %c0_201 = arith.constant 0 : index
    %c0_202 = arith.constant 0 : index
    %552 = vector.load %arg20[%c0_201, %c0_202] : memref<2x256xf32, #tpu.memory_space<vmem>>, vector<2x256xf32>
    tpu.vector_store %arg20[%c0_201, %c0_202], %551 {strides = array<i32>} : memref<2x256xf32, #tpu.memory_space<vmem>>, vector<2x256xf32>,
    %c0_203 = arith.constant 0 : index
    %c0_204 = arith.constant 0 : index
    %553 = vector.load %arg18[%c0_203, %c0_204] : memref<432x256xbf16, #tpu.memory_space<vmem>>, vector<432x256xbf16>
    %554 = arith.truncf %543 : vector<2x432xf32> to vector<2x432xbf16>
    %cst_205 = arith.constant dense<0.000000e+00> : vector<2x256xf32>
    %555 = tpu.matmul %554, %553, %cst_205 {dimension_numbers = #tpu.dot_dimension_numbers<[1], [0], [0], [1], [0, 0, 1, 1], [], []>} : vector<2x432xbf16>, vector<432x256xbf16>, vector<2x256xf32> -> vector<2x256xf32>
    %c0_206 = arith.constant 0 : index
    %c0_207 = arith.constant 0 : index
    %556 = vector.load %arg19[%c0_206, %c0_207] : memref<1x256xf32, #tpu.memory_space<vmem>>, vector<1x256xf32>
    %557 = vector.broadcast %556 : vector<1x256xf32> to vector<2x256xf32>
    %558 = arith.addf %555, %557 : vector<2x256xf32>
    %cst_208 = arith.constant 0.000000e+00 : f32
    %559 = vector.broadcast %cst_208 : f32 to vector<2x256xf32>
    %560 = arith.maximumf %558, %559 : vector<2x256xf32>
    %c0_209 = arith.constant 0 : index
    %c0_210 = arith.constant 0 : index
    %561 = vector.load %arg21[%c0_209, %c0_210] : memref<2x256xf32, #tpu.memory_space<vmem>>, vector<2x256xf32>
    tpu.vector_store %arg21[%c0_209, %c0_210], %560 {strides = array<i32>} : memref<2x256xf32, #tpu.memory_space<vmem>>, vector<2x256xf32>,
    return
  }
}

</mosaic_0001>

<llo_original>
// kernel: tpu_custom_call.1
$region0: #{tpu_custom_call.1}
  #allocation0 [shape = 'u32[]', space=smem, size = 0x4, offset = 0x4, fixed_abs, tag = 'smem constant byte address 0x4 - core index']
  #allocation1 [shape = 'u32[144,128]{1,0:T(1,128)}', space=vmem, size = 0x12000, scoped, tag = 'internal scratch']
  %s0 = inlined_call_operand.vmem [shape: f32[2,467], index: 0, kind: input, shape index: {}]
  %s1 = inlined_call_operand.vmem [shape: f32[40,48], index: 1, kind: input, shape index: {}]
  %s2 = inlined_call_operand.vmem [shape: bf16[48,16], index: 2, kind: input, shape index: {}]
  %s3 = inlined_call_operand.vmem [shape: f32[1,16], index: 3, kind: input, shape index: {}]
  %s4 = inlined_call_operand.vmem [shape: bf16[3,16,48], index: 4, kind: input, shape index: {}]
  %s5 = inlined_call_operand.vmem [shape: bf16[3,16,16], index: 5, kind: input, shape index: {}]
  %s6 = inlined_call_operand.vmem [shape: f32[3,1,16], index: 6, kind: input, shape index: {}]
  %s7 = inlined_call_operand.vmem [shape: f32[3,1,16], index: 7, kind: input, shape index: {}]
  %s8 = inlined_call_operand.vmem [shape: bf16[3,16,32], index: 8, kind: input, shape index: {}]
  %s9 = inlined_call_operand.vmem [shape: f32[3,1,32], index: 9, kind: input, shape index: {}]
  %s10 = inlined_call_operand.vmem [shape: bf16[3,32,16], index: 10, kind: input, shape index: {}]
  %s11 = inlined_call_operand.vmem [shape: f32[3,1,16], index: 11, kind: input, shape index: {}]
  %s12 = inlined_call_operand.vmem [shape: f32[3,1,16], index: 12, kind: input, shape index: {}]
  %s13 = inlined_call_operand.vmem [shape: f32[3,1,16], index: 13, kind: input, shape index: {}]
  %s14 = inlined_call_operand.vmem [shape: bf16[467,560], index: 14, kind: input, shape index: {}]
  %s15 = inlined_call_operand.vmem [shape: f32[1,560], index: 15, kind: input, shape index: {}]
  %s16 = inlined_call_operand.vmem [shape: bf16[944,256], index: 16, kind: input, shape index: {}]
  %s17 = inlined_call_operand.vmem [shape: f32[1,256], index: 17, kind: input, shape index: {}]
  %s18 = inlined_call_operand.vmem [shape: bf16[432,256], index: 18, kind: input, shape index: {}]
  %s19 = inlined_call_operand.vmem [shape: f32[1,256], index: 19, kind: input, shape index: {}]
  %s20 = inlined_call_operand.hbm [shape: f32[2,256], index: 20, kind: output, shape index: {0}]
  %s21 = inlined_call_operand.hbm [shape: f32[2,256], index: 21, kind: output, shape index: {1}]
  %22 = xla_tuple %s20, %s21
  %s23 = sld [smem:[#allocation0]]
  $region98: #{tpu_custom_call.1} parent=0
    _
  %s25 = ssub.s32 1, %s23
  %s26 = scalar_select 0, %s25, %s23
  $region1: #{tpu_custom_call.1} parent=0
    #allocation2 [shape = 'u8[2048]{0}', space=vmem, size = 0x800, scoped, tag = 'output window, operand 0, single buffered']
    #allocation3 [shape = 's32[1]{0}', space=sflag, size = 0x4, scoped, tag = 'scoped memory for tpu_custom_call.1']
    #allocation4 [shape = 'u8[2048]{0}', space=vmem, size = 0x800, scoped, tag = 'output window, operand 1, single buffered']
    #allocation5 [shape = 's32[1]{0}', space=sflag, size = 0x4, scoped, tag = 'scoped memory for tpu_custom_call.1']
    %27 = vsyncpa [#allocation3], 0
    %28 = vsyncpa [#allocation5], 0
    // Predicated region
    $region2: #{tpu_custom_call.1} parent=1 // pred_check
      _
    $region3: #{tpu_custom_call.1} parent=1 // pred_check_branch
      %30 = sbr.rel (0) target = $region5
    $region4: #{tpu_custom_call.1} parent=1 // pred_region
      _
    $region5: #{tpu_custom_call.1} parent=1 // pred_fallthru
      _
    // Predicated region
    $region6: #{tpu_custom_call.1} parent=1 // pred_check
      _
    $region7: #{tpu_custom_call.1} parent=1 // pred_check_branch
      %32 = sbr.rel (0) target = $region9
    $region8: #{tpu_custom_call.1} parent=1 // pred_region
      _
    $region9: #{tpu_custom_call.1} parent=1 // pred_fallthru
      _
    // Predicated region
    $region10: #{tpu_custom_call.1} parent=1 // pred_check
      _
    $region11: #{tpu_custom_call.1} parent=1 // pred_check_branch
      %34 = sbr.rel (0) target = $region13
    $region12: #{tpu_custom_call.1} parent=1 // pred_region
      _
    $region13: #{tpu_custom_call.1} parent=1 // pred_fallthru
      _
    // Predicated region
    $region14: #{tpu_custom_call.1} parent=1 // pred_check
      _
    $region15: #{tpu_custom_call.1} parent=1 // pred_check_branch
      %36 = sbr.rel (0) target = $region17
    $region16: #{tpu_custom_call.1} parent=1 // pred_region
      _
    $region17: #{tpu_custom_call.1} parent=1 // pred_fallthru
      _
    // Predicated region
    $region18: #{tpu_custom_call.1} parent=1 // pred_check
      _
    $region19: #{tpu_custom_call.1} parent=1 // pred_check_branch
      %38 = sbr.rel (0) target = $region21
    $region20: #{tpu_custom_call.1} parent=1 // pred_region
      _
    $region21: #{tpu_custom_call.1} parent=1 // pred_fallthru
      _
    // Predicated region
    $region22: #{tpu_custom_call.1} parent=1 // pred_check
      _
    $region23: #{tpu_custom_call.1} parent=1 // pred_check_branch
      %40 = sbr.rel (0) target = $region25
    $region24: #{tpu_custom_call.1} parent=1 // pred_region
      _
    $region25: #{tpu_custom_call.1} parent=1 // pred_fallthru
      _
    // Predicated region
    $region26: #{tpu_custom_call.1} parent=1 // pred_check
      _
    $region27: #{tpu_custom_call.1} parent=1 // pred_check_branch
      %42 = sbr.rel (0) target = $region29
    $region28: #{tpu_custom_call.1} parent=1 // pred_region
      _
    $region29: #{tpu_custom_call.1} parent=1 // pred_fallthru
      _
    // Predicated region
    $region30: #{tpu_custom_call.1} parent=1 // pred_check
      _
    $region31: #{tpu_custom_call.1} parent=1 // pred_check_branch
      %44 = sbr.rel (0) target = $region33
    $region32: #{tpu_custom_call.1} parent=1 // pred_region
      _
    $region33: #{tpu_custom_call.1} parent=1 // pred_fallthru
      _
    // Predicated region
    $region34: #{tpu_custom_call.1} parent=1 // pred_check
      _
    $region35: #{tpu_custom_call.1} parent=1 // pred_check_branch
      %46 = sbr.rel (0) target = $region37
    $region36: #{tpu_custom_call.1} parent=1 // pred_region
      _
    $region37: #{tpu_custom_call.1} parent=1 // pred_fallthru
      _
    // Predicated region
    $region38: #{tpu_custom_call.1} parent=1 // pred_check
      _
    $region39: #{tpu_custom_call.1} parent=1 // pred_check_branch
      %48 = sbr.rel (0) target = $region41
    $region40: #{tpu_custom_call.1} parent=1 // pred_region
      _
    $region41: #{tpu_custom_call.1} parent=1 // pred_fallthru
      _
    // Predicated region
    $region42: #{tpu_custom_call.1} parent=1 // pred_check
      _
    $region43: #{tpu_custom_call.1} parent=1 // pred_check_branch
      %50 = sbr.rel (0) target = $region45
    $region44: #{tpu_custom_call.1} parent=1 // pred_region
      _
    $region45: #{tpu_custom_call.1} parent=1 // pred_fallthru
      _
    // Predicated region
    $region46: #{tpu_custom_call.1} parent=1 // pred_check
      _
    $region47: #{tpu_custom_call.1} parent=1 // pred_check_branch
      %52 = sbr.rel (0) target = $region49
    $region48: #{tpu_custom_call.1} parent=1 // pred_region
      _
    $region49: #{tpu_custom_call.1} parent=1 // pred_fallthru
      _
    // Predicated region
    $region50: #{tpu_custom_call.1} parent=1 // pred_check
      _
    $region51: #{tpu_custom_call.1} parent=1 // pred_check_branch
      %54 = sbr.rel (0) target = $region53
    $region52: #{tpu_custom_call.1} parent=1 // pred_region
      _
    $region53: #{tpu_custom_call.1} parent=1 // pred_fallthru
      _
    // Predicated region
    $region54: #{tpu_custom_call.1} parent=1 // pred_check
      _
    $region55: #{tpu_custom_call.1} parent=1 // pred_check_branch
      %56 = sbr.rel (0) target = $region57
    $region56: #{tpu_custom_call.1} parent=1 // pred_region
      _
    $region57: #{tpu_custom_call.1} parent=1 // pred_fallthru
      _
    // Predicated region
    $region58: #{tpu_custom_call.1} parent=1 // pred_check
      _
    $region59: #{tpu_custom_call.1} parent=1 // pred_check_branch
      %58 = sbr.rel (0) target = $region61
    $region60: #{tpu_custom_call.1} parent=1 // pred_region
      _
    $region61: #{tpu_custom_call.1} parent=1 // pred_fallthru
      _
    // Predicated region
    $region62: #{tpu_custom_call.1} parent=1 // pred_check
      _
    $region63: #{tpu_custom_call.1} parent=1 // pred_check_branch
      %60 = sbr.rel (0) target = $region65
    $region64: #{tpu_custom_call.1} parent=1 // pred_region
      _
    $region65: #{tpu_custom_call.1} parent=1 // pred_fallthru
      _
    // Predicated region
    $region66: #{tpu_custom_call.1} parent=1 // pred_check
      _
    $region67: #{tpu_custom_call.1} parent=1 // pred_check_branch
      %62 = sbr.rel (0) target = $region69
    $region68: #{tpu_custom_call.1} parent=1 // pred_region
      _
    $region69: #{tpu_custom_call.1} parent=1 // pred_fallthru
      _
    // Predicated region
    $region70: #{tpu_custom_call.1} parent=1 // pred_check
      _
    $region71: #{tpu_custom_call.1} parent=1 // pred_check_branch
      %64 = sbr.rel (0) target = $region73
    $region72: #{tpu_custom_call.1} parent=1 // pred_region
      _
    $region73: #{tpu_custom_call.1} parent=1 // pred_fallthru
      _
    // Predicated region
    $region74: #{tpu_custom_call.1} parent=1 // pred_check
      _
    $region75: #{tpu_custom_call.1} parent=1 // pred_check_branch
      %66 = sbr.rel (0) target = $region77
    $region76: #{tpu_custom_call.1} parent=1 // pred_region
      _
    $region77: #{tpu_custom_call.1} parent=1 // pred_fallthru
      _
    // Predicated region
    $region78: #{tpu_custom_call.1} parent=1 // pred_check
      _
    $region79: #{tpu_custom_call.1} parent=1 // pred_check_branch
      %68 = sbr.rel (0) target = $region81
    $region80: #{tpu_custom_call.1} parent=1 // pred_region
      _
    $region81: #{tpu_custom_call.1} parent=1 // pred_fallthru
      _
    %v70 = vld [vmem:[%s0] sm:$0xff]
    %v71 = vlaneseq
    %v72 = vand.u32 %v71, 127
    %v73 = vadd.s32 %v72, 128
    %v74 = vadd.s32 %v72, 256
    %v75 = vadd.s32 %v72, 384
    %vm76 = vcmp.lt.s32.totalorder %v72, 10
    %vm77 = vcmp.lt.s32.totalorder %v73, 10
    %vm78 = vcmp.lt.s32.totalorder %v74, 10
    %vm79 = vcmp.lt.s32.totalorder %v75, 10
    %v80 = vadd.f32 %v70, 1.0
    %v81 = vlog2.pop %v80
    %v82 = vmul.f32 %v81, 0.6931472
    %v84 = vcombine.high %v82, %v82
    %v86 = vunpack.c.l.s4 1983009808
    %v87 = vunpack.c.0.s8 %v86
    %v88 = vlaneseq
    %v89 = vshrl.u32 %v88, 7
    %v90 = vsub.s32 %v87, %v89
    %v91 = vrot.slane %v82, %v90
    %v93 = vunpack.c.l.s4 1983009808
    %v94 = vunpack.c.0.s8 %v93
    %v95 = vlaneseq
    %v96 = vshrl.u32 %v95, 7
    %v97 = vsub.s32 %v94, %v96
    %v98 = vrot.slane %v84, %v97
    %v99 = vcombine.high %v91, %v91
    %v100 = vcombine.high %v98, %v98
    %v106 = vcombine.high %v70, %v70
    %v108 = vunpack.c.l.s4 1983009808
    %v109 = vunpack.c.0.s8 %v108
    %v110 = vlaneseq
    %v111 = vshrl.u32 %v110, 7
    %v112 = vsub.s32 %v109, %v111
    %v113 = vrot.slane %v70, %v112
    %v115 = vunpack.c.l.s4 1983009808
    %v116 = vunpack.c.0.s8 %v115
    %v117 = vlaneseq
    %v118 = vshrl.u32 %v117, 7
    %v119 = vsub.s32 %v116, %v118
    %v120 = vrot.slane %v106, %v119
    %v121 = vcombine.high %v113, %v113
    %v122 = vcombine.high %v120, %v120
    %v127 = vsel %vm76, %v91, %v113
    %v128 = vsel %vm77, %v99, %v121
    %v129 = vsel %vm78, %v98, %v120
    %v130 = vsel %vm79, %v100, %v122
    %v131 = vld [vmem:[%s14] sm:$0xff]
    %v132 = vld [vmem:[%s14 + $0x8] sm:$0xff]
    %v133 = vld [vmem:[%s14 + $0x10] sm:$0xf]
    %v134 = vld [vmem:[%s14 + $0x14] sm:$0xff]
    %v135 = vld [vmem:[%s14 + $0x1c] sm:$0xff]
    %v136 = vld [vmem:[%s14 + $0x24] sm:$0xf]
    %v137 = vld [vmem:[%s14 + $0x28] sm:$0xff]
    %v138 = vld [vmem:[%s14 + $0x30] sm:$0xff]
    %v139 = vld [vmem:[%s14 + $0x38] sm:$0xf]
    %v140 = vld [vmem:[%s14 + $0x3c] sm:$0xff]
    %v141 = vld [vmem:[%s14 + $0x44] sm:$0xff]
    %v142 = vld [vmem:[%s14 + $0x4c] sm:$0xf]
    %v143 = vld [vmem:[%s14 + $0x50] sm:$0xff]
    %v144 = vld [vmem:[%s14 + $0x58] sm:$0xff]
    %v145 = vld [vmem:[%s14 + $0x60] sm:$0xf]
    %v146 = vld [vmem:[%s14 + $0x64] sm:$0xff]
    %v147 = vld [vmem:[%s14 + $0x6c] sm:$0xff]
    %v148 = vld [vmem:[%s14 + $0x74] sm:$0xf]
    %v149 = vld [vmem:[%s14 + $0x78] sm:$0xff]
    %v150 = vld [vmem:[%s14 + $0x80] sm:$0xff]
    %v151 = vld [vmem:[%s14 + $0x88] sm:$0xf]
    %v152 = vld [vmem:[%s14 + $0x8c] sm:$0xff]
    %v153 = vld [vmem:[%s14 + $0x94] sm:$0xff]
    %v154 = vld [vmem:[%s14 + $0x9c] sm:$0xf]
    %v155 = vld [vmem:[%s14 + $0xa0] sm:$0xff]
    %v156 = vld [vmem:[%s14 + $0xa8] sm:$0xff]
    %v157 = vld [vmem:[%s14 + $0xb0] sm:$0xf]
    %v158 = vld [vmem:[%s14 + $0xb4] sm:$0xff]
    %v159 = vld [vmem:[%s14 + $0xbc] sm:$0xff]
    %v160 = vld [vmem:[%s14 + $0xc4] sm:$0xf]
    %v161 = vld [vmem:[%s14 + $0xc8] sm:$0xff]
    %v162 = vld [vmem:[%s14 + $0xd0] sm:$0xff]
    %v163 = vld [vmem:[%s14 + $0xd8] sm:$0xf]
    %v164 = vld [vmem:[%s14 + $0xdc] sm:$0xff]
    %v165 = vld [vmem:[%s14 + $0xe4] sm:$0xff]
    %v166 = vld [vmem:[%s14 + $0xec] sm:$0xf]
    %v167 = vld [vmem:[%s14 + $0xf0] sm:$0xff]
    %v168 = vld [vmem:[%s14 + $0xf8] sm:$0xff]
    %v169 = vld [vmem:[%s14 + $0x100] sm:$0xf]
    %v170 = vld [vmem:[%s14 + $0x104] sm:$0xff]
    %v171 = vld [vmem:[%s14 + $0x10c] sm:$0xff]
    %v172 = vld [vmem:[%s14 + $0x114] sm:$0xf]
    %v173 = vld [vmem:[%s14 + $0x118] sm:$0xff]
    %v174 = vld [vmem:[%s14 + $0x120] sm:$0xff]
    %v175 = vld [vmem:[%s14 + $0x128] sm:$0xf]
    %v176 = vld [vmem:[%s14 + $0x12c] sm:$0xff]
    %v177 = vld [vmem:[%s14 + $0x134] sm:$0xff]
    %v178 = vld [vmem:[%s14 + $0x13c] sm:$0xf]
    %v179 = vld [vmem:[%s14 + $0x140] sm:$0xff]
    %v180 = vld [vmem:[%s14 + $0x148] sm:$0xff]
    %v181 = vld [vmem:[%s14 + $0x150] sm:$0xf]
    %v182 = vld [vmem:[%s14 + $0x154] sm:$0xff]
    %v183 = vld [vmem:[%s14 + $0x15c] sm:$0xff]
    %v184 = vld [vmem:[%s14 + $0x164] sm:$0xf]
    %v185 = vld [vmem:[%s14 + $0x168] sm:$0xff]
    %v186 = vld [vmem:[%s14 + $0x170] sm:$0xff]
    %v187 = vld [vmem:[%s14 + $0x178] sm:$0xf]
    %v188 = vld [vmem:[%s14 + $0x17c] sm:$0xff]
    %v189 = vld [vmem:[%s14 + $0x184] sm:$0xff]
    %v190 = vld [vmem:[%s14 + $0x18c] sm:$0xf]
    %v191 = vld [vmem:[%s14 + $0x190] sm:$0xff]
    %v192 = vld [vmem:[%s14 + $0x198] sm:$0xff]
    %v193 = vld [vmem:[%s14 + $0x1a0] sm:$0xf]
    %v194 = vld [vmem:[%s14 + $0x1a4] sm:$0xff]
    %v195 = vld [vmem:[%s14 + $0x1ac] sm:$0xff]
    %v196 = vld [vmem:[%s14 + $0x1b4] sm:$0xf]
    %v197 = vld [vmem:[%s14 + $0x1b8] sm:$0xff]
    %v198 = vld [vmem:[%s14 + $0x1c0] sm:$0xff]
    %v199 = vld [vmem:[%s14 + $0x1c8] sm:$0xf]
    %v200 = vld [vmem:[%s14 + $0x1cc] sm:$0xff]
    %v201 = vld [vmem:[%s14 + $0x1d4] sm:$0xff]
    %v202 = vld [vmem:[%s14 + $0x1dc] sm:$0xf]
    %v203 = vld [vmem:[%s14 + $0x1e0] sm:$0xff]
    %v204 = vld [vmem:[%s14 + $0x1e8] sm:$0xff]
    %v205 = vld [vmem:[%s14 + $0x1f0] sm:$0xf]
    %v206 = vld [vmem:[%s14 + $0x1f4] sm:$0xff]
    %v207 = vld [vmem:[%s14 + $0x1fc] sm:$0xff]
    %v208 = vld [vmem:[%s14 + $0x204] sm:$0xf]
    %v209 = vld [vmem:[%s14 + $0x208] sm:$0xff]
    %v210 = vld [vmem:[%s14 + $0x210] sm:$0xff]
    %v211 = vld [vmem:[%s14 + $0x218] sm:$0xf]
    %v212 = vld [vmem:[%s14 + $0x21c] sm:$0xff]
    %v213 = vld [vmem:[%s14 + $0x224] sm:$0xff]
    %v214 = vld [vmem:[%s14 + $0x22c] sm:$0xf]
    %v215 = vld [vmem:[%s14 + $0x230] sm:$0xff]
    %v216 = vld [vmem:[%s14 + $0x238] sm:$0xff]
    %v217 = vld [vmem:[%s14 + $0x240] sm:$0xf]
    %v218 = vld [vmem:[%s14 + $0x244] sm:$0xff]
    %v219 = vld [vmem:[%s14 + $0x24c] sm:$0xff]
    %v220 = vld [vmem:[%s14 + $0x254] sm:$0xf]
    %v221 = vld [vmem:[%s14 + $0x258] sm:$0xff]
    %v222 = vld [vmem:[%s14 + $0x260] sm:$0xff]
    %v223 = vld [vmem:[%s14 + $0x268] sm:$0xf]
    %v224 = vld [vmem:[%s14 + $0x26c] sm:$0xff]
    %v225 = vld [vmem:[%s14 + $0x274] sm:$0xff]
    %v226 = vld [vmem:[%s14 + $0x27c] sm:$0xf]
    %v227 = vld [vmem:[%s14 + $0x280] sm:$0xff]
    %v228 = vld [vmem:[%s14 + $0x288] sm:$0xff]
    %v229 = vld [vmem:[%s14 + $0x290] sm:$0xf]
    %v230 = vld [vmem:[%s14 + $0x294] sm:$0xff]
    %v231 = vld [vmem:[%s14 + $0x29c] sm:$0xff]
    %v232 = vld [vmem:[%s14 + $0x2a4] sm:$0xf]
    %v233 = vld [vmem:[%s14 + $0x2a8] sm:$0xff]
    %v234 = vld [vmem:[%s14 + $0x2b0] sm:$0xff]
    %v235 = vld [vmem:[%s14 + $0x2b8] sm:$0xf]
    %v236 = vld [vmem:[%s14 + $0x2bc] sm:$0xff]
    %v237 = vld [vmem:[%s14 + $0x2c4] sm:$0xff]
    %v238 = vld [vmem:[%s14 + $0x2cc] sm:$0xf]
    %v239 = vld [vmem:[%s14 + $0x2d0] sm:$0xff]
    %v240 = vld [vmem:[%s14 + $0x2d8] sm:$0xff]
    %v241 = vld [vmem:[%s14 + $0x2e0] sm:$0xf]
    %v242 = vld [vmem:[%s14 + $0x2e4] sm:$0xff]
    %v243 = vld [vmem:[%s14 + $0x2ec] sm:$0xff]
    %v244 = vld [vmem:[%s14 + $0x2f4] sm:$0xf]
    %v245 = vld [vmem:[%s14 + $0x2f8] sm:$0xff]
    %v246 = vld [vmem:[%s14 + $0x300] sm:$0xff]
    %v247 = vld [vmem:[%s14 + $0x308] sm:$0xf]
    %v248 = vld [vmem:[%s14 + $0x30c] sm:$0xff]
    %v249 = vld [vmem:[%s14 + $0x314] sm:$0xff]
    %v250 = vld [vmem:[%s14 + $0x31c] sm:$0xf]
    %v251 = vld [vmem:[%s14 + $0x320] sm:$0xff]
    %v252 = vld [vmem:[%s14 + $0x328] sm:$0xff]
    %v253 = vld [vmem:[%s14 + $0x330] sm:$0xf]
    %v254 = vld [vmem:[%s14 + $0x334] sm:$0xff]
    %v255 = vld [vmem:[%s14 + $0x33c] sm:$0xff]
    %v256 = vld [vmem:[%s14 + $0x344] sm:$0xf]
    %v257 = vld [vmem:[%s14 + $0x348] sm:$0xff]
    %v258 = vld [vmem:[%s14 + $0x350] sm:$0xff]
    %v259 = vld [vmem:[%s14 + $0x358] sm:$0xf]
    %v260 = vld [vmem:[%s14 + $0x35c] sm:$0xff]
    %v261 = vld [vmem:[%s14 + $0x364] sm:$0xff]
    %v262 = vld [vmem:[%s14 + $0x36c] sm:$0xf]
    %v263 = vld [vmem:[%s14 + $0x370] sm:$0xff]
    %v264 = vld [vmem:[%s14 + $0x378] sm:$0xff]
    %v265 = vld [vmem:[%s14 + $0x380] sm:$0xf]
    %v266 = vld [vmem:[%s14 + $0x384] sm:$0xff]
    %v267 = vld [vmem:[%s14 + $0x38c] sm:$0xff]
    %v268 = vld [vmem:[%s14 + $0x394] sm:$0xf]
    %v269 = vld [vmem:[%s14 + $0x398] sm:$0xff]
    %v270 = vld [vmem:[%s14 + $0x3a0] sm:$0xff]
    %v271 = vld [vmem:[%s14 + $0x3a8] sm:$0xf]
    %v272 = vld [vmem:[%s14 + $0x3ac] sm:$0xff]
    %v273 = vld [vmem:[%s14 + $0x3b4] sm:$0xff]
    %v274 = vld [vmem:[%s14 + $0x3bc] sm:$0xf]
    %v275 = vld [vmem:[%s14 + $0x3c0] sm:$0xff]
    %v276 = vld [vmem:[%s14 + $0x3c8] sm:$0xff]
    %v277 = vld [vmem:[%s14 + $0x3d0] sm:$0xf]
    %v278 = vld [vmem:[%s14 + $0x3d4] sm:$0xff]
    %v279 = vld [vmem:[%s14 + $0x3dc] sm:$0xff]
    %v280 = vld [vmem:[%s14 + $0x3e4] sm:$0xf]
    %v281 = vld [vmem:[%s14 + $0x3e8] sm:$0xff]
    %v282 = vld [vmem:[%s14 + $0x3f0] sm:$0xff]
    %v283 = vld [vmem:[%s14 + $0x3f8] sm:$0xf]
    %v284 = vld [vmem:[%s14 + $0x3fc] sm:$0xff]
    %v285 = vld [vmem:[%s14 + $0x404] sm:$0xff]
    %v286 = vld [vmem:[%s14 + $0x40c] sm:$0xf]
    %v287 = vld [vmem:[%s14 + $0x410] sm:$0xff]
    %v288 = vld [vmem:[%s14 + $0x418] sm:$0xff]
    %v289 = vld [vmem:[%s14 + $0x420] sm:$0xf]
    %v290 = vld [vmem:[%s14 + $0x424] sm:$0xff]
    %v291 = vld [vmem:[%s14 + $0x42c] sm:$0xff]
    %v292 = vld [vmem:[%s14 + $0x434] sm:$0xf]
    %v293 = vld [vmem:[%s14 + $0x438] sm:$0xff]
    %v294 = vld [vmem:[%s14 + $0x440] sm:$0xff]
    %v295 = vld [vmem:[%s14 + $0x448] sm:$0xf]
    %v296 = vld [vmem:[%s14 + $0x44c] sm:$0xff]
    %v297 = vld [vmem:[%s14 + $0x454] sm:$0xff]
    %v298 = vld [vmem:[%s14 + $0x45c] sm:$0xf]
    %v299 = vld [vmem:[%s14 + $0x460] sm:$0xff]
    %v300 = vld [vmem:[%s14 + $0x468] sm:$0xff]
    %v301 = vld [vmem:[%s14 + $0x470] sm:$0xf]
    %v302 = vld [vmem:[%s14 + $0x474] sm:$0xff]
    %v303 = vld [vmem:[%s14 + $0x47c] sm:$0xff]
    %v304 = vld [vmem:[%s14 + $0x484] sm:$0xf]
    %v305 = vld [vmem:[%s14 + $0x488] sm:$0x33]
    %v306 = vld [vmem:[%s14 + $0x490] sm:$0x33]
    %v307 = vld [vmem:[%s14 + $0x498] sm:$0x3]
    %v308 = vpack.c.bf16 %v127, %v127
    %v309 = vpack.c.bf16 %v128, %v128
    %v310 = vpack.c.bf16 %v129, %v129
    %v311 = vpack.c.bf16 %v130, %v130
    %v312 = vld [vmem:[%s15] sm:$0x1f]
    %v314 = vlaneseq
    %v315 = vshrl.u32 %v314, 7
    %v316 = vsub.s32 0, %v315
    %v317 = vrot.slane %v312, %v316
    %v318 = vlaneseq
    %v319 = vshrl.u32 %v318, 7
    %v320 = vsub.s32 1, %v319
    %v321 = vrot.slane %v312, %v320
    %v322 = vlaneseq
    %v323 = vshrl.u32 %v322, 7
    %v324 = vsub.s32 2, %v323
    %v325 = vrot.slane %v312, %v324
    %v326 = vlaneseq
    %v327 = vshrl.u32 %v326, 7
    %v328 = vsub.s32 3, %v327
    %v329 = vrot.slane %v312, %v328
    %v330 = vlaneseq
    %v331 = vshrl.u32 %v330, 7
    %v332 = vsub.s32 4, %v331
    %v333 = vrot.slane %v312, %v332
    %v516 = vunpack.c.l.b16 %v131
    %v517 = vunpack.c.h.b16 %v131
    %v518 = vunpack.c.l.b16 %v132
    %v519 = vunpack.c.h.b16 %v132
    %v520 = vunpack.c.l.b16 %v133
    %v521 = vunpack.c.l.b16 %v134
    %v522 = vunpack.c.h.b16 %v134
    %v523 = vunpack.c.l.b16 %v135
    %v524 = vunpack.c.h.b16 %v135
    %v525 = vunpack.c.l.b16 %v136
    %v526 = vunpack.c.l.b16 %v137
    %v527 = vunpack.c.h.b16 %v137
    %v528 = vunpack.c.l.b16 %v138
    %v529 = vunpack.c.h.b16 %v138
    %v530 = vunpack.c.l.b16 %v139
    %v531 = vunpack.c.l.b16 %v140
    %v532 = vunpack.c.h.b16 %v140
    %v533 = vunpack.c.l.b16 %v141
    %v534 = vunpack.c.h.b16 %v141
    %v535 = vunpack.c.l.b16 %v142
    %v536 = vunpack.c.l.b16 %v143
    %v537 = vunpack.c.h.b16 %v143
    %v538 = vunpack.c.l.b16 %v144
    %v539 = vunpack.c.h.b16 %v144
    %v540 = vunpack.c.l.b16 %v145
    %v541 = vunpack.c.l.b16 %v146
    %v542 = vunpack.c.h.b16 %v146
    %v543 = vunpack.c.l.b16 %v147
    %v544 = vunpack.c.h.b16 %v147
    %v545 = vunpack.c.l.b16 %v148
    %v546 = vunpack.c.l.b16 %v149
    %v547 = vunpack.c.h.b16 %v149
    %v548 = vunpack.c.l.b16 %v150
    %v549 = vunpack.c.h.b16 %v150
    %v550 = vunpack.c.l.b16 %v151
    %v551 = vunpack.c.l.b16 %v152
    %v552 = vunpack.c.h.b16 %v152
    %v553 = vunpack.c.l.b16 %v153
    %v554 = vunpack.c.h.b16 %v153
    %v555 = vunpack.c.l.b16 %v154
    %v556 = vunpack.c.l.b16 %v155
    %v557 = vunpack.c.h.b16 %v155
    %v558 = vunpack.c.l.b16 %v156
    %v559 = vunpack.c.h.b16 %v156
    %v560 = vunpack.c.l.b16 %v157
    %v561 = vunpack.c.l.b16 %v158
    %v562 = vunpack.c.h.b16 %v158
    %v563 = vunpack.c.l.b16 %v159
    %v564 = vunpack.c.h.b16 %v159
    %v565 = vunpack.c.l.b16 %v160
    %v566 = vunpack.c.l.b16 %v161
    %v567 = vunpack.c.h.b16 %v161
    %v568 = vunpack.c.l.b16 %v162
    %v569 = vunpack.c.h.b16 %v162
    %v570 = vunpack.c.l.b16 %v163
    %v571 = vunpack.c.l.b16 %v164
    %v572 = vunpack.c.h.b16 %v164
    %v573 = vunpack.c.l.b16 %v165
    %v574 = vunpack.c.h.b16 %v165
    %v575 = vunpack.c.l.b16 %v166
    %v576 = vunpack.c.l.b16 %v167
    %v577 = vunpack.c.h.b16 %v167
    %v578 = vunpack.c.l.b16 %v168
    %v579 = vunpack.c.h.b16 %v168
    %v580 = vunpack.c.l.b16 %v169
    %v581 = vunpack.c.l.b16 %v170
    %v582 = vunpack.c.h.b16 %v170
    %v583 = vunpack.c.l.b16 %v171
    %v584 = vunpack.c.h.b16 %v171
    %v585 = vunpack.c.l.b16 %v172
    %v586 = vunpack.c.l.b16 %v173
    %v587 = vunpack.c.h.b16 %v173
    %v588 = vunpack.c.l.b16 %v174
    %v589 = vunpack.c.h.b16 %v174
    %v590 = vunpack.c.l.b16 %v175
    %v591 = vunpack.c.l.b16 %v176
    %v592 = vunpack.c.h.b16 %v176
    %v593 = vunpack.c.l.b16 %v177
    %v594 = vunpack.c.h.b16 %v177
    %v595 = vunpack.c.l.b16 %v178
    %v596 = vunpack.c.l.b16 %v179
    %v597 = vunpack.c.h.b16 %v179
    %v598 = vunpack.c.l.b16 %v180
    %v599 = vunpack.c.h.b16 %v180
    %v600 = vunpack.c.l.b16 %v181
    %v601 = vunpack.c.l.b16 %v182
    %v602 = vunpack.c.h.b16 %v182
    %v603 = vunpack.c.l.b16 %v183
    %v604 = vunpack.c.h.b16 %v183
    %v605 = vunpack.c.l.b16 %v184
    %v606 = vunpack.c.l.b16 %v185
    %v607 = vunpack.c.h.b16 %v185
    %v608 = vunpack.c.l.b16 %v186
    %v609 = vunpack.c.h.b16 %v186
    %v610 = vunpack.c.l.b16 %v187
    %v611 = vunpack.c.l.b16 %v188
    %v612 = vunpack.c.h.b16 %v188
    %v613 = vunpack.c.l.b16 %v189
    %v614 = vunpack.c.h.b16 %v189
    %v615 = vunpack.c.l.b16 %v190
    %v616 = vunpack.c.l.b16 %v191
    %v617 = vunpack.c.h.b16 %v191
    %v618 = vunpack.c.l.b16 %v192
    %v619 = vunpack.c.h.b16 %v192
    %v620 = vunpack.c.l.b16 %v193
    %v621 = vunpack.c.l.b16 %v194
    %v622 = vunpack.c.h.b16 %v194
    %v623 = vunpack.c.l.b16 %v195
    %v624 = vunpack.c.h.b16 %v195
    %v625 = vunpack.c.l.b16 %v196
    %v626 = vunpack.c.l.b16 %v197
    %v627 = vunpack.c.h.b16 %v197
    %v628 = vunpack.c.l.b16 %v198
    %v629 = vunpack.c.h.b16 %v198
    %v630 = vunpack.c.l.b16 %v199
    %v631 = vunpack.c.l.b16 %v200
    %v632 = vunpack.c.h.b16 %v200
    %v633 = vunpack.c.l.b16 %v201
    %v634 = vunpack.c.h.b16 %v201
    %v635 = vunpack.c.l.b16 %v202
    %v636 = vunpack.c.l.b16 %v203
    %v637 = vunpack.c.h.b16 %v203
    %v638 = vunpack.c.l.b16 %v204
    %v639 = vunpack.c.h.b16 %v204
    %v640 = vunpack.c.l.b16 %v205
    %v641 = vunpack.c.l.b16 %v206
    %v642 = vunpack.c.h.b16 %v206
    %v643 = vunpack.c.l.b16 %v207
    %v644 = vunpack.c.h.b16 %v207
    %v645 = vunpack.c.l.b16 %v208
    %v646 = vunpack.c.l.b16 %v209
    %v647 = vunpack.c.h.b16 %v209
    %v648 = vunpack.c.l.b16 %v210
    %v649 = vunpack.c.h.b16 %v210
    %v650 = vunpack.c.l.b16 %v211
    %v651 = vunpack.c.l.b16 %v212
    %v652 = vunpack.c.h.b16 %v212
    %v653 = vunpack.c.l.b16 %v213
    %v654 = vunpack.c.h.b16 %v213
    %v655 = vunpack.c.l.b16 %v214
    %v656 = vunpack.c.l.b16 %v215
    %v657 = vunpack.c.h.b16 %v215
    %v658 = vunpack.c.l.b16 %v216
    %v659 = vunpack.c.h.b16 %v216
    %v660 = vunpack.c.l.b16 %v217
    %v661 = vunpack.c.l.b16 %v218
    %v662 = vunpack.c.h.b16 %v218
    %v663 = vunpack.c.l.b16 %v219
    %v664 = vunpack.c.h.b16 %v219
    %v665 = vunpack.c.l.b16 %v220
    %v666 = vunpack.c.l.b16 %v221
    %v667 = vunpack.c.h.b16 %v221
    %v668 = vunpack.c.l.b16 %v222
    %v669 = vunpack.c.h.b16 %v222
    %v670 = vunpack.c.l.b16 %v223
    %v671 = vunpack.c.l.b16 %v224
    %v672 = vunpack.c.h.b16 %v224
    %v673 = vunpack.c.l.b16 %v225
    %v674 = vunpack.c.h.b16 %v225
    %v675 = vunpack.c.l.b16 %v226
    %v676 = vunpack.c.l.b16 %v227
    %v677 = vunpack.c.h.b16 %v227
    %v678 = vunpack.c.l.b16 %v228
    %v679 = vunpack.c.h.b16 %v228
    %v680 = vunpack.c.l.b16 %v229
    %v681 = vunpack.c.l.b16 %v230
    %v682 = vunpack.c.h.b16 %v230
    %v683 = vunpack.c.l.b16 %v231
    %v684 = vunpack.c.h.b16 %v231
    %v685 = vunpack.c.l.b16 %v232
    %v686 = vunpack.c.l.b16 %v233
    %v687 = vunpack.c.h.b16 %v233
    %v688 = vunpack.c.l.b16 %v234
    %v689 = vunpack.c.h.b16 %v234
    %v690 = vunpack.c.l.b16 %v235
    %v691 = vunpack.c.l.b16 %v236
    %v692 = vunpack.c.h.b16 %v236
    %v693 = vunpack.c.l.b16 %v237
    %v694 = vunpack.c.h.b16 %v237
    %v695 = vunpack.c.l.b16 %v238
    %v696 = vunpack.c.l.b16 %v239
    %v697 = vunpack.c.h.b16 %v239
    %v698 = vunpack.c.l.b16 %v240
    %v699 = vunpack.c.h.b16 %v240
    %v700 = vunpack.c.l.b16 %v241
    %v701 = vunpack.c.l.b16 %v242
    %v702 = vunpack.c.h.b16 %v242
    %v703 = vunpack.c.l.b16 %v243
    %v704 = vunpack.c.h.b16 %v243
    %v705 = vunpack.c.l.b16 %v244
    %v706 = vunpack.c.l.b16 %v245
    %v707 = vunpack.c.h.b16 %v245
    %v708 = vunpack.c.l.b16 %v246
    %v709 = vunpack.c.h.b16 %v246
    %v710 = vunpack.c.l.b16 %v247
    %v711 = vunpack.c.l.b16 %v248
    %v712 = vunpack.c.h.b16 %v248
    %v713 = vunpack.c.l.b16 %v249
    %v714 = vunpack.c.h.b16 %v249
    %v715 = vunpack.c.l.b16 %v250
    %v716 = vunpack.c.l.b16 %v251
    %v717 = vunpack.c.h.b16 %v251
    %v718 = vunpack.c.l.b16 %v252
    %v719 = vunpack.c.h.b16 %v252
    %v720 = vunpack.c.l.b16 %v253
    %v721 = vunpack.c.l.b16 %v254
    %v722 = vunpack.c.h.b16 %v254
    %v723 = vunpack.c.l.b16 %v255
    %v724 = vunpack.c.h.b16 %v255
    %v725 = vunpack.c.l.b16 %v256
    %v726 = vunpack.c.l.b16 %v257
    %v727 = vunpack.c.h.b16 %v257
    %v728 = vunpack.c.l.b16 %v258
    %v729 = vunpack.c.h.b16 %v258
    %v730 = vunpack.c.l.b16 %v259
    %v731 = vunpack.c.l.b16 %v260
    %v732 = vunpack.c.h.b16 %v260
    %v733 = vunpack.c.l.b16 %v261
    %v734 = vunpack.c.h.b16 %v261
    %v735 = vunpack.c.l.b16 %v262
    %v736 = vunpack.c.l.b16 %v263
    %v737 = vunpack.c.h.b16 %v263
    %v738 = vunpack.c.l.b16 %v264
    %v739 = vunpack.c.h.b16 %v264
    %v740 = vunpack.c.l.b16 %v265
    %v741 = vunpack.c.l.b16 %v266
    %v742 = vunpack.c.h.b16 %v266
    %v743 = vunpack.c.l.b16 %v267
    %v744 = vunpack.c.h.b16 %v267
    %v745 = vunpack.c.l.b16 %v268
    %v746 = vunpack.c.l.b16 %v269
    %v747 = vunpack.c.h.b16 %v269
    %v748 = vunpack.c.l.b16 %v270
    %v749 = vunpack.c.h.b16 %v270
    %v750 = vunpack.c.l.b16 %v271
    %v751 = vunpack.c.l.b16 %v272
    %v752 = vunpack.c.h.b16 %v272
    %v753 = vunpack.c.l.b16 %v273
    %v754 = vunpack.c.h.b16 %v273
    %v755 = vunpack.c.l.b16 %v274
    %v756 = vunpack.c.l.b16 %v275
    %v757 = vunpack.c.h.b16 %v275
    %v758 = vunpack.c.l.b16 %v276
    %v759 = vunpack.c.h.b16 %v276
    %v760 = vunpack.c.l.b16 %v277
    %v761 = vunpack.c.l.b16 %v278
    %v762 = vunpack.c.h.b16 %v278
    %v763 = vunpack.c.l.b16 %v279
    %v764 = vunpack.c.h.b16 %v279
    %v765 = vunpack.c.l.b16 %v280
    %v766 = vunpack.c.l.b16 %v281
    %v767 = vunpack.c.h.b16 %v281
    %v768 = vunpack.c.l.b16 %v282
    %v769 = vunpack.c.h.b16 %v282
    %v770 = vunpack.c.l.b16 %v283
    %v771 = vunpack.c.l.b16 %v284
    %v772 = vunpack.c.h.b16 %v284
    %v773 = vunpack.c.l.b16 %v285
    %v774 = vunpack.c.h.b16 %v285
    %v775 = vunpack.c.l.b16 %v286
    %v776 = vunpack.c.l.b16 %v287
    %v777 = vunpack.c.h.b16 %v287
    %v778 = vunpack.c.l.b16 %v288
    %v779 = vunpack.c.h.b16 %v288
    %v780 = vunpack.c.l.b16 %v289
    %v781 = vunpack.c.l.b16 %v290
    %v782 = vunpack.c.h.b16 %v290
    %v783 = vunpack.c.l.b16 %v291
    %v784 = vunpack.c.h.b16 %v291
    %v785 = vunpack.c.l.b16 %v292
    %v786 = vunpack.c.l.b16 %v293
    %v787 = vunpack.c.h.b16 %v293
    %v788 = vunpack.c.l.b16 %v294
    %v789 = vunpack.c.h.b16 %v294
    %v790 = vunpack.c.l.b16 %v295
    %v791 = vunpack.c.l.b16 %v296
    %v792 = vunpack.c.h.b16 %v296
    %v793 = vunpack.c.l.b16 %v297
    %v794 = vunpack.c.h.b16 %v297
    %v795 = vunpack.c.l.b16 %v298
    %v796 = vunpack.c.l.b16 %v299
    %v797 = vunpack.c.h.b16 %v299
    %v798 = vunpack.c.l.b16 %v300
    %v799 = vunpack.c.h.b16 %v300
    %v800 = vunpack.c.l.b16 %v301
    %v801 = vunpack.c.l.b16 %v302
    %v802 = vunpack.c.h.b16 %v302
    %v803 = vunpack.c.l.b16 %v303
    %v804 = vunpack.c.h.b16 %v303
    %v805 = vunpack.c.l.b16 %v304
    %v806 = vunpack.c.l.b16 %v305
    %v807 = vunpack.c.h.b16 %v305
    %v808 = vunpack.c.l.b16 %v306
    %v809 = vunpack.c.h.b16 %v306
    %v810 = vunpack.c.l.b16 %v307
    %v811 = vpack.c.b16 %v521, %v516
    %v812 = vpack.c.b16 %v522, %v517
    %v813 = vpack.c.b16 %v523, %v518
    %v814 = vpack.c.b16 %v524, %v519
    %v815 = vpack.c.b16 %v525, %v520
    %v816 = vpack.c.b16 %v531, %v526
    %v817 = vpack.c.b16 %v532, %v527
    %v818 = vpack.c.b16 %v533, %v528
    %v819 = vpack.c.b16 %v534, %v529
    %v820 = vpack.c.b16 %v535, %v530
    %v821 = vpack.c.b16 %v541, %v536
    %v822 = vpack.c.b16 %v542, %v537
    %v823 = vpack.c.b16 %v543, %v538
    %v824 = vpack.c.b16 %v544, %v539
    %v825 = vpack.c.b16 %v545, %v540
    %v826 = vpack.c.b16 %v551, %v546
    %v827 = vpack.c.b16 %v552, %v547
    %v828 = vpack.c.b16 %v553, %v548
    %v829 = vpack.c.b16 %v554, %v549
    %v830 = vpack.c.b16 %v555, %v550
    %v831 = vpack.c.b16 %v561, %v556
    %v832 = vpack.c.b16 %v562, %v557
    %v833 = vpack.c.b16 %v563, %v558
    %v834 = vpack.c.b16 %v564, %v559
    %v835 = vpack.c.b16 %v565, %v560
    %v836 = vpack.c.b16 %v571, %v566
    %v837 = vpack.c.b16 %v572, %v567
    %v838 = vpack.c.b16 %v573, %v568
    %v839 = vpack.c.b16 %v574, %v569
    %v840 = vpack.c.b16 %v575, %v570
    %v841 = vpack.c.b16 %v581, %v576
    %v842 = vpack.c.b16 %v582, %v577
    %v843 = vpack.c.b16 %v583, %v578
    %v844 = vpack.c.b16 %v584, %v579
    %v845 = vpack.c.b16 %v585, %v580
    %v846 = vpack.c.b16 %v591, %v586
    %v847 = vpack.c.b16 %v592, %v587
    %v848 = vpack.c.b16 %v593, %v588
    %v849 = vpack.c.b16 %v594, %v589
    %v850 = vpack.c.b16 %v595, %v590
    %v851 = vpack.c.b16 %v601, %v596
    %v852 = vpack.c.b16 %v602, %v597
    %v853 = vpack.c.b16 %v603, %v598
    %v854 = vpack.c.b16 %v604, %v599
    %v855 = vpack.c.b16 %v605, %v600
    %v856 = vpack.c.b16 %v611, %v606
    %v857 = vpack.c.b16 %v612, %v607
    %v858 = vpack.c.b16 %v613, %v608
    %v859 = vpack.c.b16 %v614, %v609
    %v860 = vpack.c.b16 %v615, %v610
    %v861 = vpack.c.b16 %v621, %v616
    %v862 = vpack.c.b16 %v622, %v617
    %v863 = vpack.c.b16 %v623, %v618
    %v864 = vpack.c.b16 %v624, %v619
    %v865 = vpack.c.b16 %v625, %v620
    %v866 = vpack.c.b16 %v631, %v626
    %v867 = vpack.c.b16 %v632, %v627
    %v868 = vpack.c.b16 %v633, %v628
    %v869 = vpack.c.b16 %v634, %v629
    %v870 = vpack.c.b16 %v635, %v630
    %v871 = vpack.c.b16 %v641, %v636
    %v872 = vpack.c.b16 %v642, %v637
    %v873 = vpack.c.b16 %v643, %v638
    %v874 = vpack.c.b16 %v644, %v639
    %v875 = vpack.c.b16 %v645, %v640
    %v876 = vpack.c.b16 %v651, %v646
    %v877 = vpack.c.b16 %v652, %v647
    %v878 = vpack.c.b16 %v653, %v648
    %v879 = vpack.c.b16 %v654, %v649
    %v880 = vpack.c.b16 %v655, %v650
    %v881 = vpack.c.b16 %v661, %v656
    %v882 = vpack.c.b16 %v662, %v657
    %v883 = vpack.c.b16 %v663, %v658
    %v884 = vpack.c.b16 %v664, %v659
    %v885 = vpack.c.b16 %v665, %v660
    %v886 = vpack.c.b16 %v671, %v666
    %v887 = vpack.c.b16 %v672, %v667
    %v888 = vpack.c.b16 %v673, %v668
    %v889 = vpack.c.b16 %v674, %v669
    %v890 = vpack.c.b16 %v675, %v670
    %v891 = vpack.c.b16 %v681, %v676
    %v892 = vpack.c.b16 %v682, %v677
    %v893 = vpack.c.b16 %v683, %v678
    %v894 = vpack.c.b16 %v684, %v679
    %v895 = vpack.c.b16 %v685, %v680
    %v896 = vpack.c.b16 %v691, %v686
    %v897 = vpack.c.b16 %v692, %v687
    %v898 = vpack.c.b16 %v693, %v688
    %v899 = vpack.c.b16 %v694, %v689
    %v900 = vpack.c.b16 %v695, %v690
    %v901 = vpack.c.b16 %v701, %v696
    %v902 = vpack.c.b16 %v702, %v697
    %v903 = vpack.c.b16 %v703, %v698
    %v904 = vpack.c.b16 %v704, %v699
    %v905 = vpack.c.b16 %v705, %v700
    %v906 = vpack.c.b16 %v711, %v706
    %v907 = vpack.c.b16 %v712, %v707
    %v908 = vpack.c.b16 %v713, %v708
    %v909 = vpack.c.b16 %v714, %v709
    %v910 = vpack.c.b16 %v715, %v710
    %v911 = vpack.c.b16 %v721, %v716
    %v912 = vpack.c.b16 %v722, %v717
    %v913 = vpack.c.b16 %v723, %v718
    %v914 = vpack.c.b16 %v724, %v719
    %v915 = vpack.c.b16 %v725, %v720
    %v916 = vpack.c.b16 %v731, %v726
    %v917 = vpack.c.b16 %v732, %v727
    %v918 = vpack.c.b16 %v733, %v728
    %v919 = vpack.c.b16 %v734, %v729
    %v920 = vpack.c.b16 %v735, %v730
    %v921 = vpack.c.b16 %v741, %v736
    %v922 = vpack.c.b16 %v742, %v737
    %v923 = vpack.c.b16 %v743, %v738
    %v924 = vpack.c.b16 %v744, %v739
    %v925 = vpack.c.b16 %v745, %v740
    %v926 = vpack.c.b16 %v751, %v746
    %v927 = vpack.c.b16 %v752, %v747
    %v928 = vpack.c.b16 %v753, %v748
    %v929 = vpack.c.b16 %v754, %v749
    %v930 = vpack.c.b16 %v755, %v750
    %v931 = vpack.c.b16 %v761, %v756
    %v932 = vpack.c.b16 %v762, %v757
    %v933 = vpack.c.b16 %v763, %v758
    %v934 = vpack.c.b16 %v764, %v759
    %v935 = vpack.c.b16 %v765, %v760
    %v936 = vpack.c.b16 %v771, %v766
    %v937 = vpack.c.b16 %v772, %v767
    %v938 = vpack.c.b16 %v773, %v768
    %v939 = vpack.c.b16 %v774, %v769
    %v940 = vpack.c.b16 %v775, %v770
    %v941 = vpack.c.b16 %v781, %v776
    %v942 = vpack.c.b16 %v782, %v777
    %v943 = vpack.c.b16 %v783, %v778
    %v944 = vpack.c.b16 %v784, %v779
    %v945 = vpack.c.b16 %v785, %v780
    %v946 = vpack.c.b16 %v791, %v786
    %v947 = vpack.c.b16 %v792, %v787
    %v948 = vpack.c.b16 %v793, %v788
    %v949 = vpack.c.b16 %v794, %v789
    %v950 = vpack.c.b16 %v795, %v790
    %v951 = vpack.c.b16 %v801, %v796
    %v952 = vpack.c.b16 %v802, %v797
    %v953 = vpack.c.b16 %v803, %v798
    %v954 = vpack.c.b16 %v804, %v799
    %v955 = vpack.c.b16 %v805, %v800
    %v956 = vpack.c.b16 %v806, %v806
    %v957 = vpack.c.b16 %v807, %v807
    %v958 = vpack.c.b16 %v808, %v808
    %v959 = vpack.c.b16 %v809, %v809
    %v960 = vpack.c.b16 %v810, %v810
    %vm1106 = vcmask 678912
    %v1108 = vsel %vm1106, %v311, 0
    %vm1110 = vcmask 1040384
    %vm1111 = vcmask 1041408
    %v1112 = vsel %vm1110, 4294967295, 65535
    %v1113 = vsel %vm1111, %v1112, 0
    %v1115 = vand.u32 %v956, %v1113
    %v1118 = vand.u32 %v957, %v1113
    %v1121 = vand.u32 %v958, %v1113
    %v1124 = vand.u32 %v959, %v1113
    %v1127 = vand.u32 %v960, %v1113
    %1129 = vmatprep.subr.bf16.mxu0 %v812
    %1130 = vmatpush1.bf16.msra.mxu0 %v811
    %1131 = vmatprep.subr.bf16.mxu0 %v817
    %1132 = vmatpush1.bf16.msra.mxu0 %v816
    %1133 = vmatprep.subr.bf16.mxu0 %v822
    %1134 = vmatpush1.bf16.msra.mxu0 %v821
    %1135 = vmatprep.subr.bf16.mxu0 %v827
    %1136 = vmatpush1.bf16.msra.mxu0 %v826
    %1137 = vmatprep.subr.bf16.mxu0 %v832
    %1138 = vmatpush1.bf16.msra.mxu0 %v831
    %1139 = vmatprep.subr.bf16.mxu0 %v837
    %1140 = vmatpush1.bf16.msra.mxu0 %v836
    %1141 = vmatprep.subr.bf16.mxu0 %v842
    %1142 = vmatpush1.bf16.msra.mxu0 %v841
    %1143 = vmatprep.subr.bf16.mxu0 %v847
    %1144 = vmatpush1.bf16.msra.mxu0 %v846
    %1145 = vmatprep.subr.bf16.mxu0 %v852
    %1146 = vmatpush1.bf16.msra.mxu0 %v851
    %1147 = vmatprep.subr.bf16.mxu0 %v857
    %1148 = vmatpush1.bf16.msra.mxu0 %v856
    %1149 = vmatprep.subr.bf16.mxu0 %v862
    %1150 = vmatpush1.bf16.msra.mxu0 %v861
    %1151 = vmatprep.subr.bf16.mxu0 %v867
    %1152 = vmatpush1.bf16.msra.mxu0 %v866
    %1153 = vmatprep.subr.bf16.mxu0 %v872
    %1154 = vmatpush1.bf16.msra.mxu0 %v871
    %1155 = vmatprep.subr.bf16.mxu0 %v877
    %1156 = vmatpush1.bf16.msra.mxu0 %v876
    %1157 = vmatprep.subr.bf16.mxu0 %v882
    %1158 = vmatpush1.bf16.msra.mxu0 %v881
    %1159 = vmatprep.subr.bf16.mxu0 %v887
    %1160 = vmatpush1.bf16.msra.mxu0 %v886
    %1161 = vmatprep.mubr.bf16.mxu0 %v309
    %1162 = vmatmul.mubr.bf16.gmra.mrb[0].mxu0 %v308
    %v1163 = vpop.f32.mrb[0].mxu0
    %v1164 = vadd.f32 %v317, %v1163
    %v1165 = vpop.f32.mrb[0].mxu0
    %v1166 = vadd.f32 %v321, %v1165
    %v1167 = vpop.f32.mrb[0].mxu0
    %v1168 = vpop.f32.mrb[0].mxu0
    %1169 = vdwg.mxu0
    %1170 = vmatprep.subr.bf16.mxu0 %v892
    %1171 = vmatpush1.bf16.msra.mxu0 %v891
    %1172 = vmatprep.subr.bf16.mxu0 %v897
    %1173 = vmatpush1.bf16.msra.mxu0 %v896
    %1174 = vmatprep.subr.bf16.mxu0 %v902
    %1175 = vmatpush1.bf16.msra.mxu0 %v901
    %1176 = vmatprep.subr.bf16.mxu0 %v907
    %1177 = vmatpush1.bf16.msra.mxu0 %v906
    %1178 = vmatprep.subr.bf16.mxu0 %v912
    %1179 = vmatpush1.bf16.msra.mxu0 %v911
    %1180 = vmatprep.subr.bf16.mxu0 %v917
    %1181 = vmatpush1.bf16.msra.mxu0 %v916
    %1182 = vmatprep.subr.bf16.mxu0 %v922
    %1183 = vmatpush1.bf16.msra.mxu0 %v921
    %1184 = vmatprep.subr.bf16.mxu0 %v927
    %1185 = vmatpush1.bf16.msra.mxu0 %v926
    %1186 = vmatprep.subr.bf16.mxu0 %v932
    %1187 = vmatpush1.bf16.msra.mxu0 %v931
    %1188 = vmatprep.subr.bf16.mxu0 %v937
    %1189 = vmatpush1.bf16.msra.mxu0 %v936
    %1190 = vmatprep.subr.bf16.mxu0 %v942
    %1191 = vmatpush1.bf16.msra.mxu0 %v941
    %1192 = vmatprep.subr.bf16.mxu0 %v947
    %1193 = vmatpush1.bf16.msra.mxu0 %v946
    %1194 = vmatprep.subr.bf16.mxu0 %v952
    %1195 = vmatpush1.bf16.msra.mxu0 %v951
    %1196 = vmatprep.subr.bf16.mxu0 %v1118
    %1197 = vmatpush1.bf16.msra.mxu0 %v1115
    %1198 = vmatprep.subr.bf16.mxu0 0
    %1199 = vmatpush1.bf16.msra.mxu0 0
    %1200 = vmatprep.subr.bf16.mxu0 0
    %1201 = vmatpush1.bf16.msra.mxu0 0
    %1202 = vmatprep.mubr.bf16.mxu0 %v1108
    %1203 = vmatmul.mubr.bf16.gmra.mrb[0].mxu0 %v310
    %v1204 = vpop.f32.mrb[0].mxu0
    %v1205 = vadd.f32 %v1164, %v1204
    %v1206 = vpop.f32.mrb[0].mxu0
    %v1207 = vadd.f32 %v1166, %v1206
    %v1208 = vpop.f32.mrb[0].mxu0
    %v1209 = vpop.f32.mrb[0].mxu0
    %1210 = vdwg.mxu0
    %1211 = vmatprep.subr.bf16.mxu0 %v814
    %1212 = vmatpush1.bf16.msra.mxu0 %v813
    %1213 = vmatprep.subr.bf16.mxu0 %v819
    %1214 = vmatpush1.bf16.msra.mxu0 %v818
    %1215 = vmatprep.subr.bf16.mxu0 %v824
    %1216 = vmatpush1.bf16.msra.mxu0 %v823
    %1217 = vmatprep.subr.bf16.mxu0 %v829
    %1218 = vmatpush1.bf16.msra.mxu0 %v828
    %1219 = vmatprep.subr.bf16.mxu0 %v834
    %1220 = vmatpush1.bf16.msra.mxu0 %v833
    %1221 = vmatprep.subr.bf16.mxu0 %v839
    %1222 = vmatpush1.bf16.msra.mxu0 %v838
    %1223 = vmatprep.subr.bf16.mxu0 %v844
    %1224 = vmatpush1.bf16.msra.mxu0 %v843
    %1225 = vmatprep.subr.bf16.mxu0 %v849
    %1226 = vmatpush1.bf16.msra.mxu0 %v848
    %1227 = vmatprep.subr.bf16.mxu0 %v854
    %1228 = vmatpush1.bf16.msra.mxu0 %v853
    %1229 = vmatprep.subr.bf16.mxu0 %v859
    %1230 = vmatpush1.bf16.msra.mxu0 %v858
    %1231 = vmatprep.subr.bf16.mxu0 %v864
    %1232 = vmatpush1.bf16.msra.mxu0 %v863
    %1233 = vmatprep.subr.bf16.mxu0 %v869
    %1234 = vmatpush1.bf16.msra.mxu0 %v868
    %1235 = vmatprep.subr.bf16.mxu0 %v874
    %1236 = vmatpush1.bf16.msra.mxu0 %v873
    %1237 = vmatprep.subr.bf16.mxu0 %v879
    %1238 = vmatpush1.bf16.msra.mxu0 %v878
    %1239 = vmatprep.subr.bf16.mxu0 %v884
    %1240 = vmatpush1.bf16.msra.mxu0 %v883
    %1241 = vmatprep.subr.bf16.mxu0 %v889
    %1242 = vmatpush1.bf16.msra.mxu0 %v888
    %1243 = vmatprep.mubr.bf16.mxu0 %v309
    %1244 = vmatmul.mubr.bf16.gmra.mrb[0].mxu0 %v308
    %v1245 = vpop.f32.mrb[0].mxu0
    %v1246 = vadd.f32 %v325, %v1245
    %v1247 = vpop.f32.mrb[0].mxu0
    %v1248 = vadd.f32 %v329, %v1247
    %v1249 = vpop.f32.mrb[0].mxu0
    %v1250 = vpop.f32.mrb[0].mxu0
    %1251 = vdwg.mxu0
    %1252 = vmatprep.subr.bf16.mxu0 %v894
    %1253 = vmatpush1.bf16.msra.mxu0 %v893
    %1254 = vmatprep.subr.bf16.mxu0 %v899
    %1255 = vmatpush1.bf16.msra.mxu0 %v898
    %1256 = vmatprep.subr.bf16.mxu0 %v904
    %1257 = vmatpush1.bf16.msra.mxu0 %v903
    %1258 = vmatprep.subr.bf16.mxu0 %v909
    %1259 = vmatpush1.bf16.msra.mxu0 %v908
    %1260 = vmatprep.subr.bf16.mxu0 %v914
    %1261 = vmatpush1.bf16.msra.mxu0 %v913
    %1262 = vmatprep.subr.bf16.mxu0 %v919
    %1263 = vmatpush1.bf16.msra.mxu0 %v918
    %1264 = vmatprep.subr.bf16.mxu0 %v924
    %1265 = vmatpush1.bf16.msra.mxu0 %v923
    %1266 = vmatprep.subr.bf16.mxu0 %v929
    %1267 = vmatpush1.bf16.msra.mxu0 %v928
    %1268 = vmatprep.subr.bf16.mxu0 %v934
    %1269 = vmatpush1.bf16.msra.mxu0 %v933
    %1270 = vmatprep.subr.bf16.mxu0 %v939
    %1271 = vmatpush1.bf16.msra.mxu0 %v938
    %1272 = vmatprep.subr.bf16.mxu0 %v944
    %1273 = vmatpush1.bf16.msra.mxu0 %v943
    %1274 = vmatprep.subr.bf16.mxu0 %v949
    %1275 = vmatpush1.bf16.msra.mxu0 %v948
    %1276 = vmatprep.subr.bf16.mxu0 %v954
    %1277 = vmatpush1.bf16.msra.mxu0 %v953
    %1278 = vmatprep.subr.bf16.mxu0 %v1124
    %1279 = vmatpush1.bf16.msra.mxu0 %v1121
    %1280 = vmatprep.subr.bf16.mxu0 0
    %1281 = vmatpush1.bf16.msra.mxu0 0
    %1282 = vmatprep.subr.bf16.mxu0 0
    %1283 = vmatpush1.bf16.msra.mxu0 0
    %1284 = vmatprep.mubr.bf16.mxu0 %v1108
    %1285 = vmatmul.mubr.bf16.gmra.mrb[0].mxu0 %v310
    %v1286 = vpop.f32.mrb[0].mxu0
    %v1287 = vadd.f32 %v1246, %v1286
    %v1288 = vpop.f32.mrb[0].mxu0
    %v1289 = vadd.f32 %v1248, %v1288
    %v1290 = vpop.f32.mrb[0].mxu0
    %v1291 = vpop.f32.mrb[0].mxu0
    %1292 = vdwg.mxu0
    %1293 = vmatprep.subr.bf16.mxu0 0
    %1294 = vmatpush1.bf16.msra.mxu0 %v815
    %1295 = vmatprep.subr.bf16.mxu0 0
    %1296 = vmatpush1.bf16.msra.mxu0 %v820
    %1297 = vmatprep.subr.bf16.mxu0 0
    %1298 = vmatpush1.bf16.msra.mxu0 %v825
    %1299 = vmatprep.subr.bf16.mxu0 0
    %1300 = vmatpush1.bf16.msra.mxu0 %v830
    %1301 = vmatprep.subr.bf16.mxu0 0
    %1302 = vmatpush1.bf16.msra.mxu0 %v835
    %1303 = vmatprep.subr.bf16.mxu0 0
    %1304 = vmatpush1.bf16.msra.mxu0 %v840
    %1305 = vmatprep.subr.bf16.mxu0 0
    %1306 = vmatpush1.bf16.msra.mxu0 %v845
    %1307 = vmatprep.subr.bf16.mxu0 0
    %1308 = vmatpush1.bf16.msra.mxu0 %v850
    %1309 = vmatprep.subr.bf16.mxu0 0
    %1310 = vmatpush1.bf16.msra.mxu0 %v855
    %1311 = vmatprep.subr.bf16.mxu0 0
    %1312 = vmatpush1.bf16.msra.mxu0 %v860
    %1313 = vmatprep.subr.bf16.mxu0 0
    %1314 = vmatpush1.bf16.msra.mxu0 %v865
    %1315 = vmatprep.subr.bf16.mxu0 0
    %1316 = vmatpush1.bf16.msra.mxu0 %v870
    %1317 = vmatprep.subr.bf16.mxu0 0
    %1318 = vmatpush1.bf16.msra.mxu0 %v875
    %1319 = vmatprep.subr.bf16.mxu0 0
    %1320 = vmatpush1.bf16.msra.mxu0 %v880
    %1321 = vmatprep.subr.bf16.mxu0 0
    %1322 = vmatpush1.bf16.msra.mxu0 %v885
    %1323 = vmatprep.subr.bf16.mxu0 0
    %1324 = vmatpush1.bf16.msra.mxu0 %v890
    %1325 = vmatprep.mubr.bf16.mxu0 %v309
    %1326 = vmatmul.mubr.bf16.gmra.mrb[0].mxu0 %v308
    %v1327 = vpop.f32.mrb[0].mxu0
    %v1328 = vadd.f32 %v333, %v1327
    %v1329 = vpop.f32.mrb[0].mxu0
    %v1330 = vpop.f32.mrb[0].mxu0
    %v1331 = vpop.f32.mrb[0].mxu0
    %1332 = vdwg.mxu0
    %1333 = vmatprep.subr.bf16.mxu0 0
    %1334 = vmatpush1.bf16.msra.mxu0 %v895
    %1335 = vmatprep.subr.bf16.mxu0 0
    %1336 = vmatpush1.bf16.msra.mxu0 %v900
    %1337 = vmatprep.subr.bf16.mxu0 0
    %1338 = vmatpush1.bf16.msra.mxu0 %v905
    %1339 = vmatprep.subr.bf16.mxu0 0
    %1340 = vmatpush1.bf16.msra.mxu0 %v910
    %1341 = vmatprep.subr.bf16.mxu0 0
    %1342 = vmatpush1.bf16.msra.mxu0 %v915
    %1343 = vmatprep.subr.bf16.mxu0 0
    %1344 = vmatpush1.bf16.msra.mxu0 %v920
    %1345 = vmatprep.subr.bf16.mxu0 0
    %1346 = vmatpush1.bf16.msra.mxu0 %v925
    %1347 = vmatprep.subr.bf16.mxu0 0
    %1348 = vmatpush1.bf16.msra.mxu0 %v930
    %1349 = vmatprep.subr.bf16.mxu0 0
    %1350 = vmatpush1.bf16.msra.mxu0 %v935
    %1351 = vmatprep.subr.bf16.mxu0 0
    %1352 = vmatpush1.bf16.msra.mxu0 %v940
    %1353 = vmatprep.subr.bf16.mxu0 0
    %1354 = vmatpush1.bf16.msra.mxu0 %v945
    %1355 = vmatprep.subr.bf16.mxu0 0
    %1356 = vmatpush1.bf16.msra.mxu0 %v950
    %1357 = vmatprep.subr.bf16.mxu0 0
    %1358 = vmatpush1.bf16.msra.mxu0 %v955
    %1359 = vmatprep.subr.bf16.mxu0 0
    %1360 = vmatpush1.bf16.msra.mxu0 %v1127
    %1361 = vmatprep.subr.bf16.mxu0 0
    %1362 = vmatpush1.bf16.msra.mxu0 0
    %1363 = vmatprep.subr.bf16.mxu0 0
    %1364 = vmatpush1.bf16.msra.mxu0 0
    %1365 = vmatprep.mubr.bf16.mxu0 %v1108
    %1366 = vmatmul.mubr.bf16.gmra.mrb[0].mxu0 %v310
    %v1367 = vpop.f32.mrb[0].mxu0
    %v1368 = vadd.f32 %v1328, %v1367
    %v1369 = vpop.f32.mrb[0].mxu0
    %v1370 = vpop.f32.mrb[0].mxu0
    %v1371 = vpop.f32.mrb[0].mxu0
    %1372 = vdwg.mxu0
    %v1373 = vmax.f32 %v1205, 0.0
    %v1374 = vmax.f32 %v1207, 0.0
    %v1375 = vmax.f32 %v1287, 0.0
    %v1376 = vmax.f32 %v1289, 0.0
    %v1377 = vmax.f32 %v1368, 0.0
    %v1378 = vld [vmem:[%s1] sm:$0xff]
    %v1379 = vld [vmem:[%s1 + $0x8] sm:$0xff]
    %v1380 = vld [vmem:[%s1 + $0x10] sm:$0xff]
    %v1381 = vld [vmem:[%s1 + $0x18] sm:$0xff]
    %v1382 = vld [vmem:[%s1 + $0x20] sm:$0xff]
    %v1383 = vld [vmem:[%s2] sm:$0xf]
    %v1384 = vld [vmem:[%s2 + $0x4] sm:$0xf]
    %v1385 = vld [vmem:[%s2 + $0x8] sm:$0xf]
    %v1386 = vld [vmem:[%s2 + $0xc] sm:$0xf]
    %v1387 = vld [vmem:[%s2 + $0x10] sm:$0xf]
    %v1388 = vld [vmem:[%s2 + $0x14] sm:$0xf]
    %v1389 = vpack.c.bf16 %v1379, %v1378
    %v1390 = vpack.c.bf16 %v1381, %v1380
    %v1391 = vpack.c.bf16 %v1382, %v1382
    %v1392 = vld [vmem:[%s3] sm:$0x1]
    %v1394 = vlaneseq
    %v1395 = vshrl.u32 %v1394, 7
    %v1396 = vsub.s32 0, %v1395
    %v1397 = vrot.slane %v1392, %v1396
    %v1405 = vunpack.c.l.b16 %v1383
    %v1406 = vunpack.c.l.b16 %v1384
    %v1407 = vunpack.c.l.b16 %v1385
    %v1408 = vunpack.c.l.b16 %v1386
    %v1409 = vunpack.c.l.b16 %v1387
    %v1410 = vunpack.c.l.b16 %v1388
    %v1411 = vpack.c.b16 %v1406, %v1405
    %v1412 = vpack.c.b16 %v1408, %v1407
    %v1413 = vpack.c.b16 %v1410, %v1409
    %vm1417 = vcmask 392192
    %v1419 = vsel %vm1417, %v1389, 0
    %v1422 = vsel %vm1417, %v1390, 0
    %v1425 = vsel %vm1417, %v1391, 0
    %1427 = vmatprep.subr.bf16.mxu0 0
    %1428 = vmatpush1.bf16.msra.mxu0 %v1411
    %1429 = vmatprep.subr.bf16.mxu0 0
    %1430 = vmatpush1.bf16.msra.mxu0 %v1412
    %1431 = vmatprep.subr.bf16.mxu0 0
    %1432 = vmatpush1.bf16.msra.mxu0 %v1413
    %1433 = vmatprep.subr.bf16.mxu0 0
    %1434 = vmatpush1.bf16.msra.mxu0 0
    %1435 = vmatprep.subr.bf16.mxu0 0
    %1436 = vmatpush1.bf16.msra.mxu0 0
    %1437 = vmatprep.subr.bf16.mxu0 0
    %1438 = vmatpush1.bf16.msra.mxu0 0
    %1439 = vmatprep.subr.bf16.mxu0 0
    %1440 = vmatpush1.bf16.msra.mxu0 0
    %1441 = vmatprep.subr.bf16.mxu0 0
    %1442 = vmatpush1.bf16.msra.mxu0 0
    %1443 = vmatprep.subr.bf16.mxu0 0
    %1444 = vmatpush1.bf16.msra.mxu0 0
    %1445 = vmatprep.subr.bf16.mxu0 0
    %1446 = vmatpush1.bf16.msra.mxu0 0
    %1447 = vmatprep.subr.bf16.mxu0 0
    %1448 = vmatpush1.bf16.msra.mxu0 0
    %1449 = vmatprep.subr.bf16.mxu0 0
    %1450 = vmatpush1.bf16.msra.mxu0 0
    %1451 = vmatprep.subr.bf16.mxu0 0
    %1452 = vmatpush1.bf16.msra.mxu0 0
    %1453 = vmatprep.subr.bf16.mxu0 0
    %1454 = vmatpush1.bf16.msra.mxu0 0
    %1455 = vmatprep.subr.bf16.mxu0 0
    %1456 = vmatpush1.bf16.msra.mxu0 0
    %1457 = vmatprep.subr.bf16.mxu0 0
    %1458 = vmatpush1.bf16.msra.mxu0 0
    %1459 = vmatprep.mubr.bf16.mxu0 0
    %1460 = vmatmul.mubr.bf16.gmra.mrb[0].mxu0 %v1419
    %v1461 = vpop.f32.mrb[0].mxu0
    %v1462 = vadd.f32 %v1397, %v1461
    %v1463 = vpop.f32.mrb[0].mxu0
    %v1464 = vpop.f32.mrb[0].mxu0
    %v1465 = vadd.f32 %v1397, %v1464
    %v1466 = vpop.f32.mrb[0].mxu0
    %1467 = vmatprep.mubr.bf16.mxu0 0
    %1468 = vmatmul.mubr.bf16.gmra.mrb[0].mxu0 %v1422
    %v1469 = vpop.f32.mrb[0].mxu0
    %v1470 = vadd.f32 %v1397, %v1469
    %v1471 = vpop.f32.mrb[0].mxu0
    %v1472 = vpop.f32.mrb[0].mxu0
    %v1473 = vadd.f32 %v1397, %v1472
    %v1474 = vpop.f32.mrb[0].mxu0
    %1475 = vmatprep.mubr.bf16.mxu0 0
    %1476 = vmatmul.mubr.bf16.gmra.mrb[0].mxu0 %v1425
    %v1477 = vpop.f32.mrb[0].mxu0
    %v1478 = vadd.f32 %v1397, %v1477
    %v1479 = vpop.f32.mrb[0].mxu0
    %v1480 = vpop.f32.mrb[0].mxu0
    %v1481 = vpop.f32.mrb[0].mxu0
    %1482 = vdwg.mxu0
    %v1483 = vld [vmem:[%s4] sm:$0xf]
    %v1484 = vld [vmem:[%s4 + $0x4] sm:$0xf]
    %v1485 = vld [vmem:[%s5] sm:$0xf]
    %v1486 = vld [vmem:[%s5 + $0x4] sm:$0xf]
    %v1487 = vld [vmem:[%s6] sm:$0x1]
    %v1488 = vld [vmem:[%s7] sm:$0x1]
    %v1489 = vld [vmem:[%s8] sm:$0xf]
    %v1490 = vld [vmem:[%s8 + $0x4] sm:$0xf]
    %v1491 = vld [vmem:[%s9] sm:$0x1]
    %v1492 = vld [vmem:[%s10] sm:$0xf]
    %v1493 = vld [vmem:[%s10 + $0x4] sm:$0xf]
    %v1494 = vld [vmem:[%s10 + $0x8] sm:$0xf]
    %v1495 = vld [vmem:[%s10 + $0xc] sm:$0xf]
    %v1496 = vld [vmem:[%s11] sm:$0x1]
    %v1497 = vld [vmem:[%s12] sm:$0x1]
    %v1498 = vld [vmem:[%s13] sm:$0x1]
    %v1499 = vpack.c.bf16 %v1465, %v1462
    %v1500 = vpack.c.bf16 %v1473, %v1470
    %v1501 = vpack.c.bf16 %v1478, %v1478
    %v1504 = vunpack.c.l.b16 %v1483
    %v1505 = vunpack.c.l.b16 %v1484
    %v1506 = vpack.c.b16 %v1505, %v1504
    %vm1508 = vcmask 130048
    %v1510 = vsel %vm1508, %v1499, 0
    %v1513 = vsel %vm1508, %v1500, 0
    %v1516 = vsel %vm1508, %v1501, 0
    %1518 = vmatprep.subr.bf16.mxu0 0
    %1519 = vmatpush1.bf16.msra.mxu0 %v1506
    %1520 = vmatprep.subr.bf16.mxu0 0
    %1521 = vmatpush1.bf16.msra.mxu0 0
    %1522 = vmatprep.subr.bf16.mxu0 0
    %1523 = vmatpush1.bf16.msra.mxu0 0
    %1524 = vmatprep.subr.bf16.mxu0 0
    %1525 = vmatpush1.bf16.msra.mxu0 0
    %1526 = vmatprep.subr.bf16.mxu0 0
    %1527 = vmatpush1.bf16.msra.mxu0 0
    %1528 = vmatprep.subr.bf16.mxu0 0
    %1529 = vmatpush1.bf16.msra.mxu0 0
    %1530 = vmatprep.subr.bf16.mxu0 0
    %1531 = vmatpush1.bf16.msra.mxu0 0
    %1532 = vmatprep.subr.bf16.mxu0 0
    %1533 = vmatpush1.bf16.msra.mxu0 0
    %1534 = vmatprep.subr.bf16.mxu0 0
    %1535 = vmatpush1.bf16.msra.mxu0 0
    %1536 = vmatprep.subr.bf16.mxu0 0
    %1537 = vmatpush1.bf16.msra.mxu0 0
    %1538 = vmatprep.subr.bf16.mxu0 0
    %1539 = vmatpush1.bf16.msra.mxu0 0
    %1540 = vmatprep.subr.bf16.mxu0 0
    %1541 = vmatpush1.bf16.msra.mxu0 0
    %1542 = vmatprep.subr.bf16.mxu0 0
    %1543 = vmatpush1.bf16.msra.mxu0 0
    %1544 = vmatprep.subr.bf16.mxu0 0
    %1545 = vmatpush1.bf16.msra.mxu0 0
    %1546 = vmatprep.subr.bf16.mxu0 0
    %1547 = vmatpush1.bf16.msra.mxu0 0
    %1548 = vmatprep.subr.bf16.mxu0 0
    %1549 = vmatpush1.bf16.msra.mxu0 0
    %1550 = vmatprep.mubr.bf16.mxu0 0
    %1551 = vmatmul.mubr.bf16.gmra.mrb[0].mxu0 %v1510
    %v1552 = vpop.f32.mrb[0].mxu0
    %v1553 = vadd.f32 0.0, %v1552
    %v1554 = vpop.f32.mrb[0].mxu0
    %v1555 = vpop.f32.mrb[0].mxu0
    %v1556 = vadd.f32 0.0, %v1555
    %v1557 = vpop.f32.mrb[0].mxu0
    %1558 = vmatprep.mubr.bf16.mxu0 0
    %1559 = vmatmul.mubr.bf16.gmra.mrb[0].mxu0 %v1513
    %v1560 = vpop.f32.mrb[0].mxu0
    %v1561 = vadd.f32 0.0, %v1560
    %v1562 = vpop.f32.mrb[0].mxu0
    %v1563 = vpop.f32.mrb[0].mxu0
    %v1564 = vadd.f32 0.0, %v1563
    %v1565 = vpop.f32.mrb[0].mxu0
    %1566 = vmatprep.mubr.bf16.mxu0 0
    %1567 = vmatmul.mubr.bf16.gmra.mrb[0].mxu0 %v1516
    %v1568 = vpop.f32.mrb[0].mxu0
    %v1569 = vadd.f32 0.0, %v1568
    %v1570 = vpop.f32.mrb[0].mxu0
    %v1571 = vpop.f32.mrb[0].mxu0
    %v1572 = vpop.f32.mrb[0].mxu0
    %1573 = vdwg.mxu0
    %v1574 = vpack.c.bf16 %v1556, %v1553
    %v1575 = vpack.c.bf16 %v1561, %v1561
    %1578 = vrot.lane.b32.xlu0 %v1574, 112
    %v1579 = vpop.permute.xlu0 %1578
    %1580 = vrot.lane.b32.xlu0 %v1575, 112
    %v1581 = vpop.permute.xlu0 %1580
    %vm1582 = vcmask 64512
    %v1584 = vsel %vm1582, %v1574, 0
    %v1587 = vsel %vm1582, %v1575, 0
    %v1590 = vsel %vm1582, %v1579, 0
    %v1593 = vsel %vm1582, %v1581, 0
    %1595 = vmatprep.subr.bf16.mxu0 0
    %1596 = vmatpush1.bf16.xpose.msra.mxu0 %v1590
    %1597 = vmatprep.subr.bf16.mxu0 0
    %1598 = vmatpush1.bf16.xpose.msra.mxu0 %v1593
    %1599 = vmatprep.subr.bf16.mxu0 0
    %1600 = vmatpush1.bf16.xpose.msra.mxu0 0
    %1601 = vmatprep.subr.bf16.mxu0 0
    %1602 = vmatpush1.bf16.xpose.msra.mxu0 0
    %1603 = vmatprep.subr.bf16.mxu0 0
    %1604 = vmatpush1.bf16.xpose.msra.mxu0 0
    %1605 = vmatprep.subr.bf16.mxu0 0
    %1606 = vmatpush1.bf16.xpose.msra.mxu0 0
    %1607 = vmatprep.subr.bf16.mxu0 0
    %1608 = vmatpush1.bf16.xpose.msra.mxu0 0
    %1609 = vmatprep.subr.bf16.mxu0 0
    %1610 = vmatpush1.bf16.xpose.msra.mxu0 0
    %1611 = vmatprep.subr.bf16.mxu0 0
    %1612 = vmatpush1.bf16.xpose.msra.mxu0 0
    %1613 = vmatprep.subr.bf16.mxu0 0
    %1614 = vmatpush1.bf16.xpose.msra.mxu0 0
    %1615 = vmatprep.subr.bf16.mxu0 0
    %1616 = vmatpush1.bf16.xpose.msra.mxu0 0
    %1617 = vmatprep.subr.bf16.mxu0 0
    %1618 = vmatpush1.bf16.xpose.msra.mxu0 0
    %1619 = vmatprep.subr.bf16.mxu0 0
    %1620 = vmatpush1.bf16.xpose.msra.mxu0 0
    %1621 = vmatprep.subr.bf16.mxu0 0
    %1622 = vmatpush1.bf16.xpose.msra.mxu0 0
    %1623 = vmatprep.subr.bf16.mxu0 0
    %1624 = vmatpush1.bf16.xpose.msra.mxu0 0
    %1625 = vmatprep.subr.bf16.mxu0 0
    %1626 = vmatpush1.bf16.xpose.msra.mxu0 0
    %1627 = vmatprep.mubr.bf16.mxu0 0
    %1628 = vmatmul.mubr.bf16.gmra.mrb[0].mxu0 %v1584
    %v1629 = vpop.f32.mrb[0].mxu0
    %v1630 = vadd.f32 0.0, %v1629
    %v1631 = vpop.f32.mrb[0].mxu0
    %v1632 = vpop.f32.mrb[0].mxu0
    %v1633 = vadd.f32 0.0, %v1632
    %v1634 = vpop.f32.mrb[0].mxu0
    %1635 = vmatprep.mubr.bf16.mxu0 0
    %1636 = vmatmul.mubr.bf16.gmra.mrb[0].mxu0 %v1587
    %v1637 = vpop.f32.mrb[0].mxu0
    %v1638 = vadd.f32 0.0, %v1637
    %v1639 = vpop.f32.mrb[0].mxu0
    %v1640 = vpop.f32.mrb[0].mxu0
    %v1641 = vpop.f32.mrb[0].mxu0
    %1642 = vdwg.mxu0
    %vm1643 = vcmask 162816
    %v1644 = vsel %vm1643, %v1630, -inf
    %1645 = vmax.xlane.f32.xlu0 %v1644
    %v1646 = vpop.xlane.xlu0 %1645
    %v1647 = vsel %vm1643, %v1633, -inf
    %1648 = vmax.xlane.f32.xlu0 %v1647
    %v1649 = vpop.xlane.xlu0 %1648
    %vm1650 = vcmask 158720
    %v1651 = vsel %vm1650, %v1638, -inf
    %1652 = vmax.xlane.f32.xlu0 %v1651
    %v1653 = vpop.xlane.xlu0 %1652
    %v1654 = vsub.f32 %v1630, %v1646
    %v1655 = vsub.f32 %v1633, %v1649
    %v1656 = vsub.f32 %v1638, %v1653
    %v1657 = vmul.f32 %v1654, 1.442695
    %v1658 = vpow.pop %v1657
    %v1659 = vmul.f32 %v1655, 1.442695
    %v1660 = vpow.pop %v1659
    %v1661 = vmul.f32 %v1656, 1.442695
    %v1662 = vpow.pop %v1661
    %v1663 = vsel %vm1643, %v1658, 0.0
    %1664 = vadd.xlane.f32.xlu0 %v1663
    %v1665 = vpop.xlane.xlu0 %1664
    %v1666 = vsel %vm1643, %v1660, 0.0
    %1667 = vadd.xlane.f32.xlu0 %v1666
    %v1668 = vpop.xlane.xlu0 %1667
    %v1669 = vsel %vm1650, %v1662, 0.0
    %1670 = vadd.xlane.f32.xlu0 %v1669
    %v1671 = vpop.xlane.xlu0 %1670
    %v1672 = vrcp.pop %v1665
    %v1673 = vmul.f32 %v1658, %v1672
    %v1674 = vrcp.pop %v1668
    %v1675 = vmul.f32 %v1660, %v1674
    %v1676 = vrcp.pop %v1671
    %v1677 = vmul.f32 %v1662, %v1676
    %v1678 = vpack.c.bf16 %v1675, %v1673
    %v1679 = vpack.c.bf16 %v1677, %v1677
    %1680 = vrot.lane.b32.xlu0 %v1574, 96
    %v1681 = vpop.permute.xlu0 %1680
    %1682 = vrot.lane.b32.xlu0 %v1575, 96
    %v1683 = vpop.permute.xlu0 %1682
    %v1686 = vsel %vm1643, %v1678, 0
    %v1689 = vsel %vm1643, %v1679, 0
    %v1692 = vsel %vm1111, %v1683, 0
    %1694 = vmatprep.subr.bf16.mxu0 0
    %1695 = vmatpush1.bf16.msra.mxu0 %v1681
    %1696 = vmatprep.subr.bf16.mxu0 0
    %1697 = vmatpush1.bf16.msra.mxu0 %v1692
    %1698 = vmatprep.subr.bf16.mxu0 0
    %1699 = vmatpush1.bf16.msra.mxu0 0
    %1700 = vmatprep.subr.bf16.mxu0 0
    %1701 = vmatpush1.bf16.msra.mxu0 0
    %1702 = vmatprep.subr.bf16.mxu0 0
    %1703 = vmatpush1.bf16.msra.mxu0 0
    %1704 = vmatprep.subr.bf16.mxu0 0
    %1705 = vmatpush1.bf16.msra.mxu0 0
    %1706 = vmatprep.subr.bf16.mxu0 0
    %1707 = vmatpush1.bf16.msra.mxu0 0
    %1708 = vmatprep.subr.bf16.mxu0 0
    %1709 = vmatpush1.bf16.msra.mxu0 0
    %1710 = vmatprep.subr.bf16.mxu0 0
    %1711 = vmatpush1.bf16.msra.mxu0 0
    %1712 = vmatprep.subr.bf16.mxu0 0
    %1713 = vmatpush1.bf16.msra.mxu0 0
    %1714 = vmatprep.subr.bf16.mxu0 0
    %1715 = vmatpush1.bf16.msra.mxu0 0
    %1716 = vmatprep.subr.bf16.mxu0 0
    %1717 = vmatpush1.bf16.msra.mxu0 0
    %1718 = vmatprep.subr.bf16.mxu0 0
    %1719 = vmatpush1.bf16.msra.mxu0 0
    %1720 = vmatprep.subr.bf16.mxu0 0
    %1721 = vmatpush1.bf16.msra.mxu0 0
    %1722 = vmatprep.subr.bf16.mxu0 0
    %1723 = vmatpush1.bf16.msra.mxu0 0
    %1724 = vmatprep.subr.bf16.mxu0 0
    %1725 = vmatpush1.bf16.msra.mxu0 0
    %1726 = vmatprep.mubr.bf16.mxu0 0
    %1727 = vmatmul.mubr.bf16.gmra.mrb[0].mxu0 %v1686
    %v1728 = vpop.f32.mrb[0].mxu0
    %v1729 = vadd.f32 0.0, %v1728
    %v1730 = vpop.f32.mrb[0].mxu0
    %v1731 = vpop.f32.mrb[0].mxu0
    %v1732 = vadd.f32 0.0, %v1731
    %v1733 = vpop.f32.mrb[0].mxu0
    %1734 = vmatprep.mubr.bf16.mxu0 0
    %1735 = vmatmul.mubr.bf16.gmra.mrb[0].mxu0 %v1689
    %v1736 = vpop.f32.mrb[0].mxu0
    %v1737 = vadd.f32 0.0, %v1736
    %v1738 = vpop.f32.mrb[0].mxu0
    %v1739 = vpop.f32.mrb[0].mxu0
    %v1740 = vpop.f32.mrb[0].mxu0
    %1741 = vdwg.mxu0
    %1742 = vrot.lane.b32.xlu0 %v1574, 120
    %v1743 = vpop.permute.xlu0 %1742
    %1744 = vrot.lane.b32.xlu0 %v1575, 120
    %v1745 = vpop.permute.xlu0 %1744
    %1746 = vrot.lane.b32.xlu0 %v1574, 104
    %v1747 = vpop.permute.xlu0 %1746
    %1748 = vrot.lane.b32.xlu0 %v1575, 104
    %v1749 = vpop.permute.xlu0 %1748
    %v1751 = vsel %vm1582, %v1743, 0
    %v1754 = vsel %vm1582, %v1745, 0
    %v1757 = vsel %vm1582, %v1747, 0
    %v1760 = vsel %vm1582, %v1749, 0
    %1762 = vmatprep.subr.bf16.mxu0 0
    %1763 = vmatpush1.bf16.xpose.msra.mxu0 %v1757
    %1764 = vmatprep.subr.bf16.mxu0 0
    %1765 = vmatpush1.bf16.xpose.msra.mxu0 %v1760
    %1766 = vmatprep.subr.bf16.mxu0 0
    %1767 = vmatpush1.bf16.xpose.msra.mxu0 0
    %1768 = vmatprep.subr.bf16.mxu0 0
    %1769 = vmatpush1.bf16.xpose.msra.mxu0 0
    %1770 = vmatprep.subr.bf16.mxu0 0
    %1771 = vmatpush1.bf16.xpose.msra.mxu0 0
    %1772 = vmatprep.subr.bf16.mxu0 0
    %1773 = vmatpush1.bf16.xpose.msra.mxu0 0
    %1774 = vmatprep.subr.bf16.mxu0 0
    %1775 = vmatpush1.bf16.xpose.msra.mxu0 0
    %1776 = vmatprep.subr.bf16.mxu0 0
    %1777 = vmatpush1.bf16.xpose.msra.mxu0 0
    %1778 = vmatprep.subr.bf16.mxu0 0
    %1779 = vmatpush1.bf16.xpose.msra.mxu0 0
    %1780 = vmatprep.subr.bf16.mxu0 0
    %1781 = vmatpush1.bf16.xpose.msra.mxu0 0
    %1782 = vmatprep.subr.bf16.mxu0 0
    %1783 = vmatpush1.bf16.xpose.msra.mxu0 0
    %1784 = vmatprep.subr.bf16.mxu0 0
    %1785 = vmatpush1.bf16.xpose.msra.mxu0 0
    %1786 = vmatprep.subr.bf16.mxu0 0
    %1787 = vmatpush1.bf16.xpose.msra.mxu0 0
    %1788 = vmatprep.subr.bf16.mxu0 0
    %1789 = vmatpush1.bf16.xpose.msra.mxu0 0
    %1790 = vmatprep.subr.bf16.mxu0 0
    %1791 = vmatpush1.bf16.xpose.msra.mxu0 0
    %1792 = vmatprep.subr.bf16.mxu0 0
    %1793 = vmatpush1.bf16.xpose.msra.mxu0 0
    %1794 = vmatprep.mubr.bf16.mxu0 0
    %1795 = vmatmul.mubr.bf16.gmra.mrb[0].mxu0 %v1751
    %v1796 = vpop.f32.mrb[0].mxu0
    %v1797 = vadd.f32 0.0, %v1796
    %v1798 = vpop.f32.mrb[0].mxu0
    %v1799 = vpop.f32.mrb[0].mxu0
    %v1800 = vadd.f32 0.0, %v1799
    %v1801 = vpop.f32.mrb[0].mxu0
    %1802 = vmatprep.mubr.bf16.mxu0 0
    %1803 = vmatmul.mubr.bf16.gmra.mrb[0].mxu0 %v1754
    %v1804 = vpop.f32.mrb[0].mxu0
    %v1805 = vadd.f32 0.0, %v1804
    %v1806 = vpop.f32.mrb[0].mxu0
    %v1807 = vpop.f32.mrb[0].mxu0
    %v1808 = vpop.f32.mrb[0].mxu0
    %1809 = vdwg.mxu0
    %v1810 = vsel %vm1643, %v1797, -inf
    %1811 = vmax.xlane.f32.xlu0 %v1810
    %v1812 = vpop.xlane.xlu0 %1811
    %v1813 = vsel %vm1643, %v1800, -inf
    %1814 = vmax.xlane.f32.xlu0 %v1813
    %v1815 = vpop.xlane.xlu0 %1814
    %v1816 = vsel %vm1650, %v1805, -inf
    %1817 = vmax.xlane.f32.xlu0 %v1816
    %v1818 = vpop.xlane.xlu0 %1817
    %v1819 = vsub.f32 %v1797, %v1812
    %v1820 = vsub.f32 %v1800, %v1815
    %v1821 = vsub.f32 %v1805, %v1818
    %v1822 = vmul.f32 %v1819, 1.442695
    %v1823 = vpow.pop %v1822
    %v1824 = vmul.f32 %v1820, 1.442695
    %v1825 = vpow.pop %v1824
    %v1826 = vmul.f32 %v1821, 1.442695
    %v1827 = vpow.pop %v1826
    %v1828 = vsel %vm1643, %v1823, 0.0
    %1829 = vadd.xlane.f32.xlu0 %v1828
    %v1830 = vpop.xlane.xlu0 %1829
    %v1831 = vsel %vm1643, %v1825, 0.0
    %1832 = vadd.xlane.f32.xlu0 %v1831
    %v1833 = vpop.xlane.xlu0 %1832
    %v1834 = vsel %vm1650, %v1827, 0.0
    %1835 = vadd.xlane.f32.xlu0 %v1834
    %v1836 = vpop.xlane.xlu0 %1835
    %v1837 = vrcp.pop %v1830
    %v1838 = vmul.f32 %v1823, %v1837
    %v1839 = vrcp.pop %v1833
    %v1840 = vmul.f32 %v1825, %v1839
    %v1841 = vrcp.pop %v1836
    %v1842 = vmul.f32 %v1827, %v1841
    %v1843 = vpack.c.bf16 %v1840, %v1838
    %v1844 = vpack.c.bf16 %v1842, %v1842
    %1845 = vrot.lane.b32.xlu0 %v1574, 88
    %v1846 = vpop.permute.xlu0 %1845
    %1847 = vrot.lane.b32.xlu0 %v1575, 88
    %v1848 = vpop.permute.xlu0 %1847
    %v1851 = vsel %vm1643, %v1843, 0
    %v1854 = vsel %vm1643, %v1844, 0
    %v1857 = vsel %vm1111, %v1848, 0
    %1859 = vmatprep.subr.bf16.mxu0 0
    %1860 = vmatpush1.bf16.msra.mxu0 %v1846
    %1861 = vmatprep.subr.bf16.mxu0 0
    %1862 = vmatpush1.bf16.msra.mxu0 %v1857
    %1863 = vmatprep.subr.bf16.mxu0 0
    %1864 = vmatpush1.bf16.msra.mxu0 0
    %1865 = vmatprep.subr.bf16.mxu0 0
    %1866 = vmatpush1.bf16.msra.mxu0 0
    %1867 = vmatprep.subr.bf16.mxu0 0
    %1868 = vmatpush1.bf16.msra.mxu0 0
    %1869 = vmatprep.subr.bf16.mxu0 0
    %1870 = vmatpush1.bf16.msra.mxu0 0
    %1871 = vmatprep.subr.bf16.mxu0 0
    %1872 = vmatpush1.bf16.msra.mxu0 0
    %1873 = vmatprep.subr.bf16.mxu0 0
    %1874 = vmatpush1.bf16.msra.mxu0 0
    %1875 = vmatprep.subr.bf16.mxu0 0
    %1876 = vmatpush1.bf16.msra.mxu0 0
    %1877 = vmatprep.subr.bf16.mxu0 0
    %1878 = vmatpush1.bf16.msra.mxu0 0
    %1879 = vmatprep.subr.bf16.mxu0 0
    %1880 = vmatpush1.bf16.msra.mxu0 0
    %1881 = vmatprep.subr.bf16.mxu0 0
    %1882 = vmatpush1.bf16.msra.mxu0 0
    %1883 = vmatprep.subr.bf16.mxu0 0
    %1884 = vmatpush1.bf16.msra.mxu0 0
    %1885 = vmatprep.subr.bf16.mxu0 0
    %1886 = vmatpush1.bf16.msra.mxu0 0
    %1887 = vmatprep.subr.bf16.mxu0 0
    %1888 = vmatpush1.bf16.msra.mxu0 0
    %1889 = vmatprep.subr.bf16.mxu0 0
    %1890 = vmatpush1.bf16.msra.mxu0 0
    %1891 = vmatprep.mubr.bf16.mxu0 0
    %1892 = vmatmul.mubr.bf16.gmra.mrb[0].mxu0 %v1851
    %v1893 = vpop.f32.mrb[0].mxu0
    %v1894 = vadd.f32 0.0, %v1893
    %v1895 = vpop.f32.mrb[0].mxu0
    %v1896 = vpop.f32.mrb[0].mxu0
    %v1897 = vadd.f32 0.0, %v1896
    %v1898 = vpop.f32.mrb[0].mxu0
    %1899 = vmatprep.mubr.bf16.mxu0 0
    %1900 = vmatmul.mubr.bf16.gmra.mrb[0].mxu0 %v1854
    %v1901 = vpop.f32.mrb[0].mxu0
    %v1902 = vadd.f32 0.0, %v1901
    %v1903 = vpop.f32.mrb[0].mxu0
    %v1904 = vpop.f32.mrb[0].mxu0
    %v1905 = vpop.f32.mrb[0].mxu0
    %1906 = vdwg.mxu0
    %1910 = vrot.lane.b32.xlu0 %v1894, 8
    %v1911 = vpop.permute.xlu0 %1910
    %1912 = vrot.lane.b32.xlu0 %v1897, 8
    %v1913 = vpop.permute.xlu0 %1912
    %1914 = vrot.lane.b32.xlu0 %v1902, 8
    %v1915 = vpop.permute.xlu0 %1914
    %v1919 = vsel %vm1582, %v1729, %v1911
    %v1920 = vsel %vm1582, %v1732, %v1913
    %v1921 = vsel %vm1582, %v1737, %v1915
    %v1922 = vpack.c.bf16 %v1564, %v1561
    %v1923 = vpack.c.bf16 %v1569, %v1569
    %vm1926 = vcmask 1045504
    %v1927 = vrot.slane %v1922, 2
    %v1928 = vrot.slane %v1923, 2
    %v1929 = vsel %vm1926, %v1927, %v1928
    %1930 = vrot.lane.b32.xlu0 %v1929, 112
    %v1931 = vpop.permute.xlu0 %1930
    %1932 = vrot.lane.b32.xlu0 %v1928, 112
    %v1933 = vpop.permute.xlu0 %1932
    %v1935 = vsel %vm1582, %v1929, 0
    %v1938 = vsel %vm1582, %v1928, 0
    %v1941 = vsel %vm1582, %v1931, 0
    %v1944 = vsel %vm1582, %v1933, 0
    %1946 = vmatprep.subr.bf16.mxu0 0
    %1947 = vmatpush1.bf16.xpose.msra.mxu0 %v1941
    %1948 = vmatprep.subr.bf16.mxu0 0
    %1949 = vmatpush1.bf16.xpose.msra.mxu0 %v1944
    %1950 = vmatprep.subr.bf16.mxu0 0
    %1951 = vmatpush1.bf16.xpose.msra.mxu0 0
    %1952 = vmatprep.subr.bf16.mxu0 0
    %1953 = vmatpush1.bf16.xpose.msra.mxu0 0
    %1954 = vmatprep.subr.bf16.mxu0 0
    %1955 = vmatpush1.bf16.xpose.msra.mxu0 0
    %1956 = vmatprep.subr.bf16.mxu0 0
    %1957 = vmatpush1.bf16.xpose.msra.mxu0 0
    %1958 = vmatprep.subr.bf16.mxu0 0
    %1959 = vmatpush1.bf16.xpose.msra.mxu0 0
    %1960 = vmatprep.subr.bf16.mxu0 0
    %1961 = vmatpush1.bf16.xpose.msra.mxu0 0
    %1962 = vmatprep.subr.bf16.mxu0 0
    %1963 = vmatpush1.bf16.xpose.msra.mxu0 0
    %1964 = vmatprep.subr.bf16.mxu0 0
    %1965 = vmatpush1.bf16.xpose.msra.mxu0 0
    %1966 = vmatprep.subr.bf16.mxu0 0
    %1967 = vmatpush1.bf16.xpose.msra.mxu0 0
    %1968 = vmatprep.subr.bf16.mxu0 0
    %1969 = vmatpush1.bf16.xpose.msra.mxu0 0
    %1970 = vmatprep.subr.bf16.mxu0 0
    %1971 = vmatpush1.bf16.xpose.msra.mxu0 0
    %1972 = vmatprep.subr.bf16.mxu0 0
    %1973 = vmatpush1.bf16.xpose.msra.mxu0 0
    %1974 = vmatprep.subr.bf16.mxu0 0
    %1975 = vmatpush1.bf16.xpose.msra.mxu0 0
    %1976 = vmatprep.subr.bf16.mxu0 0
    %1977 = vmatpush1.bf16.xpose.msra.mxu0 0
    %1978 = vmatprep.mubr.bf16.mxu0 0
    %1979 = vmatmul.mubr.bf16.gmra.mrb[0].mxu0 %v1935
    %v1980 = vpop.f32.mrb[0].mxu0
    %v1981 = vadd.f32 0.0, %v1980
    %v1982 = vpop.f32.mrb[0].mxu0
    %v1983 = vpop.f32.mrb[0].mxu0
    %v1984 = vadd.f32 0.0, %v1983
    %v1985 = vpop.f32.mrb[0].mxu0
    %1986 = vmatprep.mubr.bf16.mxu0 0
    %1987 = vmatmul.mubr.bf16.gmra.mrb[0].mxu0 %v1938
    %v1988 = vpop.f32.mrb[0].mxu0
    %v1989 = vadd.f32 0.0, %v1988
    %v1990 = vpop.f32.mrb[0].mxu0
    %v1991 = vpop.f32.mrb[0].mxu0
    %v1992 = vpop.f32.mrb[0].mxu0
    %1993 = vdwg.mxu0
    %v1994 = vsel %vm1643, %v1981, -inf
    %1995 = vmax.xlane.f32.xlu0 %v1994
    %v1996 = vpop.xlane.xlu0 %1995
    %v1997 = vsel %vm1643, %v1984, -inf
    %1998 = vmax.xlane.f32.xlu0 %v1997
    %v1999 = vpop.xlane.xlu0 %1998
    %v2000 = vsel %vm1650, %v1989, -inf
    %2001 = vmax.xlane.f32.xlu0 %v2000
    %v2002 = vpop.xlane.xlu0 %2001
    %v2003 = vsub.f32 %v1981, %v1996
    %v2004 = vsub.f32 %v1984, %v1999
    %v2005 = vsub.f32 %v1989, %v2002
    %v2006 = vmul.f32 %v2003, 1.442695
    %v2007 = vpow.pop %v2006
    %v2008 = vmul.f32 %v2004, 1.442695
    %v2009 = vpow.pop %v2008
    %v2010 = vmul.f32 %v2005, 1.442695
    %v2011 = vpow.pop %v2010
    %v2012 = vsel %vm1643, %v2007, 0.0
    %2013 = vadd.xlane.f32.xlu0 %v2012
    %v2014 = vpop.xlane.xlu0 %2013
    %v2015 = vsel %vm1643, %v2009, 0.0
    %2016 = vadd.xlane.f32.xlu0 %v2015
    %v2017 = vpop.xlane.xlu0 %2016
    %v2018 = vsel %vm1650, %v2011, 0.0
    %2019 = vadd.xlane.f32.xlu0 %v2018
    %v2020 = vpop.xlane.xlu0 %2019
    %v2021 = vrcp.pop %v2014
    %v2022 = vmul.f32 %v2007, %v2021
    %v2023 = vrcp.pop %v2017
    %v2024 = vmul.f32 %v2009, %v2023
    %v2025 = vrcp.pop %v2020
    %v2026 = vmul.f32 %v2011, %v2025
    %v2027 = vpack.c.bf16 %v2024, %v2022
    %v2028 = vpack.c.bf16 %v2026, %v2026
    %2029 = vrot.lane.b32.xlu0 %v1929, 96
    %v2030 = vpop.permute.xlu0 %2029
    %2031 = vrot.lane.b32.xlu0 %v1928, 96
    %v2032 = vpop.permute.xlu0 %2031
    %v2035 = vsel %vm1643, %v2027, 0
    %v2038 = vsel %vm1643, %v2028, 0
    %v2041 = vsel %vm1111, %v2032, 0
    %2043 = vmatprep.subr.bf16.mxu0 0
    %2044 = vmatpush1.bf16.msra.mxu0 %v2030
    %2045 = vmatprep.subr.bf16.mxu0 0
    %2046 = vmatpush1.bf16.msra.mxu0 %v2041
    %2047 = vmatprep.subr.bf16.mxu0 0
    %2048 = vmatpush1.bf16.msra.mxu0 0
    %2049 = vmatprep.subr.bf16.mxu0 0
    %2050 = vmatpush1.bf16.msra.mxu0 0
    %2051 = vmatprep.subr.bf16.mxu0 0
    %2052 = vmatpush1.bf16.msra.mxu0 0
    %2053 = vmatprep.subr.bf16.mxu0 0
    %2054 = vmatpush1.bf16.msra.mxu0 0
    %2055 = vmatprep.subr.bf16.mxu0 0
    %2056 = vmatpush1.bf16.msra.mxu0 0
    %2057 = vmatprep.subr.bf16.mxu0 0
    %2058 = vmatpush1.bf16.msra.mxu0 0
    %2059 = vmatprep.subr.bf16.mxu0 0
    %2060 = vmatpush1.bf16.msra.mxu0 0
    %2061 = vmatprep.subr.bf16.mxu0 0
    %2062 = vmatpush1.bf16.msra.mxu0 0
    %2063 = vmatprep.subr.bf16.mxu0 0
    %2064 = vmatpush1.bf16.msra.mxu0 0
    %2065 = vmatprep.subr.bf16.mxu0 0
    %2066 = vmatpush1.bf16.msra.mxu0 0
    %2067 = vmatprep.subr.bf16.mxu0 0
    %2068 = vmatpush1.bf16.msra.mxu0 0
    %2069 = vmatprep.subr.bf16.mxu0 0
    %2070 = vmatpush1.bf16.msra.mxu0 0
    %2071 = vmatprep.subr.bf16.mxu0 0
    %2072 = vmatpush1.bf16.msra.mxu0 0
    %2073 = vmatprep.subr.bf16.mxu0 0
    %2074 = vmatpush1.bf16.msra.mxu0 0
    %2075 = vmatprep.mubr.bf16.mxu0 0
    %2076 = vmatmul.mubr.bf16.gmra.mrb[0].mxu0 %v2035
    %v2077 = vpop.f32.mrb[0].mxu0
    %v2078 = vadd.f32 0.0, %v2077
    %v2079 = vpop.f32.mrb[0].mxu0
    %v2080 = vpop.f32.mrb[0].mxu0
    %v2081 = vadd.f32 0.0, %v2080
    %v2082 = vpop.f32.mrb[0].mxu0
    %2083 = vmatprep.mubr.bf16.mxu0 0
    %2084 = vmatmul.mubr.bf16.gmra.mrb[0].mxu0 %v2038
    %v2085 = vpop.f32.mrb[0].mxu0
    %v2086 = vadd.f32 0.0, %v2085
    %v2087 = vpop.f32.mrb[0].mxu0
    %v2088 = vpop.f32.mrb[0].mxu0
    %v2089 = vpop.f32.mrb[0].mxu0
    %2090 = vdwg.mxu0
    %2091 = vrot.lane.b32.xlu0 %v1929, 120
    %v2092 = vpop.permute.xlu0 %2091
    %2093 = vrot.lane.b32.xlu0 %v1928, 120
    %v2094 = vpop.permute.xlu0 %2093
    %2095 = vrot.lane.b32.xlu0 %v1929, 104
    %v2096 = vpop.permute.xlu0 %2095
    %2097 = vrot.lane.b32.xlu0 %v1928, 104
    %v2098 = vpop.permute.xlu0 %2097
    %v2100 = vsel %vm1582, %v2092, 0
    %v2103 = vsel %vm1582, %v2094, 0
    %v2106 = vsel %vm1582, %v2096, 0
    %v2109 = vsel %vm1582, %v2098, 0
    %2111 = vmatprep.subr.bf16.mxu0 0
    %2112 = vmatpush1.bf16.xpose.msra.mxu0 %v2106
    %2113 = vmatprep.subr.bf16.mxu0 0
    %2114 = vmatpush1.bf16.xpose.msra.mxu0 %v2109
    %2115 = vmatprep.subr.bf16.mxu0 0
    %2116 = vmatpush1.bf16.xpose.msra.mxu0 0
    %2117 = vmatprep.subr.bf16.mxu0 0
    %2118 = vmatpush1.bf16.xpose.msra.mxu0 0
    %2119 = vmatprep.subr.bf16.mxu0 0
    %2120 = vmatpush1.bf16.xpose.msra.mxu0 0
    %2121 = vmatprep.subr.bf16.mxu0 0
    %2122 = vmatpush1.bf16.xpose.msra.mxu0 0
    %2123 = vmatprep.subr.bf16.mxu0 0
    %2124 = vmatpush1.bf16.xpose.msra.mxu0 0
    %2125 = vmatprep.subr.bf16.mxu0 0
    %2126 = vmatpush1.bf16.xpose.msra.mxu0 0
    %2127 = vmatprep.subr.bf16.mxu0 0
    %2128 = vmatpush1.bf16.xpose.msra.mxu0 0
    %2129 = vmatprep.subr.bf16.mxu0 0
    %2130 = vmatpush1.bf16.xpose.msra.mxu0 0
    %2131 = vmatprep.subr.bf16.mxu0 0
    %2132 = vmatpush1.bf16.xpose.msra.mxu0 0
    %2133 = vmatprep.subr.bf16.mxu0 0
    %2134 = vmatpush1.bf16.xpose.msra.mxu0 0
    %2135 = vmatprep.subr.bf16.mxu0 0
    %2136 = vmatpush1.bf16.xpose.msra.mxu0 0
    %2137 = vmatprep.subr.bf16.mxu0 0
    %2138 = vmatpush1.bf16.xpose.msra.mxu0 0
    %2139 = vmatprep.subr.bf16.mxu0 0
    %2140 = vmatpush1.bf16.xpose.msra.mxu0 0
    %2141 = vmatprep.subr.bf16.mxu0 0
    %2142 = vmatpush1.bf16.xpose.msra.mxu0 0
    %2143 = vmatprep.mubr.bf16.mxu0 0
    %2144 = vmatmul.mubr.bf16.gmra.mrb[0].mxu0 %v2100
    %v2145 = vpop.f32.mrb[0].mxu0
    %v2146 = vadd.f32 0.0, %v2145
    %v2147 = vpop.f32.mrb[0].mxu0
    %v2148 = vpop.f32.mrb[0].mxu0
    %v2149 = vadd.f32 0.0, %v2148
    %v2150 = vpop.f32.mrb[0].mxu0
    %2151 = vmatprep.mubr.bf16.mxu0 0
    %2152 = vmatmul.mubr.bf16.gmra.mrb[0].mxu0 %v2103
    %v2153 = vpop.f32.mrb[0].mxu0
    %v2154 = vadd.f32 0.0, %v2153
    %v2155 = vpop.f32.mrb[0].mxu0
    %v2156 = vpop.f32.mrb[0].mxu0
    %v2157 = vpop.f32.mrb[0].mxu0
    %2158 = vdwg.mxu0
    %v2159 = vsel %vm1643, %v2146, -inf
    %2160 = vmax.xlane.f32.xlu0 %v2159
    %v2161 = vpop.xlane.xlu0 %2160
    %v2162 = vsel %vm1643, %v2149, -inf
    %2163 = vmax.xlane.f32.xlu0 %v2162
    %v2164 = vpop.xlane.xlu0 %2163
    %v2165 = vsel %vm1650, %v2154, -inf
    %2166 = vmax.xlane.f32.xlu0 %v2165
    %v2167 = vpop.xlane.xlu0 %2166
    %v2168 = vsub.f32 %v2146, %v2161
    %v2169 = vsub.f32 %v2149, %v2164
    %v2170 = vsub.f32 %v2154, %v2167
    %v2171 = vmul.f32 %v2168, 1.442695
    %v2172 = vpow.pop %v2171
    %v2173 = vmul.f32 %v2169, 1.442695
    %v2174 = vpow.pop %v2173
    %v2175 = vmul.f32 %v2170, 1.442695
    %v2176 = vpow.pop %v2175
    %v2177 = vsel %vm1643, %v2172, 0.0
    %2178 = vadd.xlane.f32.xlu0 %v2177
    %v2179 = vpop.xlane.xlu0 %2178
    %v2180 = vsel %vm1643, %v2174, 0.0
    %2181 = vadd.xlane.f32.xlu0 %v2180
    %v2182 = vpop.xlane.xlu0 %2181
    %v2183 = vsel %vm1650, %v2176, 0.0
    %2184 = vadd.xlane.f32.xlu0 %v2183
    %v2185 = vpop.xlane.xlu0 %2184
    %v2186 = vrcp.pop %v2179
    %v2187 = vmul.f32 %v2172, %v2186
    %v2188 = vrcp.pop %v2182
    %v2189 = vmul.f32 %v2174, %v2188
    %v2190 = vrcp.pop %v2185
    %v2191 = vmul.f32 %v2176, %v2190
    %v2192 = vpack.c.bf16 %v2189, %v2187
    %v2193 = vpack.c.bf16 %v2191, %v2191
    %2194 = vrot.lane.b32.xlu0 %v1929, 88
    %v2195 = vpop.permute.xlu0 %2194
    %2196 = vrot.lane.b32.xlu0 %v1928, 88
    %v2197 = vpop.permute.xlu0 %2196
    %v2200 = vsel %vm1643, %v2192, 0
    %v2203 = vsel %vm1643, %v2193, 0
    %v2206 = vsel %vm1111, %v2197, 0
    %2208 = vmatprep.subr.bf16.mxu0 0
    %2209 = vmatpush1.bf16.msra.mxu0 %v2195
    %2210 = vmatprep.subr.bf16.mxu0 0
    %2211 = vmatpush1.bf16.msra.mxu0 %v2206
    %2212 = vmatprep.subr.bf16.mxu0 0
    %2213 = vmatpush1.bf16.msra.mxu0 0
    %2214 = vmatprep.subr.bf16.mxu0 0
    %2215 = vmatpush1.bf16.msra.mxu0 0
    %2216 = vmatprep.subr.bf16.mxu0 0
    %2217 = vmatpush1.bf16.msra.mxu0 0
    %2218 = vmatprep.subr.bf16.mxu0 0
    %2219 = vmatpush1.bf16.msra.mxu0 0
    %2220 = vmatprep.subr.bf16.mxu0 0
    %2221 = vmatpush1.bf16.msra.mxu0 0
    %2222 = vmatprep.subr.bf16.mxu0 0
    %2223 = vmatpush1.bf16.msra.mxu0 0
    %2224 = vmatprep.subr.bf16.mxu0 0
    %2225 = vmatpush1.bf16.msra.mxu0 0
    %2226 = vmatprep.subr.bf16.mxu0 0
    %2227 = vmatpush1.bf16.msra.mxu0 0
    %2228 = vmatprep.subr.bf16.mxu0 0
    %2229 = vmatpush1.bf16.msra.mxu0 0
    %2230 = vmatprep.subr.bf16.mxu0 0
    %2231 = vmatpush1.bf16.msra.mxu0 0
    %2232 = vmatprep.subr.bf16.mxu0 0
    %2233 = vmatpush1.bf16.msra.mxu0 0
    %2234 = vmatprep.subr.bf16.mxu0 0
    %2235 = vmatpush1.bf16.msra.mxu0 0
    %2236 = vmatprep.subr.bf16.mxu0 0
    %2237 = vmatpush1.bf16.msra.mxu0 0
    %2238 = vmatprep.subr.bf16.mxu0 0
    %2239 = vmatpush1.bf16.msra.mxu0 0
    %2240 = vmatprep.mubr.bf16.mxu0 0
    %2241 = vmatmul.mubr.bf16.gmra.mrb[0].mxu0 %v2200
    %v2242 = vpop.f32.mrb[0].mxu0
    %v2243 = vadd.f32 0.0, %v2242
    %v2244 = vpop.f32.mrb[0].mxu0
    %v2245 = vpop.f32.mrb[0].mxu0
    %v2246 = vadd.f32 0.0, %v2245
    %v2247 = vpop.f32.mrb[0].mxu0
    %2248 = vmatprep.mubr.bf16.mxu0 0
    %2249 = vmatmul.mubr.bf16.gmra.mrb[0].mxu0 %v2203
    %v2250 = vpop.f32.mrb[0].mxu0
    %v2251 = vadd.f32 0.0, %v2250
    %v2252 = vpop.f32.mrb[0].mxu0
    %v2253 = vpop.f32.mrb[0].mxu0
    %v2254 = vpop.f32.mrb[0].mxu0
    %2255 = vdwg.mxu0
    %2259 = vrot.lane.b32.xlu0 %v2243, 8
    %v2260 = vpop.permute.xlu0 %2259
    %2261 = vrot.lane.b32.xlu0 %v2246, 8
    %v2262 = vpop.permute.xlu0 %2261
    %2263 = vrot.lane.b32.xlu0 %v2251, 8
    %v2264 = vpop.permute.xlu0 %2263
    %v2268 = vsel %vm1582, %v2078, %v2260
    %v2269 = vsel %vm1582, %v2081, %v2262
    %v2270 = vsel %vm1582, %v2086, %v2264
    %vm2274 = vcmask 1043456
    %v2275 = vrot.slane %v2268, 4
    %v2276 = vrot.slane %v2269, 4
    %v2277 = vsel %vm2274, %v2275, %v2276
    %v2278 = vrot.slane %v2270, 4
    %v2279 = vsel %vm2274, %v2276, %v2278
    %v2283 = vsel %vm2274, %v1921, %v2275
    %v2284 = vpack.c.bf16 %v1920, %v1919
    %v2285 = vpack.c.bf16 %v2277, %v2283
    %v2286 = vpack.c.bf16 %v2279, %v2279
    %v2289 = vunpack.c.l.b16 %v1485
    %v2290 = vunpack.c.l.b16 %v1486
    %v2291 = vpack.c.b16 %v2290, %v2289
    %v2294 = vsel %vm1508, %v2284, 0
    %v2297 = vsel %vm1508, %v2285, 0
    %v2300 = vsel %vm1508, %v2286, 0
    %2302 = vmatprep.subr.bf16.mxu0 0
    %2303 = vmatpush1.bf16.msra.mxu0 %v2291
    %2304 = vmatprep.subr.bf16.mxu0 0
    %2305 = vmatpush1.bf16.msra.mxu0 0
    %2306 = vmatprep.subr.bf16.mxu0 0
    %2307 = vmatpush1.bf16.msra.mxu0 0
    %2308 = vmatprep.subr.bf16.mxu0 0
    %2309 = vmatpush1.bf16.msra.mxu0 0
    %2310 = vmatprep.subr.bf16.mxu0 0
    %2311 = vmatpush1.bf16.msra.mxu0 0
    %2312 = vmatprep.subr.bf16.mxu0 0
    %2313 = vmatpush1.bf16.msra.mxu0 0
    %2314 = vmatprep.subr.bf16.mxu0 0
    %2315 = vmatpush1.bf16.msra.mxu0 0
    %2316 = vmatprep.subr.bf16.mxu0 0
    %2317 = vmatpush1.bf16.msra.mxu0 0
    %2318 = vmatprep.subr.bf16.mxu0 0
    %2319 = vmatpush1.bf16.msra.mxu0 0
    %2320 = vmatprep.subr.bf16.mxu0 0
    %2321 = vmatpush1.bf16.msra.mxu0 0
    %2322 = vmatprep.subr.bf16.mxu0 0
    %2323 = vmatpush1.bf16.msra.mxu0 0
    %2324 = vmatprep.subr.bf16.mxu0 0
    %2325 = vmatpush1.bf16.msra.mxu0 0
    %2326 = vmatprep.subr.bf16.mxu0 0
    %2327 = vmatpush1.bf16.msra.mxu0 0
    %2328 = vmatprep.subr.bf16.mxu0 0
    %2329 = vmatpush1.bf16.msra.mxu0 0
    %2330 = vmatprep.subr.bf16.mxu0 0
    %2331 = vmatpush1.bf16.msra.mxu0 0
    %2332 = vmatprep.subr.bf16.mxu0 0
    %2333 = vmatpush1.bf16.msra.mxu0 0
    %2334 = vmatprep.mubr.bf16.mxu0 0
    %2335 = vmatmul.mubr.bf16.gmra.mrb[0].mxu0 %v2294
    %v2336 = vpop.f32.mrb[0].mxu0
    %v2337 = vadd.f32 %v1462, %v2336
    %v2338 = vpop.f32.mrb[0].mxu0
    %v2339 = vpop.f32.mrb[0].mxu0
    %v2340 = vadd.f32 %v1465, %v2339
    %v2341 = vpop.f32.mrb[0].mxu0
    %2342 = vmatprep.mubr.bf16.mxu0 0
    %2343 = vmatmul.mubr.bf16.gmra.mrb[0].mxu0 %v2297
    %v2344 = vpop.f32.mrb[0].mxu0
    %v2345 = vadd.f32 %v1470, %v2344
    %v2346 = vpop.f32.mrb[0].mxu0
    %v2347 = vpop.f32.mrb[0].mxu0
    %v2348 = vadd.f32 %v1473, %v2347
    %v2349 = vpop.f32.mrb[0].mxu0
    %2350 = vmatprep.mubr.bf16.mxu0 0
    %2351 = vmatmul.mubr.bf16.gmra.mrb[0].mxu0 %v2300
    %v2352 = vpop.f32.mrb[0].mxu0
    %v2353 = vadd.f32 %v1478, %v2352
    %v2354 = vpop.f32.mrb[0].mxu0
    %v2355 = vpop.f32.mrb[0].mxu0
    %v2356 = vpop.f32.mrb[0].mxu0
    %2357 = vdwg.mxu0
    %v2358 = vsel %vm1508, %v2337, 0.0
    %2359 = vadd.xlane.f32.xlu0 %v2358
    %v2360 = vpop.xlane.xlu0 %2359
    %v2361 = vsel %vm1508, %v2340, 0.0
    %2362 = vadd.xlane.f32.xlu0 %v2361
    %v2363 = vpop.xlane.xlu0 %2362
    %v2364 = vsel %vm1508, %v2345, 0.0
    %2365 = vadd.xlane.f32.xlu0 %v2364
    %v2366 = vpop.xlane.xlu0 %2365
    %v2367 = vsel %vm1508, %v2348, 0.0
    %2368 = vadd.xlane.f32.xlu0 %v2367
    %v2369 = vpop.xlane.xlu0 %2368
    %v2370 = vsel %vm1508, %v2353, 0.0
    %2371 = vadd.xlane.f32.xlu0 %v2370
    %v2372 = vpop.xlane.xlu0 %2371
    %v2373 = vrcp.pop 16.0
    %v2374 = vmul.f32 %v2360, %v2373
    %v2375 = vmul.f32 %v2363, %v2373
    %v2376 = vmul.f32 %v2366, %v2373
    %v2377 = vmul.f32 %v2369, %v2373
    %v2378 = vmul.f32 %v2372, %v2373
    %v2379 = vsub.f32 %v2337, %v2374
    %v2380 = vsub.f32 %v2340, %v2375
    %v2381 = vsub.f32 %v2345, %v2376
    %v2382 = vsub.f32 %v2348, %v2377
    %v2383 = vsub.f32 %v2353, %v2378
    %v2384 = vmul.f32 %v2379, %v2379
    %v2385 = vmul.f32 %v2380, %v2380
    %v2386 = vmul.f32 %v2381, %v2381
    %v2387 = vmul.f32 %v2382, %v2382
    %v2388 = vmul.f32 %v2383, %v2383
    %v2389 = vsel %vm1508, %v2384, 0.0
    %2390 = vadd.xlane.f32.xlu0 %v2389
    %v2391 = vpop.xlane.xlu0 %2390
    %v2392 = vsel %vm1508, %v2385, 0.0
    %2393 = vadd.xlane.f32.xlu0 %v2392
    %v2394 = vpop.xlane.xlu0 %2393
    %v2395 = vsel %vm1508, %v2386, 0.0
    %2396 = vadd.xlane.f32.xlu0 %v2395
    %v2397 = vpop.xlane.xlu0 %2396
    %v2398 = vsel %vm1508, %v2387, 0.0
    %2399 = vadd.xlane.f32.xlu0 %v2398
    %v2400 = vpop.xlane.xlu0 %2399
    %v2401 = vsel %vm1508, %v2388, 0.0
    %2402 = vadd.xlane.f32.xlu0 %v2401
    %v2403 = vpop.xlane.xlu0 %2402
    %v2404 = vmul.f32 %v2391, %v2373
    %v2405 = vmul.f32 %v2394, %v2373
    %v2406 = vmul.f32 %v2397, %v2373
    %v2407 = vmul.f32 %v2400, %v2373
    %v2408 = vmul.f32 %v2403, %v2373
    %v2409 = vadd.f32 %v2404, 1e-06
    %v2410 = vadd.f32 %v2405, 1e-06
    %v2411 = vadd.f32 %v2406, 1e-06
    %v2412 = vadd.f32 %v2407, 1e-06
    %v2413 = vadd.f32 %v2408, 1e-06
    %v2414 = vrsqrt.pop %v2409
    %v2415 = vrsqrt.pop %v2410
    %v2416 = vrsqrt.pop %v2411
    %v2417 = vrsqrt.pop %v2412
    %v2418 = vrsqrt.pop %v2413
    %v2419 = vmul.f32 %v2379, %v2414
    %v2420 = vmul.f32 %v2380, %v2415
    %v2421 = vmul.f32 %v2381, %v2416
    %v2422 = vmul.f32 %v2382, %v2417
    %v2423 = vmul.f32 %v2383, %v2418
    %v2425 = vlaneseq
    %v2426 = vshrl.u32 %v2425, 7
    %v2427 = vsub.s32 0, %v2426
    %v2428 = vrot.slane %v1487, %v2427
    %v2430 = vmul.f32 %v2419, %v2428
    %v2431 = vmul.f32 %v2420, %v2428
    %v2432 = vmul.f32 %v2421, %v2428
    %v2433 = vmul.f32 %v2422, %v2428
    %v2434 = vmul.f32 %v2423, %v2428
    %v2436 = vlaneseq
    %v2437 = vshrl.u32 %v2436, 7
    %v2438 = vsub.s32 0, %v2437
    %v2439 = vrot.slane %v1488, %v2438
    %v2441 = vadd.f32 %v2430, %v2439
    %v2442 = vadd.f32 %v2431, %v2439
    %v2443 = vadd.f32 %v2432, %v2439
    %v2444 = vadd.f32 %v2433, %v2439
    %v2445 = vadd.f32 %v2434, %v2439
    %v2446 = vpack.c.bf16 %v2442, %v2441
    %v2447 = vpack.c.bf16 %v2444, %v2443
    %v2448 = vpack.c.bf16 %v2445, %v2445
    %v2450 = vlaneseq
    %v2451 = vshrl.u32 %v2450, 7
    %v2452 = vsub.s32 0, %v2451
    %v2453 = vrot.slane %v1491, %v2452
    %v2457 = vunpack.c.l.b16 %v1489
    %v2458 = vunpack.c.l.b16 %v1490
    %v2459 = vpack.c.b16 %v2458, %v2457
    %v2462 = vsel %vm1508, %v2446, 0
    %v2465 = vsel %vm1508, %v2447, 0
    %v2468 = vsel %vm1508, %v2448, 0
    %2470 = vmatprep.subr.bf16.mxu0 0
    %2471 = vmatpush1.bf16.msra.mxu0 %v2459
    %2472 = vmatprep.subr.bf16.mxu0 0
    %2473 = vmatpush1.bf16.msra.mxu0 0
    %2474 = vmatprep.subr.bf16.mxu0 0
    %2475 = vmatpush1.bf16.msra.mxu0 0
    %2476 = vmatprep.subr.bf16.mxu0 0
    %2477 = vmatpush1.bf16.msra.mxu0 0
    %2478 = vmatprep.subr.bf16.mxu0 0
    %2479 = vmatpush1.bf16.msra.mxu0 0
    %2480 = vmatprep.subr.bf16.mxu0 0
    %2481 = vmatpush1.bf16.msra.mxu0 0
    %2482 = vmatprep.subr.bf16.mxu0 0
    %2483 = vmatpush1.bf16.msra.mxu0 0
    %2484 = vmatprep.subr.bf16.mxu0 0
    %2485 = vmatpush1.bf16.msra.mxu0 0
    %2486 = vmatprep.subr.bf16.mxu0 0
    %2487 = vmatpush1.bf16.msra.mxu0 0
    %2488 = vmatprep.subr.bf16.mxu0 0
    %2489 = vmatpush1.bf16.msra.mxu0 0
    %2490 = vmatprep.subr.bf16.mxu0 0
    %2491 = vmatpush1.bf16.msra.mxu0 0
    %2492 = vmatprep.subr.bf16.mxu0 0
    %2493 = vmatpush1.bf16.msra.mxu0 0
    %2494 = vmatprep.subr.bf16.mxu0 0
    %2495 = vmatpush1.bf16.msra.mxu0 0
    %2496 = vmatprep.subr.bf16.mxu0 0
    %2497 = vmatpush1.bf16.msra.mxu0 0
    %2498 = vmatprep.subr.bf16.mxu0 0
    %2499 = vmatpush1.bf16.msra.mxu0 0
    %2500 = vmatprep.subr.bf16.mxu0 0
    %2501 = vmatpush1.bf16.msra.mxu0 0
    %2502 = vmatprep.mubr.bf16.mxu0 0
    %2503 = vmatmul.mubr.bf16.gmra.mrb[0].mxu0 %v2462
    %v2504 = vpop.f32.mrb[0].mxu0
    %v2505 = vadd.f32 %v2453, %v2504
    %v2506 = vpop.f32.mrb[0].mxu0
    %v2507 = vpop.f32.mrb[0].mxu0
    %v2508 = vadd.f32 %v2453, %v2507
    %v2509 = vpop.f32.mrb[0].mxu0
    %2510 = vmatprep.mubr.bf16.mxu0 0
    %2511 = vmatmul.mubr.bf16.gmra.mrb[0].mxu0 %v2465
    %v2512 = vpop.f32.mrb[0].mxu0
    %v2513 = vadd.f32 %v2453, %v2512
    %v2514 = vpop.f32.mrb[0].mxu0
    %v2515 = vpop.f32.mrb[0].mxu0
    %v2516 = vadd.f32 %v2453, %v2515
    %v2517 = vpop.f32.mrb[0].mxu0
    %2518 = vmatprep.mubr.bf16.mxu0 0
    %2519 = vmatmul.mubr.bf16.gmra.mrb[0].mxu0 %v2468
    %v2520 = vpop.f32.mrb[0].mxu0
    %v2521 = vadd.f32 %v2453, %v2520
    %v2522 = vpop.f32.mrb[0].mxu0
    %v2523 = vpop.f32.mrb[0].mxu0
    %v2524 = vpop.f32.mrb[0].mxu0
    %2525 = vdwg.mxu0
    %v2526 = vmax.f32 %v2505, 0.0
    %v2527 = vmax.f32 %v2508, 0.0
    %v2528 = vmax.f32 %v2513, 0.0
    %v2529 = vmax.f32 %v2516, 0.0
    %v2530 = vmax.f32 %v2521, 0.0
    %v2531 = vpack.c.bf16 %v2527, %v2526
    %v2532 = vpack.c.bf16 %v2529, %v2528
    %v2533 = vpack.c.bf16 %v2530, %v2530
    %v2535 = vlaneseq
    %v2536 = vshrl.u32 %v2535, 7
    %v2537 = vsub.s32 0, %v2536
    %v2538 = vrot.slane %v1496, %v2537
    %v2544 = vunpack.c.l.b16 %v1492
    %v2545 = vunpack.c.l.b16 %v1493
    %v2546 = vunpack.c.l.b16 %v1494
    %v2547 = vunpack.c.l.b16 %v1495
    %v2548 = vpack.c.b16 %v2545, %v2544
    %v2549 = vpack.c.b16 %v2547, %v2546
    %vm2552 = vcmask 261120
    %v2554 = vsel %vm2552, %v2531, 0
    %v2557 = vsel %vm2552, %v2532, 0
    %v2560 = vsel %vm2552, %v2533, 0
    %2562 = vmatprep.subr.bf16.mxu0 0
    %2563 = vmatpush1.bf16.msra.mxu0 %v2548
    %2564 = vmatprep.subr.bf16.mxu0 0
    %2565 = vmatpush1.bf16.msra.mxu0 %v2549
    %2566 = vmatprep.subr.bf16.mxu0 0
    %2567 = vmatpush1.bf16.msra.mxu0 0
    %2568 = vmatprep.subr.bf16.mxu0 0
    %2569 = vmatpush1.bf16.msra.mxu0 0
    %2570 = vmatprep.subr.bf16.mxu0 0
    %2571 = vmatpush1.bf16.msra.mxu0 0
    %2572 = vmatprep.subr.bf16.mxu0 0
    %2573 = vmatpush1.bf16.msra.mxu0 0
    %2574 = vmatprep.subr.bf16.mxu0 0
    %2575 = vmatpush1.bf16.msra.mxu0 0
    %2576 = vmatprep.subr.bf16.mxu0 0
    %2577 = vmatpush1.bf16.msra.mxu0 0
    %2578 = vmatprep.subr.bf16.mxu0 0
    %2579 = vmatpush1.bf16.msra.mxu0 0
    %2580 = vmatprep.subr.bf16.mxu0 0
    %2581 = vmatpush1.bf16.msra.mxu0 0
    %2582 = vmatprep.subr.bf16.mxu0 0
    %2583 = vmatpush1.bf16.msra.mxu0 0
    %2584 = vmatprep.subr.bf16.mxu0 0
    %2585 = vmatpush1.bf16.msra.mxu0 0
    %2586 = vmatprep.subr.bf16.mxu0 0
    %2587 = vmatpush1.bf16.msra.mxu0 0
    %2588 = vmatprep.subr.bf16.mxu0 0
    %2589 = vmatpush1.bf16.msra.mxu0 0
    %2590 = vmatprep.subr.bf16.mxu0 0
    %2591 = vmatpush1.bf16.msra.mxu0 0
    %2592 = vmatprep.subr.bf16.mxu0 0
    %2593 = vmatpush1.bf16.msra.mxu0 0
    %2594 = vmatprep.mubr.bf16.mxu0 0
    %2595 = vmatmul.mubr.bf16.gmra.mrb[0].mxu0 %v2554
    %v2596 = vpop.f32.mrb[0].mxu0
    %v2597 = vadd.f32 %v2538, %v2596
    %v2598 = vpop.f32.mrb[0].mxu0
    %v2599 = vpop.f32.mrb[0].mxu0
    %v2600 = vadd.f32 %v2538, %v2599
    %v2601 = vpop.f32.mrb[0].mxu0
    %2602 = vmatprep.mubr.bf16.mxu0 0
    %2603 = vmatmul.mubr.bf16.gmra.mrb[0].mxu0 %v2557
    %v2604 = vpop.f32.mrb[0].mxu0
    %v2605 = vadd.f32 %v2538, %v2604
    %v2606 = vpop.f32.mrb[0].mxu0
    %v2607 = vpop.f32.mrb[0].mxu0
    %v2608 = vadd.f32 %v2538, %v2607
    %v2609 = vpop.f32.mrb[0].mxu0
    %2610 = vmatprep.mubr.bf16.mxu0 0
    %2611 = vmatmul.mubr.bf16.gmra.mrb[0].mxu0 %v2560
    %v2612 = vpop.f32.mrb[0].mxu0
    %v2613 = vadd.f32 %v2538, %v2612
    %v2614 = vpop.f32.mrb[0].mxu0
    %v2615 = vpop.f32.mrb[0].mxu0
    %v2616 = vpop.f32.mrb[0].mxu0
    %2617 = vdwg.mxu0
    %v2618 = vadd.f32 %v2597, %v2441
    %v2619 = vadd.f32 %v2600, %v2442
    %v2620 = vadd.f32 %v2605, %v2443
    %v2621 = vadd.f32 %v2608, %v2444
    %v2622 = vadd.f32 %v2613, %v2445
    %v2623 = vsel %vm1508, %v2618, 0.0
    %2624 = vadd.xlane.f32.xlu0 %v2623
    %v2625 = vpop.xlane.xlu0 %2624
    %v2626 = vsel %vm1508, %v2619, 0.0
    %2627 = vadd.xlane.f32.xlu0 %v2626
    %v2628 = vpop.xlane.xlu0 %2627
    %v2629 = vsel %vm1508, %v2620, 0.0
    %2630 = vadd.xlane.f32.xlu0 %v2629
    %v2631 = vpop.xlane.xlu0 %2630
    %v2632 = vsel %vm1508, %v2621, 0.0
    %2633 = vadd.xlane.f32.xlu0 %v2632
    %v2634 = vpop.xlane.xlu0 %2633
    %v2635 = vsel %vm1508, %v2622, 0.0
    %2636 = vadd.xlane.f32.xlu0 %v2635
    %v2637 = vpop.xlane.xlu0 %2636
    %v2638 = vmul.f32 %v2625, %v2373
    %v2639 = vmul.f32 %v2628, %v2373
    %v2640 = vmul.f32 %v2631, %v2373
    %v2641 = vmul.f32 %v2634, %v2373
    %v2642 = vmul.f32 %v2637, %v2373
    %v2643 = vsub.f32 %v2618, %v2638
    %v2644 = vsub.f32 %v2619, %v2639
    %v2645 = vsub.f32 %v2620, %v2640
    %v2646 = vsub.f32 %v2621, %v2641
    %v2647 = vsub.f32 %v2622, %v2642
    %v2648 = vmul.f32 %v2643, %v2643
    %v2649 = vmul.f32 %v2644, %v2644
    %v2650 = vmul.f32 %v2645, %v2645
    %v2651 = vmul.f32 %v2646, %v2646
    %v2652 = vmul.f32 %v2647, %v2647
    %v2653 = vsel %vm1508, %v2648, 0.0
    %2654 = vadd.xlane.f32.xlu0 %v2653
    %v2655 = vpop.xlane.xlu0 %2654
    %v2656 = vsel %vm1508, %v2649, 0.0
    %2657 = vadd.xlane.f32.xlu0 %v2656
    %v2658 = vpop.xlane.xlu0 %2657
    %v2659 = vsel %vm1508, %v2650, 0.0
    %2660 = vadd.xlane.f32.xlu0 %v2659
    %v2661 = vpop.xlane.xlu0 %2660
    %v2662 = vsel %vm1508, %v2651, 0.0
    %2663 = vadd.xlane.f32.xlu0 %v2662
    %v2664 = vpop.xlane.xlu0 %2663
    %v2665 = vsel %vm1508, %v2652, 0.0
    %2666 = vadd.xlane.f32.xlu0 %v2665
    %v2667 = vpop.xlane.xlu0 %2666
    %v2668 = vmul.f32 %v2655, %v2373
    %v2669 = vmul.f32 %v2658, %v2373
    %v2670 = vmul.f32 %v2661, %v2373
    %v2671 = vmul.f32 %v2664, %v2373
    %v2672 = vmul.f32 %v2667, %v2373
    %v2673 = vadd.f32 %v2668, 1e-06
    %v2674 = vadd.f32 %v2669, 1e-06
    %v2675 = vadd.f32 %v2670, 1e-06
    %v2676 = vadd.f32 %v2671, 1e-06
    %v2677 = vadd.f32 %v2672, 1e-06
    %v2678 = vrsqrt.pop %v2673
    %v2679 = vrsqrt.pop %v2674
    %v2680 = vrsqrt.pop %v2675
    %v2681 = vrsqrt.pop %v2676
    %v2682 = vrsqrt.pop %v2677
    %v2683 = vmul.f32 %v2643, %v2678
    %v2684 = vmul.f32 %v2644, %v2679
    %v2685 = vmul.f32 %v2645, %v2680
    %v2686 = vmul.f32 %v2646, %v2681
    %v2687 = vmul.f32 %v2647, %v2682
    %v2689 = vlaneseq
    %v2690 = vshrl.u32 %v2689, 7
    %v2691 = vsub.s32 0, %v2690
    %v2692 = vrot.slane %v1497, %v2691
    %v2694 = vmul.f32 %v2683, %v2692
    %v2695 = vmul.f32 %v2684, %v2692
    %v2696 = vmul.f32 %v2685, %v2692
    %v2697 = vmul.f32 %v2686, %v2692
    %v2698 = vmul.f32 %v2687, %v2692
    %v2700 = vlaneseq
    %v2701 = vshrl.u32 %v2700, 7
    %v2702 = vsub.s32 0, %v2701
    %v2703 = vrot.slane %v1498, %v2702
    %v2705 = vadd.f32 %v2694, %v2703
    %v2706 = vadd.f32 %v2695, %v2703
    %v2707 = vadd.f32 %v2696, %v2703
    %v2708 = vadd.f32 %v2697, %v2703
    %v2709 = vadd.f32 %v2698, %v2703
    %s2710 = scalar_lea.vmem %s4, 8
    %v2711 = vld [vmem:[%s2710] sm:$0xf]
    %v2712 = vld [vmem:[%s2710 + $0x4] sm:$0xf]
    %s2713 = scalar_lea.vmem %s5, 8
    %v2714 = vld [vmem:[%s2713] sm:$0xf]
    %v2715 = vld [vmem:[%s2713 + $0x4] sm:$0xf]
    %s2716 = scalar_lea.vmem %s6, 1
    %v2717 = vld [vmem:[%s2716] sm:$0x1]
    %s2718 = scalar_lea.vmem %s7, 1
    %v2719 = vld [vmem:[%s2718] sm:$0x1]
    %s2720 = scalar_lea.vmem %s8, 8
    %v2721 = vld [vmem:[%s2720] sm:$0xf]
    %v2722 = vld [vmem:[%s2720 + $0x4] sm:$0xf]
    %s2723 = scalar_lea.vmem %s9, 1
    %v2724 = vld [vmem:[%s2723] sm:$0x1]
    %s2725 = scalar_lea.vmem %s10, 16
    %v2726 = vld [vmem:[%s2725] sm:$0xf]
    %v2727 = vld [vmem:[%s2725 + $0x4] sm:$0xf]
    %v2728 = vld [vmem:[%s2725 + $0x8] sm:$0xf]
    %v2729 = vld [vmem:[%s2725 + $0xc] sm:$0xf]
    %s2730 = scalar_lea.vmem %s11, 1
    %v2731 = vld [vmem:[%s2730] sm:$0x1]
    %s2732 = scalar_lea.vmem %s12, 1
    %v2733 = vld [vmem:[%s2732] sm:$0x1]
    %s2734 = scalar_lea.vmem %s13, 1
    %v2735 = vld [vmem:[%s2734] sm:$0x1]
    %v2736 = vpack.c.bf16 %v2706, %v2705
    %v2737 = vpack.c.bf16 %v2708, %v2707
    %v2738 = vpack.c.bf16 %v2709, %v2709
    %v2741 = vunpack.c.l.b16 %v2711
    %v2742 = vunpack.c.l.b16 %v2712
    %v2743 = vpack.c.b16 %v2742, %v2741
    %v2746 = vsel %vm1508, %v2736, 0
    %v2749 = vsel %vm1508, %v2737, 0
    %v2752 = vsel %vm1508, %v2738, 0
    %2754 = vmatprep.subr.bf16.mxu0 0
    %2755 = vmatpush1.bf16.msra.mxu0 %v2743
    %2756 = vmatprep.subr.bf16.mxu0 0
    %2757 = vmatpush1.bf16.msra.mxu0 0
    %2758 = vmatprep.subr.bf16.mxu0 0
    %2759 = vmatpush1.bf16.msra.mxu0 0
    %2760 = vmatprep.subr.bf16.mxu0 0
    %2761 = vmatpush1.bf16.msra.mxu0 0
    %2762 = vmatprep.subr.bf16.mxu0 0
    %2763 = vmatpush1.bf16.msra.mxu0 0
    %2764 = vmatprep.subr.bf16.mxu0 0
    %2765 = vmatpush1.bf16.msra.mxu0 0
    %2766 = vmatprep.subr.bf16.mxu0 0
    %2767 = vmatpush1.bf16.msra.mxu0 0
    %2768 = vmatprep.subr.bf16.mxu0 0
    %2769 = vmatpush1.bf16.msra.mxu0 0
    %2770 = vmatprep.subr.bf16.mxu0 0
    %2771 = vmatpush1.bf16.msra.mxu0 0
    %2772 = vmatprep.subr.bf16.mxu0 0
    %2773 = vmatpush1.bf16.msra.mxu0 0
    %2774 = vmatprep.subr.bf16.mxu0 0
    %2775 = vmatpush1.bf16.msra.mxu0 0
    %2776 = vmatprep.subr.bf16.mxu0 0
    %2777 = vmatpush1.bf16.msra.mxu0 0
    %2778 = vmatprep.subr.bf16.mxu0 0
    %2779 = vmatpush1.bf16.msra.mxu0 0
    %2780 = vmatprep.subr.bf16.mxu0 0
    %2781 = vmatpush1.bf16.msra.mxu0 0
    %2782 = vmatprep.subr.bf16.mxu0 0
    %2783 = vmatpush1.bf16.msra.mxu0 0
    %2784 = vmatprep.subr.bf16.mxu0 0
    %2785 = vmatpush1.bf16.msra.mxu0 0
    %2786 = vmatprep.mubr.bf16.mxu0 0
    %2787 = vmatmul.mubr.bf16.gmra.mrb[0].mxu0 %v2746
    %v2788 = vpop.f32.mrb[0].mxu0
    %v2789 = vadd.f32 0.0, %v2788
    %v2790 = vpop.f32.mrb[0].mxu0
    %v2791 = vpop.f32.mrb[0].mxu0
    %v2792 = vadd.f32 0.0, %v2791
    %v2793 = vpop.f32.mrb[0].mxu0
    %2794 = vmatprep.mubr.bf16.mxu0 0
    %2795 = vmatmul.mubr.bf16.gmra.mrb[0].mxu0 %v2749
    %v2796 = vpop.f32.mrb[0].mxu0
    %v2797 = vadd.f32 0.0, %v2796
    %v2798 = vpop.f32.mrb[0].mxu0
    %v2799 = vpop.f32.mrb[0].mxu0
    %v2800 = vadd.f32 0.0, %v2799
    %v2801 = vpop.f32.mrb[0].mxu0
    %2802 = vmatprep.mubr.bf16.mxu0 0
    %2803 = vmatmul.mubr.bf16.gmra.mrb[0].mxu0 %v2752
    %v2804 = vpop.f32.mrb[0].mxu0
    %v2805 = vadd.f32 0.0, %v2804
    %v2806 = vpop.f32.mrb[0].mxu0
    %v2807 = vpop.f32.mrb[0].mxu0
    %v2808 = vpop.f32.mrb[0].mxu0
    %2809 = vdwg.mxu0
    %v2810 = vpack.c.bf16 %v2792, %v2789
    %v2811 = vpack.c.bf16 %v2797, %v2797
    %2814 = vrot.lane.b32.xlu0 %v2810, 112
    %v2815 = vpop.permute.xlu0 %2814
    %2816 = vrot.lane.b32.xlu0 %v2811, 112
    %v2817 = vpop.permute.xlu0 %2816
    %v2819 = vsel %vm1582, %v2810, 0
    %v2822 = vsel %vm1582, %v2811, 0
    %v2825 = vsel %vm1582, %v2815, 0
    %v2828 = vsel %vm1582, %v2817, 0
    %2830 = vmatprep.subr.bf16.mxu0 0
    %2831 = vmatpush1.bf16.xpose.msra.mxu0 %v2825
    %2832 = vmatprep.subr.bf16.mxu0 0
    %2833 = vmatpush1.bf16.xpose.msra.mxu0 %v2828
    %2834 = vmatprep.subr.bf16.mxu0 0
    %2835 = vmatpush1.bf16.xpose.msra.mxu0 0
    %2836 = vmatprep.subr.bf16.mxu0 0
    %2837 = vmatpush1.bf16.xpose.msra.mxu0 0
    %2838 = vmatprep.subr.bf16.mxu0 0
    %2839 = vmatpush1.bf16.xpose.msra.mxu0 0
    %2840 = vmatprep.subr.bf16.mxu0 0
    %2841 = vmatpush1.bf16.xpose.msra.mxu0 0
    %2842 = vmatprep.subr.bf16.mxu0 0
    %2843 = vmatpush1.bf16.xpose.msra.mxu0 0
    %2844 = vmatprep.subr.bf16.mxu0 0
    %2845 = vmatpush1.bf16.xpose.msra.mxu0 0
    %2846 = vmatprep.subr.bf16.mxu0 0
    %2847 = vmatpush1.bf16.xpose.msra.mxu0 0
    %2848 = vmatprep.subr.bf16.mxu0 0
    %2849 = vmatpush1.bf16.xpose.msra.mxu0 0
    %2850 = vmatprep.subr.bf16.mxu0 0
    %2851 = vmatpush1.bf16.xpose.msra.mxu0 0
    %2852 = vmatprep.subr.bf16.mxu0 0
    %2853 = vmatpush1.bf16.xpose.msra.mxu0 0
    %2854 = vmatprep.subr.bf16.mxu0 0
    %2855 = vmatpush1.bf16.xpose.msra.mxu0 0
    %2856 = vmatprep.subr.bf16.mxu0 0
    %2857 = vmatpush1.bf16.xpose.msra.mxu0 0
    %2858 = vmatprep.subr.bf16.mxu0 0
    %2859 = vmatpush1.bf16.xpose.msra.mxu0 0
    %2860 = vmatprep.subr.bf16.mxu0 0
    %2861 = vmatpush1.bf16.xpose.msra.mxu0 0
    %2862 = vmatprep.mubr.bf16.mxu0 0
    %2863 = vmatmul.mubr.bf16.gmra.mrb[0].mxu0 %v2819
    %v2864 = vpop.f32.mrb[0].mxu0
    %v2865 = vadd.f32 0.0, %v2864
    %v2866 = vpop.f32.mrb[0].mxu0
    %v2867 = vpop.f32.mrb[0].mxu0
    %v2868 = vadd.f32 0.0, %v2867
    %v2869 = vpop.f32.mrb[0].mxu0
    %2870 = vmatprep.mubr.bf16.mxu0 0
    %2871 = vmatmul.mubr.bf16.gmra.mrb[0].mxu0 %v2822
    %v2872 = vpop.f32.mrb[0].mxu0
    %v2873 = vadd.f32 0.0, %v2872
    %v2874 = vpop.f32.mrb[0].mxu0
    %v2875 = vpop.f32.mrb[0].mxu0
    %v2876 = vpop.f32.mrb[0].mxu0
    %2877 = vdwg.mxu0
    %v2878 = vsel %vm1643, %v2865, -inf
    %2879 = vmax.xlane.f32.xlu0 %v2878
    %v2880 = vpop.xlane.xlu0 %2879
    %v2881 = vsel %vm1643, %v2868, -inf
    %2882 = vmax.xlane.f32.xlu0 %v2881
    %v2883 = vpop.xlane.xlu0 %2882
    %v2884 = vsel %vm1650, %v2873, -inf
    %2885 = vmax.xlane.f32.xlu0 %v2884
    %v2886 = vpop.xlane.xlu0 %2885
    %v2887 = vsub.f32 %v2865, %v2880
    %v2888 = vsub.f32 %v2868, %v2883
    %v2889 = vsub.f32 %v2873, %v2886
    %v2890 = vmul.f32 %v2887, 1.442695
    %v2891 = vpow.pop %v2890
    %v2892 = vmul.f32 %v2888, 1.442695
    %v2893 = vpow.pop %v2892
    %v2894 = vmul.f32 %v2889, 1.442695
    %v2895 = vpow.pop %v2894
    %v2896 = vsel %vm1643, %v2891, 0.0
    %2897 = vadd.xlane.f32.xlu0 %v2896
    %v2898 = vpop.xlane.xlu0 %2897
    %v2899 = vsel %vm1643, %v2893, 0.0
    %2900 = vadd.xlane.f32.xlu0 %v2899
    %v2901 = vpop.xlane.xlu0 %2900
    %v2902 = vsel %vm1650, %v2895, 0.0
    %2903 = vadd.xlane.f32.xlu0 %v2902
    %v2904 = vpop.xlane.xlu0 %2903
    %v2905 = vrcp.pop %v2898
    %v2906 = vmul.f32 %v2891, %v2905
    %v2907 = vrcp.pop %v2901
    %v2908 = vmul.f32 %v2893, %v2907
    %v2909 = vrcp.pop %v2904
    %v2910 = vmul.f32 %v2895, %v2909
    %v2911 = vpack.c.bf16 %v2908, %v2906
    %v2912 = vpack.c.bf16 %v2910, %v2910
    %2913 = vrot.lane.b32.xlu0 %v2810, 96
    %v2914 = vpop.permute.xlu0 %2913
    %2915 = vrot.lane.b32.xlu0 %v2811, 96
    %v2916 = vpop.permute.xlu0 %2915
    %v2919 = vsel %vm1643, %v2911, 0
    %v2922 = vsel %vm1643, %v2912, 0
    %v2925 = vsel %vm1111, %v2916, 0
    %2927 = vmatprep.subr.bf16.mxu0 0
    %2928 = vmatpush1.bf16.msra.mxu0 %v2914
    %2929 = vmatprep.subr.bf16.mxu0 0
    %2930 = vmatpush1.bf16.msra.mxu0 %v2925
    %2931 = vmatprep.subr.bf16.mxu0 0
    %2932 = vmatpush1.bf16.msra.mxu0 0
    %2933 = vmatprep.subr.bf16.mxu0 0
    %2934 = vmatpush1.bf16.msra.mxu0 0
    %2935 = vmatprep.subr.bf16.mxu0 0
    %2936 = vmatpush1.bf16.msra.mxu0 0
    %2937 = vmatprep.subr.bf16.mxu0 0
    %2938 = vmatpush1.bf16.msra.mxu0 0
    %2939 = vmatprep.subr.bf16.mxu0 0
    %2940 = vmatpush1.bf16.msra.mxu0 0
    %2941 = vmatprep.subr.bf16.mxu0 0
    %2942 = vmatpush1.bf16.msra.mxu0 0
    %2943 = vmatprep.subr.bf16.mxu0 0
    %2944 = vmatpush1.bf16.msra.mxu0 0
    %2945 = vmatprep.subr.bf16.mxu0 0
    %2946 = vmatpush1.bf16.msra.mxu0 0
    %2947 = vmatprep.subr.bf16.mxu0 0
    %2948 = vmatpush1.bf16.msra.mxu0 0
    %2949 = vmatprep.subr.bf16.mxu0 0
    %2950 = vmatpush1.bf16.msra.mxu0 0
    %2951 = vmatprep.subr.bf16.mxu0 0
    %2952 = vmatpush1.bf16.msra.mxu0 0
    %2953 = vmatprep.subr.bf16.mxu0 0
    %2954 = vmatpush1.bf16.msra.mxu0 0
    %2955 = vmatprep.subr.bf16.mxu0 0
    %2956 = vmatpush1.bf16.msra.mxu0 0
    %2957 = vmatprep.subr.bf16.mxu0 0
    %2958 = vmatpush1.bf16.msra.mxu0 0
    %2959 = vmatprep.mubr.bf16.mxu0 0
    %2960 = vmatmul.mubr.bf16.gmra.mrb[0].mxu0 %v2919
    %v2961 = vpop.f32.mrb[0].mxu0
    %v2962 = vadd.f32 0.0, %v2961
    %v2963 = vpop.f32.mrb[0].mxu0
    %v2964 = vpop.f32.mrb[0].mxu0
    %v2965 = vadd.f32 0.0, %v2964
    %v2966 = vpop.f32.mrb[0].mxu0
    %2967 = vmatprep.mubr.bf16.mxu0 0
    %2968 = vmatmul.mubr.bf16.gmra.mrb[0].mxu0 %v2922
    %v2969 = vpop.f32.mrb[0].mxu0
    %v2970 = vadd.f32 0.0, %v2969
    %v2971 = vpop.f32.mrb[0].mxu0
    %v2972 = vpop.f32.mrb[0].mxu0
    %v2973 = vpop.f32.mrb[0].mxu0
    %2974 = vdwg.mxu0
    %2975 = vrot.lane.b32.xlu0 %v2810, 120
    %v2976 = vpop.permute.xlu0 %2975
    %2977 = vrot.lane.b32.xlu0 %v2811, 120
    %v2978 = vpop.permute.xlu0 %2977
    %2979 = vrot.lane.b32.xlu0 %v2810, 104
    %v2980 = vpop.permute.xlu0 %2979
    %2981 = vrot.lane.b32.xlu0 %v2811, 104
    %v2982 = vpop.permute.xlu0 %2981
    %v2984 = vsel %vm1582, %v2976, 0
    %v2987 = vsel %vm1582, %v2978, 0
    %v2990 = vsel %vm1582, %v2980, 0
    %v2993 = vsel %vm1582, %v2982, 0
    %2995 = vmatprep.subr.bf16.mxu0 0
    %2996 = vmatpush1.bf16.xpose.msra.mxu0 %v2990
    %2997 = vmatprep.subr.bf16.mxu0 0
    %2998 = vmatpush1.bf16.xpose.msra.mxu0 %v2993
    %2999 = vmatprep.subr.bf16.mxu0 0
    %3000 = vmatpush1.bf16.xpose.msra.mxu0 0
    %3001 = vmatprep.subr.bf16.mxu0 0
    %3002 = vmatpush1.bf16.xpose.msra.mxu0 0
    %3003 = vmatprep.subr.bf16.mxu0 0
    %3004 = vmatpush1.bf16.xpose.msra.mxu0 0
    %3005 = vmatprep.subr.bf16.mxu0 0
    %3006 = vmatpush1.bf16.xpose.msra.mxu0 0
    %3007 = vmatprep.subr.bf16.mxu0 0
    %3008 = vmatpush1.bf16.xpose.msra.mxu0 0
    %3009 = vmatprep.subr.bf16.mxu0 0
    %3010 = vmatpush1.bf16.xpose.msra.mxu0 0
    %3011 = vmatprep.subr.bf16.mxu0 0
    %3012 = vmatpush1.bf16.xpose.msra.mxu0 0
    %3013 = vmatprep.subr.bf16.mxu0 0
    %3014 = vmatpush1.bf16.xpose.msra.mxu0 0
    %3015 = vmatprep.subr.bf16.mxu0 0
    %3016 = vmatpush1.bf16.xpose.msra.mxu0 0
    %3017 = vmatprep.subr.bf16.mxu0 0
    %3018 = vmatpush1.bf16.xpose.msra.mxu0 0
    %3019 = vmatprep.subr.bf16.mxu0 0
    %3020 = vmatpush1.bf16.xpose.msra.mxu0 0
    %3021 = vmatprep.subr.bf16.mxu0 0
    %3022 = vmatpush1.bf16.xpose.msra.mxu0 0
    %3023 = vmatprep.subr.bf16.mxu0 0
    %3024 = vmatpush1.bf16.xpose.msra.mxu0 0
    %3025 = vmatprep.subr.bf16.mxu0 0
    %3026 = vmatpush1.bf16.xpose.msra.mxu0 0
    %3027 = vmatprep.mubr.bf16.mxu0 0
    %3028 = vmatmul.mubr.bf16.gmra.mrb[0].mxu0 %v2984
    %v3029 = vpop.f32.mrb[0].mxu0
    %v3030 = vadd.f32 0.0, %v3029
    %v3031 = vpop.f32.mrb[0].mxu0
    %v3032 = vpop.f32.mrb[0].mxu0
    %v3033 = vadd.f32 0.0, %v3032
    %v3034 = vpop.f32.mrb[0].mxu0
    %3035 = vmatprep.mubr.bf16.mxu0 0
    %3036 = vmatmul.mubr.bf16.gmra.mrb[0].mxu0 %v2987
    %v3037 = vpop.f32.mrb[0].mxu0
    %v3038 = vadd.f32 0.0, %v3037
    %v3039 = vpop.f32.mrb[0].mxu0
    %v3040 = vpop.f32.mrb[0].mxu0
    %v3041 = vpop.f32.mrb[0].mxu0
    %3042 = vdwg.mxu0
    %v3043 = vsel %vm1643, %v3030, -inf
    %3044 = vmax.xlane.f32.xlu0 %v3043
    %v3045 = vpop.xlane.xlu0 %3044
    %v3046 = vsel %vm1643, %v3033, -inf
    %3047 = vmax.xlane.f32.xlu0 %v3046
    %v3048 = vpop.xlane.xlu0 %3047
    %v3049 = vsel %vm1650, %v3038, -inf
    %3050 = vmax.xlane.f32.xlu0 %v3049
    %v3051 = vpop.xlane.xlu0 %3050
    %v3052 = vsub.f32 %v3030, %v3045
    %v3053 = vsub.f32 %v3033, %v3048
    %v3054 = vsub.f32 %v3038, %v3051
    %v3055 = vmul.f32 %v3052, 1.442695
    %v3056 = vpow.pop %v3055
    %v3057 = vmul.f32 %v3053, 1.442695
    %v3058 = vpow.pop %v3057
    %v3059 = vmul.f32 %v3054, 1.442695
    %v3060 = vpow.pop %v3059
    %v3061 = vsel %vm1643, %v3056, 0.0
    %3062 = vadd.xlane.f32.xlu0 %v3061
    %v3063 = vpop.xlane.xlu0 %3062
    %v3064 = vsel %vm1643, %v3058, 0.0
    %3065 = vadd.xlane.f32.xlu0 %v3064
    %v3066 = vpop.xlane.xlu0 %3065
    %v3067 = vsel %vm1650, %v3060, 0.0
    %3068 = vadd.xlane.f32.xlu0 %v3067
    %v3069 = vpop.xlane.xlu0 %3068
    %v3070 = vrcp.pop %v3063
    %v3071 = vmul.f32 %v3056, %v3070
    %v3072 = vrcp.pop %v3066
    %v3073 = vmul.f32 %v3058, %v3072
    %v3074 = vrcp.pop %v3069
    %v3075 = vmul.f32 %v3060, %v3074
    %v3076 = vpack.c.bf16 %v3073, %v3071
    %v3077 = vpack.c.bf16 %v3075, %v3075
    %3078 = vrot.lane.b32.xlu0 %v2810, 88
    %v3079 = vpop.permute.xlu0 %3078
    %3080 = vrot.lane.b32.xlu0 %v2811, 88
    %v3081 = vpop.permute.xlu0 %3080
    %v3084 = vsel %vm1643, %v3076, 0
    %v3087 = vsel %vm1643, %v3077, 0
    %v3090 = vsel %vm1111, %v3081, 0
    %3092 = vmatprep.subr.bf16.mxu0 0
    %3093 = vmatpush1.bf16.msra.mxu0 %v3079
    %3094 = vmatprep.subr.bf16.mxu0 0
    %3095 = vmatpush1.bf16.msra.mxu0 %v3090
    %3096 = vmatprep.subr.bf16.mxu0 0
    %3097 = vmatpush1.bf16.msra.mxu0 0
    %3098 = vmatprep.subr.bf16.mxu0 0
    %3099 = vmatpush1.bf16.msra.mxu0 0
    %3100 = vmatprep.subr.bf16.mxu0 0
    %3101 = vmatpush1.bf16.msra.mxu0 0
    %3102 = vmatprep.subr.bf16.mxu0 0
    %3103 = vmatpush1.bf16.msra.mxu0 0
    %3104 = vmatprep.subr.bf16.mxu0 0
    %3105 = vmatpush1.bf16.msra.mxu0 0
    %3106 = vmatprep.subr.bf16.mxu0 0
    %3107 = vmatpush1.bf16.msra.mxu0 0
    %3108 = vmatprep.subr.bf16.mxu0 0
    %3109 = vmatpush1.bf16.msra.mxu0 0
    %3110 = vmatprep.subr.bf16.mxu0 0
    %3111 = vmatpush1.bf16.msra.mxu0 0
    %3112 = vmatprep.subr.bf16.mxu0 0
    %3113 = vmatpush1.bf16.msra.mxu0 0
    %3114 = vmatprep.subr.bf16.mxu0 0
    %3115 = vmatpush1.bf16.msra.mxu0 0
    %3116 = vmatprep.subr.bf16.mxu0 0
    %3117 = vmatpush1.bf16.msra.mxu0 0
    %3118 = vmatprep.subr.bf16.mxu0 0
    %3119 = vmatpush1.bf16.msra.mxu0 0
    %3120 = vmatprep.subr.bf16.mxu0 0
    %3121 = vmatpush1.bf16.msra.mxu0 0
    %3122 = vmatprep.subr.bf16.mxu0 0
    %3123 = vmatpush1.bf16.msra.mxu0 0
    %3124 = vmatprep.mubr.bf16.mxu0 0
    %3125 = vmatmul.mubr.bf16.gmra.mrb[0].mxu0 %v3084
    %v3126 = vpop.f32.mrb[0].mxu0
    %v3127 = vadd.f32 0.0, %v3126
    %v3128 = vpop.f32.mrb[0].mxu0
    %v3129 = vpop.f32.mrb[0].mxu0
    %v3130 = vadd.f32 0.0, %v3129
    %v3131 = vpop.f32.mrb[0].mxu0
    %3132 = vmatprep.mubr.bf16.mxu0 0
    %3133 = vmatmul.mubr.bf16.gmra.mrb[0].mxu0 %v3087
    %v3134 = vpop.f32.mrb[0].mxu0
    %v3135 = vadd.f32 0.0, %v3134
    %v3136 = vpop.f32.mrb[0].mxu0
    %v3137 = vpop.f32.mrb[0].mxu0
    %v3138 = vpop.f32.mrb[0].mxu0
    %3139 = vdwg.mxu0
    %3143 = vrot.lane.b32.xlu0 %v3127, 8
    %v3144 = vpop.permute.xlu0 %3143
    %3145 = vrot.lane.b32.xlu0 %v3130, 8
    %v3146 = vpop.permute.xlu0 %3145
    %3147 = vrot.lane.b32.xlu0 %v3135, 8
    %v3148 = vpop.permute.xlu0 %3147
    %v3152 = vsel %vm1582, %v2962, %v3144
    %v3153 = vsel %vm1582, %v2965, %v3146
    %v3154 = vsel %vm1582, %v2970, %v3148
    %v3155 = vpack.c.bf16 %v2800, %v2797
    %v3156 = vpack.c.bf16 %v2805, %v2805
    %v3159 = vrot.slane %v3155, 2
    %v3160 = vrot.slane %v3156, 2
    %v3161 = vsel %vm1926, %v3159, %v3160
    %3162 = vrot.lane.b32.xlu0 %v3161, 112
    %v3163 = vpop.permute.xlu0 %3162
    %3164 = vrot.lane.b32.xlu0 %v3160, 112
    %v3165 = vpop.permute.xlu0 %3164
    %v3167 = vsel %vm1582, %v3161, 0
    %v3170 = vsel %vm1582, %v3160, 0
    %v3173 = vsel %vm1582, %v3163, 0
    %v3176 = vsel %vm1582, %v3165, 0
    %3178 = vmatprep.subr.bf16.mxu0 0
    %3179 = vmatpush1.bf16.xpose.msra.mxu0 %v3173
    %3180 = vmatprep.subr.bf16.mxu0 0
    %3181 = vmatpush1.bf16.xpose.msra.mxu0 %v3176
    %3182 = vmatprep.subr.bf16.mxu0 0
    %3183 = vmatpush1.bf16.xpose.msra.mxu0 0
    %3184 = vmatprep.subr.bf16.mxu0 0
    %3185 = vmatpush1.bf16.xpose.msra.mxu0 0
    %3186 = vmatprep.subr.bf16.mxu0 0
    %3187 = vmatpush1.bf16.xpose.msra.mxu0 0
    %3188 = vmatprep.subr.bf16.mxu0 0
    %3189 = vmatpush1.bf16.xpose.msra.mxu0 0
    %3190 = vmatprep.subr.bf16.mxu0 0
    %3191 = vmatpush1.bf16.xpose.msra.mxu0 0
    %3192 = vmatprep.subr.bf16.mxu0 0
    %3193 = vmatpush1.bf16.xpose.msra.mxu0 0
    %3194 = vmatprep.subr.bf16.mxu0 0
    %3195 = vmatpush1.bf16.xpose.msra.mxu0 0
    %3196 = vmatprep.subr.bf16.mxu0 0
    %3197 = vmatpush1.bf16.xpose.msra.mxu0 0
    %3198 = vmatprep.subr.bf16.mxu0 0
    %3199 = vmatpush1.bf16.xpose.msra.mxu0 0
    %3200 = vmatprep.subr.bf16.mxu0 0
    %3201 = vmatpush1.bf16.xpose.msra.mxu0 0
    %3202 = vmatprep.subr.bf16.mxu0 0
    %3203 = vmatpush1.bf16.xpose.msra.mxu0 0
    %3204 = vmatprep.subr.bf16.mxu0 0
    %3205 = vmatpush1.bf16.xpose.msra.mxu0 0
    %3206 = vmatprep.subr.bf16.mxu0 0
    %3207 = vmatpush1.bf16.xpose.msra.mxu0 0
    %3208 = vmatprep.subr.bf16.mxu0 0
    %3209 = vmatpush1.bf16.xpose.msra.mxu0 0
    %3210 = vmatprep.mubr.bf16.mxu0 0
    %3211 = vmatmul.mubr.bf16.gmra.mrb[0].mxu0 %v3167
    %v3212 = vpop.f32.mrb[0].mxu0
    %v3213 = vadd.f32 0.0, %v3212
    %v3214 = vpop.f32.mrb[0].mxu0
    %v3215 = vpop.f32.mrb[0].mxu0
    %v3216 = vadd.f32 0.0, %v3215
    %v3217 = vpop.f32.mrb[0].mxu0
    %3218 = vmatprep.mubr.bf16.mxu0 0
    %3219 = vmatmul.mubr.bf16.gmra.mrb[0].mxu0 %v3170
    %v3220 = vpop.f32.mrb[0].mxu0
    %v3221 = vadd.f32 0.0, %v3220
    %v3222 = vpop.f32.mrb[0].mxu0
    %v3223 = vpop.f32.mrb[0].mxu0
    %v3224 = vpop.f32.mrb[0].mxu0
    %3225 = vdwg.mxu0
    %v3226 = vsel %vm1643, %v3213, -inf
    %3227 = vmax.xlane.f32.xlu0 %v3226
    %v3228 = vpop.xlane.xlu0 %3227
    %v3229 = vsel %vm1643, %v3216, -inf
    %3230 = vmax.xlane.f32.xlu0 %v3229
    %v3231 = vpop.xlane.xlu0 %3230
    %v3232 = vsel %vm1650, %v3221, -inf
    %3233 = vmax.xlane.f32.xlu0 %v3232
    %v3234 = vpop.xlane.xlu0 %3233
    %v3235 = vsub.f32 %v3213, %v3228
    %v3236 = vsub.f32 %v3216, %v3231
    %v3237 = vsub.f32 %v3221, %v3234
    %v3238 = vmul.f32 %v3235, 1.442695
    %v3239 = vpow.pop %v3238
    %v3240 = vmul.f32 %v3236, 1.442695
    %v3241 = vpow.pop %v3240
    %v3242 = vmul.f32 %v3237, 1.442695
    %v3243 = vpow.pop %v3242
    %v3244 = vsel %vm1643, %v3239, 0.0
    %3245 = vadd.xlane.f32.xlu0 %v3244
    %v3246 = vpop.xlane.xlu0 %3245
    %v3247 = vsel %vm1643, %v3241, 0.0
    %3248 = vadd.xlane.f32.xlu0 %v3247
    %v3249 = vpop.xlane.xlu0 %3248
    %v3250 = vsel %vm1650, %v3243, 0.0
    %3251 = vadd.xlane.f32.xlu0 %v3250
    %v3252 = vpop.xlane.xlu0 %3251
    %v3253 = vrcp.pop %v3246
    %v3254 = vmul.f32 %v3239, %v3253
    %v3255 = vrcp.pop %v3249
    %v3256 = vmul.f32 %v3241, %v3255
    %v3257 = vrcp.pop %v3252
    %v3258 = vmul.f32 %v3243, %v3257
    %v3259 = vpack.c.bf16 %v3256, %v3254
    %v3260 = vpack.c.bf16 %v3258, %v3258
    %3261 = vrot.lane.b32.xlu0 %v3161, 96
    %v3262 = vpop.permute.xlu0 %3261
    %3263 = vrot.lane.b32.xlu0 %v3160, 96
    %v3264 = vpop.permute.xlu0 %3263
    %v3267 = vsel %vm1643, %v3259, 0
    %v3270 = vsel %vm1643, %v3260, 0
    %v3273 = vsel %vm1111, %v3264, 0
    %3275 = vmatprep.subr.bf16.mxu0 0
    %3276 = vmatpush1.bf16.msra.mxu0 %v3262
    %3277 = vmatprep.subr.bf16.mxu0 0
    %3278 = vmatpush1.bf16.msra.mxu0 %v3273
    %3279 = vmatprep.subr.bf16.mxu0 0
    %3280 = vmatpush1.bf16.msra.mxu0 0
    %3281 = vmatprep.subr.bf16.mxu0 0
    %3282 = vmatpush1.bf16.msra.mxu0 0
    %3283 = vmatprep.subr.bf16.mxu0 0
    %3284 = vmatpush1.bf16.msra.mxu0 0
    %3285 = vmatprep.subr.bf16.mxu0 0
    %3286 = vmatpush1.bf16.msra.mxu0 0
    %3287 = vmatprep.subr.bf16.mxu0 0
    %3288 = vmatpush1.bf16.msra.mxu0 0
    %3289 = vmatprep.subr.bf16.mxu0 0
    %3290 = vmatpush1.bf16.msra.mxu0 0
    %3291 = vmatprep.subr.bf16.mxu0 0
    %3292 = vmatpush1.bf16.msra.mxu0 0
    %3293 = vmatprep.subr.bf16.mxu0 0
    %3294 = vmatpush1.bf16.msra.mxu0 0
    %3295 = vmatprep.subr.bf16.mxu0 0
    %3296 = vmatpush1.bf16.msra.mxu0 0
    %3297 = vmatprep.subr.bf16.mxu0 0
    %3298 = vmatpush1.bf16.msra.mxu0 0
    %3299 = vmatprep.subr.bf16.mxu0 0
    %3300 = vmatpush1.bf16.msra.mxu0 0
    %3301 = vmatprep.subr.bf16.mxu0 0
    %3302 = vmatpush1.bf16.msra.mxu0 0
    %3303 = vmatprep.subr.bf16.mxu0 0
    %3304 = vmatpush1.bf16.msra.mxu0 0
    %3305 = vmatprep.subr.bf16.mxu0 0
    %3306 = vmatpush1.bf16.msra.mxu0 0
    %3307 = vmatprep.mubr.bf16.mxu0 0
    %3308 = vmatmul.mubr.bf16.gmra.mrb[0].mxu0 %v3267
    %v3309 = vpop.f32.mrb[0].mxu0
    %v3310 = vadd.f32 0.0, %v3309
    %v3311 = vpop.f32.mrb[0].mxu0
    %v3312 = vpop.f32.mrb[0].mxu0
    %v3313 = vadd.f32 0.0, %v3312
    %v3314 = vpop.f32.mrb[0].mxu0
    %3315 = vmatprep.mubr.bf16.mxu0 0
    %3316 = vmatmul.mubr.bf16.gmra.mrb[0].mxu0 %v3270
    %v3317 = vpop.f32.mrb[0].mxu0
    %v3318 = vadd.f32 0.0, %v3317
    %v3319 = vpop.f32.mrb[0].mxu0
    %v3320 = vpop.f32.mrb[0].mxu0
    %v3321 = vpop.f32.mrb[0].mxu0
    %3322 = vdwg.mxu0
    %3323 = vrot.lane.b32.xlu0 %v3161, 120
    %v3324 = vpop.permute.xlu0 %3323
    %3325 = vrot.lane.b32.xlu0 %v3160, 120
    %v3326 = vpop.permute.xlu0 %3325
    %3327 = vrot.lane.b32.xlu0 %v3161, 104
    %v3328 = vpop.permute.xlu0 %3327
    %3329 = vrot.lane.b32.xlu0 %v3160, 104
    %v3330 = vpop.permute.xlu0 %3329
    %v3332 = vsel %vm1582, %v3324, 0
    %v3335 = vsel %vm1582, %v3326, 0
    %v3338 = vsel %vm1582, %v3328, 0
    %v3341 = vsel %vm1582, %v3330, 0
    %3343 = vmatprep.subr.bf16.mxu0 0
    %3344 = vmatpush1.bf16.xpose.msra.mxu0 %v3338
    %3345 = vmatprep.subr.bf16.mxu0 0
    %3346 = vmatpush1.bf16.xpose.msra.mxu0 %v3341
    %3347 = vmatprep.subr.bf16.mxu0 0
    %3348 = vmatpush1.bf16.xpose.msra.mxu0 0
    %3349 = vmatprep.subr.bf16.mxu0 0
    %3350 = vmatpush1.bf16.xpose.msra.mxu0 0
    %3351 = vmatprep.subr.bf16.mxu0 0
    %3352 = vmatpush1.bf16.xpose.msra.mxu0 0
    %3353 = vmatprep.subr.bf16.mxu0 0
    %3354 = vmatpush1.bf16.xpose.msra.mxu0 0
    %3355 = vmatprep.subr.bf16.mxu0 0
    %3356 = vmatpush1.bf16.xpose.msra.mxu0 0
    %3357 = vmatprep.subr.bf16.mxu0 0
    %3358 = vmatpush1.bf16.xpose.msra.mxu0 0
    %3359 = vmatprep.subr.bf16.mxu0 0
    %3360 = vmatpush1.bf16.xpose.msra.mxu0 0
    %3361 = vmatprep.subr.bf16.mxu0 0
    %3362 = vmatpush1.bf16.xpose.msra.mxu0 0
    %3363 = vmatprep.subr.bf16.mxu0 0
    %3364 = vmatpush1.bf16.xpose.msra.mxu0 0
    %3365 = vmatprep.subr.bf16.mxu0 0
    %3366 = vmatpush1.bf16.xpose.msra.mxu0 0
    %3367 = vmatprep.subr.bf16.mxu0 0
    %3368 = vmatpush1.bf16.xpose.msra.mxu0 0
    %3369 = vmatprep.subr.bf16.mxu0 0
    %3370 = vmatpush1.bf16.xpose.msra.mxu0 0
    %3371 = vmatprep.subr.bf16.mxu0 0
    %3372 = vmatpush1.bf16.xpose.msra.mxu0 0
    %3373 = vmatprep.subr.bf16.mxu0 0
    %3374 = vmatpush1.bf16.xpose.msra.mxu0 0
    %3375 = vmatprep.mubr.bf16.mxu0 0
    %3376 = vmatmul.mubr.bf16.gmra.mrb[0].mxu0 %v3332
    %v3377 = vpop.f32.mrb[0].mxu0
    %v3378 = vadd.f32 0.0, %v3377
    %v3379 = vpop.f32.mrb[0].mxu0
    %v3380 = vpop.f32.mrb[0].mxu0
    %v3381 = vadd.f32 0.0, %v3380
    %v3382 = vpop.f32.mrb[0].mxu0
    %3383 = vmatprep.mubr.bf16.mxu0 0
    %3384 = vmatmul.mubr.bf16.gmra.mrb[0].mxu0 %v3335
    %v3385 = vpop.f32.mrb[0].mxu0
    %v3386 = vadd.f32 0.0, %v3385
    %v3387 = vpop.f32.mrb[0].mxu0
    %v3388 = vpop.f32.mrb[0].mxu0
    %v3389 = vpop.f32.mrb[0].mxu0
    %3390 = vdwg.mxu0
    %v3391 = vsel %vm1643, %v3378, -inf
    %3392 = vmax.xlane.f32.xlu0 %v3391
    %v3393 = vpop.xlane.xlu0 %3392
    %v3394 = vsel %vm1643, %v3381, -inf
    %3395 = vmax.xlane.f32.xlu0 %v3394
    %v3396 = vpop.xlane.xlu0 %3395
    %v3397 = vsel %vm1650, %v3386, -inf
    %3398 = vmax.xlane.f32.xlu0 %v3397
    %v3399 = vpop.xlane.xlu0 %3398
    %v3400 = vsub.f32 %v3378, %v3393
    %v3401 = vsub.f32 %v3381, %v3396
    %v3402 = vsub.f32 %v3386, %v3399
    %v3403 = vmul.f32 %v3400, 1.442695
    %v3404 = vpow.pop %v3403
    %v3405 = vmul.f32 %v3401, 1.442695
    %v3406 = vpow.pop %v3405
    %v3407 = vmul.f32 %v3402, 1.442695
    %v3408 = vpow.pop %v3407
    %v3409 = vsel %vm1643, %v3404, 0.0
    %3410 = vadd.xlane.f32.xlu0 %v3409
    %v3411 = vpop.xlane.xlu0 %3410
    %v3412 = vsel %vm1643, %v3406, 0.0
    %3413 = vadd.xlane.f32.xlu0 %v3412
    %v3414 = vpop.xlane.xlu0 %3413
    %v3415 = vsel %vm1650, %v3408, 0.0
    %3416 = vadd.xlane.f32.xlu0 %v3415
    %v3417 = vpop.xlane.xlu0 %3416
    %v3418 = vrcp.pop %v3411
    %v3419 = vmul.f32 %v3404, %v3418
    %v3420 = vrcp.pop %v3414
    %v3421 = vmul.f32 %v3406, %v3420
    %v3422 = vrcp.pop %v3417
    %v3423 = vmul.f32 %v3408, %v3422
    %v3424 = vpack.c.bf16 %v3421, %v3419
    %v3425 = vpack.c.bf16 %v3423, %v3423
    %3426 = vrot.lane.b32.xlu0 %v3161, 88
    %v3427 = vpop.permute.xlu0 %3426
    %3428 = vrot.lane.b32.xlu0 %v3160, 88
    %v3429 = vpop.permute.xlu0 %3428
    %v3432 = vsel %vm1643, %v3424, 0
    %v3435 = vsel %vm1643, %v3425, 0
    %v3438 = vsel %vm1111, %v3429, 0
    %3440 = vmatprep.subr.bf16.mxu0 0
    %3441 = vmatpush1.bf16.msra.mxu0 %v3427
    %3442 = vmatprep.subr.bf16.mxu0 0
    %3443 = vmatpush1.bf16.msra.mxu0 %v3438
    %3444 = vmatprep.subr.bf16.mxu0 0
    %3445 = vmatpush1.bf16.msra.mxu0 0
    %3446 = vmatprep.subr.bf16.mxu0 0
    %3447 = vmatpush1.bf16.msra.mxu0 0
    %3448 = vmatprep.subr.bf16.mxu0 0
    %3449 = vmatpush1.bf16.msra.mxu0 0
    %3450 = vmatprep.subr.bf16.mxu0 0
    %3451 = vmatpush1.bf16.msra.mxu0 0
    %3452 = vmatprep.subr.bf16.mxu0 0
    %3453 = vmatpush1.bf16.msra.mxu0 0
    %3454 = vmatprep.subr.bf16.mxu0 0
    %3455 = vmatpush1.bf16.msra.mxu0 0
    %3456 = vmatprep.subr.bf16.mxu0 0
    %3457 = vmatpush1.bf16.msra.mxu0 0
    %3458 = vmatprep.subr.bf16.mxu0 0
    %3459 = vmatpush1.bf16.msra.mxu0 0
    %3460 = vmatprep.subr.bf16.mxu0 0
    %3461 = vmatpush1.bf16.msra.mxu0 0
    %3462 = vmatprep.subr.bf16.mxu0 0
    %3463 = vmatpush1.bf16.msra.mxu0 0
    %3464 = vmatprep.subr.bf16.mxu0 0
    %3465 = vmatpush1.bf16.msra.mxu0 0
    %3466 = vmatprep.subr.bf16.mxu0 0
    %3467 = vmatpush1.bf16.msra.mxu0 0
    %3468 = vmatprep.subr.bf16.mxu0 0
    %3469 = vmatpush1.bf16.msra.mxu0 0
    %3470 = vmatprep.subr.bf16.mxu0 0
    %3471 = vmatpush1.bf16.msra.mxu0 0
    %3472 = vmatprep.mubr.bf16.mxu0 0
    %3473 = vmatmul.mubr.bf16.gmra.mrb[0].mxu0 %v3432
    %v3474 = vpop.f32.mrb[0].mxu0
    %v3475 = vadd.f32 0.0, %v3474
    %v3476 = vpop.f32.mrb[0].mxu0
    %v3477 = vpop.f32.mrb[0].mxu0
    %v3478 = vadd.f32 0.0, %v3477
    %v3479 = vpop.f32.mrb[0].mxu0
    %3480 = vmatprep.mubr.bf16.mxu0 0
    %3481 = vmatmul.mubr.bf16.gmra.mrb[0].mxu0 %v3435
    %v3482 = vpop.f32.mrb[0].mxu0
    %v3483 = vadd.f32 0.0, %v3482
    %v3484 = vpop.f32.mrb[0].mxu0
    %v3485 = vpop.f32.mrb[0].mxu0
    %v3486 = vpop.f32.mrb[0].mxu0
    %3487 = vdwg.mxu0
    %3491 = vrot.lane.b32.xlu0 %v3475, 8
    %v3492 = vpop.permute.xlu0 %3491
    %3493 = vrot.lane.b32.xlu0 %v3478, 8
    %v3494 = vpop.permute.xlu0 %3493
    %3495 = vrot.lane.b32.xlu0 %v3483, 8
    %v3496 = vpop.permute.xlu0 %3495
    %v3500 = vsel %vm1582, %v3310, %v3492
    %v3501 = vsel %vm1582, %v3313, %v3494
    %v3502 = vsel %vm1582, %v3318, %v3496
    %v3506 = vrot.slane %v3500, 4
    %v3507 = vrot.slane %v3501, 4
    %v3508 = vsel %vm2274, %v3506, %v3507
    %v3509 = vrot.slane %v3502, 4
    %v3510 = vsel %vm2274, %v3507, %v3509
    %v3514 = vsel %vm2274, %v3154, %v3506
    %v3515 = vpack.c.bf16 %v3153, %v3152
    %v3516 = vpack.c.bf16 %v3508, %v3514
    %v3517 = vpack.c.bf16 %v3510, %v3510
    %v3520 = vunpack.c.l.b16 %v2714
    %v3521 = vunpack.c.l.b16 %v2715
    %v3522 = vpack.c.b16 %v3521, %v3520
    %v3525 = vsel %vm1508, %v3515, 0
    %v3528 = vsel %vm1508, %v3516, 0
    %v3531 = vsel %vm1508, %v3517, 0
    %3533 = vmatprep.subr.bf16.mxu0 0
    %3534 = vmatpush1.bf16.msra.mxu0 %v3522
    %3535 = vmatprep.subr.bf16.mxu0 0
    %3536 = vmatpush1.bf16.msra.mxu0 0
    %3537 = vmatprep.subr.bf16.mxu0 0
    %3538 = vmatpush1.bf16.msra.mxu0 0
    %3539 = vmatprep.subr.bf16.mxu0 0
    %3540 = vmatpush1.bf16.msra.mxu0 0
    %3541 = vmatprep.subr.bf16.mxu0 0
    %3542 = vmatpush1.bf16.msra.mxu0 0
    %3543 = vmatprep.subr.bf16.mxu0 0
    %3544 = vmatpush1.bf16.msra.mxu0 0
    %3545 = vmatprep.subr.bf16.mxu0 0
    %3546 = vmatpush1.bf16.msra.mxu0 0
    %3547 = vmatprep.subr.bf16.mxu0 0
    %3548 = vmatpush1.bf16.msra.mxu0 0
    %3549 = vmatprep.subr.bf16.mxu0 0
    %3550 = vmatpush1.bf16.msra.mxu0 0
    %3551 = vmatprep.subr.bf16.mxu0 0
    %3552 = vmatpush1.bf16.msra.mxu0 0
    %3553 = vmatprep.subr.bf16.mxu0 0
    %3554 = vmatpush1.bf16.msra.mxu0 0
    %3555 = vmatprep.subr.bf16.mxu0 0
    %3556 = vmatpush1.bf16.msra.mxu0 0
    %3557 = vmatprep.subr.bf16.mxu0 0
    %3558 = vmatpush1.bf16.msra.mxu0 0
    %3559 = vmatprep.subr.bf16.mxu0 0
    %3560 = vmatpush1.bf16.msra.mxu0 0
    %3561 = vmatprep.subr.bf16.mxu0 0
    %3562 = vmatpush1.bf16.msra.mxu0 0
    %3563 = vmatprep.subr.bf16.mxu0 0
    %3564 = vmatpush1.bf16.msra.mxu0 0
    %3565 = vmatprep.mubr.bf16.mxu0 0
    %3566 = vmatmul.mubr.bf16.gmra.mrb[0].mxu0 %v3525
    %v3567 = vpop.f32.mrb[0].mxu0
    %v3568 = vadd.f32 %v2705, %v3567
    %v3569 = vpop.f32.mrb[0].mxu0
    %v3570 = vpop.f32.mrb[0].mxu0
    %v3571 = vadd.f32 %v2706, %v3570
    %v3572 = vpop.f32.mrb[0].mxu0
    %3573 = vmatprep.mubr.bf16.mxu0 0
    %3574 = vmatmul.mubr.bf16.gmra.mrb[0].mxu0 %v3528
    %v3575 = vpop.f32.mrb[0].mxu0
    %v3576 = vadd.f32 %v2707, %v3575
    %v3577 = vpop.f32.mrb[0].mxu0
    %v3578 = vpop.f32.mrb[0].mxu0
    %v3579 = vadd.f32 %v2708, %v3578
    %v3580 = vpop.f32.mrb[0].mxu0
    %3581 = vmatprep.mubr.bf16.mxu0 0
    %3582 = vmatmul.mubr.bf16.gmra.mrb[0].mxu0 %v3531
    %v3583 = vpop.f32.mrb[0].mxu0
    %v3584 = vadd.f32 %v2709, %v3583
    %v3585 = vpop.f32.mrb[0].mxu0
    %v3586 = vpop.f32.mrb[0].mxu0
    %v3587 = vpop.f32.mrb[0].mxu0
    %3588 = vdwg.mxu0
    %v3589 = vsel %vm1508, %v3568, 0.0
    %3590 = vadd.xlane.f32.xlu0 %v3589
    %v3591 = vpop.xlane.xlu0 %3590
    %v3592 = vsel %vm1508, %v3571, 0.0
    %3593 = vadd.xlane.f32.xlu0 %v3592
    %v3594 = vpop.xlane.xlu0 %3593
    %v3595 = vsel %vm1508, %v3576, 0.0
    %3596 = vadd.xlane.f32.xlu0 %v3595
    %v3597 = vpop.xlane.xlu0 %3596
    %v3598 = vsel %vm1508, %v3579, 0.0
    %3599 = vadd.xlane.f32.xlu0 %v3598
    %v3600 = vpop.xlane.xlu0 %3599
    %v3601 = vsel %vm1508, %v3584, 0.0
    %3602 = vadd.xlane.f32.xlu0 %v3601
    %v3603 = vpop.xlane.xlu0 %3602
    %v3604 = vmul.f32 %v3591, %v2373
    %v3605 = vmul.f32 %v3594, %v2373
    %v3606 = vmul.f32 %v3597, %v2373
    %v3607 = vmul.f32 %v3600, %v2373
    %v3608 = vmul.f32 %v3603, %v2373
    %v3609 = vsub.f32 %v3568, %v3604
    %v3610 = vsub.f32 %v3571, %v3605
    %v3611 = vsub.f32 %v3576, %v3606
    %v3612 = vsub.f32 %v3579, %v3607
    %v3613 = vsub.f32 %v3584, %v3608
    %v3614 = vmul.f32 %v3609, %v3609
    %v3615 = vmul.f32 %v3610, %v3610
    %v3616 = vmul.f32 %v3611, %v3611
    %v3617 = vmul.f32 %v3612, %v3612
    %v3618 = vmul.f32 %v3613, %v3613
    %v3619 = vsel %vm1508, %v3614, 0.0
    %3620 = vadd.xlane.f32.xlu0 %v3619
    %v3621 = vpop.xlane.xlu0 %3620
    %v3622 = vsel %vm1508, %v3615, 0.0
    %3623 = vadd.xlane.f32.xlu0 %v3622
    %v3624 = vpop.xlane.xlu0 %3623
    %v3625 = vsel %vm1508, %v3616, 0.0
    %3626 = vadd.xlane.f32.xlu0 %v3625
    %v3627 = vpop.xlane.xlu0 %3626
    %v3628 = vsel %vm1508, %v3617, 0.0
    %3629 = vadd.xlane.f32.xlu0 %v3628
    %v3630 = vpop.xlane.xlu0 %3629
    %v3631 = vsel %vm1508, %v3618, 0.0
    %3632 = vadd.xlane.f32.xlu0 %v3631
    %v3633 = vpop.xlane.xlu0 %3632
    %v3634 = vmul.f32 %v3621, %v2373
    %v3635 = vmul.f32 %v3624, %v2373
    %v3636 = vmul.f32 %v3627, %v2373
    %v3637 = vmul.f32 %v3630, %v2373
    %v3638 = vmul.f32 %v3633, %v2373
    %v3639 = vadd.f32 %v3634, 1e-06
    %v3640 = vadd.f32 %v3635, 1e-06
    %v3641 = vadd.f32 %v3636, 1e-06
    %v3642 = vadd.f32 %v3637, 1e-06
    %v3643 = vadd.f32 %v3638, 1e-06
    %v3644 = vrsqrt.pop %v3639
    %v3645 = vrsqrt.pop %v3640
    %v3646 = vrsqrt.pop %v3641
    %v3647 = vrsqrt.pop %v3642
    %v3648 = vrsqrt.pop %v3643
    %v3649 = vmul.f32 %v3609, %v3644
    %v3650 = vmul.f32 %v3610, %v3645
    %v3651 = vmul.f32 %v3611, %v3646
    %v3652 = vmul.f32 %v3612, %v3647
    %v3653 = vmul.f32 %v3613, %v3648
    %v3655 = vlaneseq
    %v3656 = vshrl.u32 %v3655, 7
    %v3657 = vsub.s32 0, %v3656
    %v3658 = vrot.slane %v2717, %v3657
    %v3660 = vmul.f32 %v3649, %v3658
    %v3661 = vmul.f32 %v3650, %v3658
    %v3662 = vmul.f32 %v3651, %v3658
    %v3663 = vmul.f32 %v3652, %v3658
    %v3664 = vmul.f32 %v3653, %v3658
    %v3666 = vlaneseq
    %v3667 = vshrl.u32 %v3666, 7
    %v3668 = vsub.s32 0, %v3667
    %v3669 = vrot.slane %v2719, %v3668
    %v3671 = vadd.f32 %v3660, %v3669
    %v3672 = vadd.f32 %v3661, %v3669
    %v3673 = vadd.f32 %v3662, %v3669
    %v3674 = vadd.f32 %v3663, %v3669
    %v3675 = vadd.f32 %v3664, %v3669
    %v3676 = vpack.c.bf16 %v3672, %v3671
    %v3677 = vpack.c.bf16 %v3674, %v3673
    %v3678 = vpack.c.bf16 %v3675, %v3675
    %v3680 = vlaneseq
    %v3681 = vshrl.u32 %v3680, 7
    %v3682 = vsub.s32 0, %v3681
    %v3683 = vrot.slane %v2724, %v3682
    %v3687 = vunpack.c.l.b16 %v2721
    %v3688 = vunpack.c.l.b16 %v2722
    %v3689 = vpack.c.b16 %v3688, %v3687
    %v3692 = vsel %vm1508, %v3676, 0
    %v3695 = vsel %vm1508, %v3677, 0
    %v3698 = vsel %vm1508, %v3678, 0
    %3700 = vmatprep.subr.bf16.mxu0 0
    %3701 = vmatpush1.bf16.msra.mxu0 %v3689
    %3702 = vmatprep.subr.bf16.mxu0 0
    %3703 = vmatpush1.bf16.msra.mxu0 0
    %3704 = vmatprep.subr.bf16.mxu0 0
    %3705 = vmatpush1.bf16.msra.mxu0 0
    %3706 = vmatprep.subr.bf16.mxu0 0
    %3707 = vmatpush1.bf16.msra.mxu0 0
    %3708 = vmatprep.subr.bf16.mxu0 0
    %3709 = vmatpush1.bf16.msra.mxu0 0
    %3710 = vmatprep.subr.bf16.mxu0 0
    %3711 = vmatpush1.bf16.msra.mxu0 0
    %3712 = vmatprep.subr.bf16.mxu0 0
    %3713 = vmatpush1.bf16.msra.mxu0 0
    %3714 = vmatprep.subr.bf16.mxu0 0
    %3715 = vmatpush1.bf16.msra.mxu0 0
    %3716 = vmatprep.subr.bf16.mxu0 0
    %3717 = vmatpush1.bf16.msra.mxu0 0
    %3718 = vmatprep.subr.bf16.mxu0 0
    %3719 = vmatpush1.bf16.msra.mxu0 0
    %3720 = vmatprep.subr.bf16.mxu0 0
    %3721 = vmatpush1.bf16.msra.mxu0 0
    %3722 = vmatprep.subr.bf16.mxu0 0
    %3723 = vmatpush1.bf16.msra.mxu0 0
    %3724 = vmatprep.subr.bf16.mxu0 0
    %3725 = vmatpush1.bf16.msra.mxu0 0
    %3726 = vmatprep.subr.bf16.mxu0 0
    %3727 = vmatpush1.bf16.msra.mxu0 0
    %3728 = vmatprep.subr.bf16.mxu0 0
    %3729 = vmatpush1.bf16.msra.mxu0 0
    %3730 = vmatprep.subr.bf16.mxu0 0
    %3731 = vmatpush1.bf16.msra.mxu0 0
    %3732 = vmatprep.mubr.bf16.mxu0 0
    %3733 = vmatmul.mubr.bf16.gmra.mrb[0].mxu0 %v3692
    %v3734 = vpop.f32.mrb[0].mxu0
    %v3735 = vadd.f32 %v3683, %v3734
    %v3736 = vpop.f32.mrb[0].mxu0
    %v3737 = vpop.f32.mrb[0].mxu0
    %v3738 = vadd.f32 %v3683, %v3737
    %v3739 = vpop.f32.mrb[0].mxu0
    %3740 = vmatprep.mubr.bf16.mxu0 0
    %3741 = vmatmul.mubr.bf16.gmra.mrb[0].mxu0 %v3695
    %v3742 = vpop.f32.mrb[0].mxu0
    %v3743 = vadd.f32 %v3683, %v3742
    %v3744 = vpop.f32.mrb[0].mxu0
    %v3745 = vpop.f32.mrb[0].mxu0
    %v3746 = vadd.f32 %v3683, %v3745
    %v3747 = vpop.f32.mrb[0].mxu0
    %3748 = vmatprep.mubr.bf16.mxu0 0
    %3749 = vmatmul.mubr.bf16.gmra.mrb[0].mxu0 %v3698
    %v3750 = vpop.f32.mrb[0].mxu0
    %v3751 = vadd.f32 %v3683, %v3750
    %v3752 = vpop.f32.mrb[0].mxu0
    %v3753 = vpop.f32.mrb[0].mxu0
    %v3754 = vpop.f32.mrb[0].mxu0
    %3755 = vdwg.mxu0
    %v3756 = vmax.f32 %v3735, 0.0
    %v3757 = vmax.f32 %v3738, 0.0
    %v3758 = vmax.f32 %v3743, 0.0
    %v3759 = vmax.f32 %v3746, 0.0
    %v3760 = vmax.f32 %v3751, 0.0
    %v3761 = vpack.c.bf16 %v3757, %v3756
    %v3762 = vpack.c.bf16 %v3759, %v3758
    %v3763 = vpack.c.bf16 %v3760, %v3760
    %v3765 = vlaneseq
    %v3766 = vshrl.u32 %v3765, 7
    %v3767 = vsub.s32 0, %v3766
    %v3768 = vrot.slane %v2731, %v3767
    %v3774 = vunpack.c.l.b16 %v2726
    %v3775 = vunpack.c.l.b16 %v2727
    %v3776 = vunpack.c.l.b16 %v2728
    %v3777 = vunpack.c.l.b16 %v2729
    %v3778 = vpack.c.b16 %v3775, %v3774
    %v3779 = vpack.c.b16 %v3777, %v3776
    %v3783 = vsel %vm2552, %v3761, 0
    %v3786 = vsel %vm2552, %v3762, 0
    %v3789 = vsel %vm2552, %v3763, 0
    %3791 = vmatprep.subr.bf16.mxu0 0
    %3792 = vmatpush1.bf16.msra.mxu0 %v3778
    %3793 = vmatprep.subr.bf16.mxu0 0
    %3794 = vmatpush1.bf16.msra.mxu0 %v3779
    %3795 = vmatprep.subr.bf16.mxu0 0
    %3796 = vmatpush1.bf16.msra.mxu0 0
    %3797 = vmatprep.subr.bf16.mxu0 0
    %3798 = vmatpush1.bf16.msra.mxu0 0
    %3799 = vmatprep.subr.bf16.mxu0 0
    %3800 = vmatpush1.bf16.msra.mxu0 0
    %3801 = vmatprep.subr.bf16.mxu0 0
    %3802 = vmatpush1.bf16.msra.mxu0 0
    %3803 = vmatprep.subr.bf16.mxu0 0
    %3804 = vmatpush1.bf16.msra.mxu0 0
    %3805 = vmatprep.subr.bf16.mxu0 0
    %3806 = vmatpush1.bf16.msra.mxu0 0
    %3807 = vmatprep.subr.bf16.mxu0 0
    %3808 = vmatpush1.bf16.msra.mxu0 0
    %3809 = vmatprep.subr.bf16.mxu0 0
    %3810 = vmatpush1.bf16.msra.mxu0 0
    %3811 = vmatprep.subr.bf16.mxu0 0
    %3812 = vmatpush1.bf16.msra.mxu0 0
    %3813 = vmatprep.subr.bf16.mxu0 0
    %3814 = vmatpush1.bf16.msra.mxu0 0
    %3815 = vmatprep.subr.bf16.mxu0 0
    %3816 = vmatpush1.bf16.msra.mxu0 0
    %3817 = vmatprep.subr.bf16.mxu0 0
    %3818 = vmatpush1.bf16.msra.mxu0 0
    %3819 = vmatprep.subr.bf16.mxu0 0
    %3820 = vmatpush1.bf16.msra.mxu0 0
    %3821 = vmatprep.subr.bf16.mxu0 0
    %3822 = vmatpush1.bf16.msra.mxu0 0
    %3823 = vmatprep.mubr.bf16.mxu0 0
    %3824 = vmatmul.mubr.bf16.gmra.mrb[0].mxu0 %v3783
    %v3825 = vpop.f32.mrb[0].mxu0
    %v3826 = vadd.f32 %v3768, %v3825
    %v3827 = vpop.f32.mrb[0].mxu0
    %v3828 = vpop.f32.mrb[0].mxu0
    %v3829 = vadd.f32 %v3768, %v3828
    %v3830 = vpop.f32.mrb[0].mxu0
    %3831 = vmatprep.mubr.bf16.mxu0 0
    %3832 = vmatmul.mubr.bf16.gmra.mrb[0].mxu0 %v3786
    %v3833 = vpop.f32.mrb[0].mxu0
    %v3834 = vadd.f32 %v3768, %v3833
    %v3835 = vpop.f32.mrb[0].mxu0
    %v3836 = vpop.f32.mrb[0].mxu0
    %v3837 = vadd.f32 %v3768, %v3836
    %v3838 = vpop.f32.mrb[0].mxu0
    %3839 = vmatprep.mubr.bf16.mxu0 0
    %3840 = vmatmul.mubr.bf16.gmra.mrb[0].mxu0 %v3789
    %v3841 = vpop.f32.mrb[0].mxu0
    %v3842 = vadd.f32 %v3768, %v3841
    %v3843 = vpop.f32.mrb[0].mxu0
    %v3844 = vpop.f32.mrb[0].mxu0
    %v3845 = vpop.f32.mrb[0].mxu0
    %3846 = vdwg.mxu0
    %v3847 = vadd.f32 %v3826, %v3671
    %v3848 = vadd.f32 %v3829, %v3672
    %v3849 = vadd.f32 %v3834, %v3673
    %v3850 = vadd.f32 %v3837, %v3674
    %v3851 = vadd.f32 %v3842, %v3675
    %v3852 = vsel %vm1508, %v3847, 0.0
    %3853 = vadd.xlane.f32.xlu0 %v3852
    %v3854 = vpop.xlane.xlu0 %3853
    %v3855 = vsel %vm1508, %v3848, 0.0
    %3856 = vadd.xlane.f32.xlu0 %v3855
    %v3857 = vpop.xlane.xlu0 %3856
    %v3858 = vsel %vm1508, %v3849, 0.0
    %3859 = vadd.xlane.f32.xlu0 %v3858
    %v3860 = vpop.xlane.xlu0 %3859
    %v3861 = vsel %vm1508, %v3850, 0.0
    %3862 = vadd.xlane.f32.xlu0 %v3861
    %v3863 = vpop.xlane.xlu0 %3862
    %v3864 = vsel %vm1508, %v3851, 0.0
    %3865 = vadd.xlane.f32.xlu0 %v3864
    %v3866 = vpop.xlane.xlu0 %3865
    %v3867 = vmul.f32 %v3854, %v2373
    %v3868 = vmul.f32 %v3857, %v2373
    %v3869 = vmul.f32 %v3860, %v2373
    %v3870 = vmul.f32 %v3863, %v2373
    %v3871 = vmul.f32 %v3866, %v2373
    %v3872 = vsub.f32 %v3847, %v3867
    %v3873 = vsub.f32 %v3848, %v3868
    %v3874 = vsub.f32 %v3849, %v3869
    %v3875 = vsub.f32 %v3850, %v3870
    %v3876 = vsub.f32 %v3851, %v3871
    %v3877 = vmul.f32 %v3872, %v3872
    %v3878 = vmul.f32 %v3873, %v3873
    %v3879 = vmul.f32 %v3874, %v3874
    %v3880 = vmul.f32 %v3875, %v3875
    %v3881 = vmul.f32 %v3876, %v3876
    %v3882 = vsel %vm1508, %v3877, 0.0
    %3883 = vadd.xlane.f32.xlu0 %v3882
    %v3884 = vpop.xlane.xlu0 %3883
    %v3885 = vsel %vm1508, %v3878, 0.0
    %3886 = vadd.xlane.f32.xlu0 %v3885
    %v3887 = vpop.xlane.xlu0 %3886
    %v3888 = vsel %vm1508, %v3879, 0.0
    %3889 = vadd.xlane.f32.xlu0 %v3888
    %v3890 = vpop.xlane.xlu0 %3889
    %v3891 = vsel %vm1508, %v3880, 0.0
    %3892 = vadd.xlane.f32.xlu0 %v3891
    %v3893 = vpop.xlane.xlu0 %3892
    %v3894 = vsel %vm1508, %v3881, 0.0
    %3895 = vadd.xlane.f32.xlu0 %v3894
    %v3896 = vpop.xlane.xlu0 %3895
    %v3897 = vmul.f32 %v3884, %v2373
    %v3898 = vmul.f32 %v3887, %v2373
    %v3899 = vmul.f32 %v3890, %v2373
    %v3900 = vmul.f32 %v3893, %v2373
    %v3901 = vmul.f32 %v3896, %v2373
    %v3902 = vadd.f32 %v3897, 1e-06
    %v3903 = vadd.f32 %v3898, 1e-06
    %v3904 = vadd.f32 %v3899, 1e-06
    %v3905 = vadd.f32 %v3900, 1e-06
    %v3906 = vadd.f32 %v3901, 1e-06
    %v3907 = vrsqrt.pop %v3902
    %v3908 = vrsqrt.pop %v3903
    %v3909 = vrsqrt.pop %v3904
    %v3910 = vrsqrt.pop %v3905
    %v3911 = vrsqrt.pop %v3906
    %v3912 = vmul.f32 %v3872, %v3907
    %v3913 = vmul.f32 %v3873, %v3908
    %v3914 = vmul.f32 %v3874, %v3909
    %v3915 = vmul.f32 %v3875, %v3910
    %v3916 = vmul.f32 %v3876, %v3911
    %v3918 = vlaneseq
    %v3919 = vshrl.u32 %v3918, 7
    %v3920 = vsub.s32 0, %v3919
    %v3921 = vrot.slane %v2733, %v3920
    %v3923 = vmul.f32 %v3912, %v3921
    %v3924 = vmul.f32 %v3913, %v3921
    %v3925 = vmul.f32 %v3914, %v3921
    %v3926 = vmul.f32 %v3915, %v3921
    %v3927 = vmul.f32 %v3916, %v3921
    %v3929 = vlaneseq
    %v3930 = vshrl.u32 %v3929, 7
    %v3931 = vsub.s32 0, %v3930
    %v3932 = vrot.slane %v2735, %v3931
    %v3934 = vadd.f32 %v3923, %v3932
    %v3935 = vadd.f32 %v3924, %v3932
    %v3936 = vadd.f32 %v3925, %v3932
    %v3937 = vadd.f32 %v3926, %v3932
    %v3938 = vadd.f32 %v3927, %v3932
    %s3939 = scalar_lea.vmem %s4, 16
    %v3940 = vld [vmem:[%s3939] sm:$0xf]
    %v3941 = vld [vmem:[%s3939 + $0x4] sm:$0xf]
    %s3942 = scalar_lea.vmem %s5, 16
    %v3943 = vld [vmem:[%s3942] sm:$0xf]
    %v3944 = vld [vmem:[%s3942 + $0x4] sm:$0xf]
    %s3945 = scalar_lea.vmem %s6, 2
    %v3946 = vld [vmem:[%s3945] sm:$0x1]
    %s3947 = scalar_lea.vmem %s7, 2
    %v3948 = vld [vmem:[%s3947] sm:$0x1]
    %s3949 = scalar_lea.vmem %s8, 16
    %v3950 = vld [vmem:[%s3949] sm:$0xf]
    %v3951 = vld [vmem:[%s3949 + $0x4] sm:$0xf]
    %s3952 = scalar_lea.vmem %s9, 2
    %v3953 = vld [vmem:[%s3952] sm:$0x1]
    %s3954 = scalar_lea.vmem %s10, 32
    %v3955 = vld [vmem:[%s3954] sm:$0xf]
    %v3956 = vld [vmem:[%s3954 + $0x4] sm:$0xf]
    %v3957 = vld [vmem:[%s3954 + $0x8] sm:$0xf]
    %v3958 = vld [vmem:[%s3954 + $0xc] sm:$0xf]
    %s3959 = scalar_lea.vmem %s11, 2
    %v3960 = vld [vmem:[%s3959] sm:$0x1]
    %s3961 = scalar_lea.vmem %s12, 2
    %v3962 = vld [vmem:[%s3961] sm:$0x1]
    %s3963 = scalar_lea.vmem %s13, 2
    %v3964 = vld [vmem:[%s3963] sm:$0x1]
    %v3965 = vpack.c.bf16 %v3935, %v3934
    %v3966 = vpack.c.bf16 %v3937, %v3936
    %v3967 = vpack.c.bf16 %v3938, %v3938
    %v3970 = vunpack.c.l.b16 %v3940
    %v3971 = vunpack.c.l.b16 %v3941
    %v3972 = vpack.c.b16 %v3971, %v3970
    %v3975 = vsel %vm1508, %v3965, 0
    %v3978 = vsel %vm1508, %v3966, 0
    %v3981 = vsel %vm1508, %v3967, 0
    %3983 = vmatprep.subr.bf16.mxu0 0
    %3984 = vmatpush1.bf16.msra.mxu0 %v3972
    %3985 = vmatprep.subr.bf16.mxu0 0
    %3986 = vmatpush1.bf16.msra.mxu0 0
    %3987 = vmatprep.subr.bf16.mxu0 0
    %3988 = vmatpush1.bf16.msra.mxu0 0
    %3989 = vmatprep.subr.bf16.mxu0 0
    %3990 = vmatpush1.bf16.msra.mxu0 0
    %3991 = vmatprep.subr.bf16.mxu0 0
    %3992 = vmatpush1.bf16.msra.mxu0 0
    %3993 = vmatprep.subr.bf16.mxu0 0
    %3994 = vmatpush1.bf16.msra.mxu0 0
    %3995 = vmatprep.subr.bf16.mxu0 0
    %3996 = vmatpush1.bf16.msra.mxu0 0
    %3997 = vmatprep.subr.bf16.mxu0 0
    %3998 = vmatpush1.bf16.msra.mxu0 0
    %3999 = vmatprep.subr.bf16.mxu0 0
    %4000 = vmatpush1.bf16.msra.mxu0 0
    %4001 = vmatprep.subr.bf16.mxu0 0
    %4002 = vmatpush1.bf16.msra.mxu0 0
    %4003 = vmatprep.subr.bf16.mxu0 0
    %4004 = vmatpush1.bf16.msra.mxu0 0
    %4005 = vmatprep.subr.bf16.mxu0 0
    %4006 = vmatpush1.bf16.msra.mxu0 0
    %4007 = vmatprep.subr.bf16.mxu0 0
    %4008 = vmatpush1.bf16.msra.mxu0 0
    %4009 = vmatprep.subr.bf16.mxu0 0
    %4010 = vmatpush1.bf16.msra.mxu0 0
    %4011 = vmatprep.subr.bf16.mxu0 0
    %4012 = vmatpush1.bf16.msra.mxu0 0
    %4013 = vmatprep.subr.bf16.mxu0 0
    %4014 = vmatpush1.bf16.msra.mxu0 0
    %4015 = vmatprep.mubr.bf16.mxu0 0
    %4016 = vmatmul.mubr.bf16.gmra.mrb[0].mxu0 %v3975
    %v4017 = vpop.f32.mrb[0].mxu0
    %v4018 = vadd.f32 0.0, %v4017
    %v4019 = vpop.f32.mrb[0].mxu0
    %v4020 = vpop.f32.mrb[0].mxu0
    %v4021 = vadd.f32 0.0, %v4020
    %v4022 = vpop.f32.mrb[0].mxu0
    %4023 = vmatprep.mubr.bf16.mxu0 0
    %4024 = vmatmul.mubr.bf16.gmra.mrb[0].mxu0 %v3978
    %v4025 = vpop.f32.mrb[0].mxu0
    %v4026 = vadd.f32 0.0, %v4025
    %v4027 = vpop.f32.mrb[0].mxu0
    %v4028 = vpop.f32.mrb[0].mxu0
    %v4029 = vadd.f32 0.0, %v4028
    %v4030 = vpop.f32.mrb[0].mxu0
    %4031 = vmatprep.mubr.bf16.mxu0 0
    %4032 = vmatmul.mubr.bf16.gmra.mrb[0].mxu0 %v3981
    %v4033 = vpop.f32.mrb[0].mxu0
    %v4034 = vadd.f32 0.0, %v4033
    %v4035 = vpop.f32.mrb[0].mxu0
    %v4036 = vpop.f32.mrb[0].mxu0
    %v4037 = vpop.f32.mrb[0].mxu0
    %4038 = vdwg.mxu0
    %v4039 = vpack.c.bf16 %v4021, %v4018
    %v4040 = vpack.c.bf16 %v4026, %v4026
    %4043 = vrot.lane.b32.xlu0 %v4039, 112
    %v4044 = vpop.permute.xlu0 %4043
    %4045 = vrot.lane.b32.xlu0 %v4040, 112
    %v4046 = vpop.permute.xlu0 %4045
    %v4048 = vsel %vm1582, %v4039, 0
    %v4051 = vsel %vm1582, %v4040, 0
    %v4054 = vsel %vm1582, %v4044, 0
    %v4057 = vsel %vm1582, %v4046, 0
    %4059 = vmatprep.subr.bf16.mxu0 0
    %4060 = vmatpush1.bf16.xpose.msra.mxu0 %v4054
    %4061 = vmatprep.subr.bf16.mxu0 0
    %4062 = vmatpush1.bf16.xpose.msra.mxu0 %v4057
    %4063 = vmatprep.subr.bf16.mxu0 0
    %4064 = vmatpush1.bf16.xpose.msra.mxu0 0
    %4065 = vmatprep.subr.bf16.mxu0 0
    %4066 = vmatpush1.bf16.xpose.msra.mxu0 0
    %4067 = vmatprep.subr.bf16.mxu0 0
    %4068 = vmatpush1.bf16.xpose.msra.mxu0 0
    %4069 = vmatprep.subr.bf16.mxu0 0
    %4070 = vmatpush1.bf16.xpose.msra.mxu0 0
    %4071 = vmatprep.subr.bf16.mxu0 0
    %4072 = vmatpush1.bf16.xpose.msra.mxu0 0
    %4073 = vmatprep.subr.bf16.mxu0 0
    %4074 = vmatpush1.bf16.xpose.msra.mxu0 0
    %4075 = vmatprep.subr.bf16.mxu0 0
    %4076 = vmatpush1.bf16.xpose.msra.mxu0 0
    %4077 = vmatprep.subr.bf16.mxu0 0
    %4078 = vmatpush1.bf16.xpose.msra.mxu0 0
    %4079 = vmatprep.subr.bf16.mxu0 0
    %4080 = vmatpush1.bf16.xpose.msra.mxu0 0
    %4081 = vmatprep.subr.bf16.mxu0 0
    %4082 = vmatpush1.bf16.xpose.msra.mxu0 0
    %4083 = vmatprep.subr.bf16.mxu0 0
    %4084 = vmatpush1.bf16.xpose.msra.mxu0 0
    %4085 = vmatprep.subr.bf16.mxu0 0
    %4086 = vmatpush1.bf16.xpose.msra.mxu0 0
    %4087 = vmatprep.subr.bf16.mxu0 0
    %4088 = vmatpush1.bf16.xpose.msra.mxu0 0
    %4089 = vmatprep.subr.bf16.mxu0 0
    %4090 = vmatpush1.bf16.xpose.msra.mxu0 0
    %4091 = vmatprep.mubr.bf16.mxu0 0
    %4092 = vmatmul.mubr.bf16.gmra.mrb[0].mxu0 %v4048
    %v4093 = vpop.f32.mrb[0].mxu0
    %v4094 = vadd.f32 0.0, %v4093
    %v4095 = vpop.f32.mrb[0].mxu0
    %v4096 = vpop.f32.mrb[0].mxu0
    %v4097 = vadd.f32 0.0, %v4096
    %v4098 = vpop.f32.mrb[0].mxu0
    %4099 = vmatprep.mubr.bf16.mxu0 0
    %4100 = vmatmul.mubr.bf16.gmra.mrb[0].mxu0 %v4051
    %v4101 = vpop.f32.mrb[0].mxu0
    %v4102 = vadd.f32 0.0, %v4101
    %v4103 = vpop.f32.mrb[0].mxu0
    %v4104 = vpop.f32.mrb[0].mxu0
    %v4105 = vpop.f32.mrb[0].mxu0
    %4106 = vdwg.mxu0
    %v4107 = vsel %vm1643, %v4094, -inf
    %4108 = vmax.xlane.f32.xlu0 %v4107
    %v4109 = vpop.xlane.xlu0 %4108
    %v4110 = vsel %vm1643, %v4097, -inf
    %4111 = vmax.xlane.f32.xlu0 %v4110
    %v4112 = vpop.xlane.xlu0 %4111
    %v4113 = vsel %vm1650, %v4102, -inf
    %4114 = vmax.xlane.f32.xlu0 %v4113
    %v4115 = vpop.xlane.xlu0 %4114
    %v4116 = vsub.f32 %v4094, %v4109
    %v4117 = vsub.f32 %v4097, %v4112
    %v4118 = vsub.f32 %v4102, %v4115
    %v4119 = vmul.f32 %v4116, 1.442695
    %v4120 = vpow.pop %v4119
    %v4121 = vmul.f32 %v4117, 1.442695
    %v4122 = vpow.pop %v4121
    %v4123 = vmul.f32 %v4118, 1.442695
    %v4124 = vpow.pop %v4123
    %v4125 = vsel %vm1643, %v4120, 0.0
    %4126 = vadd.xlane.f32.xlu0 %v4125
    %v4127 = vpop.xlane.xlu0 %4126
    %v4128 = vsel %vm1643, %v4122, 0.0
    %4129 = vadd.xlane.f32.xlu0 %v4128
    %v4130 = vpop.xlane.xlu0 %4129
    %v4131 = vsel %vm1650, %v4124, 0.0
    %4132 = vadd.xlane.f32.xlu0 %v4131
    %v4133 = vpop.xlane.xlu0 %4132
    %v4134 = vrcp.pop %v4127
    %v4135 = vmul.f32 %v4120, %v4134
    %v4136 = vrcp.pop %v4130
    %v4137 = vmul.f32 %v4122, %v4136
    %v4138 = vrcp.pop %v4133
    %v4139 = vmul.f32 %v4124, %v4138
    %v4140 = vpack.c.bf16 %v4137, %v4135
    %v4141 = vpack.c.bf16 %v4139, %v4139
    %4142 = vrot.lane.b32.xlu0 %v4039, 96
    %v4143 = vpop.permute.xlu0 %4142
    %4144 = vrot.lane.b32.xlu0 %v4040, 96
    %v4145 = vpop.permute.xlu0 %4144
    %v4148 = vsel %vm1643, %v4140, 0
    %v4151 = vsel %vm1643, %v4141, 0
    %v4154 = vsel %vm1111, %v4145, 0
    %4156 = vmatprep.subr.bf16.mxu0 0
    %4157 = vmatpush1.bf16.msra.mxu0 %v4143
    %4158 = vmatprep.subr.bf16.mxu0 0
    %4159 = vmatpush1.bf16.msra.mxu0 %v4154
    %4160 = vmatprep.subr.bf16.mxu0 0
    %4161 = vmatpush1.bf16.msra.mxu0 0
    %4162 = vmatprep.subr.bf16.mxu0 0
    %4163 = vmatpush1.bf16.msra.mxu0 0
    %4164 = vmatprep.subr.bf16.mxu0 0
    %4165 = vmatpush1.bf16.msra.mxu0 0
    %4166 = vmatprep.subr.bf16.mxu0 0
    %4167 = vmatpush1.bf16.msra.mxu0 0
    %4168 = vmatprep.subr.bf16.mxu0 0
    %4169 = vmatpush1.bf16.msra.mxu0 0
    %4170 = vmatprep.subr.bf16.mxu0 0
    %4171 = vmatpush1.bf16.msra.mxu0 0
    %4172 = vmatprep.subr.bf16.mxu0 0
    %4173 = vmatpush1.bf16.msra.mxu0 0
    %4174 = vmatprep.subr.bf16.mxu0 0
    %4175 = vmatpush1.bf16.msra.mxu0 0
    %4176 = vmatprep.subr.bf16.mxu0 0
    %4177 = vmatpush1.bf16.msra.mxu0 0
    %4178 = vmatprep.subr.bf16.mxu0 0
    %4179 = vmatpush1.bf16.msra.mxu0 0
    %4180 = vmatprep.subr.bf16.mxu0 0
    %4181 = vmatpush1.bf16.msra.mxu0 0
    %4182 = vmatprep.subr.bf16.mxu0 0
    %4183 = vmatpush1.bf16.msra.mxu0 0
    %4184 = vmatprep.subr.bf16.mxu0 0
    %4185 = vmatpush1.bf16.msra.mxu0 0
    %4186 = vmatprep.subr.bf16.mxu0 0
    %4187 = vmatpush1.bf16.msra.mxu0 0
    %4188 = vmatprep.mubr.bf16.mxu0 0
    %4189 = vmatmul.mubr.bf16.gmra.mrb[0].mxu0 %v4148
    %v4190 = vpop.f32.mrb[0].mxu0
    %v4191 = vadd.f32 0.0, %v4190
    %v4192 = vpop.f32.mrb[0].mxu0
    %v4193 = vpop.f32.mrb[0].mxu0
    %v4194 = vadd.f32 0.0, %v4193
    %v4195 = vpop.f32.mrb[0].mxu0
    %4196 = vmatprep.mubr.bf16.mxu0 0
    %4197 = vmatmul.mubr.bf16.gmra.mrb[0].mxu0 %v4151
    %v4198 = vpop.f32.mrb[0].mxu0
    %v4199 = vadd.f32 0.0, %v4198
    %v4200 = vpop.f32.mrb[0].mxu0
    %v4201 = vpop.f32.mrb[0].mxu0
    %v4202 = vpop.f32.mrb[0].mxu0
    %4203 = vdwg.mxu0
    %4204 = vrot.lane.b32.xlu0 %v4039, 120
    %v4205 = vpop.permute.xlu0 %4204
    %4206 = vrot.lane.b32.xlu0 %v4040, 120
    %v4207 = vpop.permute.xlu0 %4206
    %4208 = vrot.lane.b32.xlu0 %v4039, 104
    %v4209 = vpop.permute.xlu0 %4208
    %4210 = vrot.lane.b32.xlu0 %v4040, 104
    %v4211 = vpop.permute.xlu0 %4210
    %v4213 = vsel %vm1582, %v4205, 0
    %v4216 = vsel %vm1582, %v4207, 0
    %v4219 = vsel %vm1582, %v4209, 0
    %v4222 = vsel %vm1582, %v4211, 0
    %4224 = vmatprep.subr.bf16.mxu0 0
    %4225 = vmatpush1.bf16.xpose.msra.mxu0 %v4219
    %4226 = vmatprep.subr.bf16.mxu0 0
    %4227 = vmatpush1.bf16.xpose.msra.mxu0 %v4222
    %4228 = vmatprep.subr.bf16.mxu0 0
    %4229 = vmatpush1.bf16.xpose.msra.mxu0 0
    %4230 = vmatprep.subr.bf16.mxu0 0
    %4231 = vmatpush1.bf16.xpose.msra.mxu0 0
    %4232 = vmatprep.subr.bf16.mxu0 0
    %4233 = vmatpush1.bf16.xpose.msra.mxu0 0
    %4234 = vmatprep.subr.bf16.mxu0 0
    %4235 = vmatpush1.bf16.xpose.msra.mxu0 0
    %4236 = vmatprep.subr.bf16.mxu0 0
    %4237 = vmatpush1.bf16.xpose.msra.mxu0 0
    %4238 = vmatprep.subr.bf16.mxu0 0
    %4239 = vmatpush1.bf16.xpose.msra.mxu0 0
    %4240 = vmatprep.subr.bf16.mxu0 0
    %4241 = vmatpush1.bf16.xpose.msra.mxu0 0
    %4242 = vmatprep.subr.bf16.mxu0 0
    %4243 = vmatpush1.bf16.xpose.msra.mxu0 0
    %4244 = vmatprep.subr.bf16.mxu0 0
    %4245 = vmatpush1.bf16.xpose.msra.mxu0 0
    %4246 = vmatprep.subr.bf16.mxu0 0
    %4247 = vmatpush1.bf16.xpose.msra.mxu0 0
    %4248 = vmatprep.subr.bf16.mxu0 0
    %4249 = vmatpush1.bf16.xpose.msra.mxu0 0
    %4250 = vmatprep.subr.bf16.mxu0 0
    %4251 = vmatpush1.bf16.xpose.msra.mxu0 0
    %4252 = vmatprep.subr.bf16.mxu0 0
    %4253 = vmatpush1.bf16.xpose.msra.mxu0 0
    %4254 = vmatprep.subr.bf16.mxu0 0
    %4255 = vmatpush1.bf16.xpose.msra.mxu0 0
    %4256 = vmatprep.mubr.bf16.mxu0 0
    %4257 = vmatmul.mubr.bf16.gmra.mrb[0].mxu0 %v4213
    %v4258 = vpop.f32.mrb[0].mxu0
    %v4259 = vadd.f32 0.0, %v4258
    %v4260 = vpop.f32.mrb[0].mxu0
    %v4261 = vpop.f32.mrb[0].mxu0
    %v4262 = vadd.f32 0.0, %v4261
    %v4263 = vpop.f32.mrb[0].mxu0
    %4264 = vmatprep.mubr.bf16.mxu0 0
    %4265 = vmatmul.mubr.bf16.gmra.mrb[0].mxu0 %v4216
    %v4266 = vpop.f32.mrb[0].mxu0
    %v4267 = vadd.f32 0.0, %v4266
    %v4268 = vpop.f32.mrb[0].mxu0
    %v4269 = vpop.f32.mrb[0].mxu0
    %v4270 = vpop.f32.mrb[0].mxu0
    %4271 = vdwg.mxu0
    %v4272 = vsel %vm1643, %v4259, -inf
    %4273 = vmax.xlane.f32.xlu0 %v4272
    %v4274 = vpop.xlane.xlu0 %4273
    %v4275 = vsel %vm1643, %v4262, -inf
    %4276 = vmax.xlane.f32.xlu0 %v4275
    %v4277 = vpop.xlane.xlu0 %4276
    %v4278 = vsel %vm1650, %v4267, -inf
    %4279 = vmax.xlane.f32.xlu0 %v4278
    %v4280 = vpop.xlane.xlu0 %4279
    %v4281 = vsub.f32 %v4259, %v4274
    %v4282 = vsub.f32 %v4262, %v4277
    %v4283 = vsub.f32 %v4267, %v4280
    %v4284 = vmul.f32 %v4281, 1.442695
    %v4285 = vpow.pop %v4284
    %v4286 = vmul.f32 %v4282, 1.442695
    %v4287 = vpow.pop %v4286
    %v4288 = vmul.f32 %v4283, 1.442695
    %v4289 = vpow.pop %v4288
    %v4290 = vsel %vm1643, %v4285, 0.0
    %4291 = vadd.xlane.f32.xlu0 %v4290
    %v4292 = vpop.xlane.xlu0 %4291
    %v4293 = vsel %vm1643, %v4287, 0.0
    %4294 = vadd.xlane.f32.xlu0 %v4293
    %v4295 = vpop.xlane.xlu0 %4294
    %v4296 = vsel %vm1650, %v4289, 0.0
    %4297 = vadd.xlane.f32.xlu0 %v4296
    %v4298 = vpop.xlane.xlu0 %4297
    %v4299 = vrcp.pop %v4292
    %v4300 = vmul.f32 %v4285, %v4299
    %v4301 = vrcp.pop %v4295
    %v4302 = vmul.f32 %v4287, %v4301
    %v4303 = vrcp.pop %v4298
    %v4304 = vmul.f32 %v4289, %v4303
    %v4305 = vpack.c.bf16 %v4302, %v4300
    %v4306 = vpack.c.bf16 %v4304, %v4304
    %4307 = vrot.lane.b32.xlu0 %v4039, 88
    %v4308 = vpop.permute.xlu0 %4307
    %4309 = vrot.lane.b32.xlu0 %v4040, 88
    %v4310 = vpop.permute.xlu0 %4309
    %v4313 = vsel %vm1643, %v4305, 0
    %v4316 = vsel %vm1643, %v4306, 0
    %v4319 = vsel %vm1111, %v4310, 0
    %4321 = vmatprep.subr.bf16.mxu0 0
    %4322 = vmatpush1.bf16.msra.mxu0 %v4308
    %4323 = vmatprep.subr.bf16.mxu0 0
    %4324 = vmatpush1.bf16.msra.mxu0 %v4319
    %4325 = vmatprep.subr.bf16.mxu0 0
    %4326 = vmatpush1.bf16.msra.mxu0 0
    %4327 = vmatprep.subr.bf16.mxu0 0
    %4328 = vmatpush1.bf16.msra.mxu0 0
    %4329 = vmatprep.subr.bf16.mxu0 0
    %4330 = vmatpush1.bf16.msra.mxu0 0
    %4331 = vmatprep.subr.bf16.mxu0 0
    %4332 = vmatpush1.bf16.msra.mxu0 0
    %4333 = vmatprep.subr.bf16.mxu0 0
    %4334 = vmatpush1.bf16.msra.mxu0 0
    %4335 = vmatprep.subr.bf16.mxu0 0
    %4336 = vmatpush1.bf16.msra.mxu0 0
    %4337 = vmatprep.subr.bf16.mxu0 0
    %4338 = vmatpush1.bf16.msra.mxu0 0
    %4339 = vmatprep.subr.bf16.mxu0 0
    %4340 = vmatpush1.bf16.msra.mxu0 0
    %4341 = vmatprep.subr.bf16.mxu0 0
    %4342 = vmatpush1.bf16.msra.mxu0 0
    %4343 = vmatprep.subr.bf16.mxu0 0
    %4344 = vmatpush1.bf16.msra.mxu0 0
    %4345 = vmatprep.subr.bf16.mxu0 0
    %4346 = vmatpush1.bf16.msra.mxu0 0
    %4347 = vmatprep.subr.bf16.mxu0 0
    %4348 = vmatpush1.bf16.msra.mxu0 0
    %4349 = vmatprep.subr.bf16.mxu0 0
    %4350 = vmatpush1.bf16.msra.mxu0 0
    %4351 = vmatprep.subr.bf16.mxu0 0
    %4352 = vmatpush1.bf16.msra.mxu0 0
    %4353 = vmatprep.mubr.bf16.mxu0 0
    %4354 = vmatmul.mubr.bf16.gmra.mrb[0].mxu0 %v4313
    %v4355 = vpop.f32.mrb[0].mxu0
    %v4356 = vadd.f32 0.0, %v4355
    %v4357 = vpop.f32.mrb[0].mxu0
    %v4358 = vpop.f32.mrb[0].mxu0
    %v4359 = vadd.f32 0.0, %v4358
    %v4360 = vpop.f32.mrb[0].mxu0
    %4361 = vmatprep.mubr.bf16.mxu0 0
    %4362 = vmatmul.mubr.bf16.gmra.mrb[0].mxu0 %v4316
    %v4363 = vpop.f32.mrb[0].mxu0
    %v4364 = vadd.f32 0.0, %v4363
    %v4365 = vpop.f32.mrb[0].mxu0
    %v4366 = vpop.f32.mrb[0].mxu0
    %v4367 = vpop.f32.mrb[0].mxu0
    %4368 = vdwg.mxu0
    %4372 = vrot.lane.b32.xlu0 %v4356, 8
    %v4373 = vpop.permute.xlu0 %4372
    %4374 = vrot.lane.b32.xlu0 %v4359, 8
    %v4375 = vpop.permute.xlu0 %4374
    %4376 = vrot.lane.b32.xlu0 %v4364, 8
    %v4377 = vpop.permute.xlu0 %4376
    %v4381 = vsel %vm1582, %v4191, %v4373
    %v4382 = vsel %vm1582, %v4194, %v4375
    %v4383 = vsel %vm1582, %v4199, %v4377
    %v4384 = vpack.c.bf16 %v4029, %v4026
    %v4385 = vpack.c.bf16 %v4034, %v4034
    %v4388 = vrot.slane %v4384, 2
    %v4389 = vrot.slane %v4385, 2
    %v4390 = vsel %vm1926, %v4388, %v4389
    %4391 = vrot.lane.b32.xlu0 %v4390, 112
    %v4392 = vpop.permute.xlu0 %4391
    %4393 = vrot.lane.b32.xlu0 %v4389, 112
    %v4394 = vpop.permute.xlu0 %4393
    %v4396 = vsel %vm1582, %v4390, 0
    %v4399 = vsel %vm1582, %v4389, 0
    %v4402 = vsel %vm1582, %v4392, 0
    %v4405 = vsel %vm1582, %v4394, 0
    %4407 = vmatprep.subr.bf16.mxu0 0
    %4408 = vmatpush1.bf16.xpose.msra.mxu0 %v4402
    %4409 = vmatprep.subr.bf16.mxu0 0
    %4410 = vmatpush1.bf16.xpose.msra.mxu0 %v4405
    %4411 = vmatprep.subr.bf16.mxu0 0
    %4412 = vmatpush1.bf16.xpose.msra.mxu0 0
    %4413 = vmatprep.subr.bf16.mxu0 0
    %4414 = vmatpush1.bf16.xpose.msra.mxu0 0
    %4415 = vmatprep.subr.bf16.mxu0 0
    %4416 = vmatpush1.bf16.xpose.msra.mxu0 0
    %4417 = vmatprep.subr.bf16.mxu0 0
    %4418 = vmatpush1.bf16.xpose.msra.mxu0 0
    %4419 = vmatprep.subr.bf16.mxu0 0
    %4420 = vmatpush1.bf16.xpose.msra.mxu0 0
    %4421 = vmatprep.subr.bf16.mxu0 0
    %4422 = vmatpush1.bf16.xpose.msra.mxu0 0
    %4423 = vmatprep.subr.bf16.mxu0 0
    %4424 = vmatpush1.bf16.xpose.msra.mxu0 0
    %4425 = vmatprep.subr.bf16.mxu0 0
    %4426 = vmatpush1.bf16.xpose.msra.mxu0 0
    %4427 = vmatprep.subr.bf16.mxu0 0
    %4428 = vmatpush1.bf16.xpose.msra.mxu0 0
    %4429 = vmatprep.subr.bf16.mxu0 0
    %4430 = vmatpush1.bf16.xpose.msra.mxu0 0
    %4431 = vmatprep.subr.bf16.mxu0 0
    %4432 = vmatpush1.bf16.xpose.msra.mxu0 0
    %4433 = vmatprep.subr.bf16.mxu0 0
    %4434 = vmatpush1.bf16.xpose.msra.mxu0 0
    %4435 = vmatprep.subr.bf16.mxu0 0
    %4436 = vmatpush1.bf16.xpose.msra.mxu0 0
    %4437 = vmatprep.subr.bf16.mxu0 0
    %4438 = vmatpush1.bf16.xpose.msra.mxu0 0
    %4439 = vmatprep.mubr.bf16.mxu0 0
    %4440 = vmatmul.mubr.bf16.gmra.mrb[0].mxu0 %v4396
    %v4441 = vpop.f32.mrb[0].mxu0
    %v4442 = vadd.f32 0.0, %v4441
    %v4443 = vpop.f32.mrb[0].mxu0
    %v4444 = vpop.f32.mrb[0].mxu0
    %v4445 = vadd.f32 0.0, %v4444
    %v4446 = vpop.f32.mrb[0].mxu0
    %4447 = vmatprep.mubr.bf16.mxu0 0
    %4448 = vmatmul.mubr.bf16.gmra.mrb[0].mxu0 %v4399
    %v4449 = vpop.f32.mrb[0].mxu0
    %v4450 = vadd.f32 0.0, %v4449
    %v4451 = vpop.f32.mrb[0].mxu0
    %v4452 = vpop.f32.mrb[0].mxu0
    %v4453 = vpop.f32.mrb[0].mxu0
    %4454 = vdwg.mxu0
    %v4455 = vsel %vm1643, %v4442, -inf
    %4456 = vmax.xlane.f32.xlu0 %v4455
    %v4457 = vpop.xlane.xlu0 %4456
    %v4458 = vsel %vm1643, %v4445, -inf
    %4459 = vmax.xlane.f32.xlu0 %v4458
    %v4460 = vpop.xlane.xlu0 %4459
    %v4461 = vsel %vm1650, %v4450, -inf
    %4462 = vmax.xlane.f32.xlu0 %v4461
    %v4463 = vpop.xlane.xlu0 %4462
    %v4464 = vsub.f32 %v4442, %v4457
    %v4465 = vsub.f32 %v4445, %v4460
    %v4466 = vsub.f32 %v4450, %v4463
    %v4467 = vmul.f32 %v4464, 1.442695
    %v4468 = vpow.pop %v4467
    %v4469 = vmul.f32 %v4465, 1.442695
    %v4470 = vpow.pop %v4469
    %v4471 = vmul.f32 %v4466, 1.442695
    %v4472 = vpow.pop %v4471
    %v4473 = vsel %vm1643, %v4468, 0.0
    %4474 = vadd.xlane.f32.xlu0 %v4473
    %v4475 = vpop.xlane.xlu0 %4474
    %v4476 = vsel %vm1643, %v4470, 0.0
    %4477 = vadd.xlane.f32.xlu0 %v4476
    %v4478 = vpop.xlane.xlu0 %4477
    %v4479 = vsel %vm1650, %v4472, 0.0
    %4480 = vadd.xlane.f32.xlu0 %v4479
    %v4481 = vpop.xlane.xlu0 %4480
    %v4482 = vrcp.pop %v4475
    %v4483 = vmul.f32 %v4468, %v4482
    %v4484 = vrcp.pop %v4478
    %v4485 = vmul.f32 %v4470, %v4484
    %v4486 = vrcp.pop %v4481
    %v4487 = vmul.f32 %v4472, %v4486
    %v4488 = vpack.c.bf16 %v4485, %v4483
    %v4489 = vpack.c.bf16 %v4487, %v4487
    %4490 = vrot.lane.b32.xlu0 %v4390, 96
    %v4491 = vpop.permute.xlu0 %4490
    %4492 = vrot.lane.b32.xlu0 %v4389, 96
    %v4493 = vpop.permute.xlu0 %4492
    %v4496 = vsel %vm1643, %v4488, 0
    %v4499 = vsel %vm1643, %v4489, 0
    %v4502 = vsel %vm1111, %v4493, 0
    %4504 = vmatprep.subr.bf16.mxu0 0
    %4505 = vmatpush1.bf16.msra.mxu0 %v4491
    %4506 = vmatprep.subr.bf16.mxu0 0
    %4507 = vmatpush1.bf16.msra.mxu0 %v4502
    %4508 = vmatprep.subr.bf16.mxu0 0
    %4509 = vmatpush1.bf16.msra.mxu0 0
    %4510 = vmatprep.subr.bf16.mxu0 0
    %4511 = vmatpush1.bf16.msra.mxu0 0
    %4512 = vmatprep.subr.bf16.mxu0 0
    %4513 = vmatpush1.bf16.msra.mxu0 0
    %4514 = vmatprep.subr.bf16.mxu0 0
    %4515 = vmatpush1.bf16.msra.mxu0 0
    %4516 = vmatprep.subr.bf16.mxu0 0
    %4517 = vmatpush1.bf16.msra.mxu0 0
    %4518 = vmatprep.subr.bf16.mxu0 0
    %4519 = vmatpush1.bf16.msra.mxu0 0
    %4520 = vmatprep.subr.bf16.mxu0 0
    %4521 = vmatpush1.bf16.msra.mxu0 0
    %4522 = vmatprep.subr.bf16.mxu0 0
    %4523 = vmatpush1.bf16.msra.mxu0 0
    %4524 = vmatprep.subr.bf16.mxu0 0
    %4525 = vmatpush1.bf16.msra.mxu0 0
    %4526 = vmatprep.subr.bf16.mxu0 0
    %4527 = vmatpush1.bf16.msra.mxu0 0
    %4528 = vmatprep.subr.bf16.mxu0 0
    %4529 = vmatpush1.bf16.msra.mxu0 0
    %4530 = vmatprep.subr.bf16.mxu0 0
    %4531 = vmatpush1.bf16.msra.mxu0 0
    %4532 = vmatprep.subr.bf16.mxu0 0
    %4533 = vmatpush1.bf16.msra.mxu0 0
    %4534 = vmatprep.subr.bf16.mxu0 0
    %4535 = vmatpush1.bf16.msra.mxu0 0
    %4536 = vmatprep.mubr.bf16.mxu0 0
    %4537 = vmatmul.mubr.bf16.gmra.mrb[0].mxu0 %v4496
    %v4538 = vpop.f32.mrb[0].mxu0
    %v4539 = vadd.f32 0.0, %v4538
    %v4540 = vpop.f32.mrb[0].mxu0
    %v4541 = vpop.f32.mrb[0].mxu0
    %v4542 = vadd.f32 0.0, %v4541
    %v4543 = vpop.f32.mrb[0].mxu0
    %4544 = vmatprep.mubr.bf16.mxu0 0
    %4545 = vmatmul.mubr.bf16.gmra.mrb[0].mxu0 %v4499
    %v4546 = vpop.f32.mrb[0].mxu0
    %v4547 = vadd.f32 0.0, %v4546
    %v4548 = vpop.f32.mrb[0].mxu0
    %v4549 = vpop.f32.mrb[0].mxu0
    %v4550 = vpop.f32.mrb[0].mxu0
    %4551 = vdwg.mxu0
    %4552 = vrot.lane.b32.xlu0 %v4390, 120
    %v4553 = vpop.permute.xlu0 %4552
    %4554 = vrot.lane.b32.xlu0 %v4389, 120
    %v4555 = vpop.permute.xlu0 %4554
    %4556 = vrot.lane.b32.xlu0 %v4390, 104
    %v4557 = vpop.permute.xlu0 %4556
    %4558 = vrot.lane.b32.xlu0 %v4389, 104
    %v4559 = vpop.permute.xlu0 %4558
    %v4561 = vsel %vm1582, %v4553, 0
    %v4564 = vsel %vm1582, %v4555, 0
    %v4567 = vsel %vm1582, %v4557, 0
    %v4570 = vsel %vm1582, %v4559, 0
    %4572 = vmatprep.subr.bf16.mxu0 0
    %4573 = vmatpush1.bf16.xpose.msra.mxu0 %v4567
    %4574 = vmatprep.subr.bf16.mxu0 0
    %4575 = vmatpush1.bf16.xpose.msra.mxu0 %v4570
    %4576 = vmatprep.subr.bf16.mxu0 0
    %4577 = vmatpush1.bf16.xpose.msra.mxu0 0
    %4578 = vmatprep.subr.bf16.mxu0 0
    %4579 = vmatpush1.bf16.xpose.msra.mxu0 0
    %4580 = vmatprep.subr.bf16.mxu0 0
    %4581 = vmatpush1.bf16.xpose.msra.mxu0 0
    %4582 = vmatprep.subr.bf16.mxu0 0
    %4583 = vmatpush1.bf16.xpose.msra.mxu0 0
    %4584 = vmatprep.subr.bf16.mxu0 0
    %4585 = vmatpush1.bf16.xpose.msra.mxu0 0
    %4586 = vmatprep.subr.bf16.mxu0 0
    %4587 = vmatpush1.bf16.xpose.msra.mxu0 0
    %4588 = vmatprep.subr.bf16.mxu0 0
    %4589 = vmatpush1.bf16.xpose.msra.mxu0 0
    %4590 = vmatprep.subr.bf16.mxu0 0
    %4591 = vmatpush1.bf16.xpose.msra.mxu0 0
    %4592 = vmatprep.subr.bf16.mxu0 0
    %4593 = vmatpush1.bf16.xpose.msra.mxu0 0
    %4594 = vmatprep.subr.bf16.mxu0 0
    %4595 = vmatpush1.bf16.xpose.msra.mxu0 0
    %4596 = vmatprep.subr.bf16.mxu0 0
    %4597 = vmatpush1.bf16.xpose.msra.mxu0 0
    %4598 = vmatprep.subr.bf16.mxu0 0
    %4599 = vmatpush1.bf16.xpose.msra.mxu0 0
    %4600 = vmatprep.subr.bf16.mxu0 0
    %4601 = vmatpush1.bf16.xpose.msra.mxu0 0
    %4602 = vmatprep.subr.bf16.mxu0 0
    %4603 = vmatpush1.bf16.xpose.msra.mxu0 0
    %4604 = vmatprep.mubr.bf16.mxu0 0
    %4605 = vmatmul.mubr.bf16.gmra.mrb[0].mxu0 %v4561
    %v4606 = vpop.f32.mrb[0].mxu0
    %v4607 = vadd.f32 0.0, %v4606
    %v4608 = vpop.f32.mrb[0].mxu0
    %v4609 = vpop.f32.mrb[0].mxu0
    %v4610 = vadd.f32 0.0, %v4609
    %v4611 = vpop.f32.mrb[0].mxu0
    %4612 = vmatprep.mubr.bf16.mxu0 0
    %4613 = vmatmul.mubr.bf16.gmra.mrb[0].mxu0 %v4564
    %v4614 = vpop.f32.mrb[0].mxu0
    %v4615 = vadd.f32 0.0, %v4614
    %v4616 = vpop.f32.mrb[0].mxu0
    %v4617 = vpop.f32.mrb[0].mxu0
    %v4618 = vpop.f32.mrb[0].mxu0
    %4619 = vdwg.mxu0
    %v4620 = vsel %vm1643, %v4607, -inf
    %4621 = vmax.xlane.f32.xlu0 %v4620
    %v4622 = vpop.xlane.xlu0 %4621
    %v4623 = vsel %vm1643, %v4610, -inf
    %4624 = vmax.xlane.f32.xlu0 %v4623
    %v4625 = vpop.xlane.xlu0 %4624
    %v4626 = vsel %vm1650, %v4615, -inf
    %4627 = vmax.xlane.f32.xlu0 %v4626
    %v4628 = vpop.xlane.xlu0 %4627
    %v4629 = vsub.f32 %v4607, %v4622
    %v4630 = vsub.f32 %v4610, %v4625
    %v4631 = vsub.f32 %v4615, %v4628
    %v4632 = vmul.f32 %v4629, 1.442695
    %v4633 = vpow.pop %v4632
    %v4634 = vmul.f32 %v4630, 1.442695
    %v4635 = vpow.pop %v4634
    %v4636 = vmul.f32 %v4631, 1.442695
    %v4637 = vpow.pop %v4636
    %v4638 = vsel %vm1643, %v4633, 0.0
    %4639 = vadd.xlane.f32.xlu0 %v4638
    %v4640 = vpop.xlane.xlu0 %4639
    %v4641 = vsel %vm1643, %v4635, 0.0
    %4642 = vadd.xlane.f32.xlu0 %v4641
    %v4643 = vpop.xlane.xlu0 %4642
    %v4644 = vsel %vm1650, %v4637, 0.0
    %4645 = vadd.xlane.f32.xlu0 %v4644
    %v4646 = vpop.xlane.xlu0 %4645
    %v4647 = vrcp.pop %v4640
    %v4648 = vmul.f32 %v4633, %v4647
    %v4649 = vrcp.pop %v4643
    %v4650 = vmul.f32 %v4635, %v4649
    %v4651 = vrcp.pop %v4646
    %v4652 = vmul.f32 %v4637, %v4651
    %v4653 = vpack.c.bf16 %v4650, %v4648
    %v4654 = vpack.c.bf16 %v4652, %v4652
    %4655 = vrot.lane.b32.xlu0 %v4390, 88
    %v4656 = vpop.permute.xlu0 %4655
    %4657 = vrot.lane.b32.xlu0 %v4389, 88
    %v4658 = vpop.permute.xlu0 %4657
    %v4661 = vsel %vm1643, %v4653, 0
    %v4664 = vsel %vm1643, %v4654, 0
    %v4667 = vsel %vm1111, %v4658, 0
    %4669 = vmatprep.subr.bf16.mxu0 0
    %4670 = vmatpush1.bf16.msra.mxu0 %v4656
    %4671 = vmatprep.subr.bf16.mxu0 0
    %4672 = vmatpush1.bf16.msra.mxu0 %v4667
    %4673 = vmatprep.subr.bf16.mxu0 0
    %4674 = vmatpush1.bf16.msra.mxu0 0
    %4675 = vmatprep.subr.bf16.mxu0 0
    %4676 = vmatpush1.bf16.msra.mxu0 0
    %4677 = vmatprep.subr.bf16.mxu0 0
    %4678 = vmatpush1.bf16.msra.mxu0 0
    %4679 = vmatprep.subr.bf16.mxu0 0
    %4680 = vmatpush1.bf16.msra.mxu0 0
    %4681 = vmatprep.subr.bf16.mxu0 0
    %4682 = vmatpush1.bf16.msra.mxu0 0
    %4683 = vmatprep.subr.bf16.mxu0 0
    %4684 = vmatpush1.bf16.msra.mxu0 0
    %4685 = vmatprep.subr.bf16.mxu0 0
    %4686 = vmatpush1.bf16.msra.mxu0 0
    %4687 = vmatprep.subr.bf16.mxu0 0
    %4688 = vmatpush1.bf16.msra.mxu0 0
    %4689 = vmatprep.subr.bf16.mxu0 0
    %4690 = vmatpush1.bf16.msra.mxu0 0
    %4691 = vmatprep.subr.bf16.mxu0 0
    %4692 = vmatpush1.bf16.msra.mxu0 0
    %4693 = vmatprep.subr.bf16.mxu0 0
    %4694 = vmatpush1.bf16.msra.mxu0 0
    %4695 = vmatprep.subr.bf16.mxu0 0
    %4696 = vmatpush1.bf16.msra.mxu0 0
    %4697 = vmatprep.subr.bf16.mxu0 0
    %4698 = vmatpush1.bf16.msra.mxu0 0
    %4699 = vmatprep.subr.bf16.mxu0 0
    %4700 = vmatpush1.bf16.msra.mxu0 0
    %4701 = vmatprep.mubr.bf16.mxu0 0
    %4702 = vmatmul.mubr.bf16.gmra.mrb[0].mxu0 %v4661
    %v4703 = vpop.f32.mrb[0].mxu0
    %v4704 = vadd.f32 0.0, %v4703
    %v4705 = vpop.f32.mrb[0].mxu0
    %v4706 = vpop.f32.mrb[0].mxu0
    %v4707 = vadd.f32 0.0, %v4706
    %v4708 = vpop.f32.mrb[0].mxu0
    %4709 = vmatprep.mubr.bf16.mxu0 0
    %4710 = vmatmul.mubr.bf16.gmra.mrb[0].mxu0 %v4664
    %v4711 = vpop.f32.mrb[0].mxu0
    %v4712 = vadd.f32 0.0, %v4711
    %v4713 = vpop.f32.mrb[0].mxu0
    %v4714 = vpop.f32.mrb[0].mxu0
    %v4715 = vpop.f32.mrb[0].mxu0
    %4716 = vdwg.mxu0
    %4720 = vrot.lane.b32.xlu0 %v4704, 8
    %v4721 = vpop.permute.xlu0 %4720
    %4722 = vrot.lane.b32.xlu0 %v4707, 8
    %v4723 = vpop.permute.xlu0 %4722
    %4724 = vrot.lane.b32.xlu0 %v4712, 8
    %v4725 = vpop.permute.xlu0 %4724
    %v4729 = vsel %vm1582, %v4539, %v4721
    %v4730 = vsel %vm1582, %v4542, %v4723
    %v4731 = vsel %vm1582, %v4547, %v4725
    %v4735 = vrot.slane %v4729, 4
    %v4736 = vrot.slane %v4730, 4
    %v4737 = vsel %vm2274, %v4735, %v4736
    %v4738 = vrot.slane %v4731, 4
    %v4739 = vsel %vm2274, %v4736, %v4738
    %v4743 = vsel %vm2274, %v4383, %v4735
    %v4744 = vpack.c.bf16 %v4382, %v4381
    %v4745 = vpack.c.bf16 %v4737, %v4743
    %v4746 = vpack.c.bf16 %v4739, %v4739
    %v4749 = vunpack.c.l.b16 %v3943
    %v4750 = vunpack.c.l.b16 %v3944
    %v4751 = vpack.c.b16 %v4750, %v4749
    %v4754 = vsel %vm1508, %v4744, 0
    %v4757 = vsel %vm1508, %v4745, 0
    %v4760 = vsel %vm1508, %v4746, 0
    %4762 = vmatprep.subr.bf16.mxu0 0
    %4763 = vmatpush1.bf16.msra.mxu0 %v4751
    %4764 = vmatprep.subr.bf16.mxu0 0
    %4765 = vmatpush1.bf16.msra.mxu0 0
    %4766 = vmatprep.subr.bf16.mxu0 0
    %4767 = vmatpush1.bf16.msra.mxu0 0
    %4768 = vmatprep.subr.bf16.mxu0 0
    %4769 = vmatpush1.bf16.msra.mxu0 0
    %4770 = vmatprep.subr.bf16.mxu0 0
    %4771 = vmatpush1.bf16.msra.mxu0 0
    %4772 = vmatprep.subr.bf16.mxu0 0
    %4773 = vmatpush1.bf16.msra.mxu0 0
    %4774 = vmatprep.subr.bf16.mxu0 0
    %4775 = vmatpush1.bf16.msra.mxu0 0
    %4776 = vmatprep.subr.bf16.mxu0 0
    %4777 = vmatpush1.bf16.msra.mxu0 0
    %4778 = vmatprep.subr.bf16.mxu0 0
    %4779 = vmatpush1.bf16.msra.mxu0 0
    %4780 = vmatprep.subr.bf16.mxu0 0
    %4781 = vmatpush1.bf16.msra.mxu0 0
    %4782 = vmatprep.subr.bf16.mxu0 0
    %4783 = vmatpush1.bf16.msra.mxu0 0
    %4784 = vmatprep.subr.bf16.mxu0 0
    %4785 = vmatpush1.bf16.msra.mxu0 0
    %4786 = vmatprep.subr.bf16.mxu0 0
    %4787 = vmatpush1.bf16.msra.mxu0 0
    %4788 = vmatprep.subr.bf16.mxu0 0
    %4789 = vmatpush1.bf16.msra.mxu0 0
    %4790 = vmatprep.subr.bf16.mxu0 0
    %4791 = vmatpush1.bf16.msra.mxu0 0
    %4792 = vmatprep.subr.bf16.mxu0 0
    %4793 = vmatpush1.bf16.msra.mxu0 0
    %4794 = vmatprep.mubr.bf16.mxu0 0
    %4795 = vmatmul.mubr.bf16.gmra.mrb[0].mxu0 %v4754
    %v4796 = vpop.f32.mrb[0].mxu0
    %v4797 = vadd.f32 %v3934, %v4796
    %v4798 = vpop.f32.mrb[0].mxu0
    %v4799 = vpop.f32.mrb[0].mxu0
    %v4800 = vadd.f32 %v3935, %v4799
    %v4801 = vpop.f32.mrb[0].mxu0
    %4802 = vmatprep.mubr.bf16.mxu0 0
    %4803 = vmatmul.mubr.bf16.gmra.mrb[0].mxu0 %v4757
    %v4804 = vpop.f32.mrb[0].mxu0
    %v4805 = vadd.f32 %v3936, %v4804
    %v4806 = vpop.f32.mrb[0].mxu0
    %v4807 = vpop.f32.mrb[0].mxu0
    %v4808 = vadd.f32 %v3937, %v4807
    %v4809 = vpop.f32.mrb[0].mxu0
    %4810 = vmatprep.mubr.bf16.mxu0 0
    %4811 = vmatmul.mubr.bf16.gmra.mrb[0].mxu0 %v4760
    %v4812 = vpop.f32.mrb[0].mxu0
    %v4813 = vadd.f32 %v3938, %v4812
    %v4814 = vpop.f32.mrb[0].mxu0
    %v4815 = vpop.f32.mrb[0].mxu0
    %v4816 = vpop.f32.mrb[0].mxu0
    %4817 = vdwg.mxu0
    %v4818 = vsel %vm1508, %v4797, 0.0
    %4819 = vadd.xlane.f32.xlu0 %v4818
    %v4820 = vpop.xlane.xlu0 %4819
    %v4821 = vsel %vm1508, %v4800, 0.0
    %4822 = vadd.xlane.f32.xlu0 %v4821
    %v4823 = vpop.xlane.xlu0 %4822
    %v4824 = vsel %vm1508, %v4805, 0.0
    %4825 = vadd.xlane.f32.xlu0 %v4824
    %v4826 = vpop.xlane.xlu0 %4825
    %v4827 = vsel %vm1508, %v4808, 0.0
    %4828 = vadd.xlane.f32.xlu0 %v4827
    %v4829 = vpop.xlane.xlu0 %4828
    %v4830 = vsel %vm1508, %v4813, 0.0
    %4831 = vadd.xlane.f32.xlu0 %v4830
    %v4832 = vpop.xlane.xlu0 %4831
    %v4833 = vmul.f32 %v4820, %v2373
    %v4834 = vmul.f32 %v4823, %v2373
    %v4835 = vmul.f32 %v4826, %v2373
    %v4836 = vmul.f32 %v4829, %v2373
    %v4837 = vmul.f32 %v4832, %v2373
    %v4838 = vsub.f32 %v4797, %v4833
    %v4839 = vsub.f32 %v4800, %v4834
    %v4840 = vsub.f32 %v4805, %v4835
    %v4841 = vsub.f32 %v4808, %v4836
    %v4842 = vsub.f32 %v4813, %v4837
    %v4843 = vmul.f32 %v4838, %v4838
    %v4844 = vmul.f32 %v4839, %v4839
    %v4845 = vmul.f32 %v4840, %v4840
    %v4846 = vmul.f32 %v4841, %v4841
    %v4847 = vmul.f32 %v4842, %v4842
    %v4848 = vsel %vm1508, %v4843, 0.0
    %4849 = vadd.xlane.f32.xlu0 %v4848
    %v4850 = vpop.xlane.xlu0 %4849
    %v4851 = vsel %vm1508, %v4844, 0.0
    %4852 = vadd.xlane.f32.xlu0 %v4851
    %v4853 = vpop.xlane.xlu0 %4852
    %v4854 = vsel %vm1508, %v4845, 0.0
    %4855 = vadd.xlane.f32.xlu0 %v4854
    %v4856 = vpop.xlane.xlu0 %4855
    %v4857 = vsel %vm1508, %v4846, 0.0
    %4858 = vadd.xlane.f32.xlu0 %v4857
    %v4859 = vpop.xlane.xlu0 %4858
    %v4860 = vsel %vm1508, %v4847, 0.0
    %4861 = vadd.xlane.f32.xlu0 %v4860
    %v4862 = vpop.xlane.xlu0 %4861
    %v4863 = vmul.f32 %v4850, %v2373
    %v4864 = vmul.f32 %v4853, %v2373
    %v4865 = vmul.f32 %v4856, %v2373
    %v4866 = vmul.f32 %v4859, %v2373
    %v4867 = vmul.f32 %v4862, %v2373
    %v4868 = vadd.f32 %v4863, 1e-06
    %v4869 = vadd.f32 %v4864, 1e-06
    %v4870 = vadd.f32 %v4865, 1e-06
    %v4871 = vadd.f32 %v4866, 1e-06
    %v4872 = vadd.f32 %v4867, 1e-06
    %v4873 = vrsqrt.pop %v4868
    %v4874 = vrsqrt.pop %v4869
    %v4875 = vrsqrt.pop %v4870
    %v4876 = vrsqrt.pop %v4871
    %v4877 = vrsqrt.pop %v4872
    %v4878 = vmul.f32 %v4838, %v4873
    %v4879 = vmul.f32 %v4839, %v4874
    %v4880 = vmul.f32 %v4840, %v4875
    %v4881 = vmul.f32 %v4841, %v4876
    %v4882 = vmul.f32 %v4842, %v4877
    %v4884 = vlaneseq
    %v4885 = vshrl.u32 %v4884, 7
    %v4886 = vsub.s32 0, %v4885
    %v4887 = vrot.slane %v3946, %v4886
    %v4889 = vmul.f32 %v4878, %v4887
    %v4890 = vmul.f32 %v4879, %v4887
    %v4891 = vmul.f32 %v4880, %v4887
    %v4892 = vmul.f32 %v4881, %v4887
    %v4893 = vmul.f32 %v4882, %v4887
    %v4895 = vlaneseq
    %v4896 = vshrl.u32 %v4895, 7
    %v4897 = vsub.s32 0, %v4896
    %v4898 = vrot.slane %v3948, %v4897
    %v4900 = vadd.f32 %v4889, %v4898
    %v4901 = vadd.f32 %v4890, %v4898
    %v4902 = vadd.f32 %v4891, %v4898
    %v4903 = vadd.f32 %v4892, %v4898
    %v4904 = vadd.f32 %v4893, %v4898
    %v4905 = vpack.c.bf16 %v4901, %v4900
    %v4906 = vpack.c.bf16 %v4903, %v4902
    %v4907 = vpack.c.bf16 %v4904, %v4904
    %v4909 = vlaneseq
    %v4910 = vshrl.u32 %v4909, 7
    %v4911 = vsub.s32 0, %v4910
    %v4912 = vrot.slane %v3953, %v4911
    %v4916 = vunpack.c.l.b16 %v3950
    %v4917 = vunpack.c.l.b16 %v3951
    %v4918 = vpack.c.b16 %v4917, %v4916
    %v4921 = vsel %vm1508, %v4905, 0
    %v4924 = vsel %vm1508, %v4906, 0
    %v4927 = vsel %vm1508, %v4907, 0
    %4929 = vmatprep.subr.bf16.mxu0 0
    %4930 = vmatpush1.bf16.msra.mxu0 %v4918
    %4931 = vmatprep.subr.bf16.mxu0 0
    %4932 = vmatpush1.bf16.msra.mxu0 0
    %4933 = vmatprep.subr.bf16.mxu0 0
    %4934 = vmatpush1.bf16.msra.mxu0 0
    %4935 = vmatprep.subr.bf16.mxu0 0
    %4936 = vmatpush1.bf16.msra.mxu0 0
    %4937 = vmatprep.subr.bf16.mxu0 0
    %4938 = vmatpush1.bf16.msra.mxu0 0
    %4939 = vmatprep.subr.bf16.mxu0 0
    %4940 = vmatpush1.bf16.msra.mxu0 0
    %4941 = vmatprep.subr.bf16.mxu0 0
    %4942 = vmatpush1.bf16.msra.mxu0 0
    %4943 = vmatprep.subr.bf16.mxu0 0
    %4944 = vmatpush1.bf16.msra.mxu0 0
    %4945 = vmatprep.subr.bf16.mxu0 0
    %4946 = vmatpush1.bf16.msra.mxu0 0
    %4947 = vmatprep.subr.bf16.mxu0 0
    %4948 = vmatpush1.bf16.msra.mxu0 0
    %4949 = vmatprep.subr.bf16.mxu0 0
    %4950 = vmatpush1.bf16.msra.mxu0 0
    %4951 = vmatprep.subr.bf16.mxu0 0
    %4952 = vmatpush1.bf16.msra.mxu0 0
    %4953 = vmatprep.subr.bf16.mxu0 0
    %4954 = vmatpush1.bf16.msra.mxu0 0
    %4955 = vmatprep.subr.bf16.mxu0 0
    %4956 = vmatpush1.bf16.msra.mxu0 0
    %4957 = vmatprep.subr.bf16.mxu0 0
    %4958 = vmatpush1.bf16.msra.mxu0 0
    %4959 = vmatprep.subr.bf16.mxu0 0
    %4960 = vmatpush1.bf16.msra.mxu0 0
    %4961 = vmatprep.mubr.bf16.mxu0 0
    %4962 = vmatmul.mubr.bf16.gmra.mrb[0].mxu0 %v4921
    %v4963 = vpop.f32.mrb[0].mxu0
    %v4964 = vadd.f32 %v4912, %v4963
    %v4965 = vpop.f32.mrb[0].mxu0
    %v4966 = vpop.f32.mrb[0].mxu0
    %v4967 = vadd.f32 %v4912, %v4966
    %v4968 = vpop.f32.mrb[0].mxu0
    %4969 = vmatprep.mubr.bf16.mxu0 0
    %4970 = vmatmul.mubr.bf16.gmra.mrb[0].mxu0 %v4924
    %v4971 = vpop.f32.mrb[0].mxu0
    %v4972 = vadd.f32 %v4912, %v4971
    %v4973 = vpop.f32.mrb[0].mxu0
    %v4974 = vpop.f32.mrb[0].mxu0
    %v4975 = vadd.f32 %v4912, %v4974
    %v4976 = vpop.f32.mrb[0].mxu0
    %4977 = vmatprep.mubr.bf16.mxu0 0
    %4978 = vmatmul.mubr.bf16.gmra.mrb[0].mxu0 %v4927
    %v4979 = vpop.f32.mrb[0].mxu0
    %v4980 = vadd.f32 %v4912, %v4979
    %v4981 = vpop.f32.mrb[0].mxu0
    %v4982 = vpop.f32.mrb[0].mxu0
    %v4983 = vpop.f32.mrb[0].mxu0
    %4984 = vdwg.mxu0
    %v4985 = vmax.f32 %v4964, 0.0
    %v4986 = vmax.f32 %v4967, 0.0
    %v4987 = vmax.f32 %v4972, 0.0
    %v4988 = vmax.f32 %v4975, 0.0
    %v4989 = vmax.f32 %v4980, 0.0
    %v4990 = vpack.c.bf16 %v4986, %v4985
    %v4991 = vpack.c.bf16 %v4988, %v4987
    %v4992 = vpack.c.bf16 %v4989, %v4989
    %v4994 = vlaneseq
    %v4995 = vshrl.u32 %v4994, 7
    %v4996 = vsub.s32 0, %v4995
    %v4997 = vrot.slane %v3960, %v4996
    %v5003 = vunpack.c.l.b16 %v3955
    %v5004 = vunpack.c.l.b16 %v3956
    %v5005 = vunpack.c.l.b16 %v3957
    %v5006 = vunpack.c.l.b16 %v3958
    %v5007 = vpack.c.b16 %v5004, %v5003
    %v5008 = vpack.c.b16 %v5006, %v5005
    %v5012 = vsel %vm2552, %v4990, 0
    %v5015 = vsel %vm2552, %v4991, 0
    %v5018 = vsel %vm2552, %v4992, 0
    %5020 = vmatprep.subr.bf16.mxu0 0
    %5021 = vmatpush1.bf16.msra.mxu0 %v5007
    %5022 = vmatprep.subr.bf16.mxu0 0
    %5023 = vmatpush1.bf16.msra.mxu0 %v5008
    %5024 = vmatprep.subr.bf16.mxu0 0
    %5025 = vmatpush1.bf16.msra.mxu0 0
    %5026 = vmatprep.subr.bf16.mxu0 0
    %5027 = vmatpush1.bf16.msra.mxu0 0
    %5028 = vmatprep.subr.bf16.mxu0 0
    %5029 = vmatpush1.bf16.msra.mxu0 0
    %5030 = vmatprep.subr.bf16.mxu0 0
    %5031 = vmatpush1.bf16.msra.mxu0 0
    %5032 = vmatprep.subr.bf16.mxu0 0
    %5033 = vmatpush1.bf16.msra.mxu0 0
    %5034 = vmatprep.subr.bf16.mxu0 0
    %5035 = vmatpush1.bf16.msra.mxu0 0
    %5036 = vmatprep.subr.bf16.mxu0 0
    %5037 = vmatpush1.bf16.msra.mxu0 0
    %5038 = vmatprep.subr.bf16.mxu0 0
    %5039 = vmatpush1.bf16.msra.mxu0 0
    %5040 = vmatprep.subr.bf16.mxu0 0
    %5041 = vmatpush1.bf16.msra.mxu0 0
    %5042 = vmatprep.subr.bf16.mxu0 0
    %5043 = vmatpush1.bf16.msra.mxu0 0
    %5044 = vmatprep.subr.bf16.mxu0 0
    %5045 = vmatpush1.bf16.msra.mxu0 0
    %5046 = vmatprep.subr.bf16.mxu0 0
    %5047 = vmatpush1.bf16.msra.mxu0 0
    %5048 = vmatprep.subr.bf16.mxu0 0
    %5049 = vmatpush1.bf16.msra.mxu0 0
    %5050 = vmatprep.subr.bf16.mxu0 0
    %5051 = vmatpush1.bf16.msra.mxu0 0
    %5052 = vmatprep.mubr.bf16.mxu0 0
    %5053 = vmatmul.mubr.bf16.gmra.mrb[0].mxu0 %v5012
    %v5054 = vpop.f32.mrb[0].mxu0
    %v5055 = vadd.f32 %v4997, %v5054
    %v5056 = vpop.f32.mrb[0].mxu0
    %v5057 = vpop.f32.mrb[0].mxu0
    %v5058 = vadd.f32 %v4997, %v5057
    %v5059 = vpop.f32.mrb[0].mxu0
    %5060 = vmatprep.mubr.bf16.mxu0 0
    %5061 = vmatmul.mubr.bf16.gmra.mrb[0].mxu0 %v5015
    %v5062 = vpop.f32.mrb[0].mxu0
    %v5063 = vadd.f32 %v4997, %v5062
    %v5064 = vpop.f32.mrb[0].mxu0
    %v5065 = vpop.f32.mrb[0].mxu0
    %v5066 = vadd.f32 %v4997, %v5065
    %v5067 = vpop.f32.mrb[0].mxu0
    %5068 = vmatprep.mubr.bf16.mxu0 0
    %5069 = vmatmul.mubr.bf16.gmra.mrb[0].mxu0 %v5018
    %v5070 = vpop.f32.mrb[0].mxu0
    %v5071 = vadd.f32 %v4997, %v5070
    %v5072 = vpop.f32.mrb[0].mxu0
    %v5073 = vpop.f32.mrb[0].mxu0
    %v5074 = vpop.f32.mrb[0].mxu0
    %5075 = vdwg.mxu0
    %v5076 = vadd.f32 %v5055, %v4900
    %v5077 = vadd.f32 %v5058, %v4901
    %v5078 = vadd.f32 %v5063, %v4902
    %v5079 = vadd.f32 %v5066, %v4903
    %v5080 = vadd.f32 %v5071, %v4904
    %v5081 = vsel %vm1508, %v5076, 0.0
    %5082 = vadd.xlane.f32.xlu0 %v5081
    %v5083 = vpop.xlane.xlu0 %5082
    %v5084 = vsel %vm1508, %v5077, 0.0
    %5085 = vadd.xlane.f32.xlu0 %v5084
    %v5086 = vpop.xlane.xlu0 %5085
    %v5087 = vsel %vm1508, %v5078, 0.0
    %5088 = vadd.xlane.f32.xlu0 %v5087
    %v5089 = vpop.xlane.xlu0 %5088
    %v5090 = vsel %vm1508, %v5079, 0.0
    %5091 = vadd.xlane.f32.xlu0 %v5090
    %v5092 = vpop.xlane.xlu0 %5091
    %v5093 = vsel %vm1508, %v5080, 0.0
    %5094 = vadd.xlane.f32.xlu0 %v5093
    %v5095 = vpop.xlane.xlu0 %5094
    %v5096 = vmul.f32 %v5083, %v2373
    %v5097 = vmul.f32 %v5086, %v2373
    %v5098 = vmul.f32 %v5089, %v2373
    %v5099 = vmul.f32 %v5092, %v2373
    %v5100 = vmul.f32 %v5095, %v2373
    %v5101 = vsub.f32 %v5076, %v5096
    %v5102 = vsub.f32 %v5077, %v5097
    %v5103 = vsub.f32 %v5078, %v5098
    %v5104 = vsub.f32 %v5079, %v5099
    %v5105 = vsub.f32 %v5080, %v5100
    %v5106 = vmul.f32 %v5101, %v5101
    %v5107 = vmul.f32 %v5102, %v5102
    %v5108 = vmul.f32 %v5103, %v5103
    %v5109 = vmul.f32 %v5104, %v5104
    %v5110 = vmul.f32 %v5105, %v5105
    %v5111 = vsel %vm1508, %v5106, 0.0
    %5112 = vadd.xlane.f32.xlu0 %v5111
    %v5113 = vpop.xlane.xlu0 %5112
    %v5114 = vsel %vm1508, %v5107, 0.0
    %5115 = vadd.xlane.f32.xlu0 %v5114
    %v5116 = vpop.xlane.xlu0 %5115
    %v5117 = vsel %vm1508, %v5108, 0.0
    %5118 = vadd.xlane.f32.xlu0 %v5117
    %v5119 = vpop.xlane.xlu0 %5118
    %v5120 = vsel %vm1508, %v5109, 0.0
    %5121 = vadd.xlane.f32.xlu0 %v5120
    %v5122 = vpop.xlane.xlu0 %5121
    %v5123 = vsel %vm1508, %v5110, 0.0
    %5124 = vadd.xlane.f32.xlu0 %v5123
    %v5125 = vpop.xlane.xlu0 %5124
    %v5126 = vmul.f32 %v5113, %v2373
    %v5127 = vmul.f32 %v5116, %v2373
    %v5128 = vmul.f32 %v5119, %v2373
    %v5129 = vmul.f32 %v5122, %v2373
    %v5130 = vmul.f32 %v5125, %v2373
    %v5131 = vadd.f32 %v5126, 1e-06
    %v5132 = vadd.f32 %v5127, 1e-06
    %v5133 = vadd.f32 %v5128, 1e-06
    %v5134 = vadd.f32 %v5129, 1e-06
    %v5135 = vadd.f32 %v5130, 1e-06
    %v5136 = vrsqrt.pop %v5131
    %v5137 = vrsqrt.pop %v5132
    %v5138 = vrsqrt.pop %v5133
    %v5139 = vrsqrt.pop %v5134
    %v5140 = vrsqrt.pop %v5135
    %v5141 = vmul.f32 %v5101, %v5136
    %v5142 = vmul.f32 %v5102, %v5137
    %v5143 = vmul.f32 %v5103, %v5138
    %v5144 = vmul.f32 %v5104, %v5139
    %v5145 = vmul.f32 %v5105, %v5140
    %v5147 = vlaneseq
    %v5148 = vshrl.u32 %v5147, 7
    %v5149 = vsub.s32 0, %v5148
    %v5150 = vrot.slane %v3962, %v5149
    %v5152 = vmul.f32 %v5141, %v5150
    %v5153 = vmul.f32 %v5142, %v5150
    %v5154 = vmul.f32 %v5143, %v5150
    %v5155 = vmul.f32 %v5144, %v5150
    %v5156 = vmul.f32 %v5145, %v5150
    %v5158 = vlaneseq
    %v5159 = vshrl.u32 %v5158, 7
    %v5160 = vsub.s32 0, %v5159
    %v5161 = vrot.slane %v3964, %v5160
    %v5163 = vadd.f32 %v5152, %v5161
    %v5164 = vadd.f32 %v5153, %v5161
    %v5165 = vadd.f32 %v5154, %v5161
    %v5166 = vadd.f32 %v5155, %v5161
    %v5167 = vadd.f32 %v5156, %v5161
    %v5169 = vrot.slane %v5163, 1
    %5170 = vrot.lane.b32.xlu0 %v5169, 16
    %v5171 = vpop.permute.xlu0 %5170
    %v5173 = vrot.slane %v5163, 2
    %5174 = vrot.lane.b32.xlu0 %v5173, 32
    %v5175 = vpop.permute.xlu0 %5174
    %v5177 = vrot.slane %v5163, 3
    %5178 = vrot.lane.b32.xlu0 %v5177, 48
    %v5179 = vpop.permute.xlu0 %5178
    %v5181 = vrot.slane %v5163, 4
    %5182 = vrot.lane.b32.xlu0 %v5181, 64
    %v5183 = vpop.permute.xlu0 %5182
    %v5185 = vrot.slane %v5163, 5
    %5186 = vrot.lane.b32.xlu0 %v5185, 80
    %v5187 = vpop.permute.xlu0 %5186
    %v5189 = vrot.slane %v5163, 6
    %5190 = vrot.lane.b32.xlu0 %v5189, 96
    %v5191 = vpop.permute.xlu0 %5190
    %v5193 = vrot.slane %v5163, 7
    %5194 = vrot.lane.b32.xlu0 %v5193, 112
    %v5195 = vpop.permute.xlu0 %5194
    %v5198 = vrot.slane %v5164, 1
    %5199 = vrot.lane.b32.xlu0 %v5198, 16
    %v5200 = vpop.permute.xlu0 %5199
    %v5202 = vrot.slane %v5164, 2
    %5203 = vrot.lane.b32.xlu0 %v5202, 32
    %v5204 = vpop.permute.xlu0 %5203
    %v5206 = vrot.slane %v5164, 3
    %5207 = vrot.lane.b32.xlu0 %v5206, 48
    %v5208 = vpop.permute.xlu0 %5207
    %v5210 = vrot.slane %v5164, 4
    %5211 = vrot.lane.b32.xlu0 %v5210, 64
    %v5212 = vpop.permute.xlu0 %5211
    %v5214 = vrot.slane %v5164, 5
    %5215 = vrot.lane.b32.xlu0 %v5214, 80
    %v5216 = vpop.permute.xlu0 %5215
    %v5218 = vrot.slane %v5164, 6
    %5219 = vrot.lane.b32.xlu0 %v5218, 96
    %v5220 = vpop.permute.xlu0 %5219
    %v5222 = vrot.slane %v5164, 7
    %5223 = vrot.lane.b32.xlu0 %v5222, 112
    %v5224 = vpop.permute.xlu0 %5223
    %v5226 = vsel %vm1508, %v5163, %v5171
    %v5227 = vsel %vm2552, %v5226, %v5175
    %v5228 = vsel %vm1417, %v5227, %v5179
    %vm5229 = vcmask 523264
    %v5230 = vsel %vm5229, %v5228, %v5183
    %vm5231 = vcmask 654336
    %v5232 = vsel %vm5231, %v5230, %v5187
    %vm5233 = vcmask 785408
    %v5234 = vsel %vm5233, %v5232, %v5191
    %vm5235 = vcmask 916480
    %v5236 = vsel %vm5235, %v5234, %v5195
    %v5237 = vsel %vm1508, %v5164, %v5200
    %v5238 = vsel %vm2552, %v5237, %v5204
    %v5239 = vsel %vm1417, %v5238, %v5208
    %v5240 = vsel %vm5229, %v5239, %v5212
    %v5241 = vsel %vm5231, %v5240, %v5216
    %v5242 = vsel %vm5233, %v5241, %v5220
    %v5243 = vsel %vm5235, %v5242, %v5224
    %v5245 = vrot.slane %v5165, 1
    %5246 = vrot.lane.b32.xlu0 %v5245, 16
    %v5247 = vpop.permute.xlu0 %5246
    %v5249 = vrot.slane %v5165, 2
    %5250 = vrot.lane.b32.xlu0 %v5249, 32
    %v5251 = vpop.permute.xlu0 %5250
    %v5253 = vrot.slane %v5165, 3
    %5254 = vrot.lane.b32.xlu0 %v5253, 48
    %v5255 = vpop.permute.xlu0 %5254
    %v5257 = vsel %vm1508, %v5165, %v5247
    %v5258 = vsel %vm2552, %v5257, %v5251
    %v5259 = vsel %vm1417, %v5258, %v5255
    %v5261 = vrot.slane %v5166, 4
    %5262 = vrot.lane.b32.xlu0 %v5261, 64
    %v5263 = vpop.permute.xlu0 %5262
    %v5265 = vrot.slane %v5166, 5
    %5266 = vrot.lane.b32.xlu0 %v5265, 80
    %v5267 = vpop.permute.xlu0 %5266
    %v5269 = vrot.slane %v5166, 6
    %5270 = vrot.lane.b32.xlu0 %v5269, 96
    %v5271 = vpop.permute.xlu0 %5270
    %v5273 = vrot.slane %v5166, 7
    %5274 = vrot.lane.b32.xlu0 %v5273, 112
    %v5275 = vpop.permute.xlu0 %5274
    %v5277 = vrot.slane %v5166, 1
    %5278 = vrot.lane.b32.xlu0 %v5277, 16
    %v5279 = vpop.permute.xlu0 %5278
    %v5281 = vrot.slane %v5166, 2
    %5282 = vrot.lane.b32.xlu0 %v5281, 32
    %v5283 = vpop.permute.xlu0 %5282
    %v5285 = vrot.slane %v5166, 3
    %5286 = vrot.lane.b32.xlu0 %v5285, 48
    %v5287 = vpop.permute.xlu0 %5286
    %v5290 = vrot.slane %v5167, 4
    %5291 = vrot.lane.b32.xlu0 %v5290, 64
    %v5292 = vpop.permute.xlu0 %5291
    %v5294 = vrot.slane %v5167, 5
    %5295 = vrot.lane.b32.xlu0 %v5294, 80
    %v5296 = vpop.permute.xlu0 %5295
    %v5298 = vrot.slane %v5167, 6
    %5299 = vrot.lane.b32.xlu0 %v5298, 96
    %v5300 = vpop.permute.xlu0 %5299
    %v5302 = vrot.slane %v5167, 7
    %5303 = vrot.lane.b32.xlu0 %v5302, 112
    %v5304 = vpop.permute.xlu0 %5303
    %v5306 = vsel %vm5229, %v5259, %v5263
    %v5307 = vsel %vm5231, %v5306, %v5267
    %v5308 = vsel %vm5233, %v5307, %v5271
    %v5309 = vsel %vm5235, %v5308, %v5275
    %v5310 = vsel %vm1508, %v5166, %v5279
    %v5311 = vsel %vm2552, %v5310, %v5283
    %v5312 = vsel %vm1417, %v5311, %v5287
    %v5313 = vsel %vm5229, %v5312, %v5292
    %v5314 = vsel %vm5231, %v5313, %v5296
    %v5315 = vsel %vm5233, %v5314, %v5300
    %v5316 = vsel %vm5235, %v5315, %v5304
    %v5317 = vrot.slane %v5167, 1
    %5318 = vrot.lane.b32.xlu0 %v5317, 16
    %v5319 = vpop.permute.xlu0 %5318
    %v5321 = vrot.slane %v5167, 2
    %5322 = vrot.lane.b32.xlu0 %v5321, 32
    %v5323 = vpop.permute.xlu0 %5322
    %v5325 = vrot.slane %v5167, 3
    %5326 = vrot.lane.b32.xlu0 %v5325, 48
    %v5327 = vpop.permute.xlu0 %5326
    %v5329 = vsel %vm1508, %v5167, %v5319
    %v5330 = vsel %vm2552, %v5329, %v5323
    %v5331 = vsel %vm1417, %v5330, %v5327
    %v5335 = vrot.slane %v5309, 3
    %v5336 = vrot.slane %v5316, 3
    %v5337 = vrot.slane %v5331, 3
    %v5341 = vsel %vm1110, %v5236, %v5335
    %v5342 = vsel %vm1110, %v5243, %v5336
    %v5343 = vsel %vm1110, %v5259, %v5337
    %5344 = vrot.lane.b32.xlu0 %v113, 108
    %v5345 = vpop.permute.xlu0 %5344
    %5346 = vrot.lane.b32.xlu0 %v121, 108
    %v5347 = vpop.permute.xlu0 %5346
    %vm5348 = vcmask 883712
    %v5349 = vsel %vm5348, %v5345, %v5347
    %5353 = vrot.lane.b32.xlu0 %v1374, 64
    %v5354 = vpop.permute.xlu0 %5353
    %5355 = vrot.lane.b32.xlu0 %v1375, 64
    %v5356 = vpop.permute.xlu0 %5355
    %v5357 = vsel %vm5229, %v5354, %v5356
    %5363 = vrot.lane.b32.xlu0 %v5341, 16
    %v5364 = vpop.permute.xlu0 %5363
    %5365 = vrot.lane.b32.xlu0 %v5342, 16
    %v5366 = vpop.permute.xlu0 %5365
    %5367 = vrot.lane.b32.xlu0 %v5343, 16
    %v5368 = vpop.permute.xlu0 %5367
    %v5369 = vsel %vm1508, %v5364, %v5366
    %v5370 = vsel %vm1508, %v5366, %v5368
    %v5374 = vsel %vm5229, %v1374, %v5349
    %v5375 = vsel %vm1508, %v5356, %v5364
    %v5376 = vsel %vm5231, %v5370, %v1375
    %5378 = vrot.lane.b32.xlu0 %v1373, 96
    %v5379 = vpop.permute.xlu0 %5378
    %5381 = vrot.lane.b32.xlu0 %v1374, 96
    %v5382 = vpop.permute.xlu0 %5381
    %5384 = vrot.lane.b32.xlu0 %v1375, 32
    %v5385 = vpop.permute.xlu0 %5384
    %5387 = vrot.lane.b32.xlu0 %v5341, 112
    %v5388 = vpop.permute.xlu0 %5387
    %5389 = vrot.lane.b32.xlu0 %v5342, 112
    %v5390 = vpop.permute.xlu0 %5389
    %5391 = vrot.lane.b32.xlu0 %v5343, 112
    %v5392 = vpop.permute.xlu0 %5391
    %v5393 = vsel %vm5235, %v5388, %v5390
    %v5394 = vsel %vm5235, %v5390, %v5392
    %v5399 = vsel %vm2552, %v5379, %v5382
    %v5400 = vsel %vm5229, %v5399, %v5385
    %v5401 = vsel %vm5235, %v5400, %v5388
    %v5402 = vld [vmem:[%s16] sm:$0xff]
    %v5403 = vld [vmem:[%s16 + $0x8] sm:$0xff]
    %v5404 = vld [vmem:[%s16 + $0x10] sm:$0xff]
    %v5405 = vld [vmem:[%s16 + $0x18] sm:$0xff]
    %v5406 = vld [vmem:[%s16 + $0x20] sm:$0xff]
    %v5407 = vld [vmem:[%s16 + $0x28] sm:$0xff]
    %v5408 = vld [vmem:[%s16 + $0x30] sm:$0xff]
    %v5409 = vld [vmem:[%s16 + $0x38] sm:$0xff]
    %v5410 = vld [vmem:[%s16 + $0x40] sm:$0xff]
    %v5411 = vld [vmem:[%s16 + $0x48] sm:$0xff]
    %v5412 = vld [vmem:[%s16 + $0x50] sm:$0xff]
    %v5413 = vld [vmem:[%s16 + $0x58] sm:$0xff]
    %v5414 = vld [vmem:[%s16 + $0x60] sm:$0xff]
    %v5415 = vld [vmem:[%s16 + $0x68] sm:$0xff]
    %v5416 = vld [vmem:[%s16 + $0x70] sm:$0xff]
    %v5417 = vld [vmem:[%s16 + $0x78] sm:$0xff]
    %v5418 = vld [vmem:[%s16 + $0x80] sm:$0xff]
    %v5419 = vld [vmem:[%s16 + $0x88] sm:$0xff]
    %v5420 = vld [vmem:[%s16 + $0x90] sm:$0xff]
    %v5421 = vld [vmem:[%s16 + $0x98] sm:$0xff]
    %v5422 = vld [vmem:[%s16 + $0xa0] sm:$0xff]
    %v5423 = vld [vmem:[%s16 + $0xa8] sm:$0xff]
    %v5424 = vld [vmem:[%s16 + $0xb0] sm:$0xff]
    %v5425 = vld [vmem:[%s16 + $0xb8] sm:$0xff]
    %v5426 = vld [vmem:[%s16 + $0xc0] sm:$0xff]
    %v5427 = vld [vmem:[%s16 + $0xc8] sm:$0xff]
    %v5428 = vld [vmem:[%s16 + $0xd0] sm:$0xff]
    %v5429 = vld [vmem:[%s16 + $0xd8] sm:$0xff]
    %v5430 = vld [vmem:[%s16 + $0xe0] sm:$0xff]
    %v5431 = vld [vmem:[%s16 + $0xe8] sm:$0xff]
    %v5432 = vld [vmem:[%s16 + $0xf0] sm:$0xff]
    %v5433 = vld [vmem:[%s16 + $0xf8] sm:$0xff]
    %v5434 = vld [vmem:[%s16 + $0x100] sm:$0xff]
    %v5435 = vld [vmem:[%s16 + $0x108] sm:$0xff]
    %v5436 = vld [vmem:[%s16 + $0x110] sm:$0xff]
    %v5437 = vld [vmem:[%s16 + $0x118] sm:$0xff]
    %v5438 = vld [vmem:[%s16 + $0x120] sm:$0xff]
    %v5439 = vld [vmem:[%s16 + $0x128] sm:$0xff]
    %v5440 = vld [vmem:[%s16 + $0x130] sm:$0xff]
    %v5441 = vld [vmem:[%s16 + $0x138] sm:$0xff]
    %v5442 = vld [vmem:[%s16 + $0x140] sm:$0xff]
    %v5443 = vld [vmem:[%s16 + $0x148] sm:$0xff]
    %v5444 = vld [vmem:[%s16 + $0x150] sm:$0xff]
    %v5445 = vld [vmem:[%s16 + $0x158] sm:$0xff]
    %v5446 = vld [vmem:[%s16 + $0x160] sm:$0xff]
    %v5447 = vld [vmem:[%s16 + $0x168] sm:$0xff]
    %v5448 = vld [vmem:[%s16 + $0x170] sm:$0xff]
    %v5449 = vld [vmem:[%s16 + $0x178] sm:$0xff]
    %v5450 = vld [vmem:[%s16 + $0x180] sm:$0xff]
    %v5451 = vld [vmem:[%s16 + $0x188] sm:$0xff]
    %v5452 = vld [vmem:[%s16 + $0x190] sm:$0xff]
    %v5453 = vld [vmem:[%s16 + $0x198] sm:$0xff]
    %v5454 = vld [vmem:[%s16 + $0x1a0] sm:$0xff]
    %v5455 = vld [vmem:[%s16 + $0x1a8] sm:$0xff]
    %v5456 = vld [vmem:[%s16 + $0x1b0] sm:$0xff]
    %v5457 = vld [vmem:[%s16 + $0x1b8] sm:$0xff]
    %v5458 = vld [vmem:[%s16 + $0x1c0] sm:$0xff]
    %v5459 = vld [vmem:[%s16 + $0x1c8] sm:$0xff]
    %v5460 = vld [vmem:[%s16 + $0x1d0] sm:$0xff]
    %v5461 = vld [vmem:[%s16 + $0x1d8] sm:$0xff]
    %v5462 = vld [vmem:[%s16 + $0x1e0] sm:$0xff]
    %v5463 = vld [vmem:[%s16 + $0x1e8] sm:$0xff]
    %v5464 = vld [vmem:[%s16 + $0x1f0] sm:$0xff]
    %v5465 = vld [vmem:[%s16 + $0x1f8] sm:$0xff]
    %v5466 = vld [vmem:[%s16 + $0x200] sm:$0xff]
    %v5467 = vld [vmem:[%s16 + $0x208] sm:$0xff]
    %v5468 = vld [vmem:[%s16 + $0x210] sm:$0xff]
    %v5469 = vld [vmem:[%s16 + $0x218] sm:$0xff]
    %v5470 = vld [vmem:[%s16 + $0x220] sm:$0xff]
    %v5471 = vld [vmem:[%s16 + $0x228] sm:$0xff]
    %v5472 = vld [vmem:[%s16 + $0x230] sm:$0xff]
    %v5473 = vld [vmem:[%s16 + $0x238] sm:$0xff]
    %v5474 = vld [vmem:[%s16 + $0x240] sm:$0xff]
    %v5475 = vld [vmem:[%s16 + $0x248] sm:$0xff]
    %v5476 = vld [vmem:[%s16 + $0x250] sm:$0xff]
    %v5477 = vld [vmem:[%s16 + $0x258] sm:$0xff]
    %v5478 = vld [vmem:[%s16 + $0x260] sm:$0xff]
    %v5479 = vld [vmem:[%s16 + $0x268] sm:$0xff]
    %v5480 = vld [vmem:[%s16 + $0x270] sm:$0xff]
    %v5481 = vld [vmem:[%s16 + $0x278] sm:$0xff]
    %v5482 = vld [vmem:[%s16 + $0x280] sm:$0xff]
    %v5483 = vld [vmem:[%s16 + $0x288] sm:$0xff]
    %v5484 = vld [vmem:[%s16 + $0x290] sm:$0xff]
    %v5485 = vld [vmem:[%s16 + $0x298] sm:$0xff]
    %v5486 = vld [vmem:[%s16 + $0x2a0] sm:$0xff]
    %v5487 = vld [vmem:[%s16 + $0x2a8] sm:$0xff]
    %v5488 = vld [vmem:[%s16 + $0x2b0] sm:$0xff]
    %v5489 = vld [vmem:[%s16 + $0x2b8] sm:$0xff]
    %v5490 = vld [vmem:[%s16 + $0x2c0] sm:$0xff]
    %v5491 = vld [vmem:[%s16 + $0x2c8] sm:$0xff]
    %v5492 = vld [vmem:[%s16 + $0x2d0] sm:$0xff]
    %v5493 = vld [vmem:[%s16 + $0x2d8] sm:$0xff]
    %v5494 = vld [vmem:[%s16 + $0x2e0] sm:$0xff]
    %v5495 = vld [vmem:[%s16 + $0x2e8] sm:$0xff]
    %v5496 = vld [vmem:[%s16 + $0x2f0] sm:$0xff]
    %v5497 = vld [vmem:[%s16 + $0x2f8] sm:$0xff]
    %v5498 = vld [vmem:[%s16 + $0x300] sm:$0xff]
    %v5499 = vld [vmem:[%s16 + $0x308] sm:$0xff]
    %v5500 = vld [vmem:[%s16 + $0x310] sm:$0xff]
    %v5501 = vld [vmem:[%s16 + $0x318] sm:$0xff]
    %v5502 = vld [vmem:[%s16 + $0x320] sm:$0xff]
    %v5503 = vld [vmem:[%s16 + $0x328] sm:$0xff]
    %v5504 = vld [vmem:[%s16 + $0x330] sm:$0xff]
    %v5505 = vld [vmem:[%s16 + $0x338] sm:$0xff]
    %v5506 = vld [vmem:[%s16 + $0x340] sm:$0xff]
    %v5507 = vld [vmem:[%s16 + $0x348] sm:$0xff]
    %v5508 = vld [vmem:[%s16 + $0x350] sm:$0xff]
    %v5509 = vld [vmem:[%s16 + $0x358] sm:$0xff]
    %v5510 = vld [vmem:[%s16 + $0x360] sm:$0xff]
    %v5511 = vld [vmem:[%s16 + $0x368] sm:$0xff]
    %v5512 = vld [vmem:[%s16 + $0x370] sm:$0xff]
    %v5513 = vld [vmem:[%s16 + $0x378] sm:$0xff]
    %v5514 = vld [vmem:[%s16 + $0x380] sm:$0xff]
    %v5515 = vld [vmem:[%s16 + $0x388] sm:$0xff]
    %v5516 = vld [vmem:[%s16 + $0x390] sm:$0xff]
    %v5517 = vld [vmem:[%s16 + $0x398] sm:$0xff]
    %v5518 = vld [vmem:[%s16 + $0x3a0] sm:$0xff]
    %v5519 = vld [vmem:[%s16 + $0x3a8] sm:$0xff]
    %v5520 = vpack.c.bf16 %v1373, %v1373
    %v5521 = vpack.c.bf16 %v5374, %v5374
    %v5522 = vpack.c.bf16 %v5357, %v5357
    %v5523 = vpack.c.bf16 %v5375, %v5375
    %v5524 = vpack.c.bf16 %v5369, %v5369
    %v5525 = vpack.c.bf16 %v5376, %v5376
    %v5526 = vpack.c.bf16 %v1376, %v1376
    %v5527 = vpack.c.bf16 %v1377, %v1377
    %v5528 = vld [vmem:[%s17] sm:$0x3]
    %v5530 = vlaneseq
    %v5531 = vshrl.u32 %v5530, 7
    %v5532 = vsub.s32 0, %v5531
    %v5533 = vrot.slane %v5528, %v5532
    %v5534 = vlaneseq
    %v5535 = vshrl.u32 %v5534, 7
    %v5536 = vsub.s32 1, %v5535
    %v5537 = vrot.slane %v5528, %v5536
    %v5658 = vunpack.c.l.b16 %v5402
    %v5659 = vunpack.c.h.b16 %v5402
    %v5660 = vunpack.c.l.b16 %v5403
    %v5661 = vunpack.c.h.b16 %v5403
    %v5662 = vunpack.c.l.b16 %v5404
    %v5663 = vunpack.c.h.b16 %v5404
    %v5664 = vunpack.c.l.b16 %v5405
    %v5665 = vunpack.c.h.b16 %v5405
    %v5666 = vunpack.c.l.b16 %v5406
    %v5667 = vunpack.c.h.b16 %v5406
    %v5668 = vunpack.c.l.b16 %v5407
    %v5669 = vunpack.c.h.b16 %v5407
    %v5670 = vunpack.c.l.b16 %v5408
    %v5671 = vunpack.c.h.b16 %v5408
    %v5672 = vunpack.c.l.b16 %v5409
    %v5673 = vunpack.c.h.b16 %v5409
    %v5674 = vunpack.c.l.b16 %v5410
    %v5675 = vunpack.c.h.b16 %v5410
    %v5676 = vunpack.c.l.b16 %v5411
    %v5677 = vunpack.c.h.b16 %v5411
    %v5678 = vunpack.c.l.b16 %v5412
    %v5679 = vunpack.c.h.b16 %v5412
    %v5680 = vunpack.c.l.b16 %v5413
    %v5681 = vunpack.c.h.b16 %v5413
    %v5682 = vunpack.c.l.b16 %v5414
    %v5683 = vunpack.c.h.b16 %v5414
    %v5684 = vunpack.c.l.b16 %v5415
    %v5685 = vunpack.c.h.b16 %v5415
    %v5686 = vunpack.c.l.b16 %v5416
    %v5687 = vunpack.c.h.b16 %v5416
    %v5688 = vunpack.c.l.b16 %v5417
    %v5689 = vunpack.c.h.b16 %v5417
    %v5690 = vunpack.c.l.b16 %v5418
    %v5691 = vunpack.c.h.b16 %v5418
    %v5692 = vunpack.c.l.b16 %v5419
    %v5693 = vunpack.c.h.b16 %v5419
    %v5694 = vunpack.c.l.b16 %v5420
    %v5695 = vunpack.c.h.b16 %v5420
    %v5696 = vunpack.c.l.b16 %v5421
    %v5697 = vunpack.c.h.b16 %v5421
    %v5698 = vunpack.c.l.b16 %v5422
    %v5699 = vunpack.c.h.b16 %v5422
    %v5700 = vunpack.c.l.b16 %v5423
    %v5701 = vunpack.c.h.b16 %v5423
    %v5702 = vunpack.c.l.b16 %v5424
    %v5703 = vunpack.c.h.b16 %v5424
    %v5704 = vunpack.c.l.b16 %v5425
    %v5705 = vunpack.c.h.b16 %v5425
    %v5706 = vunpack.c.l.b16 %v5426
    %v5707 = vunpack.c.h.b16 %v5426
    %v5708 = vunpack.c.l.b16 %v5427
    %v5709 = vunpack.c.h.b16 %v5427
    %v5710 = vunpack.c.l.b16 %v5428
    %v5711 = vunpack.c.h.b16 %v5428
    %v5712 = vunpack.c.l.b16 %v5429
    %v5713 = vunpack.c.h.b16 %v5429
    %v5714 = vunpack.c.l.b16 %v5430
    %v5715 = vunpack.c.h.b16 %v5430
    %v5716 = vunpack.c.l.b16 %v5431
    %v5717 = vunpack.c.h.b16 %v5431
    %v5718 = vunpack.c.l.b16 %v5432
    %v5719 = vunpack.c.h.b16 %v5432
    %v5720 = vunpack.c.l.b16 %v5433
    %v5721 = vunpack.c.h.b16 %v5433
    %v5722 = vunpack.c.l.b16 %v5434
    %v5723 = vunpack.c.h.b16 %v5434
    %v5724 = vunpack.c.l.b16 %v5435
    %v5725 = vunpack.c.h.b16 %v5435
    %v5726 = vunpack.c.l.b16 %v5436
    %v5727 = vunpack.c.h.b16 %v5436
    %v5728 = vunpack.c.l.b16 %v5437
    %v5729 = vunpack.c.h.b16 %v5437
    %v5730 = vunpack.c.l.b16 %v5438
    %v5731 = vunpack.c.h.b16 %v5438
    %v5732 = vunpack.c.l.b16 %v5439
    %v5733 = vunpack.c.h.b16 %v5439
    %v5734 = vunpack.c.l.b16 %v5440
    %v5735 = vunpack.c.h.b16 %v5440
    %v5736 = vunpack.c.l.b16 %v5441
    %v5737 = vunpack.c.h.b16 %v5441
    %v5738 = vunpack.c.l.b16 %v5442
    %v5739 = vunpack.c.h.b16 %v5442
    %v5740 = vunpack.c.l.b16 %v5443
    %v5741 = vunpack.c.h.b16 %v5443
    %v5742 = vunpack.c.l.b16 %v5444
    %v5743 = vunpack.c.h.b16 %v5444
    %v5744 = vunpack.c.l.b16 %v5445
    %v5745 = vunpack.c.h.b16 %v5445
    %v5746 = vunpack.c.l.b16 %v5446
    %v5747 = vunpack.c.h.b16 %v5446
    %v5748 = vunpack.c.l.b16 %v5447
    %v5749 = vunpack.c.h.b16 %v5447
    %v5750 = vunpack.c.l.b16 %v5448
    %v5751 = vunpack.c.h.b16 %v5448
    %v5752 = vunpack.c.l.b16 %v5449
    %v5753 = vunpack.c.h.b16 %v5449
    %v5754 = vunpack.c.l.b16 %v5450
    %v5755 = vunpack.c.h.b16 %v5450
    %v5756 = vunpack.c.l.b16 %v5451
    %v5757 = vunpack.c.h.b16 %v5451
    %v5758 = vunpack.c.l.b16 %v5452
    %v5759 = vunpack.c.h.b16 %v5452
    %v5760 = vunpack.c.l.b16 %v5453
    %v5761 = vunpack.c.h.b16 %v5453
    %v5762 = vunpack.c.l.b16 %v5454
    %v5763 = vunpack.c.h.b16 %v5454
    %v5764 = vunpack.c.l.b16 %v5455
    %v5765 = vunpack.c.h.b16 %v5455
    %v5766 = vunpack.c.l.b16 %v5456
    %v5767 = vunpack.c.h.b16 %v5456
    %v5768 = vunpack.c.l.b16 %v5457
    %v5769 = vunpack.c.h.b16 %v5457
    %v5770 = vunpack.c.l.b16 %v5458
    %v5771 = vunpack.c.h.b16 %v5458
    %v5772 = vunpack.c.l.b16 %v5459
    %v5773 = vunpack.c.h.b16 %v5459
    %v5774 = vunpack.c.l.b16 %v5460
    %v5775 = vunpack.c.h.b16 %v5460
    %v5776 = vunpack.c.l.b16 %v5461
    %v5777 = vunpack.c.h.b16 %v5461
    %v5778 = vunpack.c.l.b16 %v5462
    %v5779 = vunpack.c.h.b16 %v5462
    %v5780 = vunpack.c.l.b16 %v5463
    %v5781 = vunpack.c.h.b16 %v5463
    %v5782 = vunpack.c.l.b16 %v5464
    %v5783 = vunpack.c.h.b16 %v5464
    %v5784 = vunpack.c.l.b16 %v5465
    %v5785 = vunpack.c.h.b16 %v5465
    %v5786 = vunpack.c.l.b16 %v5466
    %v5787 = vunpack.c.h.b16 %v5466
    %v5788 = vunpack.c.l.b16 %v5467
    %v5789 = vunpack.c.h.b16 %v5467
    %v5790 = vunpack.c.l.b16 %v5468
    %v5791 = vunpack.c.h.b16 %v5468
    %v5792 = vunpack.c.l.b16 %v5469
    %v5793 = vunpack.c.h.b16 %v5469
    %v5794 = vunpack.c.l.b16 %v5470
    %v5795 = vunpack.c.h.b16 %v5470
    %v5796 = vunpack.c.l.b16 %v5471
    %v5797 = vunpack.c.h.b16 %v5471
    %v5798 = vunpack.c.l.b16 %v5472
    %v5799 = vunpack.c.h.b16 %v5472
    %v5800 = vunpack.c.l.b16 %v5473
    %v5801 = vunpack.c.h.b16 %v5473
    %v5802 = vunpack.c.l.b16 %v5474
    %v5803 = vunpack.c.h.b16 %v5474
    %v5804 = vunpack.c.l.b16 %v5475
    %v5805 = vunpack.c.h.b16 %v5475
    %v5806 = vunpack.c.l.b16 %v5476
    %v5807 = vunpack.c.h.b16 %v5476
    %v5808 = vunpack.c.l.b16 %v5477
    %v5809 = vunpack.c.h.b16 %v5477
    %v5810 = vunpack.c.l.b16 %v5478
    %v5811 = vunpack.c.h.b16 %v5478
    %v5812 = vunpack.c.l.b16 %v5479
    %v5813 = vunpack.c.h.b16 %v5479
    %v5814 = vunpack.c.l.b16 %v5480
    %v5815 = vunpack.c.h.b16 %v5480
    %v5816 = vunpack.c.l.b16 %v5481
    %v5817 = vunpack.c.h.b16 %v5481
    %v5818 = vunpack.c.l.b16 %v5482
    %v5819 = vunpack.c.h.b16 %v5482
    %v5820 = vunpack.c.l.b16 %v5483
    %v5821 = vunpack.c.h.b16 %v5483
    %v5822 = vunpack.c.l.b16 %v5484
    %v5823 = vunpack.c.h.b16 %v5484
    %v5824 = vunpack.c.l.b16 %v5485
    %v5825 = vunpack.c.h.b16 %v5485
    %v5826 = vunpack.c.l.b16 %v5486
    %v5827 = vunpack.c.h.b16 %v5486
    %v5828 = vunpack.c.l.b16 %v5487
    %v5829 = vunpack.c.h.b16 %v5487
    %v5830 = vunpack.c.l.b16 %v5488
    %v5831 = vunpack.c.h.b16 %v5488
    %v5832 = vunpack.c.l.b16 %v5489
    %v5833 = vunpack.c.h.b16 %v5489
    %v5834 = vunpack.c.l.b16 %v5490
    %v5835 = vunpack.c.h.b16 %v5490
    %v5836 = vunpack.c.l.b16 %v5491
    %v5837 = vunpack.c.h.b16 %v5491
    %v5838 = vunpack.c.l.b16 %v5492
    %v5839 = vunpack.c.h.b16 %v5492
    %v5840 = vunpack.c.l.b16 %v5493
    %v5841 = vunpack.c.h.b16 %v5493
    %v5842 = vunpack.c.l.b16 %v5494
    %v5843 = vunpack.c.h.b16 %v5494
    %v5844 = vunpack.c.l.b16 %v5495
    %v5845 = vunpack.c.h.b16 %v5495
    %v5846 = vunpack.c.l.b16 %v5496
    %v5847 = vunpack.c.h.b16 %v5496
    %v5848 = vunpack.c.l.b16 %v5497
    %v5849 = vunpack.c.h.b16 %v5497
    %v5850 = vunpack.c.l.b16 %v5498
    %v5851 = vunpack.c.h.b16 %v5498
    %v5852 = vunpack.c.l.b16 %v5499
    %v5853 = vunpack.c.h.b16 %v5499
    %v5854 = vunpack.c.l.b16 %v5500
    %v5855 = vunpack.c.h.b16 %v5500
    %v5856 = vunpack.c.l.b16 %v5501
    %v5857 = vunpack.c.h.b16 %v5501
    %v5858 = vunpack.c.l.b16 %v5502
    %v5859 = vunpack.c.h.b16 %v5502
    %v5860 = vunpack.c.l.b16 %v5503
    %v5861 = vunpack.c.h.b16 %v5503
    %v5862 = vunpack.c.l.b16 %v5504
    %v5863 = vunpack.c.h.b16 %v5504
    %v5864 = vunpack.c.l.b16 %v5505
    %v5865 = vunpack.c.h.b16 %v5505
    %v5866 = vunpack.c.l.b16 %v5506
    %v5867 = vunpack.c.h.b16 %v5506
    %v5868 = vunpack.c.l.b16 %v5507
    %v5869 = vunpack.c.h.b16 %v5507
    %v5870 = vunpack.c.l.b16 %v5508
    %v5871 = vunpack.c.h.b16 %v5508
    %v5872 = vunpack.c.l.b16 %v5509
    %v5873 = vunpack.c.h.b16 %v5509
    %v5874 = vunpack.c.l.b16 %v5510
    %v5875 = vunpack.c.h.b16 %v5510
    %v5876 = vunpack.c.l.b16 %v5511
    %v5877 = vunpack.c.h.b16 %v5511
    %v5878 = vunpack.c.l.b16 %v5512
    %v5879 = vunpack.c.h.b16 %v5512
    %v5880 = vunpack.c.l.b16 %v5513
    %v5881 = vunpack.c.h.b16 %v5513
    %v5882 = vunpack.c.l.b16 %v5514
    %v5883 = vunpack.c.h.b16 %v5514
    %v5884 = vunpack.c.l.b16 %v5515
    %v5885 = vunpack.c.h.b16 %v5515
    %v5886 = vunpack.c.l.b16 %v5516
    %v5887 = vunpack.c.h.b16 %v5516
    %v5888 = vunpack.c.l.b16 %v5517
    %v5889 = vunpack.c.h.b16 %v5517
    %v5890 = vunpack.c.l.b16 %v5518
    %v5891 = vunpack.c.h.b16 %v5518
    %v5892 = vunpack.c.l.b16 %v5519
    %v5893 = vunpack.c.h.b16 %v5519
    %v5894 = vpack.c.b16 %v5660, %v5658
    %v5895 = vpack.c.b16 %v5661, %v5659
    %v5896 = vpack.c.b16 %v5664, %v5662
    %v5897 = vpack.c.b16 %v5665, %v5663
    %v5898 = vpack.c.b16 %v5668, %v5666
    %v5899 = vpack.c.b16 %v5669, %v5667
    %v5900 = vpack.c.b16 %v5672, %v5670
    %v5901 = vpack.c.b16 %v5673, %v5671
    %v5902 = vpack.c.b16 %v5676, %v5674
    %v5903 = vpack.c.b16 %v5677, %v5675
    %v5904 = vpack.c.b16 %v5680, %v5678
    %v5905 = vpack.c.b16 %v5681, %v5679
    %v5906 = vpack.c.b16 %v5684, %v5682
    %v5907 = vpack.c.b16 %v5685, %v5683
    %v5908 = vpack.c.b16 %v5688, %v5686
    %v5909 = vpack.c.b16 %v5689, %v5687
    %v5910 = vpack.c.b16 %v5692, %v5690
    %v5911 = vpack.c.b16 %v5693, %v5691
    %v5912 = vpack.c.b16 %v5696, %v5694
    %v5913 = vpack.c.b16 %v5697, %v5695
    %v5914 = vpack.c.b16 %v5700, %v5698
    %v5915 = vpack.c.b16 %v5701, %v5699
    %v5916 = vpack.c.b16 %v5704, %v5702
    %v5917 = vpack.c.b16 %v5705, %v5703
    %v5918 = vpack.c.b16 %v5708, %v5706
    %v5919 = vpack.c.b16 %v5709, %v5707
    %v5920 = vpack.c.b16 %v5712, %v5710
    %v5921 = vpack.c.b16 %v5713, %v5711
    %v5922 = vpack.c.b16 %v5716, %v5714
    %v5923 = vpack.c.b16 %v5717, %v5715
    %v5924 = vpack.c.b16 %v5720, %v5718
    %v5925 = vpack.c.b16 %v5721, %v5719
    %v5926 = vpack.c.b16 %v5724, %v5722
    %v5927 = vpack.c.b16 %v5725, %v5723
    %v5928 = vpack.c.b16 %v5728, %v5726
    %v5929 = vpack.c.b16 %v5729, %v5727
    %v5930 = vpack.c.b16 %v5732, %v5730
    %v5931 = vpack.c.b16 %v5733, %v5731
    %v5932 = vpack.c.b16 %v5736, %v5734
    %v5933 = vpack.c.b16 %v5737, %v5735
    %v5934 = vpack.c.b16 %v5740, %v5738
    %v5935 = vpack.c.b16 %v5741, %v5739
    %v5936 = vpack.c.b16 %v5744, %v5742
    %v5937 = vpack.c.b16 %v5745, %v5743
    %v5938 = vpack.c.b16 %v5748, %v5746
    %v5939 = vpack.c.b16 %v5749, %v5747
    %v5940 = vpack.c.b16 %v5752, %v5750
    %v5941 = vpack.c.b16 %v5753, %v5751
    %v5942 = vpack.c.b16 %v5756, %v5754
    %v5943 = vpack.c.b16 %v5757, %v5755
    %v5944 = vpack.c.b16 %v5760, %v5758
    %v5945 = vpack.c.b16 %v5761, %v5759
    %v5946 = vpack.c.b16 %v5764, %v5762
    %v5947 = vpack.c.b16 %v5765, %v5763
    %v5948 = vpack.c.b16 %v5768, %v5766
    %v5949 = vpack.c.b16 %v5769, %v5767
    %v5950 = vpack.c.b16 %v5772, %v5770
    %v5951 = vpack.c.b16 %v5773, %v5771
    %v5952 = vpack.c.b16 %v5776, %v5774
    %v5953 = vpack.c.b16 %v5777, %v5775
    %v5954 = vpack.c.b16 %v5780, %v5778
    %v5955 = vpack.c.b16 %v5781, %v5779
    %v5956 = vpack.c.b16 %v5784, %v5782
    %v5957 = vpack.c.b16 %v5785, %v5783
    %v5958 = vpack.c.b16 %v5788, %v5786
    %v5959 = vpack.c.b16 %v5789, %v5787
    %v5960 = vpack.c.b16 %v5792, %v5790
    %v5961 = vpack.c.b16 %v5793, %v5791
    %v5962 = vpack.c.b16 %v5796, %v5794
    %v5963 = vpack.c.b16 %v5797, %v5795
    %v5964 = vpack.c.b16 %v5800, %v5798
    %v5965 = vpack.c.b16 %v5801, %v5799
    %v5966 = vpack.c.b16 %v5804, %v5802
    %v5967 = vpack.c.b16 %v5805, %v5803
    %v5968 = vpack.c.b16 %v5808, %v5806
    %v5969 = vpack.c.b16 %v5809, %v5807
    %v5970 = vpack.c.b16 %v5812, %v5810
    %v5971 = vpack.c.b16 %v5813, %v5811
    %v5972 = vpack.c.b16 %v5816, %v5814
    %v5973 = vpack.c.b16 %v5817, %v5815
    %v5974 = vpack.c.b16 %v5820, %v5818
    %v5975 = vpack.c.b16 %v5821, %v5819
    %v5976 = vpack.c.b16 %v5824, %v5822
    %v5977 = vpack.c.b16 %v5825, %v5823
    %v5978 = vpack.c.b16 %v5828, %v5826
    %v5979 = vpack.c.b16 %v5829, %v5827
    %v5980 = vpack.c.b16 %v5832, %v5830
    %v5981 = vpack.c.b16 %v5833, %v5831
    %v5982 = vpack.c.b16 %v5836, %v5834
    %v5983 = vpack.c.b16 %v5837, %v5835
    %v5984 = vpack.c.b16 %v5840, %v5838
    %v5985 = vpack.c.b16 %v5841, %v5839
    %v5986 = vpack.c.b16 %v5844, %v5842
    %v5987 = vpack.c.b16 %v5845, %v5843
    %v5988 = vpack.c.b16 %v5848, %v5846
    %v5989 = vpack.c.b16 %v5849, %v5847
    %v5990 = vpack.c.b16 %v5852, %v5850
    %v5991 = vpack.c.b16 %v5853, %v5851
    %v5992 = vpack.c.b16 %v5856, %v5854
    %v5993 = vpack.c.b16 %v5857, %v5855
    %v5994 = vpack.c.b16 %v5860, %v5858
    %v5995 = vpack.c.b16 %v5861, %v5859
    %v5996 = vpack.c.b16 %v5864, %v5862
    %v5997 = vpack.c.b16 %v5865, %v5863
    %v5998 = vpack.c.b16 %v5868, %v5866
    %v5999 = vpack.c.b16 %v5869, %v5867
    %v6000 = vpack.c.b16 %v5872, %v5870
    %v6001 = vpack.c.b16 %v5873, %v5871
    %v6002 = vpack.c.b16 %v5876, %v5874
    %v6003 = vpack.c.b16 %v5877, %v5875
    %v6004 = vpack.c.b16 %v5880, %v5878
    %v6005 = vpack.c.b16 %v5881, %v5879
    %v6006 = vpack.c.b16 %v5884, %v5882
    %v6007 = vpack.c.b16 %v5885, %v5883
    %v6008 = vpack.c.b16 %v5888, %v5886
    %v6009 = vpack.c.b16 %v5889, %v5887
    %v6010 = vpack.c.b16 %v5892, %v5890
    %v6011 = vpack.c.b16 %v5893, %v5891
    %v6131 = vsel %vm1417, %v5527, 0
    %6133 = vmatprep.subr.bf16.mxu0 %v5895
    %6134 = vmatpush1.bf16.msra.mxu0 %v5894
    %6135 = vmatprep.subr.bf16.mxu0 %v5897
    %6136 = vmatpush1.bf16.msra.mxu0 %v5896
    %6137 = vmatprep.subr.bf16.mxu0 %v5899
    %6138 = vmatpush1.bf16.msra.mxu0 %v5898
    %6139 = vmatprep.subr.bf16.mxu0 %v5901
    %6140 = vmatpush1.bf16.msra.mxu0 %v5900
    %6141 = vmatprep.subr.bf16.mxu0 %v5903
    %6142 = vmatpush1.bf16.msra.mxu0 %v5902
    %6143 = vmatprep.subr.bf16.mxu0 %v5905
    %6144 = vmatpush1.bf16.msra.mxu0 %v5904
    %6145 = vmatprep.subr.bf16.mxu0 %v5907
    %6146 = vmatpush1.bf16.msra.mxu0 %v5906
    %6147 = vmatprep.subr.bf16.mxu0 %v5909
    %6148 = vmatpush1.bf16.msra.mxu0 %v5908
    %6149 = vmatprep.subr.bf16.mxu0 %v5911
    %6150 = vmatpush1.bf16.msra.mxu0 %v5910
    %6151 = vmatprep.subr.bf16.mxu0 %v5913
    %6152 = vmatpush1.bf16.msra.mxu0 %v5912
    %6153 = vmatprep.subr.bf16.mxu0 %v5915
    %6154 = vmatpush1.bf16.msra.mxu0 %v5914
    %6155 = vmatprep.subr.bf16.mxu0 %v5917
    %6156 = vmatpush1.bf16.msra.mxu0 %v5916
    %6157 = vmatprep.subr.bf16.mxu0 %v5919
    %6158 = vmatpush1.bf16.msra.mxu0 %v5918
    %6159 = vmatprep.subr.bf16.mxu0 %v5921
    %6160 = vmatpush1.bf16.msra.mxu0 %v5920
    %6161 = vmatprep.subr.bf16.mxu0 %v5923
    %6162 = vmatpush1.bf16.msra.mxu0 %v5922
    %6163 = vmatprep.subr.bf16.mxu0 %v5925
    %6164 = vmatpush1.bf16.msra.mxu0 %v5924
    %6165 = vmatprep.mubr.bf16.mxu0 %v5521
    %6166 = vmatmul.mubr.bf16.gmra.mrb[0].mxu0 %v5520
    %v6167 = vpop.f32.mrb[0].mxu0
    %v6168 = vadd.f32 %v5533, %v6167
    %v6169 = vpop.f32.mrb[0].mxu0
    %v6170 = vadd.f32 %v5537, %v6169
    %v6171 = vpop.f32.mrb[0].mxu0
    %v6172 = vpop.f32.mrb[0].mxu0
    %6173 = vdwg.mxu0
    %6174 = vmatprep.subr.bf16.mxu0 %v5927
    %6175 = vmatpush1.bf16.msra.mxu0 %v5926
    %6176 = vmatprep.subr.bf16.mxu0 %v5929
    %6177 = vmatpush1.bf16.msra.mxu0 %v5928
    %6178 = vmatprep.subr.bf16.mxu0 %v5931
    %6179 = vmatpush1.bf16.msra.mxu0 %v5930
    %6180 = vmatprep.subr.bf16.mxu0 %v5933
    %6181 = vmatpush1.bf16.msra.mxu0 %v5932
    %6182 = vmatprep.subr.bf16.mxu0 %v5935
    %6183 = vmatpush1.bf16.msra.mxu0 %v5934
    %6184 = vmatprep.subr.bf16.mxu0 %v5937
    %6185 = vmatpush1.bf16.msra.mxu0 %v5936
    %6186 = vmatprep.subr.bf16.mxu0 %v5939
    %6187 = vmatpush1.bf16.msra.mxu0 %v5938
    %6188 = vmatprep.subr.bf16.mxu0 %v5941
    %6189 = vmatpush1.bf16.msra.mxu0 %v5940
    %6190 = vmatprep.subr.bf16.mxu0 %v5943
    %6191 = vmatpush1.bf16.msra.mxu0 %v5942
    %6192 = vmatprep.subr.bf16.mxu0 %v5945
    %6193 = vmatpush1.bf16.msra.mxu0 %v5944
    %6194 = vmatprep.subr.bf16.mxu0 %v5947
    %6195 = vmatpush1.bf16.msra.mxu0 %v5946
    %6196 = vmatprep.subr.bf16.mxu0 %v5949
    %6197 = vmatpush1.bf16.msra.mxu0 %v5948
    %6198 = vmatprep.subr.bf16.mxu0 %v5951
    %6199 = vmatpush1.bf16.msra.mxu0 %v5950
    %6200 = vmatprep.subr.bf16.mxu0 %v5953
    %6201 = vmatpush1.bf16.msra.mxu0 %v5952
    %6202 = vmatprep.subr.bf16.mxu0 %v5955
    %6203 = vmatpush1.bf16.msra.mxu0 %v5954
    %6204 = vmatprep.subr.bf16.mxu0 %v5957
    %6205 = vmatpush1.bf16.msra.mxu0 %v5956
    %6206 = vmatprep.mubr.bf16.mxu0 %v5523
    %6207 = vmatmul.mubr.bf16.gmra.mrb[0].mxu0 %v5522
    %v6208 = vpop.f32.mrb[0].mxu0
    %v6209 = vadd.f32 %v6168, %v6208
    %v6210 = vpop.f32.mrb[0].mxu0
    %v6211 = vadd.f32 %v6170, %v6210
    %v6212 = vpop.f32.mrb[0].mxu0
    %v6213 = vpop.f32.mrb[0].mxu0
    %6214 = vdwg.mxu0
    %6215 = vmatprep.subr.bf16.mxu0 %v5959
    %6216 = vmatpush1.bf16.msra.mxu0 %v5958
    %6217 = vmatprep.subr.bf16.mxu0 %v5961
    %6218 = vmatpush1.bf16.msra.mxu0 %v5960
    %6219 = vmatprep.subr.bf16.mxu0 %v5963
    %6220 = vmatpush1.bf16.msra.mxu0 %v5962
    %6221 = vmatprep.subr.bf16.mxu0 %v5965
    %6222 = vmatpush1.bf16.msra.mxu0 %v5964
    %6223 = vmatprep.subr.bf16.mxu0 %v5967
    %6224 = vmatpush1.bf16.msra.mxu0 %v5966
    %6225 = vmatprep.subr.bf16.mxu0 %v5969
    %6226 = vmatpush1.bf16.msra.mxu0 %v5968
    %6227 = vmatprep.subr.bf16.mxu0 %v5971
    %6228 = vmatpush1.bf16.msra.mxu0 %v5970
    %6229 = vmatprep.subr.bf16.mxu0 %v5973
    %6230 = vmatpush1.bf16.msra.mxu0 %v5972
    %6231 = vmatprep.subr.bf16.mxu0 %v5975
    %6232 = vmatpush1.bf16.msra.mxu0 %v5974
    %6233 = vmatprep.subr.bf16.mxu0 %v5977
    %6234 = vmatpush1.bf16.msra.mxu0 %v5976
    %6235 = vmatprep.subr.bf16.mxu0 %v5979
    %6236 = vmatpush1.bf16.msra.mxu0 %v5978
    %6237 = vmatprep.subr.bf16.mxu0 %v5981
    %6238 = vmatpush1.bf16.msra.mxu0 %v5980
    %6239 = vmatprep.subr.bf16.mxu0 %v5983
    %6240 = vmatpush1.bf16.msra.mxu0 %v5982
    %6241 = vmatprep.subr.bf16.mxu0 %v5985
    %6242 = vmatpush1.bf16.msra.mxu0 %v5984
    %6243 = vmatprep.subr.bf16.mxu0 %v5987
    %6244 = vmatpush1.bf16.msra.mxu0 %v5986
    %6245 = vmatprep.subr.bf16.mxu0 %v5989
    %6246 = vmatpush1.bf16.msra.mxu0 %v5988
    %6247 = vmatprep.mubr.bf16.mxu0 %v5525
    %6248 = vmatmul.mubr.bf16.gmra.mrb[0].mxu0 %v5524
    %v6249 = vpop.f32.mrb[0].mxu0
    %v6250 = vadd.f32 %v6209, %v6249
    %v6251 = vpop.f32.mrb[0].mxu0
    %v6252 = vadd.f32 %v6211, %v6251
    %v6253 = vpop.f32.mrb[0].mxu0
    %v6254 = vpop.f32.mrb[0].mxu0
    %6255 = vdwg.mxu0
    %6256 = vmatprep.subr.bf16.mxu0 %v5991
    %6257 = vmatpush1.bf16.msra.mxu0 %v5990
    %6258 = vmatprep.subr.bf16.mxu0 %v5993
    %6259 = vmatpush1.bf16.msra.mxu0 %v5992
    %6260 = vmatprep.subr.bf16.mxu0 %v5995
    %6261 = vmatpush1.bf16.msra.mxu0 %v5994
    %6262 = vmatprep.subr.bf16.mxu0 %v5997
    %6263 = vmatpush1.bf16.msra.mxu0 %v5996
    %6264 = vmatprep.subr.bf16.mxu0 %v5999
    %6265 = vmatpush1.bf16.msra.mxu0 %v5998
    %6266 = vmatprep.subr.bf16.mxu0 %v6001
    %6267 = vmatpush1.bf16.msra.mxu0 %v6000
    %6268 = vmatprep.subr.bf16.mxu0 %v6003
    %6269 = vmatpush1.bf16.msra.mxu0 %v6002
    %6270 = vmatprep.subr.bf16.mxu0 %v6005
    %6271 = vmatpush1.bf16.msra.mxu0 %v6004
    %6272 = vmatprep.subr.bf16.mxu0 %v6007
    %6273 = vmatpush1.bf16.msra.mxu0 %v6006
    %6274 = vmatprep.subr.bf16.mxu0 %v6009
    %6275 = vmatpush1.bf16.msra.mxu0 %v6008
    %6276 = vmatprep.subr.bf16.mxu0 %v6011
    %6277 = vmatpush1.bf16.msra.mxu0 %v6010
    %6278 = vmatprep.subr.bf16.mxu0 0
    %6279 = vmatpush1.bf16.msra.mxu0 0
    %6280 = vmatprep.subr.bf16.mxu0 0
    %6281 = vmatpush1.bf16.msra.mxu0 0
    %6282 = vmatprep.subr.bf16.mxu0 0
    %6283 = vmatpush1.bf16.msra.mxu0 0
    %6284 = vmatprep.subr.bf16.mxu0 0
    %6285 = vmatpush1.bf16.msra.mxu0 0
    %6286 = vmatprep.subr.bf16.mxu0 0
    %6287 = vmatpush1.bf16.msra.mxu0 0
    %6288 = vmatprep.mubr.bf16.mxu0 %v6131
    %6289 = vmatmul.mubr.bf16.gmra.mrb[0].mxu0 %v5526
    %v6290 = vpop.f32.mrb[0].mxu0
    %v6291 = vadd.f32 %v6250, %v6290
    %v6292 = vpop.f32.mrb[0].mxu0
    %v6293 = vadd.f32 %v6252, %v6292
    %v6294 = vpop.f32.mrb[0].mxu0
    %v6295 = vpop.f32.mrb[0].mxu0
    %6296 = vdwg.mxu0
    %v6297 = vmax.f32 %v6291, 0.0
    %v6298 = vmax.f32 %v6293, 0.0
    %v6301 = vcombine.low %v6297, %v6298
    %v6303 = vunpack.c.l.s4 1983009808
    %v6304 = vunpack.c.0.s8 %v6303
    %v6305 = vlaneseq
    %v6306 = vshrl.u32 %v6305, 7
    %v6307 = vsub.s32 %v6304, %v6306
    %v6308 = vrot.slane %v6301, %v6307
    %6310 = vst [vmem:[#allocation2] sm:$0xf] %v6308
    %v6311 = vld [vmem:[%s18] sm:$0xff]
    %v6312 = vld [vmem:[%s18 + $0x8] sm:$0xff]
    %v6313 = vld [vmem:[%s18 + $0x10] sm:$0xff]
    %v6314 = vld [vmem:[%s18 + $0x18] sm:$0xff]
    %v6315 = vld [vmem:[%s18 + $0x20] sm:$0xff]
    %v6316 = vld [vmem:[%s18 + $0x28] sm:$0xff]
    %v6317 = vld [vmem:[%s18 + $0x30] sm:$0xff]
    %v6318 = vld [vmem:[%s18 + $0x38] sm:$0xff]
    %v6319 = vld [vmem:[%s18 + $0x40] sm:$0xff]
    %v6320 = vld [vmem:[%s18 + $0x48] sm:$0xff]
    %v6321 = vld [vmem:[%s18 + $0x50] sm:$0xff]
    %v6322 = vld [vmem:[%s18 + $0x58] sm:$0xff]
    %v6323 = vld [vmem:[%s18 + $0x60] sm:$0xff]
    %v6324 = vld [vmem:[%s18 + $0x68] sm:$0xff]
    %v6325 = vld [vmem:[%s18 + $0x70] sm:$0xff]
    %v6326 = vld [vmem:[%s18 + $0x78] sm:$0xff]
    %v6327 = vld [vmem:[%s18 + $0x80] sm:$0xff]
    %v6328 = vld [vmem:[%s18 + $0x88] sm:$0xff]
    %v6329 = vld [vmem:[%s18 + $0x90] sm:$0xff]
    %v6330 = vld [vmem:[%s18 + $0x98] sm:$0xff]
    %v6331 = vld [vmem:[%s18 + $0xa0] sm:$0xff]
    %v6332 = vld [vmem:[%s18 + $0xa8] sm:$0xff]
    %v6333 = vld [vmem:[%s18 + $0xb0] sm:$0xff]
    %v6334 = vld [vmem:[%s18 + $0xb8] sm:$0xff]
    %v6335 = vld [vmem:[%s18 + $0xc0] sm:$0xff]
    %v6336 = vld [vmem:[%s18 + $0xc8] sm:$0xff]
    %v6337 = vld [vmem:[%s18 + $0xd0] sm:$0xff]
    %v6338 = vld [vmem:[%s18 + $0xd8] sm:$0xff]
    %v6339 = vld [vmem:[%s18 + $0xe0] sm:$0xff]
    %v6340 = vld [vmem:[%s18 + $0xe8] sm:$0xff]
    %v6341 = vld [vmem:[%s18 + $0xf0] sm:$0xff]
    %v6342 = vld [vmem:[%s18 + $0xf8] sm:$0xff]
    %v6343 = vld [vmem:[%s18 + $0x100] sm:$0xff]
    %v6344 = vld [vmem:[%s18 + $0x108] sm:$0xff]
    %v6345 = vld [vmem:[%s18 + $0x110] sm:$0xff]
    %v6346 = vld [vmem:[%s18 + $0x118] sm:$0xff]
    %v6347 = vld [vmem:[%s18 + $0x120] sm:$0xff]
    %v6348 = vld [vmem:[%s18 + $0x128] sm:$0xff]
    %v6349 = vld [vmem:[%s18 + $0x130] sm:$0xff]
    %v6350 = vld [vmem:[%s18 + $0x138] sm:$0xff]
    %v6351 = vld [vmem:[%s18 + $0x140] sm:$0xff]
    %v6352 = vld [vmem:[%s18 + $0x148] sm:$0xff]
    %v6353 = vld [vmem:[%s18 + $0x150] sm:$0xff]
    %v6354 = vld [vmem:[%s18 + $0x158] sm:$0xff]
    %v6355 = vld [vmem:[%s18 + $0x160] sm:$0xff]
    %v6356 = vld [vmem:[%s18 + $0x168] sm:$0xff]
    %v6357 = vld [vmem:[%s18 + $0x170] sm:$0xff]
    %v6358 = vld [vmem:[%s18 + $0x178] sm:$0xff]
    %v6359 = vld [vmem:[%s18 + $0x180] sm:$0xff]
    %v6360 = vld [vmem:[%s18 + $0x188] sm:$0xff]
    %v6361 = vld [vmem:[%s18 + $0x190] sm:$0xff]
    %v6362 = vld [vmem:[%s18 + $0x198] sm:$0xff]
    %v6363 = vld [vmem:[%s18 + $0x1a0] sm:$0xff]
    %v6364 = vld [vmem:[%s18 + $0x1a8] sm:$0xff]
    %v6365 = vpack.c.bf16 %v5401, %v5401
    %v6366 = vpack.c.bf16 %v5393, %v5393
    %v6367 = vpack.c.bf16 %v5394, %v5394
    %v6368 = vpack.c.bf16 %v5392, %v5392
    %v6369 = vld [vmem:[%s19] sm:$0x3]
    %v6371 = vlaneseq
    %v6372 = vshrl.u32 %v6371, 7
    %v6373 = vsub.s32 0, %v6372
    %v6374 = vrot.slane %v6369, %v6373
    %v6375 = vlaneseq
    %v6376 = vshrl.u32 %v6375, 7
    %v6377 = vsub.s32 1, %v6376
    %v6378 = vrot.slane %v6369, %v6377
    %v6435 = vunpack.c.l.b16 %v6311
    %v6436 = vunpack.c.h.b16 %v6311
    %v6437 = vunpack.c.l.b16 %v6312
    %v6438 = vunpack.c.h.b16 %v6312
    %v6439 = vunpack.c.l.b16 %v6313
    %v6440 = vunpack.c.h.b16 %v6313
    %v6441 = vunpack.c.l.b16 %v6314
    %v6442 = vunpack.c.h.b16 %v6314
    %v6443 = vunpack.c.l.b16 %v6315
    %v6444 = vunpack.c.h.b16 %v6315
    %v6445 = vunpack.c.l.b16 %v6316
    %v6446 = vunpack.c.h.b16 %v6316
    %v6447 = vunpack.c.l.b16 %v6317
    %v6448 = vunpack.c.h.b16 %v6317
    %v6449 = vunpack.c.l.b16 %v6318
    %v6450 = vunpack.c.h.b16 %v6318
    %v6451 = vunpack.c.l.b16 %v6319
    %v6452 = vunpack.c.h.b16 %v6319
    %v6453 = vunpack.c.l.b16 %v6320
    %v6454 = vunpack.c.h.b16 %v6320
    %v6455 = vunpack.c.l.b16 %v6321
    %v6456 = vunpack.c.h.b16 %v6321
    %v6457 = vunpack.c.l.b16 %v6322
    %v6458 = vunpack.c.h.b16 %v6322
    %v6459 = vunpack.c.l.b16 %v6323
    %v6460 = vunpack.c.h.b16 %v6323
    %v6461 = vunpack.c.l.b16 %v6324
    %v6462 = vunpack.c.h.b16 %v6324
    %v6463 = vunpack.c.l.b16 %v6325
    %v6464 = vunpack.c.h.b16 %v6325
    %v6465 = vunpack.c.l.b16 %v6326
    %v6466 = vunpack.c.h.b16 %v6326
    %v6467 = vunpack.c.l.b16 %v6327
    %v6468 = vunpack.c.h.b16 %v6327
    %v6469 = vunpack.c.l.b16 %v6328
    %v6470 = vunpack.c.h.b16 %v6328
    %v6471 = vunpack.c.l.b16 %v6329
    %v6472 = vunpack.c.h.b16 %v6329
    %v6473 = vunpack.c.l.b16 %v6330
    %v6474 = vunpack.c.h.b16 %v6330
    %v6475 = vunpack.c.l.b16 %v6331
    %v6476 = vunpack.c.h.b16 %v6331
    %v6477 = vunpack.c.l.b16 %v6332
    %v6478 = vunpack.c.h.b16 %v6332
    %v6479 = vunpack.c.l.b16 %v6333
    %v6480 = vunpack.c.h.b16 %v6333
    %v6481 = vunpack.c.l.b16 %v6334
    %v6482 = vunpack.c.h.b16 %v6334
    %v6483 = vunpack.c.l.b16 %v6335
    %v6484 = vunpack.c.h.b16 %v6335
    %v6485 = vunpack.c.l.b16 %v6336
    %v6486 = vunpack.c.h.b16 %v6336
    %v6487 = vunpack.c.l.b16 %v6337
    %v6488 = vunpack.c.h.b16 %v6337
    %v6489 = vunpack.c.l.b16 %v6338
    %v6490 = vunpack.c.h.b16 %v6338
    %v6491 = vunpack.c.l.b16 %v6339
    %v6492 = vunpack.c.h.b16 %v6339
    %v6493 = vunpack.c.l.b16 %v6340
    %v6494 = vunpack.c.h.b16 %v6340
    %v6495 = vunpack.c.l.b16 %v6341
    %v6496 = vunpack.c.h.b16 %v6341
    %v6497 = vunpack.c.l.b16 %v6342
    %v6498 = vunpack.c.h.b16 %v6342
    %v6499 = vunpack.c.l.b16 %v6343
    %v6500 = vunpack.c.h.b16 %v6343
    %v6501 = vunpack.c.l.b16 %v6344
    %v6502 = vunpack.c.h.b16 %v6344
    %v6503 = vunpack.c.l.b16 %v6345
    %v6504 = vunpack.c.h.b16 %v6345
    %v6505 = vunpack.c.l.b16 %v6346
    %v6506 = vunpack.c.h.b16 %v6346
    %v6507 = vunpack.c.l.b16 %v6347
    %v6508 = vunpack.c.h.b16 %v6347
    %v6509 = vunpack.c.l.b16 %v6348
    %v6510 = vunpack.c.h.b16 %v6348
    %v6511 = vunpack.c.l.b16 %v6349
    %v6512 = vunpack.c.h.b16 %v6349
    %v6513 = vunpack.c.l.b16 %v6350
    %v6514 = vunpack.c.h.b16 %v6350
    %v6515 = vunpack.c.l.b16 %v6351
    %v6516 = vunpack.c.h.b16 %v6351
    %v6517 = vunpack.c.l.b16 %v6352
    %v6518 = vunpack.c.h.b16 %v6352
    %v6519 = vunpack.c.l.b16 %v6353
    %v6520 = vunpack.c.h.b16 %v6353
    %v6521 = vunpack.c.l.b16 %v6354
    %v6522 = vunpack.c.h.b16 %v6354
    %v6523 = vunpack.c.l.b16 %v6355
    %v6524 = vunpack.c.h.b16 %v6355
    %v6525 = vunpack.c.l.b16 %v6356
    %v6526 = vunpack.c.h.b16 %v6356
    %v6527 = vunpack.c.l.b16 %v6357
    %v6528 = vunpack.c.h.b16 %v6357
    %v6529 = vunpack.c.l.b16 %v6358
    %v6530 = vunpack.c.h.b16 %v6358
    %v6531 = vunpack.c.l.b16 %v6359
    %v6532 = vunpack.c.h.b16 %v6359
    %v6533 = vunpack.c.l.b16 %v6360
    %v6534 = vunpack.c.h.b16 %v6360
    %v6535 = vunpack.c.l.b16 %v6361
    %v6536 = vunpack.c.h.b16 %v6361
    %v6537 = vunpack.c.l.b16 %v6362
    %v6538 = vunpack.c.h.b16 %v6362
    %v6539 = vunpack.c.l.b16 %v6363
    %v6540 = vunpack.c.h.b16 %v6363
    %v6541 = vunpack.c.l.b16 %v6364
    %v6542 = vunpack.c.h.b16 %v6364
    %v6543 = vpack.c.b16 %v6437, %v6435
    %v6544 = vpack.c.b16 %v6438, %v6436
    %v6545 = vpack.c.b16 %v6441, %v6439
    %v6546 = vpack.c.b16 %v6442, %v6440
    %v6547 = vpack.c.b16 %v6445, %v6443
    %v6548 = vpack.c.b16 %v6446, %v6444
    %v6549 = vpack.c.b16 %v6449, %v6447
    %v6550 = vpack.c.b16 %v6450, %v6448
    %v6551 = vpack.c.b16 %v6453, %v6451
    %v6552 = vpack.c.b16 %v6454, %v6452
    %v6553 = vpack.c.b16 %v6457, %v6455
    %v6554 = vpack.c.b16 %v6458, %v6456
    %v6555 = vpack.c.b16 %v6461, %v6459
    %v6556 = vpack.c.b16 %v6462, %v6460
    %v6557 = vpack.c.b16 %v6465, %v6463
    %v6558 = vpack.c.b16 %v6466, %v6464
    %v6559 = vpack.c.b16 %v6469, %v6467
    %v6560 = vpack.c.b16 %v6470, %v6468
    %v6561 = vpack.c.b16 %v6473, %v6471
    %v6562 = vpack.c.b16 %v6474, %v6472
    %v6563 = vpack.c.b16 %v6477, %v6475
    %v6564 = vpack.c.b16 %v6478, %v6476
    %v6565 = vpack.c.b16 %v6481, %v6479
    %v6566 = vpack.c.b16 %v6482, %v6480
    %v6567 = vpack.c.b16 %v6485, %v6483
    %v6568 = vpack.c.b16 %v6486, %v6484
    %v6569 = vpack.c.b16 %v6489, %v6487
    %v6570 = vpack.c.b16 %v6490, %v6488
    %v6571 = vpack.c.b16 %v6493, %v6491
    %v6572 = vpack.c.b16 %v6494, %v6492
    %v6573 = vpack.c.b16 %v6497, %v6495
    %v6574 = vpack.c.b16 %v6498, %v6496
    %v6575 = vpack.c.b16 %v6501, %v6499
    %v6576 = vpack.c.b16 %v6502, %v6500
    %v6577 = vpack.c.b16 %v6505, %v6503
    %v6578 = vpack.c.b16 %v6506, %v6504
    %v6579 = vpack.c.b16 %v6509, %v6507
    %v6580 = vpack.c.b16 %v6510, %v6508
    %v6581 = vpack.c.b16 %v6513, %v6511
    %v6582 = vpack.c.b16 %v6514, %v6512
    %v6583 = vpack.c.b16 %v6517, %v6515
    %v6584 = vpack.c.b16 %v6518, %v6516
    %v6585 = vpack.c.b16 %v6521, %v6519
    %v6586 = vpack.c.b16 %v6522, %v6520
    %v6587 = vpack.c.b16 %v6525, %v6523
    %v6588 = vpack.c.b16 %v6526, %v6524
    %v6589 = vpack.c.b16 %v6529, %v6527
    %v6590 = vpack.c.b16 %v6530, %v6528
    %v6591 = vpack.c.b16 %v6533, %v6531
    %v6592 = vpack.c.b16 %v6534, %v6532
    %v6593 = vpack.c.b16 %v6537, %v6535
    %v6594 = vpack.c.b16 %v6538, %v6536
    %v6595 = vpack.c.b16 %v6541, %v6539
    %v6596 = vpack.c.b16 %v6542, %v6540
    %v6652 = vsel %vm1417, %v6368, 0
    %6654 = vmatprep.subr.bf16.mxu0 %v6544
    %6655 = vmatpush1.bf16.msra.mxu0 %v6543
    %6656 = vmatprep.subr.bf16.mxu0 %v6546
    %6657 = vmatpush1.bf16.msra.mxu0 %v6545
    %6658 = vmatprep.subr.bf16.mxu0 %v6548
    %6659 = vmatpush1.bf16.msra.mxu0 %v6547
    %6660 = vmatprep.subr.bf16.mxu0 %v6550
    %6661 = vmatpush1.bf16.msra.mxu0 %v6549
    %6662 = vmatprep.subr.bf16.mxu0 %v6552
    %6663 = vmatpush1.bf16.msra.mxu0 %v6551
    %6664 = vmatprep.subr.bf16.mxu0 %v6554
    %6665 = vmatpush1.bf16.msra.mxu0 %v6553
    %6666 = vmatprep.subr.bf16.mxu0 %v6556
    %6667 = vmatpush1.bf16.msra.mxu0 %v6555
    %6668 = vmatprep.subr.bf16.mxu0 %v6558
    %6669 = vmatpush1.bf16.msra.mxu0 %v6557
    %6670 = vmatprep.subr.bf16.mxu0 %v6560
    %6671 = vmatpush1.bf16.msra.mxu0 %v6559
    %6672 = vmatprep.subr.bf16.mxu0 %v6562
    %6673 = vmatpush1.bf16.msra.mxu0 %v6561
    %6674 = vmatprep.subr.bf16.mxu0 %v6564
    %6675 = vmatpush1.bf16.msra.mxu0 %v6563
    %6676 = vmatprep.subr.bf16.mxu0 %v6566
    %6677 = vmatpush1.bf16.msra.mxu0 %v6565
    %6678 = vmatprep.subr.bf16.mxu0 %v6568
    %6679 = vmatpush1.bf16.msra.mxu0 %v6567
    %6680 = vmatprep.subr.bf16.mxu0 %v6570
    %6681 = vmatpush1.bf16.msra.mxu0 %v6569
    %6682 = vmatprep.subr.bf16.mxu0 %v6572
    %6683 = vmatpush1.bf16.msra.mxu0 %v6571
    %6684 = vmatprep.subr.bf16.mxu0 %v6574
    %6685 = vmatpush1.bf16.msra.mxu0 %v6573
    %6686 = vmatprep.mubr.bf16.mxu0 %v6366
    %6687 = vmatmul.mubr.bf16.gmra.mrb[0].mxu0 %v6365
    %v6688 = vpop.f32.mrb[0].mxu0
    %v6689 = vadd.f32 %v6374, %v6688
    %v6690 = vpop.f32.mrb[0].mxu0
    %v6691 = vadd.f32 %v6378, %v6690
    %v6692 = vpop.f32.mrb[0].mxu0
    %v6693 = vpop.f32.mrb[0].mxu0
    %6694 = vdwg.mxu0
    %6695 = vmatprep.subr.bf16.mxu0 %v6576
    %6696 = vmatpush1.bf16.msra.mxu0 %v6575
    %6697 = vmatprep.subr.bf16.mxu0 %v6578
    %6698 = vmatpush1.bf16.msra.mxu0 %v6577
    %6699 = vmatprep.subr.bf16.mxu0 %v6580
    %6700 = vmatpush1.bf16.msra.mxu0 %v6579
    %6701 = vmatprep.subr.bf16.mxu0 %v6582
    %6702 = vmatpush1.bf16.msra.mxu0 %v6581
    %6703 = vmatprep.subr.bf16.mxu0 %v6584
    %6704 = vmatpush1.bf16.msra.mxu0 %v6583
    %6705 = vmatprep.subr.bf16.mxu0 %v6586
    %6706 = vmatpush1.bf16.msra.mxu0 %v6585
    %6707 = vmatprep.subr.bf16.mxu0 %v6588
    %6708 = vmatpush1.bf16.msra.mxu0 %v6587
    %6709 = vmatprep.subr.bf16.mxu0 %v6590
    %6710 = vmatpush1.bf16.msra.mxu0 %v6589
    %6711 = vmatprep.subr.bf16.mxu0 %v6592
    %6712 = vmatpush1.bf16.msra.mxu0 %v6591
    %6713 = vmatprep.subr.bf16.mxu0 %v6594
    %6714 = vmatpush1.bf16.msra.mxu0 %v6593
    %6715 = vmatprep.subr.bf16.mxu0 %v6596
    %6716 = vmatpush1.bf16.msra.mxu0 %v6595
    %6717 = vmatprep.subr.bf16.mxu0 0
    %6718 = vmatpush1.bf16.msra.mxu0 0
    %6719 = vmatprep.subr.bf16.mxu0 0
    %6720 = vmatpush1.bf16.msra.mxu0 0
    %6721 = vmatprep.subr.bf16.mxu0 0
    %6722 = vmatpush1.bf16.msra.mxu0 0
    %6723 = vmatprep.subr.bf16.mxu0 0
    %6724 = vmatpush1.bf16.msra.mxu0 0
    %6725 = vmatprep.subr.bf16.mxu0 0
    %6726 = vmatpush1.bf16.msra.mxu0 0
    %6727 = vmatprep.mubr.bf16.mxu0 %v6652
    %6728 = vmatmul.mubr.bf16.gmra.mrb[0].mxu0 %v6367
    %v6729 = vpop.f32.mrb[0].mxu0
    %v6730 = vadd.f32 %v6689, %v6729
    %v6731 = vpop.f32.mrb[0].mxu0
    %v6732 = vadd.f32 %v6691, %v6731
    %v6733 = vpop.f32.mrb[0].mxu0
    %v6734 = vpop.f32.mrb[0].mxu0
    %6735 = vdwg.mxu0
    %v6736 = vmax.f32 %v6730, 0.0
    %v6737 = vmax.f32 %v6732, 0.0
    %v6740 = vcombine.low %v6736, %v6737
    %v6742 = vunpack.c.l.s4 1983009808
    %v6743 = vunpack.c.0.s8 %v6742
    %v6744 = vlaneseq
    %v6745 = vshrl.u32 %v6744, 7
    %v6746 = vsub.s32 %v6743, %v6745
    %v6747 = vrot.slane %v6740, %v6746
    %6749 = vst [vmem:[#allocation4] sm:$0xf] %v6747
    // Predicated region
    $region82: #{tpu_custom_call.1} parent=1 // pred_check
      _
    $region83: #{tpu_custom_call.1} parent=1 // pred_check_branch
      %6751 = sbr.rel (0) target = $region85
    $region84: #{tpu_custom_call.1} parent=1 // pred_region
      %s6753 = ssub.s32 64, 64
      %6754 = vsyncadd [#allocation3], %s6753
      %s6756 = sshll.u32 [#allocation2], 4
      %s6757 = int_to_ptr.vmem [resolvable:$true] %s6756
      %6759 = dma.vmem_to_hbm [thread:$0]  %s6757, 64, %s20, [#allocation3]
    $region85: #{tpu_custom_call.1} parent=1 // pred_fallthru
      _
    // Predicated region
    $region86: #{tpu_custom_call.1} parent=1 // pred_check
      _
    $region87: #{tpu_custom_call.1} parent=1 // pred_check_branch
      %6761 = sbr.rel (0) target = $region89
    $region88: #{tpu_custom_call.1} parent=1 // pred_region
      %s6763 = ssub.s32 64, 64
      %6764 = vsyncadd [#allocation5], %s6763
      %s6766 = sshll.u32 [#allocation4], 4
      %s6767 = int_to_ptr.vmem [resolvable:$true] %s6766
      %6769 = dma.vmem_to_hbm [thread:$0]  %s6767, 64, %s21, [#allocation5]
    $region89: #{tpu_custom_call.1} parent=1 // pred_fallthru
      _
    // Predicated region
    $region90: #{tpu_custom_call.1} parent=1 // pred_check
      _
    $region91: #{tpu_custom_call.1} parent=1 // pred_check_branch
      %6771 = sbr.rel (0) target = $region93
    $region92: #{tpu_custom_call.1} parent=1 // pred_region
      %6772 = dma.done [#allocation3], 64
    $region93: #{tpu_custom_call.1} parent=1 // pred_fallthru
      _
    // Predicated region
    $region94: #{tpu_custom_call.1} parent=1 // pred_check
      _
    $region95: #{tpu_custom_call.1} parent=1 // pred_check_branch
      %6774 = sbr.rel (0) target = $region97
    $region96: #{tpu_custom_call.1} parent=1 // pred_region
      %6775 = dma.done [#allocation5], 64
    $region97: #{tpu_custom_call.1} parent=1 // pred_fallthru
      _
    %6776 = vsyncpa [#allocation3], 1
    %6777 = vsyncpa [#allocation5], 1

</llo_original>
